<compile_context>
chip_gen: v6e
topology: v6e:2x2x1
jax: 0.10.0
libtpu: 0.0.40
codegen_flags: <defaults>
</compile_context>

<pallas_src>
import math
import numpy as np
import jax
import jax.numpy as jnp
from jax.experimental import pallas as pl
from jax.experimental.pallas import tpu as pltpu

# ---- static problem dimensions (small synthetic instances) ------------------
N_B = 4        # number of queries (q_rels.shape[0])
N_H = 8        # number of head entities (old_heads_len)
N_T = 16       # number of tail entities (len(state.t))
N_PAIR = 24    # number of (head, tail) pairs
N_E = 40       # number of relation edges
N_RELS = 8     # relation vocabulary size
D = 32         # embed_size
H = 32         # attn_size
N_HEADS = 4    # n_heads_rel
HS = H // N_HEADS
VS = D // N_HEADS

N_INST = 8     # number of block instances (BFS steps / subgraphs) batched
GROUP = 4      # instances fused per grid step (stacked along the M axis)

GB = GROUP * N_B        # 16
GH = GROUP * N_H        # 32
GP = GROUP * N_PAIR     # 96
GE = GROUP * N_E        # 160
GT = GROUP * N_T        # 64

# ---- packed int32 index layouts ----------------------------------------------
COL_QR, COL_HB, COL_R, COL_H2P, COL_P2R = 0, 1, 2, 3, 4   # gather-oriented cols
N_COLS = 8
ROW_HB, ROW_T2P, ROW_P2R = 0, 1, 2                        # scatter-oriented rows
ROW_LANES = ((GE + 127) // 128) * 128

# ---- packed shared-weight slab (rows, D) -------------------------------------
R_REL = 0                       # rel_embeds             (N_RELS rows)
R_WR = R_REL + N_RELS           # proj_pair_R weight     (D rows)
R_WP = R_WR + D                 # pna proj weight        (4*D rows)
R_WG = R_WP + 4 * D             # gate weight            (3*D rows)
R_BR = R_WG + 3 * D             # proj_pair_R bias
R_BPNA = R_BR + 1               # pna proj bias
R_GAMMA = R_BPNA + 1            # layernorm gamma
R_BETA = R_GAMMA + 1            # layernorm beta
WBIG_ROWS = ((R_BETA + 1 + 7) // 8) * 8   # pad to a sublane multiple

BIG = 3.0e38


def _block_kernel(icol_ref, irow_ref, ilane_ref, fall_ref, wqk_ref, wbig_ref,
                  out_ref):
    f32, bf16 = jnp.float32, jnp.bfloat16

    def dot(a, b):
        # single-pass bf16 MXU matmul with f32 accumulation
        return jnp.dot(a.astype(bf16), b.astype(bf16),
                       preferred_element_type=f32)

    def xdot(a, b):
        # near-f32 matmul; only used for the std (variance) cancellation path
        return jnp.dot(a, b, preferred_element_type=f32,
                       precision=jax.lax.Precision.HIGHEST)

    def gmat(col, n, m):
        # gather one-hot (n, m): row i is one-hot at icol[i, col]
        c = icol_ref[0, 0:n, col:col + 1]
        j = jax.lax.broadcasted_iota(jnp.int32, (n, m), 1)
        return (j == c).astype(bf16)

    def smat(row, m, n, dtype=bf16):
        # scatter one-hot (m, n): column j is one-hot at irow[row, j]
        r = irow_ref[0, row:row + 1, 0:n]
        i = jax.lax.broadcasted_iota(jnp.int32, (m, n), 0)
        return (i == r).astype(dtype)

    # ---- per-step data (GROUP instances row-stacked) -------------------------
    g_h = fall_ref[0, 0:GH, :]                  # (GH, D)  state.E_r
    hsc = fall_ref[0, GH:2 * GH, :]             # (GH, D)  1/log(deg+1), lane-bcast

    # ---- relation embeddings / query expansion -------------------------------
    rel_emb = wbig_ref[R_REL:R_REL + N_RELS, :]
    queries = dot(gmat(COL_QR, GB, N_RELS), rel_emb)        # (GB, D)
    G_hb = gmat(COL_HB, GH, GB)
    r_q = dot(G_hb, queries)                                # (GH, D) queries[h_batch]

    # ---- PNA head scaling (done here while G_hb is live) ----------------------
    S_hb = smat(ROW_HB, GB, GH)
    cnt_b = jnp.sum(S_hb.astype(f32), axis=-1, keepdims=True)   # (GB, 1)
    sum_b = dot(S_hb, hsc)                                  # (GB, D) lane-bcast
    mean_b = sum_b / jnp.maximum(cnt_b, 1.0)
    h_scale = hsc / dot(G_hb, mean_b)                       # (GH, D) lane-bcast

    # ---- multi-head sigmoid attention -----------------------------------------
    qp = dot(g_h + r_q, wqk_ref[:, 0:H])                    # (GH, H)
    r_emb = dot(gmat(COL_R, GE, N_RELS), rel_emb)           # (GE, D) rel_embeds(r)
    kp = dot(r_emb, wqk_ref[:, H:2 * H])                    # (GE, H)

    G_h2p = gmat(COL_H2P, GP, GH)
    qp_p = dot(G_h2p, qp)                                   # (GP, H)  qp[h2pair]
    g_q_h = dot(G_h2p, g_h)                                 # (GP, D)  G_h[h2pair]
    v_scale = dot(G_h2p, h_scale)                           # (GP, D)  lane-bcast
    # h2rel == h2pair[pair2rel]  ->  composed gathers, no h2rel input needed
    q_e = dot(gmat(COL_P2R, GE, GP), qp_p)                  # (GE, H)

    ci = jax.lax.broadcasted_iota(jnp.int32, (H, N_HEADS), 0)
    hi = jax.lax.broadcasted_iota(jnp.int32, (H, N_HEADS), 1)
    m_sum = ((ci >= hi * HS) & (ci < (hi + 1) * HS)).astype(bf16)   # (H, nh)
    alpha = dot(q_e * kp, m_sum) * (1.0 / math.sqrt(HS))    # (GE, nh)
    w_att = jax.nn.sigmoid(alpha)
    hj = jax.lax.broadcasted_iota(jnp.int32, (N_HEADS, D), 0)
    cj = jax.lax.broadcasted_iota(jnp.int32, (N_HEADS, D), 1)
    m_exp = ((cj >= hj * VS) & (cj < (hj + 1) * VS)).astype(bf16)   # (nh, D)
    scaled_v = r_emb * dot(w_att, m_exp)                    # (GE, D)

    # ---- aggregate edges -> pairs, project, DistMult message ------------------
    rs = dot(smat(ROW_P2R, GP, GE), scaled_v)               # segment_sum over pair2rel
    rs = dot(rs, wbig_ref[R_WR:R_WR + D, :]) + wbig_ref[R_BR:R_BR + 1, :]
    e_v = g_q_h * rs                                        # (GP, D)
    v = e_v * v_scale                                       # (GP, D)

    # ---- PNA aggregations over t2pair (sum / mean / std on the MXU) -----------
    S_t2p = smat(ROW_T2P, GT, GP, dtype=f32)                # (GT, GP)
    cnt_t = jnp.sum(S_t2p, axis=-1, keepdims=True)          # (GT, 1)
    sum_t = xdot(S_t2p, v)                                  # (GT, D)
    sq_t = xdot(S_t2p, v * v)                               # (GT, D)
    mean_t = sum_t / jnp.maximum(cnt_t, 1.0)
    std_t = jnp.sqrt(jnp.maximum(sq_t - sum_t * sum_t, 1e-8))

    # ---- lane-packed masked segment max / min ----------------------------------
    # v relayouted to (N_PAIR, GROUP*D): instance g occupies lanes [g*D,(g+1)*D)
    v_lane = jnp.concatenate(
        [v[g * N_PAIR:(g + 1) * N_PAIR, :] for g in range(GROUP)], axis=1)
    t2p_lane = ilane_ref[0]                                 # (N_PAIR, GROUP*D) int32
    max_rows, min_rows = [], []
    for t in range(N_T):                                    # static, 2-D ops only
        m = t2p_lane == t
        max_rows.append(jnp.max(jnp.where(m, v_lane, -BIG), axis=0, keepdims=True))
        min_rows.append(jnp.min(jnp.where(m, v_lane, BIG), axis=0, keepdims=True))
    max_lane = jnp.concatenate(max_rows, axis=0)            # (N_T, GROUP*D)
    min_lane = jnp.concatenate(min_rows, axis=0)
    # back to row-stacked (GT, D)
    max_t = jnp.concatenate(
        [max_lane[:, g * D:(g + 1) * D] for g in range(GROUP)], axis=0)
    min_t = jnp.concatenate(
        [min_lane[:, g * D:(g + 1) * D] for g in range(GROUP)], axis=0)
    has = cnt_t > 0.0
    max_t = jnp.where(has, max_t, 0.0)        # empty segments stay 0 (torch)
    min_t = jnp.where(has, min_t, 0.0)

    # ---- PNA projection (sum of per-block matmuls) ------------------------------
    g_t = (dot(mean_t, wbig_ref[R_WP + 0 * D:R_WP + 1 * D, :])
           + dot(max_t, wbig_ref[R_WP + 1 * D:R_WP + 2 * D, :])
           + dot(min_t, wbig_ref[R_WP + 2 * D:R_WP + 3 * D, :])
           + dot(std_t, wbig_ref[R_WP + 3 * D:R_WP + 4 * D, :])
           + wbig_ref[R_BPNA:R_BPNA + 1, :])                # (GT, D)

    # ---- gated residue + LayerNorm ------------------------------------------------
    # head rows of each instance sit at sublane-tile-aligned offsets g*N_T
    g_t_h = jnp.concatenate(
        [g_t[g * N_T:g * N_T + N_H, :] for g in range(GROUP)], axis=0)   # (GH, D)
    gate = jax.nn.sigmoid(
        dot(g_t_h, wbig_ref[R_WG + 0 * D:R_WG + 1 * D, :])
        + dot(g_h, wbig_ref[R_WG + 1 * D:R_WG + 2 * D, :])
        + dot(r_q, wbig_ref[R_WG + 2 * D:R_WG + 3 * D, :]))
    g_h_upd = g_t_h * gate + g_h                            # (GH, D)
    pieces = []
    for g in range(GROUP):
        pieces.append(g_h_upd[g * N_H:(g + 1) * N_H, :])
        pieces.append(g_t[g * N_T + N_H:(g + 1) * N_T, :])
    g_new = jnp.concatenate(pieces, axis=0)                 # (GT, D)

    mu = jnp.mean(g_new, axis=-1, keepdims=True)
    var = jnp.mean((g_new - mu) ** 2, axis=-1, keepdims=True)
    out_ref[...] = ((g_new - mu) * jax.lax.rsqrt(var + 1e-5)
                    * wbig_ref[R_GAMMA:R_GAMMA + 1, :]
                    + wbig_ref[R_BETA:R_BETA + 1, :])


def rel_attn_ent_pna_block(icol, irow, ilane, fall, wqk, wbig):
    n_steps = N_INST // GROUP
    out = pl.pallas_call(
        _block_kernel,
        out_shape=jax.ShapeDtypeStruct((N_INST * N_T, D), jnp.float32),
        grid=(n_steps,),
        in_specs=[
            pl.BlockSpec((1, GE, N_COLS), lambda s: (s, 0, 0)),
            pl.BlockSpec((1, 8, ROW_LANES), lambda s: (s, 0, 0)),
            pl.BlockSpec((1, N_PAIR, GROUP * D), lambda s: (s, 0, 0)),
            pl.BlockSpec((1, 2 * GH, D), lambda s: (s, 0, 0)),
            pl.BlockSpec((D, 2 * H), lambda s: (0, 0)),
            pl.BlockSpec((WBIG_ROWS, D), lambda s: (0, 0)),
        ],
        out_specs=pl.BlockSpec((GT, D), lambda s: (s, 0)),
        compiler_params=pltpu.CompilerParams(
            dimension_semantics=("parallel",)),
    )(icol, irow, ilane, fall, wqk, wbig)
    return out.reshape(N_INST, N_T, D)


# ---- pure-JAX reference (direct translation of the PyTorch forward) -----------
def reference_forward(q_rels, h_batch, r_ids, h2rel, pair2rel, h2pair, t2pair,
                      rel_emb, g_h, h_o_deg, wq, wk, wr, br, wpna, bpna,
                      wgate, gamma, beta):
    hdot = lambda a, b: jnp.dot(a, b, precision=jax.lax.Precision.HIGHEST)
    queries = rel_emb[q_rels]
    r_q = queries[h_batch]
    r = rel_emb[r_ids]
    qp = hdot(g_h + r_q, wq)
    kp = hdot(r, wk)
    q_e = qp[h2rel]
    hs = H // N_HEADS
    vs = D // N_HEADS
    alphas = (q_e.reshape(N_E, N_HEADS, hs)
              * kp.reshape(N_E, N_HEADS, hs)).sum(-1) / math.sqrt(hs)
    w = jax.nn.sigmoid(alphas)
    scaled_v = (w[:, :, None] * r.reshape(N_E, N_HEADS, vs)).reshape(N_E, D)
    rs = jax.ops.segment_sum(scaled_v, pair2rel, N_PAIR)
    rs = hdot(rs, wr) + br
    e_v = g_h[h2pair] * rs
    h_scale = 1.0 / jnp.log(h_o_deg + 1.0)
    cnt_b = jax.ops.segment_sum(jnp.ones(N_H), h_batch, N_B)
    sum_b = jax.ops.segment_sum(h_scale, h_batch, N_B)
    mean_b = sum_b / jnp.maximum(cnt_b, 1.0)
    h_scale = h_scale / mean_b[h_batch]
    v = e_v * h_scale[h2pair][:, None]
    cnt_t = jax.ops.segment_sum(jnp.ones(N_PAIR), t2pair, N_T)
    sum_t = jax.ops.segment_sum(v, t2pair, N_T)
    mean_t = sum_t / jnp.maximum(cnt_t, 1.0)[:, None]
    sq_t = jax.ops.segment_sum(v * v, t2pair, N_T)
    std_t = jnp.sqrt(jnp.maximum(sq_t - sum_t ** 2, 1e-8))
    has = (cnt_t > 0)[:, None]
    max_t = jnp.where(has, jax.ops.segment_max(v, t2pair, N_T), 0.0)
    min_t = jnp.where(has, jax.ops.segment_min(v, t2pair, N_T), 0.0)
    agg = jnp.concatenate([mean_t, max_t, min_t, std_t], axis=-1)
    g_t = hdot(agg, wpna) + bpna
    gate = jax.nn.sigmoid(hdot(jnp.concatenate([g_t[:N_H], g_h, r_q], -1), wgate))
    g_new = jnp.concatenate([g_t[:N_H] * gate + g_h, g_t[N_H:]], axis=0)
    mu = g_new.mean(-1, keepdims=True)
    var = ((g_new - mu) ** 2).mean(-1, keepdims=True)
    return (g_new - mu) / jnp.sqrt(var + 1e-5) * gamma + beta


if __name__ == "__main__":
    assert N_INST % GROUP == 0
    root = jax.random.PRNGKey(0)
    k_inst, k_par = jax.random.split(root)

    # ---- per-instance BfsRepresents-style synthetic graph data ----------------
    instances = []
    for i in range(N_INST):
        ks = jax.random.split(jax.random.fold_in(k_inst, i), 8)
        q_rels = jax.random.randint(ks[0], (N_B,), 0, N_RELS, dtype=jnp.int32)
        h_batch = jnp.concatenate([            # every batch index present
            jnp.arange(N_B, dtype=jnp.int32),
            jax.random.randint(ks[1], (N_H - N_B,), 0, N_B, dtype=jnp.int32)])
        h2pair = jax.random.randint(ks[2], (N_PAIR,), 0, N_H, dtype=jnp.int32)
        t2pair = jax.random.randint(ks[3], (N_PAIR,), 0, N_T, dtype=jnp.int32)
        pair2rel = jnp.concatenate([           # every pair has >= 1 edge
            jnp.arange(N_PAIR, dtype=jnp.int32),
            jax.random.randint(ks[4], (N_E - N_PAIR,), 0, N_PAIR,
                               dtype=jnp.int32)])
        r_ids = jax.random.randint(ks[5], (N_E,), 0, N_RELS, dtype=jnp.int32)
        h_o_deg = jax.random.randint(ks[6], (N_H,), 1, 6).astype(jnp.float32)
        g_h = jax.random.normal(ks[7], (N_H, D), jnp.float32)
        instances.append(dict(q_rels=q_rels, h_batch=h_batch, h2pair=h2pair,
                              t2pair=t2pair, pair2rel=pair2rel, r_ids=r_ids,
                              h_o_deg=h_o_deg, g_h=g_h))

    # ---- shared parameters (shapes from module __init__) ----------------------
    kw = iter(jax.random.split(k_par, 16))
    rel_emb = 0.5 * jax.random.normal(next(kw), (N_RELS, D), jnp.float32)
    wq = jax.random.normal(next(kw), (D, H), jnp.float32) / math.sqrt(D)
    wk = jax.random.normal(next(kw), (D, H), jnp.float32) / math.sqrt(D)
    wr = jax.random.normal(next(kw), (D, D), jnp.float32) / math.sqrt(D)
    br = 0.1 * jax.random.normal(next(kw), (D,), jnp.float32)
    wpna = jax.random.normal(next(kw), (4 * D, D), jnp.float32) / math.sqrt(4 * D)
    bpna = 0.1 * jax.random.normal(next(kw), (D,), jnp.float32)
    wgate = jax.random.normal(next(kw), (3 * D, D), jnp.float32) / math.sqrt(3 * D)
    gamma = 1.0 + 0.1 * jax.random.normal(next(kw), (D,), jnp.float32)
    beta = 0.1 * jax.random.normal(next(kw), (D,), jnp.float32)

    # ---- pack kernel inputs (host adds per-instance offsets -> block-diagonal) --
    n_steps = N_INST // GROUP
    icol = np.zeros((n_steps, GE, N_COLS), np.int32)
    irow = np.zeros((n_steps, 8, ROW_LANES), np.int32)
    ilane = np.zeros((n_steps, N_PAIR, GROUP * D), np.int32)
    fall = np.zeros((n_steps, 2 * GH, D), np.float32)
    for i, inst in enumerate(instances):
        s, g = divmod(i, GROUP)
        q_rels_i = np.asarray(inst['q_rels'])
        h_batch_i = np.asarray(inst['h_batch'])
        h2pair_i = np.asarray(inst['h2pair'])
        t2pair_i = np.asarray(inst['t2pair'])
        pair2rel_i = np.asarray(inst['pair2rel'])
        r_ids_i = np.asarray(inst['r_ids'])
        # gather-oriented columns
        icol[s, g * N_B:(g + 1) * N_B, COL_QR] = q_rels_i
        icol[s, g * N_H:(g + 1) * N_H, COL_HB] = h_batch_i + g * N_B
        icol[s, g * N_E:(g + 1) * N_E, COL_R] = r_ids_i
        icol[s, g * N_PAIR:(g + 1) * N_PAIR, COL_H2P] = h2pair_i + g * N_H
        icol[s, g * N_E:(g + 1) * N_E, COL_P2R] = pair2rel_i + g * N_PAIR
        # scatter-oriented rows
        irow[s, ROW_HB, g * N_H:(g + 1) * N_H] = h_batch_i + g * N_B
        irow[s, ROW_T2P, g * N_PAIR:(g + 1) * N_PAIR] = t2pair_i + g * N_T
        irow[s, ROW_P2R, g * N_E:(g + 1) * N_E] = pair2rel_i + g * N_PAIR
        # lane-packed t2pair (no offset; compared against 0..N_T-1 per band)
        ilane[s, :, g * D:(g + 1) * D] = t2pair_i[:, None]
        # floats: row-stacked G_h and host-precomputed 1/log(deg+1)
        fall[s, g * N_H:(g + 1) * N_H, :] = np.asarray(inst['g_h'])
        fall[s, GH + g * N_H:GH + (g + 1) * N_H, :] = \
            (1.0 / np.log(np.asarray(inst['h_o_deg']) + 1.0))[:, None]

    wqk = jnp.concatenate([wq, wk], axis=1)
    wbig = jnp.concatenate([rel_emb, wr, wpna, wgate, br[None, :],
                            bpna[None, :], gamma[None, :], beta[None, :]],
                           axis=0)
    wbig = jnp.pad(wbig, ((0, WBIG_ROWS - wbig.shape[0]), (0, 0)))
    assert wbig.shape == (WBIG_ROWS, D)

    out = rel_attn_ent_pna_block(jnp.asarray(icol), jnp.asarray(irow),
                                 jnp.asarray(ilane), jnp.asarray(fall),
                                 wqk, wbig)
    out = jax.block_until_ready(out)

    refs = []
    for inst in instances:
        h2rel = inst['h2pair'][inst['pair2rel']]
        refs.append(reference_forward(
            inst['q_rels'], inst['h_batch'], inst['r_ids'], h2rel,
            inst['pair2rel'], inst['h2pair'], inst['t2pair'],
            rel_emb, inst['g_h'], inst['h_o_deg'],
            wq, wk, wr, br, wpna, bpna, wgate, gamma, beta))
    ref = jnp.stack(refs)

    assert out.shape == (N_INST, N_T, D)
    assert bool(jnp.all(jnp.isfinite(out)))
    err = float(jnp.max(jnp.abs(out - ref)))
    # kernel uses single-pass bf16 MXU operands (f32 accumulation); the std
    # cancellation path stays at HIGHEST precision, so errors are ~1e-2 worst.
    assert err < 5e-2, f"max abs error vs reference: {err}"
    print("KERNEL_OK")
</pallas_src>

<mosaic_0001>
module attributes {stable_mosaic.version = 11 : i64} {
  func.func @_block_kernel(%arg0: i32, %arg1: memref<1x160x8xi32, #tpu.memory_space<vmem>>, %arg2: memref<1x8x256xi32, #tpu.memory_space<vmem>>, %arg3: memref<1x24x128xi32, #tpu.memory_space<vmem>>, %arg4: memref<1x64x32xf32, #tpu.memory_space<vmem>>, %arg5: memref<32x64xf32, #tpu.memory_space<vmem>>, %arg6: memref<272x32xf32, #tpu.memory_space<vmem>>, %arg7: memref<64x32xf32, #tpu.memory_space<vmem>>) attributes {dimension_semantics = [#tpu.dimension_semantics<parallel>], iteration_bounds = array<i64: 2>, scalar_prefetch = 0 : i64, scratch_operands = 0 : i64, tpu.core_type = #tpu.core_type<tc>, window_params = [{transform_indices = @transform_0, window_bounds = array<i64: 1, 160, 8>}, {transform_indices = @transform_1, window_bounds = array<i64: 1, 8, 256>}, {transform_indices = @transform_2, window_bounds = array<i64: 1, 24, 128>}, {transform_indices = @transform_3, window_bounds = array<i64: 1, 64, 32>}, {pipeline_mode = #tpu.pipeline_mode<synchronous>, transform_indices = @transform_4, window_bounds = array<i64: 32, 64>}, {pipeline_mode = #tpu.pipeline_mode<synchronous>, transform_indices = @transform_5, window_bounds = array<i64: 272, 32>}, {transform_indices = @transform_6, window_bounds = array<i64: 64, 32>}]} {
    %c0 = arith.constant 0 : index
    %c0_0 = arith.constant 0 : index
    %c0_1 = arith.constant 0 : index
    %0 = vector.load %arg4[%c0, %c0_0, %c0_1] : memref<1x64x32xf32, #tpu.memory_space<vmem>>, vector<1x32x32xf32>
    %1 = vector.shape_cast %0 : vector<1x32x32xf32> to vector<32x32xf32>
    %c0_2 = arith.constant 0 : index
    %c32 = arith.constant 32 : index
    %c0_3 = arith.constant 0 : index
    %2 = vector.load %arg4[%c0_2, %c32, %c0_3] : memref<1x64x32xf32, #tpu.memory_space<vmem>>, vector<1x32x32xf32>
    %3 = vector.shape_cast %2 : vector<1x32x32xf32> to vector<32x32xf32>
    %c0_4 = arith.constant 0 : index
    %c0_5 = arith.constant 0 : index
    %4 = vector.load %arg6[%c0_4, %c0_5] : memref<272x32xf32, #tpu.memory_space<vmem>>, vector<8x32xf32>
    %c0_6 = arith.constant 0 : index
    %c0_7 = arith.constant 0 : index
    %c0_8 = arith.constant 0 : index
    %5 = vector.load %arg1[%c0_6, %c0_7, %c0_8] : memref<1x160x8xi32, #tpu.memory_space<vmem>>, vector<1x16x1xi32>
    %6 = vector.shape_cast %5 : vector<1x16x1xi32> to vector<16x1xi32>
    %7 = tpu.iota {dimensions = array<i32: 1>} : vector<16x8xi32>
    %8 = vector.broadcast %6 : vector<16x1xi32> to vector<16x8xi32>
    %9 = arith.cmpi eq, %7, %8 : vector<16x8xi32>
    %10 = arith.extui %9 : vector<16x8xi1> to vector<16x8xi32>
    %11 = arith.sitofp %10 : vector<16x8xi32> to vector<16x8xf32>
    %12 = arith.truncf %11 : vector<16x8xf32> to vector<16x8xbf16>
    %13 = arith.truncf %4 : vector<8x32xf32> to vector<8x32xbf16>
    %cst = arith.constant dense<0.000000e+00> : vector<16x32xf32>
    %14 = tpu.matmul %12, %13, %cst {dimension_numbers = #tpu.dot_dimension_numbers<[1], [0], [0], [1], [0, 0, 1, 1], [], []>} : vector<16x8xbf16>, vector<8x32xbf16>, vector<16x32xf32> -> vector<16x32xf32>
    %c0_9 = arith.constant 0 : index
    %c0_10 = arith.constant 0 : index
    %c1 = arith.constant 1 : index
    %15 = vector.load %arg1[%c0_9, %c0_10, %c1] : memref<1x160x8xi32, #tpu.memory_space<vmem>>, vector<1x32x1xi32>
    %16 = vector.shape_cast %15 : vector<1x32x1xi32> to vector<32x1xi32>
    %17 = tpu.iota {dimensions = array<i32: 1>} : vector<32x16xi32>
    %18 = vector.broadcast %16 : vector<32x1xi32> to vector<32x16xi32>
    %19 = arith.cmpi eq, %17, %18 : vector<32x16xi32>
    %20 = arith.extui %19 : vector<32x16xi1> to vector<32x16xi32>
    %21 = arith.sitofp %20 : vector<32x16xi32> to vector<32x16xf32>
    %22 = arith.truncf %21 : vector<32x16xf32> to vector<32x16xbf16>
    %23 = arith.truncf %14 : vector<16x32xf32> to vector<16x32xbf16>
    %cst_11 = arith.constant dense<0.000000e+00> : vector<32x32xf32>
    %24 = tpu.matmul %22, %23, %cst_11 {dimension_numbers = #tpu.dot_dimension_numbers<[1], [0], [0], [1], [0, 0, 1, 1], [], []>} : vector<32x16xbf16>, vector<16x32xbf16>, vector<32x32xf32> -> vector<32x32xf32>
    %c0_12 = arith.constant 0 : index
    %c0_13 = arith.constant 0 : index
    %c0_14 = arith.constant 0 : index
    %25 = vector.load %arg2[%c0_12, %c0_13, %c0_14] : memref<1x8x256xi32, #tpu.memory_space<vmem>>, vector<1x1x32xi32>
    %26 = vector.shape_cast %25 : vector<1x1x32xi32> to vector<1x32xi32>
    %27 = tpu.iota {dimensions = array<i32: 0>} : vector<16x32xi32>
    %28 = vector.broadcast %26 : vector<1x32xi32> to vector<16x32xi32>
    %29 = arith.cmpi eq, %27, %28 : vector<16x32xi32>
    %30 = arith.extui %29 : vector<16x32xi1> to vector<16x32xi32>
    %31 = arith.sitofp %30 : vector<16x32xi32> to vector<16x32xf32>
    %32 = arith.truncf %31 : vector<16x32xf32> to vector<16x32xbf16>
    %33 = arith.extf %32 : vector<16x32xbf16> to vector<16x32xf32>
    %cst_15 = arith.constant dense<0.000000e+00> : vector<16xf32>
    %34 = vector.multi_reduction <add>, %33, %cst_15 [1] : vector<16x32xf32> to vector<16xf32>
    %35 = vector.shape_cast %34 : vector<16xf32> to vector<16x1xf32>
    %36 = arith.truncf %3 : vector<32x32xf32> to vector<32x32xbf16>
    %cst_16 = arith.constant dense<0.000000e+00> : vector<16x32xf32>
    %37 = tpu.matmul %32, %36, %cst_16 {dimension_numbers = #tpu.dot_dimension_numbers<[1], [0], [0], [1], [0, 0, 1, 1], [], []>} : vector<16x32xbf16>, vector<32x32xbf16>, vector<16x32xf32> -> vector<16x32xf32>
    %cst_17 = arith.constant 1.000000e+00 : f32
    %38 = vector.broadcast %cst_17 : f32 to vector<16x1xf32>
    %39 = arith.maximumf %35, %38 : vector<16x1xf32>
    %40 = vector.broadcast %39 : vector<16x1xf32> to vector<16x32xf32>
    %41 = arith.divf %37, %40 : vector<16x32xf32>
    %42 = arith.truncf %41 : vector<16x32xf32> to vector<16x32xbf16>
    %cst_18 = arith.constant dense<0.000000e+00> : vector<32x32xf32>
    %43 = tpu.matmul %22, %42, %cst_18 {dimension_numbers = #tpu.dot_dimension_numbers<[1], [0], [0], [1], [0, 0, 1, 1], [], []>} : vector<32x16xbf16>, vector<16x32xbf16>, vector<32x32xf32> -> vector<32x32xf32>
    %44 = arith.divf %3, %43 : vector<32x32xf32>
    %45 = arith.addf %1, %24 : vector<32x32xf32>
    %c0_19 = arith.constant 0 : index
    %c0_20 = arith.constant 0 : index
    %46 = vector.load %arg5[%c0_19, %c0_20] : memref<32x64xf32, #tpu.memory_space<vmem>>, vector<32x32xf32>
    %47 = arith.truncf %45 : vector<32x32xf32> to vector<32x32xbf16>
    %48 = arith.truncf %46 : vector<32x32xf32> to vector<32x32xbf16>
    %cst_21 = arith.constant dense<0.000000e+00> : vector<32x32xf32>
    %49 = tpu.matmul %47, %48, %cst_21 {dimension_numbers = #tpu.dot_dimension_numbers<[1], [0], [0], [1], [0, 0, 1, 1], [], []>} : vector<32x32xbf16>, vector<32x32xbf16>, vector<32x32xf32> -> vector<32x32xf32>
    %c0_22 = arith.constant 0 : index
    %c0_23 = arith.constant 0 : index
    %c2 = arith.constant 2 : index
    %50 = vector.load %arg1[%c0_22, %c0_23, %c2] : memref<1x160x8xi32, #tpu.memory_space<vmem>>, vector<1x160x1xi32>
    %51 = vector.shape_cast %50 : vector<1x160x1xi32> to vector<160x1xi32>
    %52 = tpu.iota {dimensions = array<i32: 1>} : vector<160x8xi32>
    %53 = vector.broadcast %51 : vector<160x1xi32> to vector<160x8xi32>
    %54 = arith.cmpi eq, %52, %53 : vector<160x8xi32>
    %55 = arith.extui %54 : vector<160x8xi1> to vector<160x8xi32>
    %56 = arith.sitofp %55 : vector<160x8xi32> to vector<160x8xf32>
    %57 = arith.truncf %56 : vector<160x8xf32> to vector<160x8xbf16>
    %58 = arith.truncf %4 : vector<8x32xf32> to vector<8x32xbf16>
    %cst_24 = arith.constant dense<0.000000e+00> : vector<160x32xf32>
    %59 = tpu.matmul %57, %58, %cst_24 {dimension_numbers = #tpu.dot_dimension_numbers<[1], [0], [0], [1], [0, 0, 1, 1], [], []>} : vector<160x8xbf16>, vector<8x32xbf16>, vector<160x32xf32> -> vector<160x32xf32>
    %c0_25 = arith.constant 0 : index
    %c32_26 = arith.constant 32 : index
    %60 = vector.load %arg5[%c0_25, %c32_26] : memref<32x64xf32, #tpu.memory_space<vmem>>, vector<32x32xf32>
    %61 = arith.truncf %59 : vector<160x32xf32> to vector<160x32xbf16>
    %62 = arith.truncf %60 : vector<32x32xf32> to vector<32x32xbf16>
    %cst_27 = arith.constant dense<0.000000e+00> : vector<160x32xf32>
    %63 = tpu.matmul %61, %62, %cst_27 {dimension_numbers = #tpu.dot_dimension_numbers<[1], [0], [0], [1], [0, 0, 1, 1], [], []>} : vector<160x32xbf16>, vector<32x32xbf16>, vector<160x32xf32> -> vector<160x32xf32>
    %c0_28 = arith.constant 0 : index
    %c0_29 = arith.constant 0 : index
    %c3 = arith.constant 3 : index
    %64 = vector.load %arg1[%c0_28, %c0_29, %c3] : memref<1x160x8xi32, #tpu.memory_space<vmem>>, vector<1x96x1xi32>
    %65 = vector.shape_cast %64 : vector<1x96x1xi32> to vector<96x1xi32>
    %66 = tpu.iota {dimensions = array<i32: 1>} : vector<96x32xi32>
    %67 = vector.broadcast %65 : vector<96x1xi32> to vector<96x32xi32>
    %68 = arith.cmpi eq, %66, %67 : vector<96x32xi32>
    %69 = arith.extui %68 : vector<96x32xi1> to vector<96x32xi32>
    %70 = arith.sitofp %69 : vector<96x32xi32> to vector<96x32xf32>
    %71 = arith.truncf %70 : vector<96x32xf32> to vector<96x32xbf16>
    %72 = arith.truncf %49 : vector<32x32xf32> to vector<32x32xbf16>
    %cst_30 = arith.constant dense<0.000000e+00> : vector<96x32xf32>
    %73 = tpu.matmul %71, %72, %cst_30 {dimension_numbers = #tpu.dot_dimension_numbers<[1], [0], [0], [1], [0, 0, 1, 1], [], []>} : vector<96x32xbf16>, vector<32x32xbf16>, vector<96x32xf32> -> vector<96x32xf32>
    %74 = arith.truncf %1 : vector<32x32xf32> to vector<32x32xbf16>
    %cst_31 = arith.constant dense<0.000000e+00> : vector<96x32xf32>
    %75 = tpu.matmul %71, %74, %cst_31 {dimension_numbers = #tpu.dot_dimension_numbers<[1], [0], [0], [1], [0, 0, 1, 1], [], []>} : vector<96x32xbf16>, vector<32x32xbf16>, vector<96x32xf32> -> vector<96x32xf32>
    %76 = arith.truncf %44 : vector<32x32xf32> to vector<32x32xbf16>
    %cst_32 = arith.constant dense<0.000000e+00> : vector<96x32xf32>
    %77 = tpu.matmul %71, %76, %cst_32 {dimension_numbers = #tpu.dot_dimension_numbers<[1], [0], [0], [1], [0, 0, 1, 1], [], []>} : vector<96x32xbf16>, vector<32x32xbf16>, vector<96x32xf32> -> vector<96x32xf32>
    %c0_33 = arith.constant 0 : index
    %c0_34 = arith.constant 0 : index
    %c4 = arith.constant 4 : index
    %78 = vector.load %arg1[%c0_33, %c0_34, %c4] : memref<1x160x8xi32, #tpu.memory_space<vmem>>, vector<1x160x1xi32>
    %79 = vector.shape_cast %78 : vector<1x160x1xi32> to vector<160x1xi32>
    %80 = tpu.iota {dimensions = array<i32: 1>} : vector<160x96xi32>
    %81 = vector.broadcast %79 : vector<160x1xi32> to vector<160x96xi32>
    %82 = arith.cmpi eq, %80, %81 : vector<160x96xi32>
    %83 = arith.extui %82 : vector<160x96xi1> to vector<160x96xi32>
    %84 = arith.sitofp %83 : vector<160x96xi32> to vector<160x96xf32>
    %85 = arith.truncf %84 : vector<160x96xf32> to vector<160x96xbf16>
    %86 = arith.truncf %73 : vector<96x32xf32> to vector<96x32xbf16>
    %cst_35 = arith.constant dense<0.000000e+00> : vector<160x32xf32>
    %87 = tpu.matmul %85, %86, %cst_35 {dimension_numbers = #tpu.dot_dimension_numbers<[1], [0], [0], [1], [0, 0, 1, 1], [], []>} : vector<160x96xbf16>, vector<96x32xbf16>, vector<160x32xf32> -> vector<160x32xf32>
    %88 = tpu.iota {dimensions = array<i32: 0>} : vector<32x4xi32>
    %89 = tpu.iota {dimensions = array<i32: 1>} : vector<32x4xi32>
    %c8_i32 = arith.constant 8 : i32
    %90 = vector.broadcast %c8_i32 : i32 to vector<32x4xi32>
    %91 = arith.muli %89, %90 : vector<32x4xi32>
    %92 = arith.cmpi sge, %88, %91 : vector<32x4xi32>
    %c1_i32 = arith.constant 1 : i32
    %93 = vector.broadcast %c1_i32 : i32 to vector<32x4xi32>
    %94 = arith.addi %89, %93 : vector<32x4xi32>
    %c8_i32_36 = arith.constant 8 : i32
    %95 = vector.broadcast %c8_i32_36 : i32 to vector<32x4xi32>
    %96 = arith.muli %94, %95 : vector<32x4xi32>
    %97 = arith.cmpi slt, %88, %96 : vector<32x4xi32>
    %98 = arith.andi %92, %97 : vector<32x4xi1>
    %99 = arith.extui %98 : vector<32x4xi1> to vector<32x4xi32>
    %100 = arith.sitofp %99 : vector<32x4xi32> to vector<32x4xf32>
    %101 = arith.truncf %100 : vector<32x4xf32> to vector<32x4xbf16>
    %102 = arith.mulf %87, %63 : vector<160x32xf32>
    %103 = arith.truncf %102 : vector<160x32xf32> to vector<160x32xbf16>
    %cst_37 = arith.constant dense<0.000000e+00> : vector<160x4xf32>
    %104 = tpu.matmul %103, %101, %cst_37 {dimension_numbers = #tpu.dot_dimension_numbers<[1], [0], [0], [1], [0, 0, 1, 1], [], []>} : vector<160x32xbf16>, vector<32x4xbf16>, vector<160x4xf32> -> vector<160x4xf32>
    %cst_38 = arith.constant 0.353553385 : f32
    %105 = vector.broadcast %cst_38 : f32 to vector<160x4xf32>
    %106 = arith.mulf %104, %105 : vector<160x4xf32>
    %107 = arith.negf %106 : vector<160x4xf32>
    %108 = math.exp %107 : vector<160x4xf32>
    %cst_39 = arith.constant 1.000000e+00 : f32
    %109 = vector.broadcast %cst_39 : f32 to vector<160x4xf32>
    %110 = arith.addf %109, %108 : vector<160x4xf32>
    %111 = arith.divf %109, %110 : vector<160x4xf32>
    %112 = tpu.iota {dimensions = array<i32: 0>} : vector<4x32xi32>
    %113 = tpu.iota {dimensions = array<i32: 1>} : vector<4x32xi32>
    %c8_i32_40 = arith.constant 8 : i32
    %114 = vector.broadcast %c8_i32_40 : i32 to vector<4x32xi32>
    %115 = arith.muli %112, %114 : vector<4x32xi32>
    %116 = arith.cmpi sge, %113, %115 : vector<4x32xi32>
    %c1_i32_41 = arith.constant 1 : i32
    %117 = vector.broadcast %c1_i32_41 : i32 to vector<4x32xi32>
    %118 = arith.addi %112, %117 : vector<4x32xi32>
    %c8_i32_42 = arith.constant 8 : i32
    %119 = vector.broadcast %c8_i32_42 : i32 to vector<4x32xi32>
    %120 = arith.muli %118, %119 : vector<4x32xi32>
    %121 = arith.cmpi slt, %113, %120 : vector<4x32xi32>
    %122 = arith.andi %116, %121 : vector<4x32xi1>
    %123 = arith.extui %122 : vector<4x32xi1> to vector<4x32xi32>
    %124 = arith.sitofp %123 : vector<4x32xi32> to vector<4x32xf32>
    %125 = arith.truncf %124 : vector<4x32xf32> to vector<4x32xbf16>
    %126 = arith.truncf %111 : vector<160x4xf32> to vector<160x4xbf16>
    %cst_43 = arith.constant dense<0.000000e+00> : vector<160x32xf32>
    %127 = tpu.matmul %126, %125, %cst_43 {dimension_numbers = #tpu.dot_dimension_numbers<[1], [0], [0], [1], [0, 0, 1, 1], [], []>} : vector<160x4xbf16>, vector<4x32xbf16>, vector<160x32xf32> -> vector<160x32xf32>
    %128 = arith.mulf %59, %127 : vector<160x32xf32>
    %c0_44 = arith.constant 0 : index
    %c2_45 = arith.constant 2 : index
    %c0_46 = arith.constant 0 : index
    %129 = vector.load %arg2[%c0_44, %c2_45, %c0_46] : memref<1x8x256xi32, #tpu.memory_space<vmem>>, vector<1x1x160xi32>
    %130 = vector.shape_cast %129 : vector<1x1x160xi32> to vector<1x160xi32>
    %131 = tpu.iota {dimensions = array<i32: 0>} : vector<96x160xi32>
    %132 = vector.broadcast %130 : vector<1x160xi32> to vector<96x160xi32>
    %133 = arith.cmpi eq, %131, %132 : vector<96x160xi32>
    %134 = arith.extui %133 : vector<96x160xi1> to vector<96x160xi32>
    %135 = arith.sitofp %134 : vector<96x160xi32> to vector<96x160xf32>
    %136 = arith.truncf %135 : vector<96x160xf32> to vector<96x160xbf16>
    %137 = arith.truncf %128 : vector<160x32xf32> to vector<160x32xbf16>
    %cst_47 = arith.constant dense<0.000000e+00> : vector<96x32xf32>
    %138 = tpu.matmul %136, %137, %cst_47 {dimension_numbers = #tpu.dot_dimension_numbers<[1], [0], [0], [1], [0, 0, 1, 1], [], []>} : vector<96x160xbf16>, vector<160x32xbf16>, vector<96x32xf32> -> vector<96x32xf32>
    %c8 = arith.constant 8 : index
    %c0_48 = arith.constant 0 : index
    %139 = vector.load %arg6[%c8, %c0_48] : memref<272x32xf32, #tpu.memory_space<vmem>>, vector<32x32xf32>
    %140 = arith.truncf %138 : vector<96x32xf32> to vector<96x32xbf16>
    %141 = arith.truncf %139 : vector<32x32xf32> to vector<32x32xbf16>
    %cst_49 = arith.constant dense<0.000000e+00> : vector<96x32xf32>
    %142 = tpu.matmul %140, %141, %cst_49 {dimension_numbers = #tpu.dot_dimension_numbers<[1], [0], [0], [1], [0, 0, 1, 1], [], []>} : vector<96x32xbf16>, vector<32x32xbf16>, vector<96x32xf32> -> vector<96x32xf32>
    %c264 = arith.constant 264 : index
    %c0_50 = arith.constant 0 : index
    %143 = vector.load %arg6[%c264, %c0_50] : memref<272x32xf32, #tpu.memory_space<vmem>>, vector<1x32xf32>
    %144 = vector.broadcast %143 : vector<1x32xf32> to vector<96x32xf32>
    %145 = arith.addf %142, %144 : vector<96x32xf32>
    %146 = arith.mulf %75, %145 : vector<96x32xf32>
    %147 = arith.mulf %146, %77 : vector<96x32xf32>
    %c0_51 = arith.constant 0 : index
    %c1_52 = arith.constant 1 : index
    %c0_53 = arith.constant 0 : index
    %148 = vector.load %arg2[%c0_51, %c1_52, %c0_53] : memref<1x8x256xi32, #tpu.memory_space<vmem>>, vector<1x1x96xi32>
    %149 = vector.shape_cast %148 : vector<1x1x96xi32> to vector<1x96xi32>
    %150 = tpu.iota {dimensions = array<i32: 0>} : vector<64x96xi32>
    %151 = vector.broadcast %149 : vector<1x96xi32> to vector<64x96xi32>
    %152 = arith.cmpi eq, %150, %151 : vector<64x96xi32>
    %153 = arith.extui %152 : vector<64x96xi1> to vector<64x96xi32>
    %154 = arith.sitofp %153 : vector<64x96xi32> to vector<64x96xf32>
    %cst_54 = arith.constant dense<0.000000e+00> : vector<64xf32>
    %155 = vector.multi_reduction <add>, %154, %cst_54 [1] : vector<64x96xf32> to vector<64xf32>
    %156 = vector.shape_cast %155 : vector<64xf32> to vector<64x1xf32>
    %cst_55 = arith.constant dense<0.000000e+00> : vector<64x32xf32>
    %157 = tpu.matmul %154, %147, %cst_55 {dimension_numbers = #tpu.dot_dimension_numbers<[1], [0], [0], [1], [0, 0, 1, 1], [], []>, precision = #tpu.contract_precision<fp32>} : vector<64x96xf32>, vector<96x32xf32>, vector<64x32xf32> -> vector<64x32xf32>
    %158 = arith.mulf %147, %147 : vector<96x32xf32>
    %cst_56 = arith.constant dense<0.000000e+00> : vector<64x32xf32>
    %159 = tpu.matmul %154, %158, %cst_56 {dimension_numbers = #tpu.dot_dimension_numbers<[1], [0], [0], [1], [0, 0, 1, 1], [], []>, precision = #tpu.contract_precision<fp32>} : vector<64x96xf32>, vector<96x32xf32>, vector<64x32xf32> -> vector<64x32xf32>
    %cst_57 = arith.constant 1.000000e+00 : f32
    %160 = vector.broadcast %cst_57 : f32 to vector<64x1xf32>
    %161 = arith.maximumf %156, %160 : vector<64x1xf32>
    %162 = vector.broadcast %161 : vector<64x1xf32> to vector<64x32xf32>
    %163 = arith.divf %157, %162 : vector<64x32xf32>
    %164 = arith.mulf %157, %157 : vector<64x32xf32>
    %165 = arith.subf %159, %164 : vector<64x32xf32>
    %cst_58 = arith.constant 9.99999993E-9 : f32
    %166 = vector.broadcast %cst_58 : f32 to vector<64x32xf32>
    %167 = arith.maximumf %165, %166 : vector<64x32xf32>
    %168 = math.sqrt %167 : vector<64x32xf32>
    %169 = vector.extract_strided_slice %147 {offsets = [0, 0], sizes = [24, 32], strides = [1, 1]} : vector<96x32xf32> to vector<24x32xf32>
    %170 = vector.extract_strided_slice %147 {offsets = [24, 0], sizes = [24, 32], strides = [1, 1]} : vector<96x32xf32> to vector<24x32xf32>
    %171 = vector.extract_strided_slice %147 {offsets = [48, 0], sizes = [24, 32], strides = [1, 1]} : vector<96x32xf32> to vector<24x32xf32>
    %172 = vector.extract_strided_slice %147 {offsets = [72, 0], sizes = [24, 32], strides = [1, 1]} : vector<96x32xf32> to vector<24x32xf32>
    %173 = tpu.concatenate %169, %170, %171, %172 in 1 : vector<24x32xf32>, vector<24x32xf32>, vector<24x32xf32>, vector<24x32xf32> -> vector<24x128xf32>
    %c0_59 = arith.constant 0 : index
    %c0_60 = arith.constant 0 : index
    %c0_61 = arith.constant 0 : index
    %174 = vector.load %arg3[%c0_59, %c0_60, %c0_61] : memref<1x24x128xi32, #tpu.memory_space<vmem>>, vector<1x24x128xi32>
    %175 = vector.shape_cast %174 : vector<1x24x128xi32> to vector<24x128xi32>
    %c0_i32 = arith.constant 0 : i32
    %176 = vector.broadcast %c0_i32 : i32 to vector<24x128xi32>
    %177 = arith.cmpi eq, %175, %176 : vector<24x128xi32>
    %cst_62 = arith.constant -3.000000e+38 : f32
    %178 = vector.broadcast %cst_62 : f32 to vector<24x128xf32>
    %179 = arith.select %177, %173, %178 : vector<24x128xi1>, vector<24x128xf32>
    %cst_63 = arith.constant dense<0xFF800000> : vector<128xf32>
    %180 = vector.multi_reduction <maximumf>, %179, %cst_63 [0] : vector<24x128xf32> to vector<128xf32>
    %181 = vector.shape_cast %180 : vector<128xf32> to vector<1x128xf32>
    %cst_64 = arith.constant 3.000000e+38 : f32
    %182 = vector.broadcast %cst_64 : f32 to vector<24x128xf32>
    %183 = arith.select %177, %173, %182 : vector<24x128xi1>, vector<24x128xf32>
    %cst_65 = arith.constant dense<0x7F800000> : vector<128xf32>
    %184 = vector.multi_reduction <minimumf>, %183, %cst_65 [0] : vector<24x128xf32> to vector<128xf32>
    %185 = vector.shape_cast %184 : vector<128xf32> to vector<1x128xf32>
    %c1_i32_66 = arith.constant 1 : i32
    %186 = vector.broadcast %c1_i32_66 : i32 to vector<24x128xi32>
    %187 = arith.cmpi eq, %175, %186 : vector<24x128xi32>
    %cst_67 = arith.constant -3.000000e+38 : f32
    %188 = vector.broadcast %cst_67 : f32 to vector<24x128xf32>
    %189 = arith.select %187, %173, %188 : vector<24x128xi1>, vector<24x128xf32>
    %cst_68 = arith.constant dense<0xFF800000> : vector<128xf32>
    %190 = vector.multi_reduction <maximumf>, %189, %cst_68 [0] : vector<24x128xf32> to vector<128xf32>
    %191 = vector.shape_cast %190 : vector<128xf32> to vector<1x128xf32>
    %cst_69 = arith.constant 3.000000e+38 : f32
    %192 = vector.broadcast %cst_69 : f32 to vector<24x128xf32>
    %193 = arith.select %187, %173, %192 : vector<24x128xi1>, vector<24x128xf32>
    %cst_70 = arith.constant dense<0x7F800000> : vector<128xf32>
    %194 = vector.multi_reduction <minimumf>, %193, %cst_70 [0] : vector<24x128xf32> to vector<128xf32>
    %195 = vector.shape_cast %194 : vector<128xf32> to vector<1x128xf32>
    %c2_i32 = arith.constant 2 : i32
    %196 = vector.broadcast %c2_i32 : i32 to vector<24x128xi32>
    %197 = arith.cmpi eq, %175, %196 : vector<24x128xi32>
    %cst_71 = arith.constant -3.000000e+38 : f32
    %198 = vector.broadcast %cst_71 : f32 to vector<24x128xf32>
    %199 = arith.select %197, %173, %198 : vector<24x128xi1>, vector<24x128xf32>
    %cst_72 = arith.constant dense<0xFF800000> : vector<128xf32>
    %200 = vector.multi_reduction <maximumf>, %199, %cst_72 [0] : vector<24x128xf32> to vector<128xf32>
    %201 = vector.shape_cast %200 : vector<128xf32> to vector<1x128xf32>
    %cst_73 = arith.constant 3.000000e+38 : f32
    %202 = vector.broadcast %cst_73 : f32 to vector<24x128xf32>
    %203 = arith.select %197, %173, %202 : vector<24x128xi1>, vector<24x128xf32>
    %cst_74 = arith.constant dense<0x7F800000> : vector<128xf32>
    %204 = vector.multi_reduction <minimumf>, %203, %cst_74 [0] : vector<24x128xf32> to vector<128xf32>
    %205 = vector.shape_cast %204 : vector<128xf32> to vector<1x128xf32>
    %c3_i32 = arith.constant 3 : i32
    %206 = vector.broadcast %c3_i32 : i32 to vector<24x128xi32>
    %207 = arith.cmpi eq, %175, %206 : vector<24x128xi32>
    %cst_75 = arith.constant -3.000000e+38 : f32
    %208 = vector.broadcast %cst_75 : f32 to vector<24x128xf32>
    %209 = arith.select %207, %173, %208 : vector<24x128xi1>, vector<24x128xf32>
    %cst_76 = arith.constant dense<0xFF800000> : vector<128xf32>
    %210 = vector.multi_reduction <maximumf>, %209, %cst_76 [0] : vector<24x128xf32> to vector<128xf32>
    %211 = vector.shape_cast %210 : vector<128xf32> to vector<1x128xf32>
    %cst_77 = arith.constant 3.000000e+38 : f32
    %212 = vector.broadcast %cst_77 : f32 to vector<24x128xf32>
    %213 = arith.select %207, %173, %212 : vector<24x128xi1>, vector<24x128xf32>
    %cst_78 = arith.constant dense<0x7F800000> : vector<128xf32>
    %214 = vector.multi_reduction <minimumf>, %213, %cst_78 [0] : vector<24x128xf32> to vector<128xf32>
    %215 = vector.shape_cast %214 : vector<128xf32> to vector<1x128xf32>
    %c4_i32 = arith.constant 4 : i32
    %216 = vector.broadcast %c4_i32 : i32 to vector<24x128xi32>
    %217 = arith.cmpi eq, %175, %216 : vector<24x128xi32>
    %cst_79 = arith.constant -3.000000e+38 : f32
    %218 = vector.broadcast %cst_79 : f32 to vector<24x128xf32>
    %219 = arith.select %217, %173, %218 : vector<24x128xi1>, vector<24x128xf32>
    %cst_80 = arith.constant dense<0xFF800000> : vector<128xf32>
    %220 = vector.multi_reduction <maximumf>, %219, %cst_80 [0] : vector<24x128xf32> to vector<128xf32>
    %221 = vector.shape_cast %220 : vector<128xf32> to vector<1x128xf32>
    %cst_81 = arith.constant 3.000000e+38 : f32
    %222 = vector.broadcast %cst_81 : f32 to vector<24x128xf32>
    %223 = arith.select %217, %173, %222 : vector<24x128xi1>, vector<24x128xf32>
    %cst_82 = arith.constant dense<0x7F800000> : vector<128xf32>
    %224 = vector.multi_reduction <minimumf>, %223, %cst_82 [0] : vector<24x128xf32> to vector<128xf32>
    %225 = vector.shape_cast %224 : vector<128xf32> to vector<1x128xf32>
    %c5_i32 = arith.constant 5 : i32
    %226 = vector.broadcast %c5_i32 : i32 to vector<24x128xi32>
    %227 = arith.cmpi eq, %175, %226 : vector<24x128xi32>
    %cst_83 = arith.constant -3.000000e+38 : f32
    %228 = vector.broadcast %cst_83 : f32 to vector<24x128xf32>
    %229 = arith.select %227, %173, %228 : vector<24x128xi1>, vector<24x128xf32>
    %cst_84 = arith.constant dense<0xFF800000> : vector<128xf32>
    %230 = vector.multi_reduction <maximumf>, %229, %cst_84 [0] : vector<24x128xf32> to vector<128xf32>
    %231 = vector.shape_cast %230 : vector<128xf32> to vector<1x128xf32>
    %cst_85 = arith.constant 3.000000e+38 : f32
    %232 = vector.broadcast %cst_85 : f32 to vector<24x128xf32>
    %233 = arith.select %227, %173, %232 : vector<24x128xi1>, vector<24x128xf32>
    %cst_86 = arith.constant dense<0x7F800000> : vector<128xf32>
    %234 = vector.multi_reduction <minimumf>, %233, %cst_86 [0] : vector<24x128xf32> to vector<128xf32>
    %235 = vector.shape_cast %234 : vector<128xf32> to vector<1x128xf32>
    %c6_i32 = arith.constant 6 : i32
    %236 = vector.broadcast %c6_i32 : i32 to vector<24x128xi32>
    %237 = arith.cmpi eq, %175, %236 : vector<24x128xi32>
    %cst_87 = arith.constant -3.000000e+38 : f32
    %238 = vector.broadcast %cst_87 : f32 to vector<24x128xf32>
    %239 = arith.select %237, %173, %238 : vector<24x128xi1>, vector<24x128xf32>
    %cst_88 = arith.constant dense<0xFF800000> : vector<128xf32>
    %240 = vector.multi_reduction <maximumf>, %239, %cst_88 [0] : vector<24x128xf32> to vector<128xf32>
    %241 = vector.shape_cast %240 : vector<128xf32> to vector<1x128xf32>
    %cst_89 = arith.constant 3.000000e+38 : f32
    %242 = vector.broadcast %cst_89 : f32 to vector<24x128xf32>
    %243 = arith.select %237, %173, %242 : vector<24x128xi1>, vector<24x128xf32>
    %cst_90 = arith.constant dense<0x7F800000> : vector<128xf32>
    %244 = vector.multi_reduction <minimumf>, %243, %cst_90 [0] : vector<24x128xf32> to vector<128xf32>
    %245 = vector.shape_cast %244 : vector<128xf32> to vector<1x128xf32>
    %c7_i32 = arith.constant 7 : i32
    %246 = vector.broadcast %c7_i32 : i32 to vector<24x128xi32>
    %247 = arith.cmpi eq, %175, %246 : vector<24x128xi32>
    %cst_91 = arith.constant -3.000000e+38 : f32
    %248 = vector.broadcast %cst_91 : f32 to vector<24x128xf32>
    %249 = arith.select %247, %173, %248 : vector<24x128xi1>, vector<24x128xf32>
    %cst_92 = arith.constant dense<0xFF800000> : vector<128xf32>
    %250 = vector.multi_reduction <maximumf>, %249, %cst_92 [0] : vector<24x128xf32> to vector<128xf32>
    %251 = vector.shape_cast %250 : vector<128xf32> to vector<1x128xf32>
    %cst_93 = arith.constant 3.000000e+38 : f32
    %252 = vector.broadcast %cst_93 : f32 to vector<24x128xf32>
    %253 = arith.select %247, %173, %252 : vector<24x128xi1>, vector<24x128xf32>
    %cst_94 = arith.constant dense<0x7F800000> : vector<128xf32>
    %254 = vector.multi_reduction <minimumf>, %253, %cst_94 [0] : vector<24x128xf32> to vector<128xf32>
    %255 = vector.shape_cast %254 : vector<128xf32> to vector<1x128xf32>
    %c8_i32_95 = arith.constant 8 : i32
    %256 = vector.broadcast %c8_i32_95 : i32 to vector<24x128xi32>
    %257 = arith.cmpi eq, %175, %256 : vector<24x128xi32>
    %cst_96 = arith.constant -3.000000e+38 : f32
    %258 = vector.broadcast %cst_96 : f32 to vector<24x128xf32>
    %259 = arith.select %257, %173, %258 : vector<24x128xi1>, vector<24x128xf32>
    %cst_97 = arith.constant dense<0xFF800000> : vector<128xf32>
    %260 = vector.multi_reduction <maximumf>, %259, %cst_97 [0] : vector<24x128xf32> to vector<128xf32>
    %261 = vector.shape_cast %260 : vector<128xf32> to vector<1x128xf32>
    %cst_98 = arith.constant 3.000000e+38 : f32
    %262 = vector.broadcast %cst_98 : f32 to vector<24x128xf32>
    %263 = arith.select %257, %173, %262 : vector<24x128xi1>, vector<24x128xf32>
    %cst_99 = arith.constant dense<0x7F800000> : vector<128xf32>
    %264 = vector.multi_reduction <minimumf>, %263, %cst_99 [0] : vector<24x128xf32> to vector<128xf32>
    %265 = vector.shape_cast %264 : vector<128xf32> to vector<1x128xf32>
    %c9_i32 = arith.constant 9 : i32
    %266 = vector.broadcast %c9_i32 : i32 to vector<24x128xi32>
    %267 = arith.cmpi eq, %175, %266 : vector<24x128xi32>
    %cst_100 = arith.constant -3.000000e+38 : f32
    %268 = vector.broadcast %cst_100 : f32 to vector<24x128xf32>
    %269 = arith.select %267, %173, %268 : vector<24x128xi1>, vector<24x128xf32>
    %cst_101 = arith.constant dense<0xFF800000> : vector<128xf32>
    %270 = vector.multi_reduction <maximumf>, %269, %cst_101 [0] : vector<24x128xf32> to vector<128xf32>
    %271 = vector.shape_cast %270 : vector<128xf32> to vector<1x128xf32>
    %cst_102 = arith.constant 3.000000e+38 : f32
    %272 = vector.broadcast %cst_102 : f32 to vector<24x128xf32>
    %273 = arith.select %267, %173, %272 : vector<24x128xi1>, vector<24x128xf32>
    %cst_103 = arith.constant dense<0x7F800000> : vector<128xf32>
    %274 = vector.multi_reduction <minimumf>, %273, %cst_103 [0] : vector<24x128xf32> to vector<128xf32>
    %275 = vector.shape_cast %274 : vector<128xf32> to vector<1x128xf32>
    %c10_i32 = arith.constant 10 : i32
    %276 = vector.broadcast %c10_i32 : i32 to vector<24x128xi32>
    %277 = arith.cmpi eq, %175, %276 : vector<24x128xi32>
    %cst_104 = arith.constant -3.000000e+38 : f32
    %278 = vector.broadcast %cst_104 : f32 to vector<24x128xf32>
    %279 = arith.select %277, %173, %278 : vector<24x128xi1>, vector<24x128xf32>
    %cst_105 = arith.constant dense<0xFF800000> : vector<128xf32>
    %280 = vector.multi_reduction <maximumf>, %279, %cst_105 [0] : vector<24x128xf32> to vector<128xf32>
    %281 = vector.shape_cast %280 : vector<128xf32> to vector<1x128xf32>
    %cst_106 = arith.constant 3.000000e+38 : f32
    %282 = vector.broadcast %cst_106 : f32 to vector<24x128xf32>
    %283 = arith.select %277, %173, %282 : vector<24x128xi1>, vector<24x128xf32>
    %cst_107 = arith.constant dense<0x7F800000> : vector<128xf32>
    %284 = vector.multi_reduction <minimumf>, %283, %cst_107 [0] : vector<24x128xf32> to vector<128xf32>
    %285 = vector.shape_cast %284 : vector<128xf32> to vector<1x128xf32>
    %c11_i32 = arith.constant 11 : i32
    %286 = vector.broadcast %c11_i32 : i32 to vector<24x128xi32>
    %287 = arith.cmpi eq, %175, %286 : vector<24x128xi32>
    %cst_108 = arith.constant -3.000000e+38 : f32
    %288 = vector.broadcast %cst_108 : f32 to vector<24x128xf32>
    %289 = arith.select %287, %173, %288 : vector<24x128xi1>, vector<24x128xf32>
    %cst_109 = arith.constant dense<0xFF800000> : vector<128xf32>
    %290 = vector.multi_reduction <maximumf>, %289, %cst_109 [0] : vector<24x128xf32> to vector<128xf32>
    %291 = vector.shape_cast %290 : vector<128xf32> to vector<1x128xf32>
    %cst_110 = arith.constant 3.000000e+38 : f32
    %292 = vector.broadcast %cst_110 : f32 to vector<24x128xf32>
    %293 = arith.select %287, %173, %292 : vector<24x128xi1>, vector<24x128xf32>
    %cst_111 = arith.constant dense<0x7F800000> : vector<128xf32>
    %294 = vector.multi_reduction <minimumf>, %293, %cst_111 [0] : vector<24x128xf32> to vector<128xf32>
    %295 = vector.shape_cast %294 : vector<128xf32> to vector<1x128xf32>
    %c12_i32 = arith.constant 12 : i32
    %296 = vector.broadcast %c12_i32 : i32 to vector<24x128xi32>
    %297 = arith.cmpi eq, %175, %296 : vector<24x128xi32>
    %cst_112 = arith.constant -3.000000e+38 : f32
    %298 = vector.broadcast %cst_112 : f32 to vector<24x128xf32>
    %299 = arith.select %297, %173, %298 : vector<24x128xi1>, vector<24x128xf32>
    %cst_113 = arith.constant dense<0xFF800000> : vector<128xf32>
    %300 = vector.multi_reduction <maximumf>, %299, %cst_113 [0] : vector<24x128xf32> to vector<128xf32>
    %301 = vector.shape_cast %300 : vector<128xf32> to vector<1x128xf32>
    %cst_114 = arith.constant 3.000000e+38 : f32
    %302 = vector.broadcast %cst_114 : f32 to vector<24x128xf32>
    %303 = arith.select %297, %173, %302 : vector<24x128xi1>, vector<24x128xf32>
    %cst_115 = arith.constant dense<0x7F800000> : vector<128xf32>
    %304 = vector.multi_reduction <minimumf>, %303, %cst_115 [0] : vector<24x128xf32> to vector<128xf32>
    %305 = vector.shape_cast %304 : vector<128xf32> to vector<1x128xf32>
    %c13_i32 = arith.constant 13 : i32
    %306 = vector.broadcast %c13_i32 : i32 to vector<24x128xi32>
    %307 = arith.cmpi eq, %175, %306 : vector<24x128xi32>
    %cst_116 = arith.constant -3.000000e+38 : f32
    %308 = vector.broadcast %cst_116 : f32 to vector<24x128xf32>
    %309 = arith.select %307, %173, %308 : vector<24x128xi1>, vector<24x128xf32>
    %cst_117 = arith.constant dense<0xFF800000> : vector<128xf32>
    %310 = vector.multi_reduction <maximumf>, %309, %cst_117 [0] : vector<24x128xf32> to vector<128xf32>
    %311 = vector.shape_cast %310 : vector<128xf32> to vector<1x128xf32>
    %cst_118 = arith.constant 3.000000e+38 : f32
    %312 = vector.broadcast %cst_118 : f32 to vector<24x128xf32>
    %313 = arith.select %307, %173, %312 : vector<24x128xi1>, vector<24x128xf32>
    %cst_119 = arith.constant dense<0x7F800000> : vector<128xf32>
    %314 = vector.multi_reduction <minimumf>, %313, %cst_119 [0] : vector<24x128xf32> to vector<128xf32>
    %315 = vector.shape_cast %314 : vector<128xf32> to vector<1x128xf32>
    %c14_i32 = arith.constant 14 : i32
    %316 = vector.broadcast %c14_i32 : i32 to vector<24x128xi32>
    %317 = arith.cmpi eq, %175, %316 : vector<24x128xi32>
    %cst_120 = arith.constant -3.000000e+38 : f32
    %318 = vector.broadcast %cst_120 : f32 to vector<24x128xf32>
    %319 = arith.select %317, %173, %318 : vector<24x128xi1>, vector<24x128xf32>
    %cst_121 = arith.constant dense<0xFF800000> : vector<128xf32>
    %320 = vector.multi_reduction <maximumf>, %319, %cst_121 [0] : vector<24x128xf32> to vector<128xf32>
    %321 = vector.shape_cast %320 : vector<128xf32> to vector<1x128xf32>
    %cst_122 = arith.constant 3.000000e+38 : f32
    %322 = vector.broadcast %cst_122 : f32 to vector<24x128xf32>
    %323 = arith.select %317, %173, %322 : vector<24x128xi1>, vector<24x128xf32>
    %cst_123 = arith.constant dense<0x7F800000> : vector<128xf32>
    %324 = vector.multi_reduction <minimumf>, %323, %cst_123 [0] : vector<24x128xf32> to vector<128xf32>
    %325 = vector.shape_cast %324 : vector<128xf32> to vector<1x128xf32>
    %c15_i32 = arith.constant 15 : i32
    %326 = vector.broadcast %c15_i32 : i32 to vector<24x128xi32>
    %327 = arith.cmpi eq, %175, %326 : vector<24x128xi32>
    %cst_124 = arith.constant -3.000000e+38 : f32
    %328 = vector.broadcast %cst_124 : f32 to vector<24x128xf32>
    %329 = arith.select %327, %173, %328 : vector<24x128xi1>, vector<24x128xf32>
    %cst_125 = arith.constant dense<0xFF800000> : vector<128xf32>
    %330 = vector.multi_reduction <maximumf>, %329, %cst_125 [0] : vector<24x128xf32> to vector<128xf32>
    %331 = vector.shape_cast %330 : vector<128xf32> to vector<1x128xf32>
    %cst_126 = arith.constant 3.000000e+38 : f32
    %332 = vector.broadcast %cst_126 : f32 to vector<24x128xf32>
    %333 = arith.select %327, %173, %332 : vector<24x128xi1>, vector<24x128xf32>
    %cst_127 = arith.constant dense<0x7F800000> : vector<128xf32>
    %334 = vector.multi_reduction <minimumf>, %333, %cst_127 [0] : vector<24x128xf32> to vector<128xf32>
    %335 = vector.shape_cast %334 : vector<128xf32> to vector<1x128xf32>
    %336 = tpu.concatenate %181, %191, %201, %211, %221, %231, %241, %251, %261, %271, %281, %291, %301, %311, %321, %331 in 0 : vector<1x128xf32>, vector<1x128xf32>, vector<1x128xf32>, vector<1x128xf32>, vector<1x128xf32>, vector<1x128xf32>, vector<1x128xf32>, vector<1x128xf32>, vector<1x128xf32>, vector<1x128xf32>, vector<1x128xf32>, vector<1x128xf32>, vector<1x128xf32>, vector<1x128xf32>, vector<1x128xf32>, vector<1x128xf32> -> vector<16x128xf32>
    %337 = tpu.concatenate %185, %195, %205, %215, %225, %235, %245, %255, %265, %275, %285, %295, %305, %315, %325, %335 in 0 : vector<1x128xf32>, vector<1x128xf32>, vector<1x128xf32>, vector<1x128xf32>, vector<1x128xf32>, vector<1x128xf32>, vector<1x128xf32>, vector<1x128xf32>, vector<1x128xf32>, vector<1x128xf32>, vector<1x128xf32>, vector<1x128xf32>, vector<1x128xf32>, vector<1x128xf32>, vector<1x128xf32>, vector<1x128xf32> -> vector<16x128xf32>
    %338 = vector.extract_strided_slice %336 {offsets = [0, 0], sizes = [16, 32], strides = [1, 1]} : vector<16x128xf32> to vector<16x32xf32>
    %339 = vector.extract_strided_slice %336 {offsets = [0, 32], sizes = [16, 32], strides = [1, 1]} : vector<16x128xf32> to vector<16x32xf32>
    %340 = vector.extract_strided_slice %336 {offsets = [0, 64], sizes = [16, 32], strides = [1, 1]} : vector<16x128xf32> to vector<16x32xf32>
    %341 = vector.extract_strided_slice %336 {offsets = [0, 96], sizes = [16, 32], strides = [1, 1]} : vector<16x128xf32> to vector<16x32xf32>
    %342 = tpu.concatenate %338, %339, %340, %341 in 0 : vector<16x32xf32>, vector<16x32xf32>, vector<16x32xf32>, vector<16x32xf32> -> vector<64x32xf32>
    %343 = vector.extract_strided_slice %337 {offsets = [0, 0], sizes = [16, 32], strides = [1, 1]} : vector<16x128xf32> to vector<16x32xf32>
    %344 = vector.extract_strided_slice %337 {offsets = [0, 32], sizes = [16, 32], strides = [1, 1]} : vector<16x128xf32> to vector<16x32xf32>
    %345 = vector.extract_strided_slice %337 {offsets = [0, 64], sizes = [16, 32], strides = [1, 1]} : vector<16x128xf32> to vector<16x32xf32>
    %346 = vector.extract_strided_slice %337 {offsets = [0, 96], sizes = [16, 32], strides = [1, 1]} : vector<16x128xf32> to vector<16x32xf32>
    %347 = tpu.concatenate %343, %344, %345, %346 in 0 : vector<16x32xf32>, vector<16x32xf32>, vector<16x32xf32>, vector<16x32xf32> -> vector<64x32xf32>
    %cst_128 = arith.constant 0.000000e+00 : f32
    %348 = vector.broadcast %cst_128 : f32 to vector<64x1xf32>
    %349 = arith.cmpf ogt, %156, %348 : vector<64x1xf32>
    %cst_129 = arith.constant 0.000000e+00 : f32
    %350 = vector.shape_cast %349 : vector<64x1xi1> to vector<64x1xi1>
    %351 = vector.broadcast %350 : vector<64x1xi1> to vector<64x32xi1>
    %352 = vector.broadcast %cst_129 : f32 to vector<64x32xf32>
    %353 = arith.select %351, %342, %352 : vector<64x32xi1>, vector<64x32xf32>
    %cst_130 = arith.constant 0.000000e+00 : f32
    %354 = vector.shape_cast %349 : vector<64x1xi1> to vector<64x1xi1>
    %355 = vector.broadcast %354 : vector<64x1xi1> to vector<64x32xi1>
    %356 = vector.broadcast %cst_130 : f32 to vector<64x32xf32>
    %357 = arith.select %355, %347, %356 : vector<64x32xi1>, vector<64x32xf32>
    %c40 = arith.constant 40 : index
    %c0_131 = arith.constant 0 : index
    %358 = vector.load %arg6[%c40, %c0_131] : memref<272x32xf32, #tpu.memory_space<vmem>>, vector<32x32xf32>
    %359 = arith.truncf %163 : vector<64x32xf32> to vector<64x32xbf16>
    %360 = arith.truncf %358 : vector<32x32xf32> to vector<32x32xbf16>
    %cst_132 = arith.constant dense<0.000000e+00> : vector<64x32xf32>
    %361 = tpu.matmul %359, %360, %cst_132 {dimension_numbers = #tpu.dot_dimension_numbers<[1], [0], [0], [1], [0, 0, 1, 1], [], []>} : vector<64x32xbf16>, vector<32x32xbf16>, vector<64x32xf32> -> vector<64x32xf32>
    %c72 = arith.constant 72 : index
    %c0_133 = arith.constant 0 : index
    %362 = vector.load %arg6[%c72, %c0_133] : memref<272x32xf32, #tpu.memory_space<vmem>>, vector<32x32xf32>
    %363 = arith.truncf %353 : vector<64x32xf32> to vector<64x32xbf16>
    %364 = arith.truncf %362 : vector<32x32xf32> to vector<32x32xbf16>
    %cst_134 = arith.constant dense<0.000000e+00> : vector<64x32xf32>
    %365 = tpu.matmul %363, %364, %cst_134 {dimension_numbers = #tpu.dot_dimension_numbers<[1], [0], [0], [1], [0, 0, 1, 1], [], []>} : vector<64x32xbf16>, vector<32x32xbf16>, vector<64x32xf32> -> vector<64x32xf32>
    %366 = arith.addf %361, %365 : vector<64x32xf32>
    %c104 = arith.constant 104 : index
    %c0_135 = arith.constant 0 : index
    %367 = vector.load %arg6[%c104, %c0_135] : memref<272x32xf32, #tpu.memory_space<vmem>>, vector<32x32xf32>
    %368 = arith.truncf %357 : vector<64x32xf32> to vector<64x32xbf16>
    %369 = arith.truncf %367 : vector<32x32xf32> to vector<32x32xbf16>
    %cst_136 = arith.constant dense<0.000000e+00> : vector<64x32xf32>
    %370 = tpu.matmul %368, %369, %cst_136 {dimension_numbers = #tpu.dot_dimension_numbers<[1], [0], [0], [1], [0, 0, 1, 1], [], []>} : vector<64x32xbf16>, vector<32x32xbf16>, vector<64x32xf32> -> vector<64x32xf32>
    %371 = arith.addf %366, %370 : vector<64x32xf32>
    %c136 = arith.constant 136 : index
    %c0_137 = arith.constant 0 : index
    %372 = vector.load %arg6[%c136, %c0_137] : memref<272x32xf32, #tpu.memory_space<vmem>>, vector<32x32xf32>
    %373 = arith.truncf %168 : vector<64x32xf32> to vector<64x32xbf16>
    %374 = arith.truncf %372 : vector<32x32xf32> to vector<32x32xbf16>
    %cst_138 = arith.constant dense<0.000000e+00> : vector<64x32xf32>
    %375 = tpu.matmul %373, %374, %cst_138 {dimension_numbers = #tpu.dot_dimension_numbers<[1], [0], [0], [1], [0, 0, 1, 1], [], []>} : vector<64x32xbf16>, vector<32x32xbf16>, vector<64x32xf32> -> vector<64x32xf32>
    %376 = arith.addf %371, %375 : vector<64x32xf32>
    %c265 = arith.constant 265 : index
    %c0_139 = arith.constant 0 : index
    %377 = vector.load %arg6[%c265, %c0_139] : memref<272x32xf32, #tpu.memory_space<vmem>>, vector<1x32xf32>
    %378 = vector.broadcast %377 : vector<1x32xf32> to vector<64x32xf32>
    %379 = arith.addf %376, %378 : vector<64x32xf32>
    %380 = vector.extract_strided_slice %379 {offsets = [0, 0], sizes = [8, 32], strides = [1, 1]} : vector<64x32xf32> to vector<8x32xf32>
    %381 = vector.extract_strided_slice %379 {offsets = [16, 0], sizes = [8, 32], strides = [1, 1]} : vector<64x32xf32> to vector<8x32xf32>
    %382 = vector.extract_strided_slice %379 {offsets = [32, 0], sizes = [8, 32], strides = [1, 1]} : vector<64x32xf32> to vector<8x32xf32>
    %383 = vector.extract_strided_slice %379 {offsets = [48, 0], sizes = [8, 32], strides = [1, 1]} : vector<64x32xf32> to vector<8x32xf32>
    %384 = tpu.concatenate %380, %381, %382, %383 in 0 : vector<8x32xf32>, vector<8x32xf32>, vector<8x32xf32>, vector<8x32xf32> -> vector<32x32xf32>
    %c168 = arith.constant 168 : index
    %c0_140 = arith.constant 0 : index
    %385 = vector.load %arg6[%c168, %c0_140] : memref<272x32xf32, #tpu.memory_space<vmem>>, vector<32x32xf32>
    %386 = arith.truncf %384 : vector<32x32xf32> to vector<32x32xbf16>
    %387 = arith.truncf %385 : vector<32x32xf32> to vector<32x32xbf16>
    %cst_141 = arith.constant dense<0.000000e+00> : vector<32x32xf32>
    %388 = tpu.matmul %386, %387, %cst_141 {dimension_numbers = #tpu.dot_dimension_numbers<[1], [0], [0], [1], [0, 0, 1, 1], [], []>} : vector<32x32xbf16>, vector<32x32xbf16>, vector<32x32xf32> -> vector<32x32xf32>
    %c200 = arith.constant 200 : index
    %c0_142 = arith.constant 0 : index
    %389 = vector.load %arg6[%c200, %c0_142] : memref<272x32xf32, #tpu.memory_space<vmem>>, vector<32x32xf32>
    %390 = arith.truncf %1 : vector<32x32xf32> to vector<32x32xbf16>
    %391 = arith.truncf %389 : vector<32x32xf32> to vector<32x32xbf16>
    %cst_143 = arith.constant dense<0.000000e+00> : vector<32x32xf32>
    %392 = tpu.matmul %390, %391, %cst_143 {dimension_numbers = #tpu.dot_dimension_numbers<[1], [0], [0], [1], [0, 0, 1, 1], [], []>} : vector<32x32xbf16>, vector<32x32xbf16>, vector<32x32xf32> -> vector<32x32xf32>
    %393 = arith.addf %388, %392 : vector<32x32xf32>
    %c232 = arith.constant 232 : index
    %c0_144 = arith.constant 0 : index
    %394 = vector.load %arg6[%c232, %c0_144] : memref<272x32xf32, #tpu.memory_space<vmem>>, vector<32x32xf32>
    %395 = arith.truncf %24 : vector<32x32xf32> to vector<32x32xbf16>
    %396 = arith.truncf %394 : vector<32x32xf32> to vector<32x32xbf16>
    %cst_145 = arith.constant dense<0.000000e+00> : vector<32x32xf32>
    %397 = tpu.matmul %395, %396, %cst_145 {dimension_numbers = #tpu.dot_dimension_numbers<[1], [0], [0], [1], [0, 0, 1, 1], [], []>} : vector<32x32xbf16>, vector<32x32xbf16>, vector<32x32xf32> -> vector<32x32xf32>
    %398 = arith.addf %393, %397 : vector<32x32xf32>
    %399 = arith.negf %398 : vector<32x32xf32>
    %400 = math.exp %399 : vector<32x32xf32>
    %cst_146 = arith.constant 1.000000e+00 : f32
    %401 = vector.broadcast %cst_146 : f32 to vector<32x32xf32>
    %402 = arith.addf %401, %400 : vector<32x32xf32>
    %403 = arith.divf %401, %402 : vector<32x32xf32>
    %404 = arith.mulf %384, %403 : vector<32x32xf32>
    %405 = arith.addf %404, %1 : vector<32x32xf32>
    %406 = vector.extract_strided_slice %405 {offsets = [0, 0], sizes = [8, 32], strides = [1, 1]} : vector<32x32xf32> to vector<8x32xf32>
    %407 = vector.extract_strided_slice %379 {offsets = [8, 0], sizes = [8, 32], strides = [1, 1]} : vector<64x32xf32> to vector<8x32xf32>
    %408 = vector.extract_strided_slice %405 {offsets = [8, 0], sizes = [8, 32], strides = [1, 1]} : vector<32x32xf32> to vector<8x32xf32>
    %409 = vector.extract_strided_slice %379 {offsets = [24, 0], sizes = [8, 32], strides = [1, 1]} : vector<64x32xf32> to vector<8x32xf32>
    %410 = vector.extract_strided_slice %405 {offsets = [16, 0], sizes = [8, 32], strides = [1, 1]} : vector<32x32xf32> to vector<8x32xf32>
    %411 = vector.extract_strided_slice %379 {offsets = [40, 0], sizes = [8, 32], strides = [1, 1]} : vector<64x32xf32> to vector<8x32xf32>
    %412 = vector.extract_strided_slice %405 {offsets = [24, 0], sizes = [8, 32], strides = [1, 1]} : vector<32x32xf32> to vector<8x32xf32>
    %413 = vector.extract_strided_slice %379 {offsets = [56, 0], sizes = [8, 32], strides = [1, 1]} : vector<64x32xf32> to vector<8x32xf32>
    %414 = tpu.concatenate %406, %407, %408, %409, %410, %411, %412, %413 in 0 : vector<8x32xf32>, vector<8x32xf32>, vector<8x32xf32>, vector<8x32xf32>, vector<8x32xf32>, vector<8x32xf32>, vector<8x32xf32>, vector<8x32xf32> -> vector<64x32xf32>
    %cst_147 = arith.constant dense<0.000000e+00> : vector<64xf32>
    %415 = vector.multi_reduction <add>, %414, %cst_147 [1] : vector<64x32xf32> to vector<64xf32>
    %416 = vector.shape_cast %415 : vector<64xf32> to vector<64x1xf32>
    %cst_148 = arith.constant 3.200000e+01 : f32
    %417 = vector.broadcast %cst_148 : f32 to vector<64x1xf32>
    %418 = arith.divf %416, %417 : vector<64x1xf32>
    %419 = vector.broadcast %418 : vector<64x1xf32> to vector<64x32xf32>
    %420 = arith.subf %414, %419 : vector<64x32xf32>
    %421 = arith.mulf %420, %420 : vector<64x32xf32>
    %cst_149 = arith.constant dense<0.000000e+00> : vector<64xf32>
    %422 = vector.multi_reduction <add>, %421, %cst_149 [1] : vector<64x32xf32> to vector<64xf32>
    %423 = vector.shape_cast %422 : vector<64xf32> to vector<64x1xf32>
    %cst_150 = arith.constant 3.200000e+01 : f32
    %424 = vector.broadcast %cst_150 : f32 to vector<64x1xf32>
    %425 = arith.divf %423, %424 : vector<64x1xf32>
    %426 = vector.broadcast %418 : vector<64x1xf32> to vector<64x32xf32>
    %427 = arith.subf %414, %426 : vector<64x32xf32>
    %cst_151 = arith.constant 9.99999974E-6 : f32
    %428 = vector.broadcast %cst_151 : f32 to vector<64x1xf32>
    %429 = arith.addf %425, %428 : vector<64x1xf32>
    %430 = math.rsqrt %429 : vector<64x1xf32>
    %431 = vector.broadcast %430 : vector<64x1xf32> to vector<64x32xf32>
    %432 = arith.mulf %427, %431 : vector<64x32xf32>
    %c266 = arith.constant 266 : index
    %c0_152 = arith.constant 0 : index
    %433 = vector.load %arg6[%c266, %c0_152] : memref<272x32xf32, #tpu.memory_space<vmem>>, vector<1x32xf32>
    %434 = vector.broadcast %433 : vector<1x32xf32> to vector<64x32xf32>
    %435 = arith.mulf %432, %434 : vector<64x32xf32>
    %c267 = arith.constant 267 : index
    %c0_153 = arith.constant 0 : index
    %436 = vector.load %arg6[%c267, %c0_153] : memref<272x32xf32, #tpu.memory_space<vmem>>, vector<1x32xf32>
    %437 = vector.broadcast %436 : vector<1x32xf32> to vector<64x32xf32>
    %438 = arith.addf %435, %437 : vector<64x32xf32>
    %c0_154 = arith.constant 0 : index
    %c0_155 = arith.constant 0 : index
    %439 = vector.load %arg7[%c0_154, %c0_155] : memref<64x32xf32, #tpu.memory_space<vmem>>, vector<64x32xf32>
    tpu.vector_store %arg7[%c0_154, %c0_155], %438 {strides = array<i32>} : memref<64x32xf32, #tpu.memory_space<vmem>>, vector<64x32xf32>,
    return
  }
  func.func @transform_0(%arg0: i32) -> (i32, i32, i32) {
    %c0_i32 = arith.constant 0 : i32
    %c0_i32_0 = arith.constant 0 : i32
    %c0_i32_1 = arith.constant 0 : i32
    return %arg0, %c0_i32, %c0_i32_0 : i32, i32, i32
  }
  func.func @transform_1(%arg0: i32) -> (i32, i32, i32) {
    %c0_i32 = arith.constant 0 : i32
    %c0_i32_0 = arith.constant 0 : i32
    %c0_i32_1 = arith.constant 0 : i32
    return %arg0, %c0_i32, %c0_i32_0 : i32, i32, i32
  }
  func.func @transform_2(%arg0: i32) -> (i32, i32, i32) {
    %c0_i32 = arith.constant 0 : i32
    %c0_i32_0 = arith.constant 0 : i32
    %c0_i32_1 = arith.constant 0 : i32
    return %arg0, %c0_i32, %c0_i32_0 : i32, i32, i32
  }
  func.func @transform_3(%arg0: i32) -> (i32, i32, i32) {
    %c0_i32 = arith.constant 0 : i32
    %c0_i32_0 = arith.constant 0 : i32
    %c0_i32_1 = arith.constant 0 : i32
    return %arg0, %c0_i32, %c0_i32_0 : i32, i32, i32
  }
  func.func @transform_4(%arg0: i32) -> (i32, i32) {
    %c0_i32 = arith.constant 0 : i32
    %c0_i32_0 = arith.constant 0 : i32
    %c0_i32_1 = arith.constant 0 : i32
    return %c0_i32, %c0_i32_0 : i32, i32
  }
  func.func @transform_5(%arg0: i32) -> (i32, i32) {
    %c0_i32 = arith.constant 0 : i32
    %c0_i32_0 = arith.constant 0 : i32
    %c0_i32_1 = arith.constant 0 : i32
    return %c0_i32, %c0_i32_0 : i32, i32
  }
  func.func @transform_6(%arg0: i32) -> (i32, i32) {
    %c0_i32 = arith.constant 0 : i32
    %c0_i32_0 = arith.constant 0 : i32
    return %arg0, %c0_i32 : i32, i32
  }
}

</mosaic_0001>

<llo_original>
// kernel: tpu_custom_call.1
$region0: #{tpu_custom_call.1}
  #allocation0 [shape = 'u32[]', space=smem, size = 0x4, offset = 0x4, fixed_abs, tag = 'smem constant byte address 0x4 - core index']
  #allocation1 [shape = 'u32[144,128]{1,0:T(1,128)}', space=vmem, size = 0x12000, scoped, tag = 'internal scratch']
  %s0 = inlined_call_operand.vmem [shape: s32[2,160,8], index: 0, kind: input, shape index: {}]
  %s1 = inlined_call_operand.vmem [shape: s32[2,8,256], index: 1, kind: input, shape index: {}]
  %s2 = inlined_call_operand.vmem [shape: s32[2,24,128], index: 2, kind: input, shape index: {}]
  %s3 = inlined_call_operand.vmem [shape: f32[2,64,32], index: 3, kind: input, shape index: {}]
  %s4 = inlined_call_operand.vmem [shape: f32[32,64], index: 4, kind: input, shape index: {}]
  %s5 = inlined_call_operand.vmem [shape: f32[272,32], index: 5, kind: input, shape index: {}]
  %s6 = inlined_call_operand.vmem [shape: f32[128,32], index: 6, kind: output, shape index: {}]
  %s7 = sld [smem:[#allocation0]]
  $region57: #{tpu_custom_call.1} parent=0
    _
  %s9 = ssub.s32 1, %s7
  %s10 = scalar_select 0, %s9, %s7
  loop: start=0, step=1, limit=4
  $region2: #{tpu_custom_call.1} parent=0 // loop_pre_header
    _
  $region3: #{tpu_custom_call.1} parent=0 // loop_header
    %s12 = sphi 0, %s16
    %p13 = scmp.ge.s32.totalorder %s12, 4
    %s22 = sphi 0, %s24
    %s25 = sphi 0, %s22
    %s26 = sphi 0, %s25
    %s42 = sphi 0, %s26
    %s48 = sphi 0, %s50
    %s51 = sphi 0, %s48
    %s52 = sphi 0, %s51
    %s68 = sphi 0, %s52
    %s74 = sphi 0, %s76
    %s77 = sphi 0, %s74
    %s78 = sphi 0, %s77
    %s94 = sphi 0, %s78
    %s100 = sphi 0, %s102
    %s103 = sphi 0, %s100
    %s104 = sphi 0, %s103
    %s120 = sphi 0, %s104
    %s124 = sphi 0, %s124
    %s126 = sphi 0, %s124
    %s127 = sphi 0, %s126
    %s141 = sphi 0, %s127
    %s145 = sphi 0, %s145
    %s147 = sphi 0, %s145
    %s148 = sphi 0, %s147
    %s162 = sphi 0, %s148
    %s168 = sphi 0, %s170
    %s171 = sphi 0, %s168
    %s172 = sphi 0, %s171
    %s188 = sphi 0, %s172
  $region4: #{tpu_custom_call.1} parent=0 // loop_header_branch
    %15 = sbr.rel (%p13) target = $region8
  $region5: #{tpu_custom_call.1} parent=0 // loop_body
    %s17 = ssub.s32 %s12, 1
    %s18 = ssub.s32 %s12, 2
    %s19 = sadd.s32 %s12, 1
    %s20 = ssub.s32 %s12, %s19
    %p21 = scmp.eq.s32.totalorder %s20, 0
    %s23 = sadd.s32 %s22, 1
    %s24 = scalar_select %p21, %s22, %s23
    %p27 = pneg %p21
    %p28 = scmp.eq.s32.totalorder %s12, 1
    %p29 = por %p27, %p28
    %p30 = scmp.ne.s32.totalorder %s22, %s25
    %p31 = scmp.eq.s32.totalorder %s12, 0
    %p32 = por %p30, %p31
    %p33 = scmp.ne.s32.totalorder %s22, %s25
    %p34 = scmp.eq.s32.totalorder %s17, 1
    %p35 = por %p33, %p34
    %p36 = scmp.ne.s32.totalorder %s25, %s26
    %p37 = scmp.eq.s32.totalorder %s17, 0
    %p38 = por %p36, %p37
    %p39 = scmp.ne.s32.totalorder %s25, %s26
    %p40 = scmp.eq.s32.totalorder %s18, 1
    %p41 = por %p39, %p40
    %p43 = scmp.ne.s32.totalorder %s26, %s42
    %p44 = scmp.eq.s32.totalorder %s18, 0
    %p45 = por %p43, %p44
    %s46 = ssub.s32 %s12, %s19
    %p47 = scmp.eq.s32.totalorder %s46, 0
    %s49 = sadd.s32 %s48, 1
    %s50 = scalar_select %p47, %s48, %s49
    %p53 = pneg %p47
    %p54 = scmp.eq.s32.totalorder %s12, 1
    %p55 = por %p53, %p54
    %p56 = scmp.ne.s32.totalorder %s48, %s51
    %p57 = scmp.eq.s32.totalorder %s12, 0
    %p58 = por %p56, %p57
    %p59 = scmp.ne.s32.totalorder %s48, %s51
    %p60 = scmp.eq.s32.totalorder %s17, 1
    %p61 = por %p59, %p60
    %p62 = scmp.ne.s32.totalorder %s51, %s52
    %p63 = scmp.eq.s32.totalorder %s17, 0
    %p64 = por %p62, %p63
    %p65 = scmp.ne.s32.totalorder %s51, %s52
    %p66 = scmp.eq.s32.totalorder %s18, 1
    %p67 = por %p65, %p66
    %p69 = scmp.ne.s32.totalorder %s52, %s68
    %p70 = scmp.eq.s32.totalorder %s18, 0
    %p71 = por %p69, %p70
    %s72 = ssub.s32 %s12, %s19
    %p73 = scmp.eq.s32.totalorder %s72, 0
    %s75 = sadd.s32 %s74, 1
    %s76 = scalar_select %p73, %s74, %s75
    %p79 = pneg %p73
    %p80 = scmp.eq.s32.totalorder %s12, 1
    %p81 = por %p79, %p80
    %p82 = scmp.ne.s32.totalorder %s74, %s77
    %p83 = scmp.eq.s32.totalorder %s12, 0
    %p84 = por %p82, %p83
    %p85 = scmp.ne.s32.totalorder %s74, %s77
    %p86 = scmp.eq.s32.totalorder %s17, 1
    %p87 = por %p85, %p86
    %p88 = scmp.ne.s32.totalorder %s77, %s78
    %p89 = scmp.eq.s32.totalorder %s17, 0
    %p90 = por %p88, %p89
    %p91 = scmp.ne.s32.totalorder %s77, %s78
    %p92 = scmp.eq.s32.totalorder %s18, 1
    %p93 = por %p91, %p92
    %p95 = scmp.ne.s32.totalorder %s78, %s94
    %p96 = scmp.eq.s32.totalorder %s18, 0
    %p97 = por %p95, %p96
    %s98 = ssub.s32 %s12, %s19
    %p99 = scmp.eq.s32.totalorder %s98, 0
    %s101 = sadd.s32 %s100, 1
    %s102 = scalar_select %p99, %s100, %s101
    %p105 = pneg %p99
    %p106 = scmp.eq.s32.totalorder %s12, 1
    %p107 = por %p105, %p106
    %p108 = scmp.ne.s32.totalorder %s100, %s103
    %p109 = scmp.eq.s32.totalorder %s12, 0
    %p110 = por %p108, %p109
    %p111 = scmp.ne.s32.totalorder %s100, %s103
    %p112 = scmp.eq.s32.totalorder %s17, 1
    %p113 = por %p111, %p112
    %p114 = scmp.ne.s32.totalorder %s103, %s104
    %p115 = scmp.eq.s32.totalorder %s17, 0
    %p116 = por %p114, %p115
    %p117 = scmp.ne.s32.totalorder %s103, %s104
    %p118 = scmp.eq.s32.totalorder %s18, 1
    %p119 = por %p117, %p118
    %p121 = scmp.ne.s32.totalorder %s104, %s120
    %p122 = scmp.eq.s32.totalorder %s18, 0
    %p123 = por %p121, %p122
    %s125 = sadd.s32 %s124, 1
    %p128 = scmp.eq.s32.totalorder %s12, 1
    %p129 = scmp.ne.s32.totalorder %s124, %s126
    %p130 = scmp.eq.s32.totalorder %s12, 0
    %p131 = por %p129, %p130
    %p132 = scmp.ne.s32.totalorder %s124, %s126
    %p133 = scmp.eq.s32.totalorder %s17, 1
    %p134 = por %p132, %p133
    %p135 = scmp.ne.s32.totalorder %s126, %s127
    %p136 = scmp.eq.s32.totalorder %s17, 0
    %p137 = por %p135, %p136
    %p138 = scmp.ne.s32.totalorder %s126, %s127
    %p139 = scmp.eq.s32.totalorder %s18, 1
    %p140 = por %p138, %p139
    %p142 = scmp.ne.s32.totalorder %s127, %s141
    %p143 = scmp.eq.s32.totalorder %s18, 0
    %p144 = por %p142, %p143
    %s146 = sadd.s32 %s145, 1
    %p149 = scmp.eq.s32.totalorder %s12, 1
    %p150 = scmp.ne.s32.totalorder %s145, %s147
    %p151 = scmp.eq.s32.totalorder %s12, 0
    %p152 = por %p150, %p151
    %p153 = scmp.ne.s32.totalorder %s145, %s147
    %p154 = scmp.eq.s32.totalorder %s17, 1
    %p155 = por %p153, %p154
    %p156 = scmp.ne.s32.totalorder %s147, %s148
    %p157 = scmp.eq.s32.totalorder %s17, 0
    %p158 = por %p156, %p157
    %p159 = scmp.ne.s32.totalorder %s147, %s148
    %p160 = scmp.eq.s32.totalorder %s18, 1
    %p161 = por %p159, %p160
    %p163 = scmp.ne.s32.totalorder %s148, %s162
    %p164 = scmp.eq.s32.totalorder %s18, 0
    %p165 = por %p163, %p164
    %s166 = ssub.s32 %s12, %s19
    %p167 = scmp.eq.s32.totalorder %s166, 0
    %s169 = sadd.s32 %s168, 1
    %s170 = scalar_select %p167, %s168, %s169
    %p173 = pneg %p167
    %p174 = scmp.eq.s32.totalorder %s12, 1
    %p175 = por %p173, %p174
    %p176 = scmp.ne.s32.totalorder %s168, %s171
    %p177 = scmp.eq.s32.totalorder %s12, 0
    %p178 = por %p176, %p177
    %p179 = scmp.ne.s32.totalorder %s168, %s171
    %p180 = scmp.eq.s32.totalorder %s17, 1
    %p181 = por %p179, %p180
    %p182 = scmp.ne.s32.totalorder %s171, %s172
    %p183 = scmp.eq.s32.totalorder %s17, 0
    %p184 = por %p182, %p183
    %p185 = scmp.ne.s32.totalorder %s171, %s172
    %p186 = scmp.eq.s32.totalorder %s18, 1
    %p187 = por %p185, %p186
    %p189 = scmp.ne.s32.totalorder %s172, %s188
    %p190 = scmp.eq.s32.totalorder %s18, 0
    %p191 = por %p189, %p190
    %p192 = scmp.le.s32.totalorder 1, %s12
    %p193 = scmp.lt.s32.totalorder %s12, 3
    %p194 = pnand %p192, %p193
    %p195 = pneg %p194
    // Predicated region
    $region9: #{tpu_custom_call.1} parent=5 // pred_check
      _
    $region10: #{tpu_custom_call.1} parent=5 // pred_check_branch
      %197 = sbr.rel (%p194) target = $region12
    $region11: #{tpu_custom_call.1} parent=5 // pred_region
      %s198 = ssub.s32 %s12, 1
      // Predicated region
      $region13: #{tpu_custom_call.1} parent=11 // pred_check
        %p199 = pneg %p137
      $region14: #{tpu_custom_call.1} parent=11 // pred_check_branch
        %201 = sbr.rel (%p199) target = $region16
      $region15: #{tpu_custom_call.1} parent=11 // pred_region
        _
      $region16: #{tpu_custom_call.1} parent=11 // pred_fallthru
        _
      // Predicated region
      $region17: #{tpu_custom_call.1} parent=11 // pred_check
        %p202 = pneg %p158
      $region18: #{tpu_custom_call.1} parent=11 // pred_check_branch
        %204 = sbr.rel (%p202) target = $region20
      $region19: #{tpu_custom_call.1} parent=11 // pred_region
        _
      $region20: #{tpu_custom_call.1} parent=11 // pred_fallthru
        _
    $region12: #{tpu_custom_call.1} parent=5 // pred_fallthru
      _
    %p205 = scmp.lt.s32.totalorder %s12, 2
    // Predicated region
    $region21: #{tpu_custom_call.1} parent=5 // pred_check
      %p206 = pneg %p205
    $region22: #{tpu_custom_call.1} parent=5 // pred_check_branch
      %208 = sbr.rel (%p206) target = $region24
    $region23: #{tpu_custom_call.1} parent=5 // pred_region
      // Predicated region
      $region25: #{tpu_custom_call.1} parent=23 // pred_check
        %p209 = pneg %p32
      $region26: #{tpu_custom_call.1} parent=23 // pred_check_branch
        %211 = sbr.rel (%p209) target = $region28
      $region27: #{tpu_custom_call.1} parent=23 // pred_region
        %p212 = scmp.lt.s32.totalorder %s12, 1
        %s213 = scalar_select %p212, %s12, 1
        %s214 = smul.addr %s213, 20
        %s215 = smul.addr %s214, 8
        %s216 = scalar_lea.vmem %s0, %s215
      $region28: #{tpu_custom_call.1} parent=23 // pred_fallthru
        _
      // Predicated region
      $region29: #{tpu_custom_call.1} parent=23 // pred_check
        %p217 = pneg %p58
      $region30: #{tpu_custom_call.1} parent=23 // pred_check_branch
        %219 = sbr.rel (%p217) target = $region32
      $region31: #{tpu_custom_call.1} parent=23 // pred_region
        %p220 = scmp.lt.s32.totalorder %s12, 1
        %s221 = scalar_select %p220, %s12, 1
        %s222 = smul.addr %s221, 2
        %s223 = smul.addr %s222, 8
        %s224 = scalar_lea.vmem %s1, %s223
      $region32: #{tpu_custom_call.1} parent=23 // pred_fallthru
        _
      // Predicated region
      $region33: #{tpu_custom_call.1} parent=23 // pred_check
        %p225 = pneg %p84
      $region34: #{tpu_custom_call.1} parent=23 // pred_check_branch
        %227 = sbr.rel (%p225) target = $region36
      $region35: #{tpu_custom_call.1} parent=23 // pred_region
        %p228 = scmp.lt.s32.totalorder %s12, 1
        %s229 = scalar_select %p228, %s12, 1
        %s230 = smul.addr %s229, 3
        %s231 = smul.addr %s230, 8
        %s232 = scalar_lea.vmem %s2, %s231
      $region36: #{tpu_custom_call.1} parent=23 // pred_fallthru
        _
      // Predicated region
      $region37: #{tpu_custom_call.1} parent=23 // pred_check
        %p233 = pneg %p110
      $region38: #{tpu_custom_call.1} parent=23 // pred_check_branch
        %235 = sbr.rel (%p233) target = $region40
      $region39: #{tpu_custom_call.1} parent=23 // pred_region
        %p236 = scmp.lt.s32.totalorder %s12, 1
        %s237 = scalar_select %p236, %s12, 1
        %s238 = smul.addr %s237, 8
        %s239 = smul.addr %s238, 8
        %s240 = scalar_lea.vmem %s3, %s239
      $region40: #{tpu_custom_call.1} parent=23 // pred_fallthru
        _
    $region24: #{tpu_custom_call.1} parent=5 // pred_fallthru
      _
    %p241 = scmp.le.s32.totalorder 1, %s12
    %p242 = scmp.lt.s32.totalorder %s12, 3
    %p243 = pnand %p241, %p242
    %p244 = pneg %p243
    // Predicated region
    $region41: #{tpu_custom_call.1} parent=5 // pred_check
      _
    $region42: #{tpu_custom_call.1} parent=5 // pred_check_branch
      %246 = sbr.rel (%p243) target = $region44
    $region43: #{tpu_custom_call.1} parent=5 // pred_region
      %s247 = ssub.s32 %s12, 1
      %p248 = scmp.lt.s32.totalorder %s17, 1
      %s249 = scalar_select %p248, %s17, 1
      %s250 = smul.addr %s249, 20
      %s251 = smul.addr %s250, 8
      %s252 = scalar_lea.vmem %s0, %s251
      %p253 = pneg %p38
      %p254 = pneg %p35
      %p255 = scmp.lt.s32.totalorder %s17, 1
      %s256 = scalar_select %p255, %s17, 1
      %s257 = smul.addr %s256, 2
      %s258 = smul.addr %s257, 8
      %s259 = scalar_lea.vmem %s1, %s258
      %p260 = pneg %p64
      %p261 = pneg %p61
      %p262 = scmp.lt.s32.totalorder %s17, 1
      %s263 = scalar_select %p262, %s17, 1
      %s264 = smul.addr %s263, 3
      %s265 = smul.addr %s264, 8
      %s266 = scalar_lea.vmem %s2, %s265
      %p267 = pneg %p90
      %p268 = pneg %p87
      %p269 = scmp.lt.s32.totalorder %s17, 1
      %s270 = scalar_select %p269, %s17, 1
      %s271 = smul.addr %s270, 8
      %s272 = smul.addr %s271, 8
      %s273 = scalar_lea.vmem %s3, %s272
      %p274 = pneg %p116
      %p275 = pneg %p113
      %p276 = pneg %p137
      %p277 = pneg %p134
      %p278 = pneg %p158
      %p279 = pneg %p155
      %p280 = pneg %p184
      %p281 = pneg %p181
      %s282 = smul.u32 8, %s17
      %p283 = scmp.lt.s32.totalorder %s282, 15
      %s284 = scalar_select %p283, %s282, 15
      %s285 = smul.addr %s284, 8
      %s286 = scalar_lea.vmem %s6, %s285
      %p287 = scmp.lt.s32.totalorder %s17, 1
      %s288 = scalar_select %p287, %s17, 1
      %s289 = smul.addr %s288, 20
      %s290 = smul.addr %s289, 8
      %s291 = scalar_lea.vmem %s0, %s290
      %p292 = scmp.lt.s32.totalorder %s17, 1
      %s293 = scalar_select %p292, %s17, 1
      %s294 = smul.addr %s293, 2
      %s295 = smul.addr %s294, 8
      %s296 = scalar_lea.vmem %s1, %s295
      %p297 = scmp.lt.s32.totalorder %s17, 1
      %s298 = scalar_select %p297, %s17, 1
      %s299 = smul.addr %s298, 3
      %s300 = smul.addr %s299, 8
      %s301 = scalar_lea.vmem %s2, %s300
      %p302 = scmp.lt.s32.totalorder %s17, 1
      %s303 = scalar_select %p302, %s17, 1
      %s304 = smul.addr %s303, 8
      %s305 = smul.addr %s304, 8
      %s306 = scalar_lea.vmem %s3, %s305
      %s307 = smul.u32 8, %s17
      %p308 = scmp.lt.s32.totalorder %s307, 15
      %s309 = scalar_select %p308, %s307, 15
      %s310 = smul.addr %s309, 8
      %s311 = scalar_lea.vmem %s6, %s310
      %s312 = smul.u32 8, %s17
      %v314 = vld [vmem:[%s306] sm:$0xff]
      %v315 = vld [vmem:[%s306 + $0x8] sm:$0xff]
      %v316 = vld [vmem:[%s306 + $0x10] sm:$0xff]
      %v317 = vld [vmem:[%s306 + $0x18] sm:$0xff]
      %v318 = vld [vmem:[%s306 + $0x20] sm:$0xff]
      %v319 = vld [vmem:[%s306 + $0x28] sm:$0xff]
      %v320 = vld [vmem:[%s306 + $0x30] sm:$0xff]
      %v321 = vld [vmem:[%s306 + $0x38] sm:$0xff]
      %v322 = vld [vmem:[%s5] sm:$0xff]
      %v323 = vld [vmem:[%s291] sm:$0xff]
      %v324 = vld [vmem:[%s291 + $0x8] sm:$0xff]
      %v325 = vlaneseq
      %v326 = vand.u32 %v325, 127
      %327 = vset.pattern.permute.xlu0 0
      %328 = vperm.xlu0 %327, %v323
      %v329 = vpop.permute.xlu0 %328
      %330 = vset.pattern.permute.xlu0 0
      %331 = vperm.xlu0 %330, %v324
      %v332 = vpop.permute.xlu0 %331
      %vm333 = vcmp.eq.s32.totalorder %v326, %v329
      %vm334 = vcmp.eq.s32.totalorder %v326, %v332
      %v335 = vsel %vm333, 1, 0
      %v336 = vsel %vm334, 1, 0
      %v337 = vcvt.s32.f32 %v335
      %v338 = vcvt.s32.f32 %v336
      %v339 = vpack.c.bf16 %v338, %v337
      %v340 = vpack.c.bf16 %v322, %v322
      %vm341 = vcmask 64512
      %v343 = vsel %vm341, %v339, 0
      %vm345 = vcmask 1043456
      %v347 = vsel %vm345, %v340, 0
      %349 = vmatprep.subr.bf16.mxu0 0
      %350 = vmatpush1.bf16.msra.mxu0 0
      %351 = vmatprep.subr.bf16.mxu0 0
      %352 = vmatpush1.bf16.msra.mxu0 0
      %353 = vmatprep.subr.bf16.mxu0 0
      %354 = vmatpush1.bf16.msra.mxu0 0
      %355 = vmatprep.subr.bf16.mxu0 0
      %356 = vmatpush1.bf16.msra.mxu0 0
      %357 = vmatprep.subr.bf16.mxu0 0
      %358 = vmatpush1.bf16.msra.mxu0 0
      %359 = vmatprep.subr.bf16.mxu0 0
      %360 = vmatpush1.bf16.msra.mxu0 0
      %361 = vmatprep.subr.bf16.mxu0 0
      %362 = vmatpush1.bf16.msra.mxu0 0
      %363 = vmatprep.subr.bf16.mxu0 0
      %364 = vmatpush1.bf16.msra.mxu0 %v347
      %365 = vmatprep.subr.bf16.mxu0 0
      %366 = vmatpush2.bf16.msra.mxu0 0
      %367 = vmatprep.subr.bf16.mxu0 0
      %368 = vmatpush2.bf16.msra.mxu0 0
      %369 = vmatprep.subr.bf16.mxu0 0
      %370 = vmatpush2.bf16.msra.mxu0 0
      %371 = vmatprep.subr.bf16.mxu0 0
      %372 = vmatpush2.bf16.msra.mxu0 0
      %373 = vmatprep.subr.bf16.mxu0 0
      %374 = vmatpush2.bf16.msra.mxu0 0
      %375 = vmatprep.subr.bf16.mxu0 0
      %376 = vmatpush2.bf16.msra.mxu0 0
      %377 = vmatprep.subr.bf16.mxu0 0
      %378 = vmatpush2.bf16.msra.mxu0 0
      %379 = vmatprep.subr.bf16.mxu0 0
      %380 = vmatpush2.bf16.msra.mxu0 0
      %381 = vmatprep.mubr.bf16.mxu0 0
      %382 = vmatmul.mubr.bf16.gmra.mxu0 %v343
      %v383 = vpop.f32.mrf.mxu0
      %v384 = vadd.f32 0.0, %v383
      %v385 = vpop.f32.mrf.mxu0
      %v386 = vpop.f32.mrf.mxu0
      %v387 = vadd.f32 0.0, %v386
      %v388 = vpop.f32.mrf.mxu0
      %389 = vdwg.mxu0
      %v390 = vld [vmem:[%s291] sm:$0xff]
      %v391 = vld [vmem:[%s291 + $0x8] sm:$0xff]
      %v392 = vld [vmem:[%s291 + $0x10] sm:$0xff]
      %v393 = vld [vmem:[%s291 + $0x18] sm:$0xff]
      %394 = vset.pattern.permute.xlu0 1
      %395 = vperm.xlu0 %394, %v390
      %v396 = vpop.permute.xlu0 %395
      %397 = vset.pattern.permute.xlu0 1
      %398 = vperm.xlu0 %397, %v391
      %v399 = vpop.permute.xlu0 %398
      %400 = vset.pattern.permute.xlu0 1
      %401 = vperm.xlu0 %400, %v392
      %v402 = vpop.permute.xlu0 %401
      %403 = vset.pattern.permute.xlu0 1
      %404 = vperm.xlu0 %403, %v393
      %v405 = vpop.permute.xlu0 %404
      %vm406 = vcmp.eq.s32.totalorder %v326, %v396
      %vm407 = vcmp.eq.s32.totalorder %v326, %v399
      %vm408 = vcmp.eq.s32.totalorder %v326, %v402
      %vm409 = vcmp.eq.s32.totalorder %v326, %v405
      %v410 = vsel %vm406, 1, 0
      %v411 = vsel %vm407, 1, 0
      %v412 = vsel %vm408, 1, 0
      %v413 = vsel %vm409, 1, 0
      %v414 = vcvt.s32.f32 %v410
      %v415 = vcvt.s32.f32 %v411
      %v416 = vcvt.s32.f32 %v412
      %v417 = vcvt.s32.f32 %v413
      %v418 = vpack.c.bf16 %v415, %v414
      %v419 = vpack.c.bf16 %v417, %v416
      %v420 = vpack.c.bf16 %v387, %v384
      %vm421 = vcmask 130048
      %v423 = vsel %vm421, %v418, 0
      %v426 = vsel %vm421, %v419, 0
      %428 = vmatprep.subr.bf16.mxu0 0
      %429 = vmatpush1.bf16.msra.mxu0 0
      %430 = vmatprep.subr.bf16.mxu0 0
      %431 = vmatpush1.bf16.msra.mxu0 0
      %432 = vmatprep.subr.bf16.mxu0 0
      %433 = vmatpush1.bf16.msra.mxu0 0
      %434 = vmatprep.subr.bf16.mxu0 0
      %435 = vmatpush1.bf16.msra.mxu0 0
      %436 = vmatprep.subr.bf16.mxu0 0
      %437 = vmatpush1.bf16.msra.mxu0 0
      %438 = vmatprep.subr.bf16.mxu0 0
      %439 = vmatpush1.bf16.msra.mxu0 0
      %440 = vmatprep.subr.bf16.mxu0 0
      %441 = vmatpush1.bf16.msra.mxu0 0
      %442 = vmatprep.subr.bf16.mxu0 0
      %443 = vmatpush1.bf16.msra.mxu0 %v420
      %444 = vmatprep.subr.bf16.mxu0 0
      %445 = vmatpush2.bf16.msra.mxu0 0
      %446 = vmatprep.subr.bf16.mxu0 0
      %447 = vmatpush2.bf16.msra.mxu0 0
      %448 = vmatprep.subr.bf16.mxu0 0
      %449 = vmatpush2.bf16.msra.mxu0 0
      %450 = vmatprep.subr.bf16.mxu0 0
      %451 = vmatpush2.bf16.msra.mxu0 0
      %452 = vmatprep.subr.bf16.mxu0 0
      %453 = vmatpush2.bf16.msra.mxu0 0
      %454 = vmatprep.subr.bf16.mxu0 0
      %455 = vmatpush2.bf16.msra.mxu0 0
      %456 = vmatprep.subr.bf16.mxu0 0
      %457 = vmatpush2.bf16.msra.mxu0 0
      %458 = vmatprep.subr.bf16.mxu0 0
      %459 = vmatpush2.bf16.msra.mxu0 0
      %460 = vmatprep.mubr.bf16.mxu0 0
      %461 = vmatmul.mubr.bf16.gmra.mxu0 %v423
      %v462 = vpop.f32.mrf.mxu0
      %v463 = vadd.f32 0.0, %v462
      %v464 = vpop.f32.mrf.mxu0
      %v465 = vpop.f32.mrf.mxu0
      %v466 = vadd.f32 0.0, %v465
      %v467 = vpop.f32.mrf.mxu0
      %468 = vmatprep.mubr.bf16.mxu0 0
      %469 = vmatmul.mubr.bf16.gmra.mxu0 %v426
      %v470 = vpop.f32.mrf.mxu0
      %v471 = vadd.f32 0.0, %v470
      %v472 = vpop.f32.mrf.mxu0
      %v473 = vpop.f32.mrf.mxu0
      %v474 = vadd.f32 0.0, %v473
      %v475 = vpop.f32.mrf.mxu0
      %476 = vdwg.mxu0
      %v477 = vld [vmem:[%s296] ss:$0 sm:$0xff]
      %v478 = vlaneseq
      %v479 = vshrl.u32 %v478, 7
      %v480 = vadd.s32 %v479, 8
      %vm481 = vcmp.eq.s32.totalorder %v479, %v477
      %vm482 = vcmp.eq.s32.totalorder %v480, %v477
      %v483 = vsel %vm481, 1, 0
      %v484 = vsel %vm482, 1, 0
      %v485 = vcvt.s32.f32 %v483
      %v486 = vcvt.s32.f32 %v484
      %v487 = vpack.c.bf16 %v486, %v485
      %v488 = vunpack.c.l.bf16 %v487
      %v489 = vunpack.c.h.bf16 %v487
      %vm490 = vcmask 261120
      %v491 = vsel %vm490, %v488, 0.0
      %492 = vadd.xlane.f32.xlu0 %v491
      %v493 = vpop.xlane.xlu0 %492
      %v494 = vsel %vm490, %v489, 0.0
      %495 = vadd.xlane.f32.xlu0 %v494
      %v496 = vpop.xlane.xlu0 %495
      %v497 = vpack.c.bf16 %v319, %v318
      %v498 = vpack.c.bf16 %v321, %v320
      %v500 = vsel %vm490, %v487, 0
      %502 = vmatprep.subr.bf16.mxu0 0
      %503 = vmatpush1.bf16.msra.mxu0 0
      %504 = vmatprep.subr.bf16.mxu0 0
      %505 = vmatpush1.bf16.msra.mxu0 0
      %506 = vmatprep.subr.bf16.mxu0 0
      %507 = vmatpush1.bf16.msra.mxu0 0
      %508 = vmatprep.subr.bf16.mxu0 0
      %509 = vmatpush1.bf16.msra.mxu0 0
      %510 = vmatprep.subr.bf16.mxu0 0
      %511 = vmatpush1.bf16.msra.mxu0 0
      %512 = vmatprep.subr.bf16.mxu0 0
      %513 = vmatpush1.bf16.msra.mxu0 0
      %514 = vmatprep.subr.bf16.mxu0 0
      %515 = vmatpush1.bf16.msra.mxu0 %v498
      %516 = vmatprep.subr.bf16.mxu0 0
      %517 = vmatpush1.bf16.msra.mxu0 %v497
      %518 = vmatprep.subr.bf16.mxu0 0
      %519 = vmatpush2.bf16.msra.mxu0 0
      %520 = vmatprep.subr.bf16.mxu0 0
      %521 = vmatpush2.bf16.msra.mxu0 0
      %522 = vmatprep.subr.bf16.mxu0 0
      %523 = vmatpush2.bf16.msra.mxu0 0
      %524 = vmatprep.subr.bf16.mxu0 0
      %525 = vmatpush2.bf16.msra.mxu0 0
      %526 = vmatprep.subr.bf16.mxu0 0
      %527 = vmatpush2.bf16.msra.mxu0 0
      %528 = vmatprep.subr.bf16.mxu0 0
      %529 = vmatpush2.bf16.msra.mxu0 0
      %530 = vmatprep.subr.bf16.mxu0 0
      %531 = vmatpush2.bf16.msra.mxu0 0
      %532 = vmatprep.subr.bf16.mxu0 0
      %533 = vmatpush2.bf16.msra.mxu0 0
      %534 = vmatprep.mubr.bf16.mxu0 0
      %535 = vmatmul.mubr.bf16.gmra.mxu0 %v500
      %v536 = vpop.f32.mrf.mxu0
      %v537 = vadd.f32 0.0, %v536
      %v538 = vpop.f32.mrf.mxu0
      %v539 = vpop.f32.mrf.mxu0
      %v540 = vadd.f32 0.0, %v539
      %v541 = vpop.f32.mrf.mxu0
      %542 = vdwg.mxu0
      %v543 = vmax.f32 %v493, 1.0
      %v544 = vmax.f32 %v496, 1.0
      %v545 = vrcp.pop %v543
      %v546 = vmul.f32 %v537, %v545
      %v547 = vrcp.pop %v544
      %v548 = vmul.f32 %v540, %v547
      %v549 = vpack.c.bf16 %v548, %v546
      %550 = vmatprep.subr.bf16.mxu0 0
      %551 = vmatpush1.bf16.msra.mxu0 0
      %552 = vmatprep.subr.bf16.mxu0 0
      %553 = vmatpush1.bf16.msra.mxu0 0
      %554 = vmatprep.subr.bf16.mxu0 0
      %555 = vmatpush1.bf16.msra.mxu0 0
      %556 = vmatprep.subr.bf16.mxu0 0
      %557 = vmatpush1.bf16.msra.mxu0 0
      %558 = vmatprep.subr.bf16.mxu0 0
      %559 = vmatpush1.bf16.msra.mxu0 0
      %560 = vmatprep.subr.bf16.mxu0 0
      %561 = vmatpush1.bf16.msra.mxu0 0
      %562 = vmatprep.subr.bf16.mxu0 0
      %563 = vmatpush1.bf16.msra.mxu0 0
      %564 = vmatprep.subr.bf16.mxu0 0
      %565 = vmatpush1.bf16.msra.mxu0 %v549
      %566 = vmatprep.subr.bf16.mxu0 0
      %567 = vmatpush2.bf16.msra.mxu0 0
      %568 = vmatprep.subr.bf16.mxu0 0
      %569 = vmatpush2.bf16.msra.mxu0 0
      %570 = vmatprep.subr.bf16.mxu0 0
      %571 = vmatpush2.bf16.msra.mxu0 0
      %572 = vmatprep.subr.bf16.mxu0 0
      %573 = vmatpush2.bf16.msra.mxu0 0
      %574 = vmatprep.subr.bf16.mxu0 0
      %575 = vmatpush2.bf16.msra.mxu0 0
      %576 = vmatprep.subr.bf16.mxu0 0
      %577 = vmatpush2.bf16.msra.mxu0 0
      %578 = vmatprep.subr.bf16.mxu0 0
      %579 = vmatpush2.bf16.msra.mxu0 0
      %580 = vmatprep.subr.bf16.mxu0 0
      %581 = vmatpush2.bf16.msra.mxu0 0
      %582 = vmatprep.mubr.bf16.mxu0 0
      %583 = vmatmul.mubr.bf16.gmra.mxu0 %v423
      %v584 = vpop.f32.mrf.mxu0
      %v585 = vadd.f32 0.0, %v584
      %v586 = vpop.f32.mrf.mxu0
      %v587 = vpop.f32.mrf.mxu0
      %v588 = vadd.f32 0.0, %v587
      %v589 = vpop.f32.mrf.mxu0
      %590 = vmatprep.mubr.bf16.mxu0 0
      %591 = vmatmul.mubr.bf16.gmra.mxu0 %v426
      %v592 = vpop.f32.mrf.mxu0
      %v593 = vadd.f32 0.0, %v592
      %v594 = vpop.f32.mrf.mxu0
      %v595 = vpop.f32.mrf.mxu0
      %v596 = vadd.f32 0.0, %v595
      %v597 = vpop.f32.mrf.mxu0
      %598 = vdwg.mxu0
      %v599 = vrcp.pop %v585
      %v600 = vmul.f32 %v318, %v599
      %v601 = vrcp.pop %v588
      %v602 = vmul.f32 %v319, %v601
      %v603 = vrcp.pop %v593
      %v604 = vmul.f32 %v320, %v603
      %v605 = vrcp.pop %v596
      %v606 = vmul.f32 %v321, %v605
      %v607 = vadd.f32 %v314, %v463
      %v608 = vadd.f32 %v315, %v466
      %v609 = vadd.f32 %v316, %v471
      %v610 = vadd.f32 %v317, %v474
      %v611 = vld [vmem:[%s4] sm:$0xff]
      %v612 = vld [vmem:[%s4 + $0x8] sm:$0xff]
      %v613 = vld [vmem:[%s4 + $0x10] sm:$0xff]
      %v614 = vld [vmem:[%s4 + $0x18] sm:$0xff]
      %v615 = vpack.c.bf16 %v608, %v607
      %v616 = vpack.c.bf16 %v610, %v609
      %v617 = vpack.c.bf16 %v612, %v611
      %v618 = vpack.c.bf16 %v614, %v613
      %v620 = vsel %vm490, %v615, 0
      %v623 = vsel %vm490, %v616, 0
      %625 = vmatprep.subr.bf16.mxu0 0
      %626 = vmatpush1.bf16.msra.mxu0 0
      %627 = vmatprep.subr.bf16.mxu0 0
      %628 = vmatpush1.bf16.msra.mxu0 0
      %629 = vmatprep.subr.bf16.mxu0 0
      %630 = vmatpush1.bf16.msra.mxu0 0
      %631 = vmatprep.subr.bf16.mxu0 0
      %632 = vmatpush1.bf16.msra.mxu0 0
      %633 = vmatprep.subr.bf16.mxu0 0
      %634 = vmatpush1.bf16.msra.mxu0 0
      %635 = vmatprep.subr.bf16.mxu0 0
      %636 = vmatpush1.bf16.msra.mxu0 0
      %637 = vmatprep.subr.bf16.mxu0 0
      %638 = vmatpush1.bf16.msra.mxu0 %v618
      %639 = vmatprep.subr.bf16.mxu0 0
      %640 = vmatpush1.bf16.msra.mxu0 %v617
      %641 = vmatprep.subr.bf16.mxu0 0
      %642 = vmatpush2.bf16.msra.mxu0 0
      %643 = vmatprep.subr.bf16.mxu0 0
      %644 = vmatpush2.bf16.msra.mxu0 0
      %645 = vmatprep.subr.bf16.mxu0 0
      %646 = vmatpush2.bf16.msra.mxu0 0
      %647 = vmatprep.subr.bf16.mxu0 0
      %648 = vmatpush2.bf16.msra.mxu0 0
      %649 = vmatprep.subr.bf16.mxu0 0
      %650 = vmatpush2.bf16.msra.mxu0 0
      %651 = vmatprep.subr.bf16.mxu0 0
      %652 = vmatpush2.bf16.msra.mxu0 0
      %653 = vmatprep.subr.bf16.mxu0 0
      %654 = vmatpush2.bf16.msra.mxu0 0
      %655 = vmatprep.subr.bf16.mxu0 0
      %656 = vmatpush2.bf16.msra.mxu0 0
      %657 = vmatprep.mubr.bf16.mxu0 0
      %658 = vmatmul.mubr.bf16.gmra.mxu0 %v620
      %v659 = vpop.f32.mrf.mxu0
      %v660 = vadd.f32 0.0, %v659
      %v661 = vpop.f32.mrf.mxu0
      %v662 = vpop.f32.mrf.mxu0
      %v663 = vadd.f32 0.0, %v662
      %v664 = vpop.f32.mrf.mxu0
      %665 = vmatprep.mubr.bf16.mxu0 0
      %666 = vmatmul.mubr.bf16.gmra.mxu0 %v623
      %v667 = vpop.f32.mrf.mxu0
      %v668 = vadd.f32 0.0, %v667
      %v669 = vpop.f32.mrf.mxu0
      %v670 = vpop.f32.mrf.mxu0
      %v671 = vadd.f32 0.0, %v670
      %v672 = vpop.f32.mrf.mxu0
      %673 = vdwg.mxu0
      %v674 = vld [vmem:[%s291] sm:$0xff]
      %v675 = vld [vmem:[%s291 + $0x8] sm:$0xff]
      %v676 = vld [vmem:[%s291 + $0x10] sm:$0xff]
      %v677 = vld [vmem:[%s291 + $0x18] sm:$0xff]
      %v678 = vld [vmem:[%s291 + $0x20] sm:$0xff]
      %v679 = vld [vmem:[%s291 + $0x28] sm:$0xff]
      %v680 = vld [vmem:[%s291 + $0x30] sm:$0xff]
      %v681 = vld [vmem:[%s291 + $0x38] sm:$0xff]
      %v682 = vld [vmem:[%s291 + $0x40] sm:$0xff]
      %v683 = vld [vmem:[%s291 + $0x48] sm:$0xff]
      %v684 = vld [vmem:[%s291 + $0x50] sm:$0xff]
      %v685 = vld [vmem:[%s291 + $0x58] sm:$0xff]
      %v686 = vld [vmem:[%s291 + $0x60] sm:$0xff]
      %v687 = vld [vmem:[%s291 + $0x68] sm:$0xff]
      %v688 = vld [vmem:[%s291 + $0x70] sm:$0xff]
      %v689 = vld [vmem:[%s291 + $0x78] sm:$0xff]
      %v690 = vld [vmem:[%s291 + $0x80] sm:$0xff]
      %v691 = vld [vmem:[%s291 + $0x88] sm:$0xff]
      %v692 = vld [vmem:[%s291 + $0x90] sm:$0xff]
      %v693 = vld [vmem:[%s291 + $0x98] sm:$0xff]
      %694 = vset.pattern.permute.xlu0 2
      %695 = vperm.xlu0 %694, %v674
      %v696 = vpop.permute.xlu0 %695
      %697 = vset.pattern.permute.xlu0 2
      %698 = vperm.xlu0 %697, %v675
      %v699 = vpop.permute.xlu0 %698
      %700 = vset.pattern.permute.xlu0 2
      %701 = vperm.xlu0 %700, %v676
      %v702 = vpop.permute.xlu0 %701
      %703 = vset.pattern.permute.xlu0 2
      %704 = vperm.xlu0 %703, %v677
      %v705 = vpop.permute.xlu0 %704
      %706 = vset.pattern.permute.xlu0 2
      %707 = vperm.xlu0 %706, %v678
      %v708 = vpop.permute.xlu0 %707
      %709 = vset.pattern.permute.xlu0 2
      %710 = vperm.xlu0 %709, %v679
      %v711 = vpop.permute.xlu0 %710
      %712 = vset.pattern.permute.xlu0 2
      %713 = vperm.xlu0 %712, %v680
      %v714 = vpop.permute.xlu0 %713
      %715 = vset.pattern.permute.xlu0 2
      %716 = vperm.xlu0 %715, %v681
      %v717 = vpop.permute.xlu0 %716
      %718 = vset.pattern.permute.xlu0 2
      %719 = vperm.xlu0 %718, %v682
      %v720 = vpop.permute.xlu0 %719
      %721 = vset.pattern.permute.xlu0 2
      %722 = vperm.xlu0 %721, %v683
      %v723 = vpop.permute.xlu0 %722
      %724 = vset.pattern.permute.xlu0 2
      %725 = vperm.xlu0 %724, %v684
      %v726 = vpop.permute.xlu0 %725
      %727 = vset.pattern.permute.xlu0 2
      %728 = vperm.xlu0 %727, %v685
      %v729 = vpop.permute.xlu0 %728
      %730 = vset.pattern.permute.xlu0 2
      %731 = vperm.xlu0 %730, %v686
      %v732 = vpop.permute.xlu0 %731
      %733 = vset.pattern.permute.xlu0 2
      %734 = vperm.xlu0 %733, %v687
      %v735 = vpop.permute.xlu0 %734
      %736 = vset.pattern.permute.xlu0 2
      %737 = vperm.xlu0 %736, %v688
      %v738 = vpop.permute.xlu0 %737
      %739 = vset.pattern.permute.xlu0 2
      %740 = vperm.xlu0 %739, %v689
      %v741 = vpop.permute.xlu0 %740
      %742 = vset.pattern.permute.xlu0 2
      %743 = vperm.xlu0 %742, %v690
      %v744 = vpop.permute.xlu0 %743
      %745 = vset.pattern.permute.xlu0 2
      %746 = vperm.xlu0 %745, %v691
      %v747 = vpop.permute.xlu0 %746
      %748 = vset.pattern.permute.xlu0 2
      %749 = vperm.xlu0 %748, %v692
      %v750 = vpop.permute.xlu0 %749
      %751 = vset.pattern.permute.xlu0 2
      %752 = vperm.xlu0 %751, %v693
      %v753 = vpop.permute.xlu0 %752
      %vm754 = vcmp.eq.s32.totalorder %v326, %v696
      %vm755 = vcmp.eq.s32.totalorder %v326, %v699
      %vm756 = vcmp.eq.s32.totalorder %v326, %v702
      %vm757 = vcmp.eq.s32.totalorder %v326, %v705
      %vm758 = vcmp.eq.s32.totalorder %v326, %v708
      %vm759 = vcmp.eq.s32.totalorder %v326, %v711
      %vm760 = vcmp.eq.s32.totalorder %v326, %v714
      %vm761 = vcmp.eq.s32.totalorder %v326, %v717
      %vm762 = vcmp.eq.s32.totalorder %v326, %v720
      %vm763 = vcmp.eq.s32.totalorder %v326, %v723
      %vm764 = vcmp.eq.s32.totalorder %v326, %v726
      %vm765 = vcmp.eq.s32.totalorder %v326, %v729
      %vm766 = vcmp.eq.s32.totalorder %v326, %v732
      %vm767 = vcmp.eq.s32.totalorder %v326, %v735
      %vm768 = vcmp.eq.s32.totalorder %v326, %v738
      %vm769 = vcmp.eq.s32.totalorder %v326, %v741
      %vm770 = vcmp.eq.s32.totalorder %v326, %v744
      %vm771 = vcmp.eq.s32.totalorder %v326, %v747
      %vm772 = vcmp.eq.s32.totalorder %v326, %v750
      %vm773 = vcmp.eq.s32.totalorder %v326, %v753
      %v774 = vsel %vm754, 1, 0
      %v775 = vsel %vm755, 1, 0
      %v776 = vsel %vm756, 1, 0
      %v777 = vsel %vm757, 1, 0
      %v778 = vsel %vm758, 1, 0
      %v779 = vsel %vm759, 1, 0
      %v780 = vsel %vm760, 1, 0
      %v781 = vsel %vm761, 1, 0
      %v782 = vsel %vm762, 1, 0
      %v783 = vsel %vm763, 1, 0
      %v784 = vsel %vm764, 1, 0
      %v785 = vsel %vm765, 1, 0
      %v786 = vsel %vm766, 1, 0
      %v787 = vsel %vm767, 1, 0
      %v788 = vsel %vm768, 1, 0
      %v789 = vsel %vm769, 1, 0
      %v790 = vsel %vm770, 1, 0
      %v791 = vsel %vm771, 1, 0
      %v792 = vsel %vm772, 1, 0
      %v793 = vsel %vm773, 1, 0
      %v794 = vcvt.s32.f32 %v774
      %v795 = vcvt.s32.f32 %v775
      %v796 = vcvt.s32.f32 %v776
      %v797 = vcvt.s32.f32 %v777
      %v798 = vcvt.s32.f32 %v778
      %v799 = vcvt.s32.f32 %v779
      %v800 = vcvt.s32.f32 %v780
      %v801 = vcvt.s32.f32 %v781
      %v802 = vcvt.s32.f32 %v782
      %v803 = vcvt.s32.f32 %v783
      %v804 = vcvt.s32.f32 %v784
      %v805 = vcvt.s32.f32 %v785
      %v806 = vcvt.s32.f32 %v786
      %v807 = vcvt.s32.f32 %v787
      %v808 = vcvt.s32.f32 %v788
      %v809 = vcvt.s32.f32 %v789
      %v810 = vcvt.s32.f32 %v790
      %v811 = vcvt.s32.f32 %v791
      %v812 = vcvt.s32.f32 %v792
      %v813 = vcvt.s32.f32 %v793
      %v814 = vpack.c.bf16 %v795, %v794
      %v815 = vpack.c.bf16 %v797, %v796
      %v816 = vpack.c.bf16 %v799, %v798
      %v817 = vpack.c.bf16 %v801, %v800
      %v818 = vpack.c.bf16 %v803, %v802
      %v819 = vpack.c.bf16 %v805, %v804
      %v820 = vpack.c.bf16 %v807, %v806
      %v821 = vpack.c.bf16 %v809, %v808
      %v822 = vpack.c.bf16 %v811, %v810
      %v823 = vpack.c.bf16 %v813, %v812
      %v825 = vsel %vm341, %v814, 0
      %v828 = vsel %vm341, %v815, 0
      %v831 = vsel %vm341, %v816, 0
      %v834 = vsel %vm341, %v817, 0
      %v837 = vsel %vm341, %v818, 0
      %v840 = vsel %vm341, %v819, 0
      %v843 = vsel %vm341, %v820, 0
      %v846 = vsel %vm341, %v821, 0
      %v849 = vsel %vm341, %v822, 0
      %v852 = vsel %vm341, %v823, 0
      %854 = vmatprep.subr.bf16.mxu0 0
      %855 = vmatpush1.bf16.msra.mxu0 0
      %856 = vmatprep.subr.bf16.mxu0 0
      %857 = vmatpush1.bf16.msra.mxu0 0
      %858 = vmatprep.subr.bf16.mxu0 0
      %859 = vmatpush1.bf16.msra.mxu0 0
      %860 = vmatprep.subr.bf16.mxu0 0
      %861 = vmatpush1.bf16.msra.mxu0 0
      %862 = vmatprep.subr.bf16.mxu0 0
      %863 = vmatpush1.bf16.msra.mxu0 0
      %864 = vmatprep.subr.bf16.mxu0 0
      %865 = vmatpush1.bf16.msra.mxu0 0
      %866 = vmatprep.subr.bf16.mxu0 0
      %867 = vmatpush1.bf16.msra.mxu0 0
      %868 = vmatprep.subr.bf16.mxu0 0
      %869 = vmatpush1.bf16.msra.mxu0 %v347
      %870 = vmatprep.subr.bf16.mxu0 0
      %871 = vmatpush2.bf16.msra.mxu0 0
      %872 = vmatprep.subr.bf16.mxu0 0
      %873 = vmatpush2.bf16.msra.mxu0 0
      %874 = vmatprep.subr.bf16.mxu0 0
      %875 = vmatpush2.bf16.msra.mxu0 0
      %876 = vmatprep.subr.bf16.mxu0 0
      %877 = vmatpush2.bf16.msra.mxu0 0
      %878 = vmatprep.subr.bf16.mxu0 0
      %879 = vmatpush2.bf16.msra.mxu0 0
      %880 = vmatprep.subr.bf16.mxu0 0
      %881 = vmatpush2.bf16.msra.mxu0 0
      %882 = vmatprep.subr.bf16.mxu0 0
      %883 = vmatpush2.bf16.msra.mxu0 0
      %884 = vmatprep.subr.bf16.mxu0 0
      %885 = vmatpush2.bf16.msra.mxu0 0
      %886 = vmatprep.mubr.bf16.mxu0 0
      %887 = vmatmul.mubr.bf16.gmra.mxu0 %v825
      %v888 = vpop.f32.mrf.mxu0
      %v889 = vadd.f32 0.0, %v888
      %v890 = vpop.f32.mrf.mxu0
      %v891 = vpop.f32.mrf.mxu0
      %v892 = vadd.f32 0.0, %v891
      %v893 = vpop.f32.mrf.mxu0
      %894 = vmatprep.mubr.bf16.mxu0 0
      %895 = vmatmul.mubr.bf16.gmra.mxu0 %v828
      %v896 = vpop.f32.mrf.mxu0
      %v897 = vadd.f32 0.0, %v896
      %v898 = vpop.f32.mrf.mxu0
      %v899 = vpop.f32.mrf.mxu0
      %v900 = vadd.f32 0.0, %v899
      %v901 = vpop.f32.mrf.mxu0
      %902 = vmatprep.mubr.bf16.mxu0 0
      %903 = vmatmul.mubr.bf16.gmra.mxu0 %v831
      %v904 = vpop.f32.mrf.mxu0
      %v905 = vadd.f32 0.0, %v904
      %v906 = vpop.f32.mrf.mxu0
      %v907 = vpop.f32.mrf.mxu0
      %v908 = vadd.f32 0.0, %v907
      %v909 = vpop.f32.mrf.mxu0
      %910 = vmatprep.mubr.bf16.mxu0 0
      %911 = vmatmul.mubr.bf16.gmra.mxu0 %v834
      %v912 = vpop.f32.mrf.mxu0
      %v913 = vadd.f32 0.0, %v912
      %v914 = vpop.f32.mrf.mxu0
      %v915 = vpop.f32.mrf.mxu0
      %v916 = vadd.f32 0.0, %v915
      %v917 = vpop.f32.mrf.mxu0
      %918 = vmatprep.mubr.bf16.mxu0 0
      %919 = vmatmul.mubr.bf16.gmra.mxu0 %v837
      %v920 = vpop.f32.mrf.mxu0
      %v921 = vadd.f32 0.0, %v920
      %v922 = vpop.f32.mrf.mxu0
      %v923 = vpop.f32.mrf.mxu0
      %v924 = vadd.f32 0.0, %v923
      %v925 = vpop.f32.mrf.mxu0
      %926 = vmatprep.mubr.bf16.mxu0 0
      %927 = vmatmul.mubr.bf16.gmra.mxu0 %v840
      %v928 = vpop.f32.mrf.mxu0
      %v929 = vadd.f32 0.0, %v928
      %v930 = vpop.f32.mrf.mxu0
      %v931 = vpop.f32.mrf.mxu0
      %v932 = vadd.f32 0.0, %v931
      %v933 = vpop.f32.mrf.mxu0
      %934 = vmatprep.mubr.bf16.mxu0 0
      %935 = vmatmul.mubr.bf16.gmra.mxu0 %v843
      %v936 = vpop.f32.mrf.mxu0
      %v937 = vadd.f32 0.0, %v936
      %v938 = vpop.f32.mrf.mxu0
      %v939 = vpop.f32.mrf.mxu0
      %v940 = vadd.f32 0.0, %v939
      %v941 = vpop.f32.mrf.mxu0
      %942 = vmatprep.mubr.bf16.mxu0 0
      %943 = vmatmul.mubr.bf16.gmra.mxu0 %v846
      %v944 = vpop.f32.mrf.mxu0
      %v945 = vadd.f32 0.0, %v944
      %v946 = vpop.f32.mrf.mxu0
      %v947 = vpop.f32.mrf.mxu0
      %v948 = vadd.f32 0.0, %v947
      %v949 = vpop.f32.mrf.mxu0
      %950 = vmatprep.mubr.bf16.mxu0 0
      %951 = vmatmul.mubr.bf16.gmra.mxu0 %v849
      %v952 = vpop.f32.mrf.mxu0
      %v953 = vadd.f32 0.0, %v952
      %v954 = vpop.f32.mrf.mxu0
      %v955 = vpop.f32.mrf.mxu0
      %v956 = vadd.f32 0.0, %v955
      %v957 = vpop.f32.mrf.mxu0
      %958 = vmatprep.mubr.bf16.mxu0 0
      %959 = vmatmul.mubr.bf16.gmra.mxu0 %v852
      %v960 = vpop.f32.mrf.mxu0
      %v961 = vadd.f32 0.0, %v960
      %v962 = vpop.f32.mrf.mxu0
      %v963 = vpop.f32.mrf.mxu0
      %v964 = vadd.f32 0.0, %v963
      %v965 = vpop.f32.mrf.mxu0
      %966 = vdwg.mxu0
      %v967 = vpack.c.bf16 %v892, %v889
      %v968 = vpack.c.bf16 %v900, %v897
      %v969 = vpack.c.bf16 %v908, %v905
      %v970 = vpack.c.bf16 %v916, %v913
      %v971 = vpack.c.bf16 %v924, %v921
      %v972 = vpack.c.bf16 %v932, %v929
      %v973 = vpack.c.bf16 %v940, %v937
      %v974 = vpack.c.bf16 %v948, %v945
      %v975 = vpack.c.bf16 %v956, %v953
      %v976 = vpack.c.bf16 %v964, %v961
      %979 = vrot.lane.b32.xlu0 %v617, 96
      %v980 = vpop.permute.xlu0 %979
      %981 = vrot.lane.b32.xlu0 %v618, 96
      %v982 = vpop.permute.xlu0 %981
      %v986 = vsel %vm490, %v967, 0
      %v989 = vsel %vm490, %v968, 0
      %v992 = vsel %vm490, %v969, 0
      %v995 = vsel %vm490, %v970, 0
      %v998 = vsel %vm490, %v971, 0
      %v1001 = vsel %vm490, %v972, 0
      %v1004 = vsel %vm490, %v973, 0
      %v1007 = vsel %vm490, %v974, 0
      %v1010 = vsel %vm490, %v975, 0
      %v1013 = vsel %vm490, %v976, 0
      %1015 = vmatprep.subr.bf16.mxu0 0
      %1016 = vmatpush1.bf16.msra.mxu0 0
      %1017 = vmatprep.subr.bf16.mxu0 0
      %1018 = vmatpush1.bf16.msra.mxu0 0
      %1019 = vmatprep.subr.bf16.mxu0 0
      %1020 = vmatpush1.bf16.msra.mxu0 0
      %1021 = vmatprep.subr.bf16.mxu0 0
      %1022 = vmatpush1.bf16.msra.mxu0 0
      %1023 = vmatprep.subr.bf16.mxu0 0
      %1024 = vmatpush1.bf16.msra.mxu0 0
      %1025 = vmatprep.subr.bf16.mxu0 0
      %1026 = vmatpush1.bf16.msra.mxu0 0
      %1027 = vmatprep.subr.bf16.mxu0 0
      %1028 = vmatpush1.bf16.msra.mxu0 %v982
      %1029 = vmatprep.subr.bf16.mxu0 0
      %1030 = vmatpush1.bf16.msra.mxu0 %v980
      %1031 = vmatprep.subr.bf16.mxu0 0
      %1032 = vmatpush2.bf16.msra.mxu0 0
      %1033 = vmatprep.subr.bf16.mxu0 0
      %1034 = vmatpush2.bf16.msra.mxu0 0
      %1035 = vmatprep.subr.bf16.mxu0 0
      %1036 = vmatpush2.bf16.msra.mxu0 0
      %1037 = vmatprep.subr.bf16.mxu0 0
      %1038 = vmatpush2.bf16.msra.mxu0 0
      %1039 = vmatprep.subr.bf16.mxu0 0
      %1040 = vmatpush2.bf16.msra.mxu0 0
      %1041 = vmatprep.subr.bf16.mxu0 0
      %1042 = vmatpush2.bf16.msra.mxu0 0
      %1043 = vmatprep.subr.bf16.mxu0 0
      %1044 = vmatpush2.bf16.msra.mxu0 0
      %1045 = vmatprep.subr.bf16.mxu0 0
      %1046 = vmatpush2.bf16.msra.mxu0 0
      %1047 = vmatprep.mubr.bf16.mxu0 0
      %1048 = vmatmul.mubr.bf16.gmra.mxu0 %v986
      %v1049 = vpop.f32.mrf.mxu0
      %v1050 = vadd.f32 0.0, %v1049
      %v1051 = vpop.f32.mrf.mxu0
      %v1052 = vpop.f32.mrf.mxu0
      %v1053 = vadd.f32 0.0, %v1052
      %v1054 = vpop.f32.mrf.mxu0
      %1055 = vmatprep.mubr.bf16.mxu0 0
      %1056 = vmatmul.mubr.bf16.gmra.mxu0 %v989
      %v1057 = vpop.f32.mrf.mxu0
      %v1058 = vadd.f32 0.0, %v1057
      %v1059 = vpop.f32.mrf.mxu0
      %v1060 = vpop.f32.mrf.mxu0
      %v1061 = vadd.f32 0.0, %v1060
      %v1062 = vpop.f32.mrf.mxu0
      %1063 = vmatprep.mubr.bf16.mxu0 0
      %1064 = vmatmul.mubr.bf16.gmra.mxu0 %v992
      %v1065 = vpop.f32.mrf.mxu0
      %v1066 = vadd.f32 0.0, %v1065
      %v1067 = vpop.f32.mrf.mxu0
      %v1068 = vpop.f32.mrf.mxu0
      %v1069 = vadd.f32 0.0, %v1068
      %v1070 = vpop.f32.mrf.mxu0
      %1071 = vmatprep.mubr.bf16.mxu0 0
      %1072 = vmatmul.mubr.bf16.gmra.mxu0 %v995
      %v1073 = vpop.f32.mrf.mxu0
      %v1074 = vadd.f32 0.0, %v1073
      %v1075 = vpop.f32.mrf.mxu0
      %v1076 = vpop.f32.mrf.mxu0
      %v1077 = vadd.f32 0.0, %v1076
      %v1078 = vpop.f32.mrf.mxu0
      %1079 = vmatprep.mubr.bf16.mxu0 0
      %1080 = vmatmul.mubr.bf16.gmra.mxu0 %v998
      %v1081 = vpop.f32.mrf.mxu0
      %v1082 = vadd.f32 0.0, %v1081
      %v1083 = vpop.f32.mrf.mxu0
      %v1084 = vpop.f32.mrf.mxu0
      %v1085 = vadd.f32 0.0, %v1084
      %v1086 = vpop.f32.mrf.mxu0
      %1087 = vmatprep.mubr.bf16.mxu0 0
      %1088 = vmatmul.mubr.bf16.gmra.mxu0 %v1001
      %v1089 = vpop.f32.mrf.mxu0
      %v1090 = vadd.f32 0.0, %v1089
      %v1091 = vpop.f32.mrf.mxu0
      %v1092 = vpop.f32.mrf.mxu0
      %v1093 = vadd.f32 0.0, %v1092
      %v1094 = vpop.f32.mrf.mxu0
      %1095 = vmatprep.mubr.bf16.mxu0 0
      %1096 = vmatmul.mubr.bf16.gmra.mxu0 %v1004
      %v1097 = vpop.f32.mrf.mxu0
      %v1098 = vadd.f32 0.0, %v1097
      %v1099 = vpop.f32.mrf.mxu0
      %v1100 = vpop.f32.mrf.mxu0
      %v1101 = vadd.f32 0.0, %v1100
      %v1102 = vpop.f32.mrf.mxu0
      %1103 = vmatprep.mubr.bf16.mxu0 0
      %1104 = vmatmul.mubr.bf16.gmra.mxu0 %v1007
      %v1105 = vpop.f32.mrf.mxu0
      %v1106 = vadd.f32 0.0, %v1105
      %v1107 = vpop.f32.mrf.mxu0
      %v1108 = vpop.f32.mrf.mxu0
      %v1109 = vadd.f32 0.0, %v1108
      %v1110 = vpop.f32.mrf.mxu0
      %1111 = vmatprep.mubr.bf16.mxu0 0
      %1112 = vmatmul.mubr.bf16.gmra.mxu0 %v1010
      %v1113 = vpop.f32.mrf.mxu0
      %v1114 = vadd.f32 0.0, %v1113
      %v1115 = vpop.f32.mrf.mxu0
      %v1116 = vpop.f32.mrf.mxu0
      %v1117 = vadd.f32 0.0, %v1116
      %v1118 = vpop.f32.mrf.mxu0
      %1119 = vmatprep.mubr.bf16.mxu0 0
      %1120 = vmatmul.mubr.bf16.gmra.mxu0 %v1013
      %v1121 = vpop.f32.mrf.mxu0
      %v1122 = vadd.f32 0.0, %v1121
      %v1123 = vpop.f32.mrf.mxu0
      %v1124 = vpop.f32.mrf.mxu0
      %v1125 = vadd.f32 0.0, %v1124
      %v1126 = vpop.f32.mrf.mxu0
      %1127 = vdwg.mxu0
      %v1128 = vld [vmem:[%s291] sm:$0xff]
      %v1129 = vld [vmem:[%s291 + $0x8] sm:$0xff]
      %v1130 = vld [vmem:[%s291 + $0x10] sm:$0xff]
      %v1131 = vld [vmem:[%s291 + $0x18] sm:$0xff]
      %v1132 = vld [vmem:[%s291 + $0x20] sm:$0xff]
      %v1133 = vld [vmem:[%s291 + $0x28] sm:$0xff]
      %v1134 = vld [vmem:[%s291 + $0x30] sm:$0xff]
      %v1135 = vld [vmem:[%s291 + $0x38] sm:$0xff]
      %v1136 = vld [vmem:[%s291 + $0x40] sm:$0xff]
      %v1137 = vld [vmem:[%s291 + $0x48] sm:$0xff]
      %v1138 = vld [vmem:[%s291 + $0x50] sm:$0xff]
      %v1139 = vld [vmem:[%s291 + $0x58] sm:$0xff]
      %1140 = vset.pattern.permute.xlu0 3
      %1141 = vperm.xlu0 %1140, %v1128
      %v1142 = vpop.permute.xlu0 %1141
      %1143 = vset.pattern.permute.xlu0 3
      %1144 = vperm.xlu0 %1143, %v1129
      %v1145 = vpop.permute.xlu0 %1144
      %1146 = vset.pattern.permute.xlu0 3
      %1147 = vperm.xlu0 %1146, %v1130
      %v1148 = vpop.permute.xlu0 %1147
      %1149 = vset.pattern.permute.xlu0 3
      %1150 = vperm.xlu0 %1149, %v1131
      %v1151 = vpop.permute.xlu0 %1150
      %1152 = vset.pattern.permute.xlu0 3
      %1153 = vperm.xlu0 %1152, %v1132
      %v1154 = vpop.permute.xlu0 %1153
      %1155 = vset.pattern.permute.xlu0 3
      %1156 = vperm.xlu0 %1155, %v1133
      %v1157 = vpop.permute.xlu0 %1156
      %1158 = vset.pattern.permute.xlu0 3
      %1159 = vperm.xlu0 %1158, %v1134
      %v1160 = vpop.permute.xlu0 %1159
      %1161 = vset.pattern.permute.xlu0 3
      %1162 = vperm.xlu0 %1161, %v1135
      %v1163 = vpop.permute.xlu0 %1162
      %1164 = vset.pattern.permute.xlu0 3
      %1165 = vperm.xlu0 %1164, %v1136
      %v1166 = vpop.permute.xlu0 %1165
      %1167 = vset.pattern.permute.xlu0 3
      %1168 = vperm.xlu0 %1167, %v1137
      %v1169 = vpop.permute.xlu0 %1168
      %1170 = vset.pattern.permute.xlu0 3
      %1171 = vperm.xlu0 %1170, %v1138
      %v1172 = vpop.permute.xlu0 %1171
      %1173 = vset.pattern.permute.xlu0 3
      %1174 = vperm.xlu0 %1173, %v1139
      %v1175 = vpop.permute.xlu0 %1174
      %vm1176 = vcmp.eq.s32.totalorder %v326, %v1142
      %vm1177 = vcmp.eq.s32.totalorder %v326, %v1145
      %vm1178 = vcmp.eq.s32.totalorder %v326, %v1148
      %vm1179 = vcmp.eq.s32.totalorder %v326, %v1151
      %vm1180 = vcmp.eq.s32.totalorder %v326, %v1154
      %vm1181 = vcmp.eq.s32.totalorder %v326, %v1157
      %vm1182 = vcmp.eq.s32.totalorder %v326, %v1160
      %vm1183 = vcmp.eq.s32.totalorder %v326, %v1163
      %vm1184 = vcmp.eq.s32.totalorder %v326, %v1166
      %vm1185 = vcmp.eq.s32.totalorder %v326, %v1169
      %vm1186 = vcmp.eq.s32.totalorder %v326, %v1172
      %vm1187 = vcmp.eq.s32.totalorder %v326, %v1175
      %v1188 = vsel %vm1176, 1, 0
      %v1189 = vsel %vm1177, 1, 0
      %v1190 = vsel %vm1178, 1, 0
      %v1191 = vsel %vm1179, 1, 0
      %v1192 = vsel %vm1180, 1, 0
      %v1193 = vsel %vm1181, 1, 0
      %v1194 = vsel %vm1182, 1, 0
      %v1195 = vsel %vm1183, 1, 0
      %v1196 = vsel %vm1184, 1, 0
      %v1197 = vsel %vm1185, 1, 0
      %v1198 = vsel %vm1186, 1, 0
      %v1199 = vsel %vm1187, 1, 0
      %v1200 = vcvt.s32.f32 %v1188
      %v1201 = vcvt.s32.f32 %v1189
      %v1202 = vcvt.s32.f32 %v1190
      %v1203 = vcvt.s32.f32 %v1191
      %v1204 = vcvt.s32.f32 %v1192
      %v1205 = vcvt.s32.f32 %v1193
      %v1206 = vcvt.s32.f32 %v1194
      %v1207 = vcvt.s32.f32 %v1195
      %v1208 = vcvt.s32.f32 %v1196
      %v1209 = vcvt.s32.f32 %v1197
      %v1210 = vcvt.s32.f32 %v1198
      %v1211 = vcvt.s32.f32 %v1199
      %v1212 = vpack.c.bf16 %v1201, %v1200
      %v1213 = vpack.c.bf16 %v1203, %v1202
      %v1214 = vpack.c.bf16 %v1205, %v1204
      %v1215 = vpack.c.bf16 %v1207, %v1206
      %v1216 = vpack.c.bf16 %v1209, %v1208
      %v1217 = vpack.c.bf16 %v1211, %v1210
      %v1218 = vpack.c.bf16 %v663, %v660
      %v1219 = vpack.c.bf16 %v671, %v668
      %v1221 = vsel %vm490, %v1212, 0
      %v1224 = vsel %vm490, %v1213, 0
      %v1227 = vsel %vm490, %v1214, 0
      %v1230 = vsel %vm490, %v1215, 0
      %v1233 = vsel %vm490, %v1216, 0
      %v1236 = vsel %vm490, %v1217, 0
      %1238 = vmatprep.subr.bf16.mxu0 0
      %1239 = vmatpush1.bf16.msra.mxu0 0
      %1240 = vmatprep.subr.bf16.mxu0 0
      %1241 = vmatpush1.bf16.msra.mxu0 0
      %1242 = vmatprep.subr.bf16.mxu0 0
      %1243 = vmatpush1.bf16.msra.mxu0 0
      %1244 = vmatprep.subr.bf16.mxu0 0
      %1245 = vmatpush1.bf16.msra.mxu0 0
      %1246 = vmatprep.subr.bf16.mxu0 0
      %1247 = vmatpush1.bf16.msra.mxu0 0
      %1248 = vmatprep.subr.bf16.mxu0 0
      %1249 = vmatpush1.bf16.msra.mxu0 0
      %1250 = vmatprep.subr.bf16.mxu0 0
      %1251 = vmatpush1.bf16.msra.mxu0 %v1219
      %1252 = vmatprep.subr.bf16.mxu0 0
      %1253 = vmatpush1.bf16.msra.mxu0 %v1218
      %1254 = vmatprep.subr.bf16.mxu0 0
      %1255 = vmatpush2.bf16.msra.mxu0 0
      %1256 = vmatprep.subr.bf16.mxu0 0
      %1257 = vmatpush2.bf16.msra.mxu0 0
      %1258 = vmatprep.subr.bf16.mxu0 0
      %1259 = vmatpush2.bf16.msra.mxu0 0
      %1260 = vmatprep.subr.bf16.mxu0 0
      %1261 = vmatpush2.bf16.msra.mxu0 0
      %1262 = vmatprep.subr.bf16.mxu0 0
      %1263 = vmatpush2.bf16.msra.mxu0 0
      %1264 = vmatprep.subr.bf16.mxu0 0
      %1265 = vmatpush2.bf16.msra.mxu0 0
      %1266 = vmatprep.subr.bf16.mxu0 0
      %1267 = vmatpush2.bf16.msra.mxu0 0
      %1268 = vmatprep.subr.bf16.mxu0 0
      %1269 = vmatpush2.bf16.msra.mxu0 0
      %1270 = vmatprep.mubr.bf16.mxu0 0
      %1271 = vmatmul.mubr.bf16.gmra.mxu0 %v1221
      %v1272 = vpop.f32.mrf.mxu0
      %v1273 = vadd.f32 0.0, %v1272
      %v1274 = vpop.f32.mrf.mxu0
      %v1275 = vpop.f32.mrf.mxu0
      %v1276 = vadd.f32 0.0, %v1275
      %v1277 = vpop.f32.mrf.mxu0
      %1278 = vmatprep.mubr.bf16.mxu0 0
      %1279 = vmatmul.mubr.bf16.gmra.mxu0 %v1224
      %v1280 = vpop.f32.mrf.mxu0
      %v1281 = vadd.f32 0.0, %v1280
      %v1282 = vpop.f32.mrf.mxu0
      %v1283 = vpop.f32.mrf.mxu0
      %v1284 = vadd.f32 0.0, %v1283
      %v1285 = vpop.f32.mrf.mxu0
      %1286 = vmatprep.mubr.bf16.mxu0 0
      %1287 = vmatmul.mubr.bf16.gmra.mxu0 %v1227
      %v1288 = vpop.f32.mrf.mxu0
      %v1289 = vadd.f32 0.0, %v1288
      %v1290 = vpop.f32.mrf.mxu0
      %v1291 = vpop.f32.mrf.mxu0
      %v1292 = vadd.f32 0.0, %v1291
      %v1293 = vpop.f32.mrf.mxu0
      %1294 = vmatprep.mubr.bf16.mxu0 0
      %1295 = vmatmul.mubr.bf16.gmra.mxu0 %v1230
      %v1296 = vpop.f32.mrf.mxu0
      %v1297 = vadd.f32 0.0, %v1296
      %v1298 = vpop.f32.mrf.mxu0
      %v1299 = vpop.f32.mrf.mxu0
      %v1300 = vadd.f32 0.0, %v1299
      %v1301 = vpop.f32.mrf.mxu0
      %1302 = vmatprep.mubr.bf16.mxu0 0
      %1303 = vmatmul.mubr.bf16.gmra.mxu0 %v1233
      %v1304 = vpop.f32.mrf.mxu0
      %v1305 = vadd.f32 0.0, %v1304
      %v1306 = vpop.f32.mrf.mxu0
      %v1307 = vpop.f32.mrf.mxu0
      %v1308 = vadd.f32 0.0, %v1307
      %v1309 = vpop.f32.mrf.mxu0
      %1310 = vmatprep.mubr.bf16.mxu0 0
      %1311 = vmatmul.mubr.bf16.gmra.mxu0 %v1236
      %v1312 = vpop.f32.mrf.mxu0
      %v1313 = vadd.f32 0.0, %v1312
      %v1314 = vpop.f32.mrf.mxu0
      %v1315 = vpop.f32.mrf.mxu0
      %v1316 = vadd.f32 0.0, %v1315
      %v1317 = vpop.f32.mrf.mxu0
      %1318 = vdwg.mxu0
      %v1319 = vpack.c.bf16 %v315, %v314
      %v1320 = vpack.c.bf16 %v317, %v316
      %1321 = vmatprep.subr.bf16.mxu0 0
      %1322 = vmatpush1.bf16.msra.mxu0 0
      %1323 = vmatprep.subr.bf16.mxu0 0
      %1324 = vmatpush1.bf16.msra.mxu0 0
      %1325 = vmatprep.subr.bf16.mxu0 0
      %1326 = vmatpush1.bf16.msra.mxu0 0
      %1327 = vmatprep.subr.bf16.mxu0 0
      %1328 = vmatpush1.bf16.msra.mxu0 0
      %1329 = vmatprep.subr.bf16.mxu0 0
      %1330 = vmatpush1.bf16.msra.mxu0 0
      %1331 = vmatprep.subr.bf16.mxu0 0
      %1332 = vmatpush1.bf16.msra.mxu0 0
      %1333 = vmatprep.subr.bf16.mxu0 0
      %1334 = vmatpush1.bf16.msra.mxu0 %v1320
      %1335 = vmatprep.subr.bf16.mxu0 0
      %1336 = vmatpush1.bf16.msra.mxu0 %v1319
      %1337 = vmatprep.subr.bf16.mxu0 0
      %1338 = vmatpush2.bf16.msra.mxu0 0
      %1339 = vmatprep.subr.bf16.mxu0 0
      %1340 = vmatpush2.bf16.msra.mxu0 0
      %1341 = vmatprep.subr.bf16.mxu0 0
      %1342 = vmatpush2.bf16.msra.mxu0 0
      %1343 = vmatprep.subr.bf16.mxu0 0
      %1344 = vmatpush2.bf16.msra.mxu0 0
      %1345 = vmatprep.subr.bf16.mxu0 0
      %1346 = vmatpush2.bf16.msra.mxu0 0
      %1347 = vmatprep.subr.bf16.mxu0 0
      %1348 = vmatpush2.bf16.msra.mxu0 0
      %1349 = vmatprep.subr.bf16.mxu0 0
      %1350 = vmatpush2.bf16.msra.mxu0 0
      %1351 = vmatprep.subr.bf16.mxu0 0
      %1352 = vmatpush2.bf16.msra.mxu0 0
      %1353 = vmatprep.mubr.bf16.mxu0 0
      %1354 = vmatmul.mubr.bf16.gmra.mxu0 %v1221
      %v1355 = vpop.f32.mrf.mxu0
      %v1356 = vadd.f32 0.0, %v1355
      %v1357 = vpop.f32.mrf.mxu0
      %v1358 = vpop.f32.mrf.mxu0
      %v1359 = vadd.f32 0.0, %v1358
      %v1360 = vpop.f32.mrf.mxu0
      %1361 = vmatprep.mubr.bf16.mxu0 0
      %1362 = vmatmul.mubr.bf16.gmra.mxu0 %v1224
      %v1363 = vpop.f32.mrf.mxu0
      %v1364 = vadd.f32 0.0, %v1363
      %v1365 = vpop.f32.mrf.mxu0
      %v1366 = vpop.f32.mrf.mxu0
      %v1367 = vadd.f32 0.0, %v1366
      %v1368 = vpop.f32.mrf.mxu0
      %1369 = vmatprep.mubr.bf16.mxu0 0
      %1370 = vmatmul.mubr.bf16.gmra.mxu0 %v1227
      %v1371 = vpop.f32.mrf.mxu0
      %v1372 = vadd.f32 0.0, %v1371
      %v1373 = vpop.f32.mrf.mxu0
      %v1374 = vpop.f32.mrf.mxu0
      %v1375 = vadd.f32 0.0, %v1374
      %v1376 = vpop.f32.mrf.mxu0
      %1377 = vmatprep.mubr.bf16.mxu0 0
      %1378 = vmatmul.mubr.bf16.gmra.mxu0 %v1230
      %v1379 = vpop.f32.mrf.mxu0
      %v1380 = vadd.f32 0.0, %v1379
      %v1381 = vpop.f32.mrf.mxu0
      %v1382 = vpop.f32.mrf.mxu0
      %v1383 = vadd.f32 0.0, %v1382
      %v1384 = vpop.f32.mrf.mxu0
      %1385 = vmatprep.mubr.bf16.mxu0 0
      %1386 = vmatmul.mubr.bf16.gmra.mxu0 %v1233
      %v1387 = vpop.f32.mrf.mxu0
      %v1388 = vadd.f32 0.0, %v1387
      %v1389 = vpop.f32.mrf.mxu0
      %v1390 = vpop.f32.mrf.mxu0
      %v1391 = vadd.f32 0.0, %v1390
      %v1392 = vpop.f32.mrf.mxu0
      %1393 = vmatprep.mubr.bf16.mxu0 0
      %1394 = vmatmul.mubr.bf16.gmra.mxu0 %v1236
      %v1395 = vpop.f32.mrf.mxu0
      %v1396 = vadd.f32 0.0, %v1395
      %v1397 = vpop.f32.mrf.mxu0
      %v1398 = vpop.f32.mrf.mxu0
      %v1399 = vadd.f32 0.0, %v1398
      %v1400 = vpop.f32.mrf.mxu0
      %1401 = vdwg.mxu0
      %v1402 = vpack.c.bf16 %v602, %v600
      %v1403 = vpack.c.bf16 %v606, %v604
      %1404 = vmatprep.subr.bf16.mxu0 0
      %1405 = vmatpush1.bf16.msra.mxu0 0
      %1406 = vmatprep.subr.bf16.mxu0 0
      %1407 = vmatpush1.bf16.msra.mxu0 0
      %1408 = vmatprep.subr.bf16.mxu0 0
      %1409 = vmatpush1.bf16.msra.mxu0 0
      %1410 = vmatprep.subr.bf16.mxu0 0
      %1411 = vmatpush1.bf16.msra.mxu0 0
      %1412 = vmatprep.subr.bf16.mxu0 0
      %1413 = vmatpush1.bf16.msra.mxu0 0
      %1414 = vmatprep.subr.bf16.mxu0 0
      %1415 = vmatpush1.bf16.msra.mxu0 0
      %1416 = vmatprep.subr.bf16.mxu0 0
      %1417 = vmatpush1.bf16.msra.mxu0 %v1403
      %1418 = vmatprep.subr.bf16.mxu0 0
      %1419 = vmatpush1.bf16.msra.mxu0 %v1402
      %1420 = vmatprep.subr.bf16.mxu0 0
      %1421 = vmatpush2.bf16.msra.mxu0 0
      %1422 = vmatprep.subr.bf16.mxu0 0
      %1423 = vmatpush2.bf16.msra.mxu0 0
      %1424 = vmatprep.subr.bf16.mxu0 0
      %1425 = vmatpush2.bf16.msra.mxu0 0
      %1426 = vmatprep.subr.bf16.mxu0 0
      %1427 = vmatpush2.bf16.msra.mxu0 0
      %1428 = vmatprep.subr.bf16.mxu0 0
      %1429 = vmatpush2.bf16.msra.mxu0 0
      %1430 = vmatprep.subr.bf16.mxu0 0
      %1431 = vmatpush2.bf16.msra.mxu0 0
      %1432 = vmatprep.subr.bf16.mxu0 0
      %1433 = vmatpush2.bf16.msra.mxu0 0
      %1434 = vmatprep.subr.bf16.mxu0 0
      %1435 = vmatpush2.bf16.msra.mxu0 0
      %1436 = vmatprep.mubr.bf16.mxu0 0
      %1437 = vmatmul.mubr.bf16.gmra.mxu0 %v1221
      %v1438 = vpop.f32.mrf.mxu0
      %v1439 = vadd.f32 0.0, %v1438
      %v1440 = vpop.f32.mrf.mxu0
      %v1441 = vpop.f32.mrf.mxu0
      %v1442 = vadd.f32 0.0, %v1441
      %v1443 = vpop.f32.mrf.mxu0
      %1444 = vmatprep.mubr.bf16.mxu0 0
      %1445 = vmatmul.mubr.bf16.gmra.mxu0 %v1224
      %v1446 = vpop.f32.mrf.mxu0
      %v1447 = vadd.f32 0.0, %v1446
      %v1448 = vpop.f32.mrf.mxu0
      %v1449 = vpop.f32.mrf.mxu0
      %v1450 = vadd.f32 0.0, %v1449
      %v1451 = vpop.f32.mrf.mxu0
      %1452 = vmatprep.mubr.bf16.mxu0 0
      %1453 = vmatmul.mubr.bf16.gmra.mxu0 %v1227
      %v1454 = vpop.f32.mrf.mxu0
      %v1455 = vadd.f32 0.0, %v1454
      %v1456 = vpop.f32.mrf.mxu0
      %v1457 = vpop.f32.mrf.mxu0
      %v1458 = vadd.f32 0.0, %v1457
      %v1459 = vpop.f32.mrf.mxu0
      %1460 = vmatprep.mubr.bf16.mxu0 0
      %1461 = vmatmul.mubr.bf16.gmra.mxu0 %v1230
      %v1462 = vpop.f32.mrf.mxu0
      %v1463 = vadd.f32 0.0, %v1462
      %v1464 = vpop.f32.mrf.mxu0
      %v1465 = vpop.f32.mrf.mxu0
      %v1466 = vadd.f32 0.0, %v1465
      %v1467 = vpop.f32.mrf.mxu0
      %1468 = vmatprep.mubr.bf16.mxu0 0
      %1469 = vmatmul.mubr.bf16.gmra.mxu0 %v1233
      %v1470 = vpop.f32.mrf.mxu0
      %v1471 = vadd.f32 0.0, %v1470
      %v1472 = vpop.f32.mrf.mxu0
      %v1473 = vpop.f32.mrf.mxu0
      %v1474 = vadd.f32 0.0, %v1473
      %v1475 = vpop.f32.mrf.mxu0
      %1476 = vmatprep.mubr.bf16.mxu0 0
      %1477 = vmatmul.mubr.bf16.gmra.mxu0 %v1236
      %v1478 = vpop.f32.mrf.mxu0
      %v1479 = vadd.f32 0.0, %v1478
      %v1480 = vpop.f32.mrf.mxu0
      %v1481 = vpop.f32.mrf.mxu0
      %v1482 = vadd.f32 0.0, %v1481
      %v1483 = vpop.f32.mrf.mxu0
      %1484 = vdwg.mxu0
      %1485 = vset.pattern.permute.xlu0 4
      %1486 = vperm.xlu0 %1485, %v674
      %v1487 = vpop.permute.xlu0 %1486
      %1488 = vset.pattern.permute.xlu0 4
      %1489 = vperm.xlu0 %1488, %v675
      %v1490 = vpop.permute.xlu0 %1489
      %1491 = vset.pattern.permute.xlu0 4
      %1492 = vperm.xlu0 %1491, %v676
      %v1493 = vpop.permute.xlu0 %1492
      %1494 = vset.pattern.permute.xlu0 4
      %1495 = vperm.xlu0 %1494, %v677
      %v1496 = vpop.permute.xlu0 %1495
      %1497 = vset.pattern.permute.xlu0 4
      %1498 = vperm.xlu0 %1497, %v678
      %v1499 = vpop.permute.xlu0 %1498
      %1500 = vset.pattern.permute.xlu0 4
      %1501 = vperm.xlu0 %1500, %v679
      %v1502 = vpop.permute.xlu0 %1501
      %1503 = vset.pattern.permute.xlu0 4
      %1504 = vperm.xlu0 %1503, %v680
      %v1505 = vpop.permute.xlu0 %1504
      %1506 = vset.pattern.permute.xlu0 4
      %1507 = vperm.xlu0 %1506, %v681
      %v1508 = vpop.permute.xlu0 %1507
      %1509 = vset.pattern.permute.xlu0 4
      %1510 = vperm.xlu0 %1509, %v682
      %v1511 = vpop.permute.xlu0 %1510
      %1512 = vset.pattern.permute.xlu0 4
      %1513 = vperm.xlu0 %1512, %v683
      %v1514 = vpop.permute.xlu0 %1513
      %1515 = vset.pattern.permute.xlu0 4
      %1516 = vperm.xlu0 %1515, %v684
      %v1517 = vpop.permute.xlu0 %1516
      %1518 = vset.pattern.permute.xlu0 4
      %1519 = vperm.xlu0 %1518, %v685
      %v1520 = vpop.permute.xlu0 %1519
      %1521 = vset.pattern.permute.xlu0 4
      %1522 = vperm.xlu0 %1521, %v686
      %v1523 = vpop.permute.xlu0 %1522
      %1524 = vset.pattern.permute.xlu0 4
      %1525 = vperm.xlu0 %1524, %v687
      %v1526 = vpop.permute.xlu0 %1525
      %1527 = vset.pattern.permute.xlu0 4
      %1528 = vperm.xlu0 %1527, %v688
      %v1529 = vpop.permute.xlu0 %1528
      %1530 = vset.pattern.permute.xlu0 4
      %1531 = vperm.xlu0 %1530, %v689
      %v1532 = vpop.permute.xlu0 %1531
      %1533 = vset.pattern.permute.xlu0 4
      %1534 = vperm.xlu0 %1533, %v690
      %v1535 = vpop.permute.xlu0 %1534
      %1536 = vset.pattern.permute.xlu0 4
      %1537 = vperm.xlu0 %1536, %v691
      %v1538 = vpop.permute.xlu0 %1537
      %1539 = vset.pattern.permute.xlu0 4
      %1540 = vperm.xlu0 %1539, %v692
      %v1541 = vpop.permute.xlu0 %1540
      %1542 = vset.pattern.permute.xlu0 4
      %1543 = vperm.xlu0 %1542, %v693
      %v1544 = vpop.permute.xlu0 %1543
      %vm1545 = vcmp.eq.s32.totalorder %v326, %v1487
      %vm1546 = vcmp.eq.s32.totalorder %v326, %v1490
      %vm1547 = vcmp.eq.s32.totalorder %v326, %v1493
      %vm1548 = vcmp.eq.s32.totalorder %v326, %v1496
      %vm1549 = vcmp.eq.s32.totalorder %v326, %v1499
      %vm1550 = vcmp.eq.s32.totalorder %v326, %v1502
      %vm1551 = vcmp.eq.s32.totalorder %v326, %v1505
      %vm1552 = vcmp.eq.s32.totalorder %v326, %v1508
      %vm1553 = vcmp.eq.s32.totalorder %v326, %v1511
      %vm1554 = vcmp.eq.s32.totalorder %v326, %v1514
      %vm1555 = vcmp.eq.s32.totalorder %v326, %v1517
      %vm1556 = vcmp.eq.s32.totalorder %v326, %v1520
      %vm1557 = vcmp.eq.s32.totalorder %v326, %v1523
      %vm1558 = vcmp.eq.s32.totalorder %v326, %v1526
      %vm1559 = vcmp.eq.s32.totalorder %v326, %v1529
      %vm1560 = vcmp.eq.s32.totalorder %v326, %v1532
      %vm1561 = vcmp.eq.s32.totalorder %v326, %v1535
      %vm1562 = vcmp.eq.s32.totalorder %v326, %v1538
      %vm1563 = vcmp.eq.s32.totalorder %v326, %v1541
      %vm1564 = vcmp.eq.s32.totalorder %v326, %v1544
      %v1565 = vsel %vm1545, 1, 0
      %v1566 = vsel %vm1546, 1, 0
      %v1567 = vsel %vm1547, 1, 0
      %v1568 = vsel %vm1548, 1, 0
      %v1569 = vsel %vm1549, 1, 0
      %v1570 = vsel %vm1550, 1, 0
      %v1571 = vsel %vm1551, 1, 0
      %v1572 = vsel %vm1552, 1, 0
      %v1573 = vsel %vm1553, 1, 0
      %v1574 = vsel %vm1554, 1, 0
      %v1575 = vsel %vm1555, 1, 0
      %v1576 = vsel %vm1556, 1, 0
      %v1577 = vsel %vm1557, 1, 0
      %v1578 = vsel %vm1558, 1, 0
      %v1579 = vsel %vm1559, 1, 0
      %v1580 = vsel %vm1560, 1, 0
      %v1581 = vsel %vm1561, 1, 0
      %v1582 = vsel %vm1562, 1, 0
      %v1583 = vsel %vm1563, 1, 0
      %v1584 = vsel %vm1564, 1, 0
      %v1585 = vcvt.s32.f32 %v1565
      %v1586 = vcvt.s32.f32 %v1566
      %v1587 = vcvt.s32.f32 %v1567
      %v1588 = vcvt.s32.f32 %v1568
      %v1589 = vcvt.s32.f32 %v1569
      %v1590 = vcvt.s32.f32 %v1570
      %v1591 = vcvt.s32.f32 %v1571
      %v1592 = vcvt.s32.f32 %v1572
      %v1593 = vcvt.s32.f32 %v1573
      %v1594 = vcvt.s32.f32 %v1574
      %v1595 = vcvt.s32.f32 %v1575
      %v1596 = vcvt.s32.f32 %v1576
      %v1597 = vcvt.s32.f32 %v1577
      %v1598 = vcvt.s32.f32 %v1578
      %v1599 = vcvt.s32.f32 %v1579
      %v1600 = vcvt.s32.f32 %v1580
      %v1601 = vcvt.s32.f32 %v1581
      %v1602 = vcvt.s32.f32 %v1582
      %v1603 = vcvt.s32.f32 %v1583
      %v1604 = vcvt.s32.f32 %v1584
      %v1605 = vpack.c.bf16 %v1586, %v1585
      %v1606 = vpack.c.bf16 %v1588, %v1587
      %v1607 = vpack.c.bf16 %v1590, %v1589
      %v1608 = vpack.c.bf16 %v1592, %v1591
      %v1609 = vpack.c.bf16 %v1594, %v1593
      %v1610 = vpack.c.bf16 %v1596, %v1595
      %v1611 = vpack.c.bf16 %v1598, %v1597
      %v1612 = vpack.c.bf16 %v1600, %v1599
      %v1613 = vpack.c.bf16 %v1602, %v1601
      %v1614 = vpack.c.bf16 %v1604, %v1603
      %v1615 = vpack.c.bf16 %v1276, %v1273
      %v1616 = vpack.c.bf16 %v1284, %v1281
      %v1617 = vpack.c.bf16 %v1292, %v1289
      %v1618 = vpack.c.bf16 %v1300, %v1297
      %v1619 = vpack.c.bf16 %v1308, %v1305
      %v1620 = vpack.c.bf16 %v1316, %v1313
      %vm1621 = vcmask 785408
      %v1623 = vsel %vm1621, %v1605, 0
      %v1626 = vsel %vm1621, %v1606, 0
      %v1629 = vsel %vm1621, %v1607, 0
      %v1632 = vsel %vm1621, %v1608, 0
      %v1635 = vsel %vm1621, %v1609, 0
      %v1638 = vsel %vm1621, %v1610, 0
      %v1641 = vsel %vm1621, %v1611, 0
      %v1644 = vsel %vm1621, %v1612, 0
      %v1647 = vsel %vm1621, %v1613, 0
      %v1650 = vsel %vm1621, %v1614, 0
      %1652 = vmatprep.subr.bf16.mxu0 0
      %1653 = vmatpush1.bf16.msra.mxu0 0
      %1654 = vmatprep.subr.bf16.mxu0 0
      %1655 = vmatpush1.bf16.msra.mxu0 0
      %1656 = vmatprep.subr.bf16.mxu0 0
      %1657 = vmatpush1.bf16.msra.mxu0 %v1620
      %1658 = vmatprep.subr.bf16.mxu0 0
      %1659 = vmatpush1.bf16.msra.mxu0 %v1619
      %1660 = vmatprep.subr.bf16.mxu0 0
      %1661 = vmatpush1.bf16.msra.mxu0 %v1618
      %1662 = vmatprep.subr.bf16.mxu0 0
      %1663 = vmatpush1.bf16.msra.mxu0 %v1617
      %1664 = vmatprep.subr.bf16.mxu0 0
      %1665 = vmatpush1.bf16.msra.mxu0 %v1616
      %1666 = vmatprep.subr.bf16.mxu0 0
      %1667 = vmatpush1.bf16.msra.mxu0 %v1615
      %1668 = vmatprep.subr.bf16.mxu0 0
      %1669 = vmatpush2.bf16.msra.mxu0 0
      %1670 = vmatprep.subr.bf16.mxu0 0
      %1671 = vmatpush2.bf16.msra.mxu0 0
      %1672 = vmatprep.subr.bf16.mxu0 0
      %1673 = vmatpush2.bf16.msra.mxu0 0
      %1674 = vmatprep.subr.bf16.mxu0 0
      %1675 = vmatpush2.bf16.msra.mxu0 0
      %1676 = vmatprep.subr.bf16.mxu0 0
      %1677 = vmatpush2.bf16.msra.mxu0 0
      %1678 = vmatprep.subr.bf16.mxu0 0
      %1679 = vmatpush2.bf16.msra.mxu0 0
      %1680 = vmatprep.subr.bf16.mxu0 0
      %1681 = vmatpush2.bf16.msra.mxu0 0
      %1682 = vmatprep.subr.bf16.mxu0 0
      %1683 = vmatpush2.bf16.msra.mxu0 0
      %1684 = vmatprep.mubr.bf16.mxu0 0
      %1685 = vmatmul.mubr.bf16.gmra.mxu0 %v1623
      %v1686 = vpop.f32.mrf.mxu0
      %v1687 = vadd.f32 0.0, %v1686
      %v1688 = vpop.f32.mrf.mxu0
      %v1689 = vpop.f32.mrf.mxu0
      %v1690 = vadd.f32 0.0, %v1689
      %v1691 = vpop.f32.mrf.mxu0
      %1692 = vmatprep.mubr.bf16.mxu0 0
      %1693 = vmatmul.mubr.bf16.gmra.mxu0 %v1626
      %v1694 = vpop.f32.mrf.mxu0
      %v1695 = vadd.f32 0.0, %v1694
      %v1696 = vpop.f32.mrf.mxu0
      %v1697 = vpop.f32.mrf.mxu0
      %v1698 = vadd.f32 0.0, %v1697
      %v1699 = vpop.f32.mrf.mxu0
      %1700 = vmatprep.mubr.bf16.mxu0 0
      %1701 = vmatmul.mubr.bf16.gmra.mxu0 %v1629
      %v1702 = vpop.f32.mrf.mxu0
      %v1703 = vadd.f32 0.0, %v1702
      %v1704 = vpop.f32.mrf.mxu0
      %v1705 = vpop.f32.mrf.mxu0
      %v1706 = vadd.f32 0.0, %v1705
      %v1707 = vpop.f32.mrf.mxu0
      %1708 = vmatprep.mubr.bf16.mxu0 0
      %1709 = vmatmul.mubr.bf16.gmra.mxu0 %v1632
      %v1710 = vpop.f32.mrf.mxu0
      %v1711 = vadd.f32 0.0, %v1710
      %v1712 = vpop.f32.mrf.mxu0
      %v1713 = vpop.f32.mrf.mxu0
      %v1714 = vadd.f32 0.0, %v1713
      %v1715 = vpop.f32.mrf.mxu0
      %1716 = vmatprep.mubr.bf16.mxu0 0
      %1717 = vmatmul.mubr.bf16.gmra.mxu0 %v1635
      %v1718 = vpop.f32.mrf.mxu0
      %v1719 = vadd.f32 0.0, %v1718
      %v1720 = vpop.f32.mrf.mxu0
      %v1721 = vpop.f32.mrf.mxu0
      %v1722 = vadd.f32 0.0, %v1721
      %v1723 = vpop.f32.mrf.mxu0
      %1724 = vmatprep.mubr.bf16.mxu0 0
      %1725 = vmatmul.mubr.bf16.gmra.mxu0 %v1638
      %v1726 = vpop.f32.mrf.mxu0
      %v1727 = vadd.f32 0.0, %v1726
      %v1728 = vpop.f32.mrf.mxu0
      %v1729 = vpop.f32.mrf.mxu0
      %v1730 = vadd.f32 0.0, %v1729
      %v1731 = vpop.f32.mrf.mxu0
      %1732 = vmatprep.mubr.bf16.mxu0 0
      %1733 = vmatmul.mubr.bf16.gmra.mxu0 %v1641
      %v1734 = vpop.f32.mrf.mxu0
      %v1735 = vadd.f32 0.0, %v1734
      %v1736 = vpop.f32.mrf.mxu0
      %v1737 = vpop.f32.mrf.mxu0
      %v1738 = vadd.f32 0.0, %v1737
      %v1739 = vpop.f32.mrf.mxu0
      %1740 = vmatprep.mubr.bf16.mxu0 0
      %1741 = vmatmul.mubr.bf16.gmra.mxu0 %v1644
      %v1742 = vpop.f32.mrf.mxu0
      %v1743 = vadd.f32 0.0, %v1742
      %v1744 = vpop.f32.mrf.mxu0
      %v1745 = vpop.f32.mrf.mxu0
      %v1746 = vadd.f32 0.0, %v1745
      %v1747 = vpop.f32.mrf.mxu0
      %1748 = vmatprep.mubr.bf16.mxu0 0
      %1749 = vmatmul.mubr.bf16.gmra.mxu0 %v1647
      %v1750 = vpop.f32.mrf.mxu0
      %v1751 = vadd.f32 0.0, %v1750
      %v1752 = vpop.f32.mrf.mxu0
      %v1753 = vpop.f32.mrf.mxu0
      %v1754 = vadd.f32 0.0, %v1753
      %v1755 = vpop.f32.mrf.mxu0
      %1756 = vmatprep.mubr.bf16.mxu0 0
      %1757 = vmatmul.mubr.bf16.gmra.mxu0 %v1650
      %v1758 = vpop.f32.mrf.mxu0
      %v1759 = vadd.f32 0.0, %v1758
      %v1760 = vpop.f32.mrf.mxu0
      %v1761 = vpop.f32.mrf.mxu0
      %v1762 = vadd.f32 0.0, %v1761
      %v1763 = vpop.f32.mrf.mxu0
      %1764 = vdwg.mxu0
      %v1765 = vadd.s32 %v479, 16
      %v1766 = vadd.s32 %v479, 24
      %v1767 = vmul.u32 %v326, 8
      %vm1768 = vcmp.ge.s32.totalorder %v479, %v1767
      %vm1769 = vcmp.ge.s32.totalorder %v480, %v1767
      %vm1770 = vcmp.ge.s32.totalorder %v1765, %v1767
      %vm1771 = vcmp.ge.s32.totalorder %v1766, %v1767
      %v1772 = vadd.s32 %v326, 1
      %v1773 = vmul.u32 %v1772, 8
      %vm1774 = vcmp.lt.s32.totalorder %v479, %v1773
      %vm1775 = vcmp.lt.s32.totalorder %v480, %v1773
      %vm1776 = vcmp.lt.s32.totalorder %v1765, %v1773
      %vm1777 = vcmp.lt.s32.totalorder %v1766, %v1773
      %vm1778 = vmand %vm1768, %vm1774
      %vm1779 = vmand %vm1769, %vm1775
      %vm1780 = vmand %vm1770, %vm1776
      %vm1781 = vmand %vm1771, %vm1777
      %v1782 = vsel %vm1778, 1, 0
      %v1783 = vsel %vm1779, 1, 0
      %v1784 = vsel %vm1780, 1, 0
      %v1785 = vsel %vm1781, 1, 0
      %v1786 = vcvt.s32.f32 %v1782
      %v1787 = vcvt.s32.f32 %v1783
      %v1788 = vcvt.s32.f32 %v1784
      %v1789 = vcvt.s32.f32 %v1785
      %v1790 = vpack.c.bf16 %v1787, %v1786
      %v1791 = vpack.c.bf16 %v1789, %v1788
      %v1792 = vmul.f32 %v1687, %v1050
      %v1793 = vmul.f32 %v1690, %v1053
      %v1794 = vmul.f32 %v1695, %v1058
      %v1795 = vmul.f32 %v1698, %v1061
      %v1796 = vmul.f32 %v1703, %v1066
      %v1797 = vmul.f32 %v1706, %v1069
      %v1798 = vmul.f32 %v1711, %v1074
      %v1799 = vmul.f32 %v1714, %v1077
      %v1800 = vmul.f32 %v1719, %v1082
      %v1801 = vmul.f32 %v1722, %v1085
      %v1802 = vmul.f32 %v1727, %v1090
      %v1803 = vmul.f32 %v1730, %v1093
      %v1804 = vmul.f32 %v1735, %v1098
      %v1805 = vmul.f32 %v1738, %v1101
      %v1806 = vmul.f32 %v1743, %v1106
      %v1807 = vmul.f32 %v1746, %v1109
      %v1808 = vmul.f32 %v1751, %v1114
      %v1809 = vmul.f32 %v1754, %v1117
      %v1810 = vmul.f32 %v1759, %v1122
      %v1811 = vmul.f32 %v1762, %v1125
      %v1812 = vpack.c.bf16 %v1793, %v1792
      %v1813 = vpack.c.bf16 %v1795, %v1794
      %v1814 = vpack.c.bf16 %v1797, %v1796
      %v1815 = vpack.c.bf16 %v1799, %v1798
      %v1816 = vpack.c.bf16 %v1801, %v1800
      %v1817 = vpack.c.bf16 %v1803, %v1802
      %v1818 = vpack.c.bf16 %v1805, %v1804
      %v1819 = vpack.c.bf16 %v1807, %v1806
      %v1820 = vpack.c.bf16 %v1809, %v1808
      %v1821 = vpack.c.bf16 %v1811, %v1810
      %v1823 = vsel %vm490, %v1812, 0
      %v1826 = vsel %vm490, %v1813, 0
      %v1829 = vsel %vm490, %v1814, 0
      %v1832 = vsel %vm490, %v1815, 0
      %v1835 = vsel %vm490, %v1816, 0
      %v1838 = vsel %vm490, %v1817, 0
      %v1841 = vsel %vm490, %v1818, 0
      %v1844 = vsel %vm490, %v1819, 0
      %v1847 = vsel %vm490, %v1820, 0
      %v1850 = vsel %vm490, %v1821, 0
      %1852 = vmatprep.subr.bf16.mxu0 0
      %1853 = vmatpush1.bf16.msra.mxu0 0
      %1854 = vmatprep.subr.bf16.mxu0 0
      %1855 = vmatpush1.bf16.msra.mxu0 0
      %1856 = vmatprep.subr.bf16.mxu0 0
      %1857 = vmatpush1.bf16.msra.mxu0 0
      %1858 = vmatprep.subr.bf16.mxu0 0
      %1859 = vmatpush1.bf16.msra.mxu0 0
      %1860 = vmatprep.subr.bf16.mxu0 0
      %1861 = vmatpush1.bf16.msra.mxu0 0
      %1862 = vmatprep.subr.bf16.mxu0 0
      %1863 = vmatpush1.bf16.msra.mxu0 0
      %1864 = vmatprep.subr.bf16.mxu0 0
      %1865 = vmatpush1.bf16.msra.mxu0 %v1791
      %1866 = vmatprep.subr.bf16.mxu0 0
      %1867 = vmatpush1.bf16.msra.mxu0 %v1790
      %1868 = vmatprep.subr.bf16.mxu0 0
      %1869 = vmatpush2.bf16.msra.mxu0 0
      %1870 = vmatprep.subr.bf16.mxu0 0
      %1871 = vmatpush2.bf16.msra.mxu0 0
      %1872 = vmatprep.subr.bf16.mxu0 0
      %1873 = vmatpush2.bf16.msra.mxu0 0
      %1874 = vmatprep.subr.bf16.mxu0 0
      %1875 = vmatpush2.bf16.msra.mxu0 0
      %1876 = vmatprep.subr.bf16.mxu0 0
      %1877 = vmatpush2.bf16.msra.mxu0 0
      %1878 = vmatprep.subr.bf16.mxu0 0
      %1879 = vmatpush2.bf16.msra.mxu0 0
      %1880 = vmatprep.subr.bf16.mxu0 0
      %1881 = vmatpush2.bf16.msra.mxu0 0
      %1882 = vmatprep.subr.bf16.mxu0 0
      %1883 = vmatpush2.bf16.msra.mxu0 0
      %1884 = vmatprep.mubr.bf16.mxu0 0
      %1885 = vmatmul.mubr.bf16.gmra.mxu0 %v1823
      %v1886 = vpop.f32.mrf.mxu0
      %v1887 = vadd.f32 0.0, %v1886
      %v1888 = vpop.f32.mrf.mxu0
      %v1889 = vpop.f32.mrf.mxu0
      %v1890 = vadd.f32 0.0, %v1889
      %v1891 = vpop.f32.mrf.mxu0
      %1892 = vmatprep.mubr.bf16.mxu0 0
      %1893 = vmatmul.mubr.bf16.gmra.mxu0 %v1826
      %v1894 = vpop.f32.mrf.mxu0
      %v1895 = vadd.f32 0.0, %v1894
      %v1896 = vpop.f32.mrf.mxu0
      %v1897 = vpop.f32.mrf.mxu0
      %v1898 = vadd.f32 0.0, %v1897
      %v1899 = vpop.f32.mrf.mxu0
      %1900 = vmatprep.mubr.bf16.mxu0 0
      %1901 = vmatmul.mubr.bf16.gmra.mxu0 %v1829
      %v1902 = vpop.f32.mrf.mxu0
      %v1903 = vadd.f32 0.0, %v1902
      %v1904 = vpop.f32.mrf.mxu0
      %v1905 = vpop.f32.mrf.mxu0
      %v1906 = vadd.f32 0.0, %v1905
      %v1907 = vpop.f32.mrf.mxu0
      %1908 = vmatprep.mubr.bf16.mxu0 0
      %1909 = vmatmul.mubr.bf16.gmra.mxu0 %v1832
      %v1910 = vpop.f32.mrf.mxu0
      %v1911 = vadd.f32 0.0, %v1910
      %v1912 = vpop.f32.mrf.mxu0
      %v1913 = vpop.f32.mrf.mxu0
      %v1914 = vadd.f32 0.0, %v1913
      %v1915 = vpop.f32.mrf.mxu0
      %1916 = vmatprep.mubr.bf16.mxu0 0
      %1917 = vmatmul.mubr.bf16.gmra.mxu0 %v1835
      %v1918 = vpop.f32.mrf.mxu0
      %v1919 = vadd.f32 0.0, %v1918
      %v1920 = vpop.f32.mrf.mxu0
      %v1921 = vpop.f32.mrf.mxu0
      %v1922 = vadd.f32 0.0, %v1921
      %v1923 = vpop.f32.mrf.mxu0
      %1924 = vmatprep.mubr.bf16.mxu0 0
      %1925 = vmatmul.mubr.bf16.gmra.mxu0 %v1838
      %v1926 = vpop.f32.mrf.mxu0
      %v1927 = vadd.f32 0.0, %v1926
      %v1928 = vpop.f32.mrf.mxu0
      %v1929 = vpop.f32.mrf.mxu0
      %v1930 = vadd.f32 0.0, %v1929
      %v1931 = vpop.f32.mrf.mxu0
      %1932 = vmatprep.mubr.bf16.mxu0 0
      %1933 = vmatmul.mubr.bf16.gmra.mxu0 %v1841
      %v1934 = vpop.f32.mrf.mxu0
      %v1935 = vadd.f32 0.0, %v1934
      %v1936 = vpop.f32.mrf.mxu0
      %v1937 = vpop.f32.mrf.mxu0
      %v1938 = vadd.f32 0.0, %v1937
      %v1939 = vpop.f32.mrf.mxu0
      %1940 = vmatprep.mubr.bf16.mxu0 0
      %1941 = vmatmul.mubr.bf16.gmra.mxu0 %v1844
      %v1942 = vpop.f32.mrf.mxu0
      %v1943 = vadd.f32 0.0, %v1942
      %v1944 = vpop.f32.mrf.mxu0
      %v1945 = vpop.f32.mrf.mxu0
      %v1946 = vadd.f32 0.0, %v1945
      %v1947 = vpop.f32.mrf.mxu0
      %1948 = vmatprep.mubr.bf16.mxu0 0
      %1949 = vmatmul.mubr.bf16.gmra.mxu0 %v1847
      %v1950 = vpop.f32.mrf.mxu0
      %v1951 = vadd.f32 0.0, %v1950
      %v1952 = vpop.f32.mrf.mxu0
      %v1953 = vpop.f32.mrf.mxu0
      %v1954 = vadd.f32 0.0, %v1953
      %v1955 = vpop.f32.mrf.mxu0
      %1956 = vmatprep.mubr.bf16.mxu0 0
      %1957 = vmatmul.mubr.bf16.gmra.mxu0 %v1850
      %v1958 = vpop.f32.mrf.mxu0
      %v1959 = vadd.f32 0.0, %v1958
      %v1960 = vpop.f32.mrf.mxu0
      %v1961 = vpop.f32.mrf.mxu0
      %v1962 = vadd.f32 0.0, %v1961
      %v1963 = vpop.f32.mrf.mxu0
      %1964 = vdwg.mxu0
      %v1965 = vmul.f32 %v1887, 0.35355338
      %v1966 = vmul.f32 %v1890, 0.35355338
      %v1967 = vmul.f32 %v1895, 0.35355338
      %v1968 = vmul.f32 %v1898, 0.35355338
      %v1969 = vmul.f32 %v1903, 0.35355338
      %v1970 = vmul.f32 %v1906, 0.35355338
      %v1971 = vmul.f32 %v1911, 0.35355338
      %v1972 = vmul.f32 %v1914, 0.35355338
      %v1973 = vmul.f32 %v1919, 0.35355338
      %v1974 = vmul.f32 %v1922, 0.35355338
      %v1975 = vmul.f32 %v1927, 0.35355338
      %v1976 = vmul.f32 %v1930, 0.35355338
      %v1977 = vmul.f32 %v1935, 0.35355338
      %v1978 = vmul.f32 %v1938, 0.35355338
      %v1979 = vmul.f32 %v1943, 0.35355338
      %v1980 = vmul.f32 %v1946, 0.35355338
      %v1981 = vmul.f32 %v1951, 0.35355338
      %v1982 = vmul.f32 %v1954, 0.35355338
      %v1983 = vmul.f32 %v1959, 0.35355338
      %v1984 = vmul.f32 %v1962, 0.35355338
      %v1985 = vxor.u32 %v1965, 2147483648
      %v1986 = vxor.u32 %v1966, 2147483648
      %v1987 = vxor.u32 %v1967, 2147483648
      %v1988 = vxor.u32 %v1968, 2147483648
      %v1989 = vxor.u32 %v1969, 2147483648
      %v1990 = vxor.u32 %v1970, 2147483648
      %v1991 = vxor.u32 %v1971, 2147483648
      %v1992 = vxor.u32 %v1972, 2147483648
      %v1993 = vxor.u32 %v1973, 2147483648
      %v1994 = vxor.u32 %v1974, 2147483648
      %v1995 = vxor.u32 %v1975, 2147483648
      %v1996 = vxor.u32 %v1976, 2147483648
      %v1997 = vxor.u32 %v1977, 2147483648
      %v1998 = vxor.u32 %v1978, 2147483648
      %v1999 = vxor.u32 %v1979, 2147483648
      %v2000 = vxor.u32 %v1980, 2147483648
      %v2001 = vxor.u32 %v1981, 2147483648
      %v2002 = vxor.u32 %v1982, 2147483648
      %v2003 = vxor.u32 %v1983, 2147483648
      %v2004 = vxor.u32 %v1984, 2147483648
      %v2005 = vmul.f32 %v1985, 1.442695
      %v2006 = vpow.pop %v2005
      %v2007 = vmul.f32 %v1986, 1.442695
      %v2008 = vpow.pop %v2007
      %v2009 = vmul.f32 %v1987, 1.442695
      %v2010 = vpow.pop %v2009
      %v2011 = vmul.f32 %v1988, 1.442695
      %v2012 = vpow.pop %v2011
      %v2013 = vmul.f32 %v1989, 1.442695
      %v2014 = vpow.pop %v2013
      %v2015 = vmul.f32 %v1990, 1.442695
      %v2016 = vpow.pop %v2015
      %v2017 = vmul.f32 %v1991, 1.442695
      %v2018 = vpow.pop %v2017
      %v2019 = vmul.f32 %v1992, 1.442695
      %v2020 = vpow.pop %v2019
      %v2021 = vmul.f32 %v1993, 1.442695
      %v2022 = vpow.pop %v2021
      %v2023 = vmul.f32 %v1994, 1.442695
      %v2024 = vpow.pop %v2023
      %v2025 = vmul.f32 %v1995, 1.442695
      %v2026 = vpow.pop %v2025
      %v2027 = vmul.f32 %v1996, 1.442695
      %v2028 = vpow.pop %v2027
      %v2029 = vmul.f32 %v1997, 1.442695
      %v2030 = vpow.pop %v2029
      %v2031 = vmul.f32 %v1998, 1.442695
      %v2032 = vpow.pop %v2031
      %v2033 = vmul.f32 %v1999, 1.442695
      %v2034 = vpow.pop %v2033
      %v2035 = vmul.f32 %v2000, 1.442695
      %v2036 = vpow.pop %v2035
      %v2037 = vmul.f32 %v2001, 1.442695
      %v2038 = vpow.pop %v2037
      %v2039 = vmul.f32 %v2002, 1.442695
      %v2040 = vpow.pop %v2039
      %v2041 = vmul.f32 %v2003, 1.442695
      %v2042 = vpow.pop %v2041
      %v2043 = vmul.f32 %v2004, 1.442695
      %v2044 = vpow.pop %v2043
      %v2045 = vadd.f32 %v2006, 1.0
      %v2046 = vadd.f32 %v2008, 1.0
      %v2047 = vadd.f32 %v2010, 1.0
      %v2048 = vadd.f32 %v2012, 1.0
      %v2049 = vadd.f32 %v2014, 1.0
      %v2050 = vadd.f32 %v2016, 1.0
      %v2051 = vadd.f32 %v2018, 1.0
      %v2052 = vadd.f32 %v2020, 1.0
      %v2053 = vadd.f32 %v2022, 1.0
      %v2054 = vadd.f32 %v2024, 1.0
      %v2055 = vadd.f32 %v2026, 1.0
      %v2056 = vadd.f32 %v2028, 1.0
      %v2057 = vadd.f32 %v2030, 1.0
      %v2058 = vadd.f32 %v2032, 1.0
      %v2059 = vadd.f32 %v2034, 1.0
      %v2060 = vadd.f32 %v2036, 1.0
      %v2061 = vadd.f32 %v2038, 1.0
      %v2062 = vadd.f32 %v2040, 1.0
      %v2063 = vadd.f32 %v2042, 1.0
      %v2064 = vadd.f32 %v2044, 1.0
      %v2065 = vrcp.pop %v2045
      %v2066 = vmul.f32 1.0, %v2065
      %v2067 = vrcp.pop %v2046
      %v2068 = vmul.f32 1.0, %v2067
      %v2069 = vrcp.pop %v2047
      %v2070 = vmul.f32 1.0, %v2069
      %v2071 = vrcp.pop %v2048
      %v2072 = vmul.f32 1.0, %v2071
      %v2073 = vrcp.pop %v2049
      %v2074 = vmul.f32 1.0, %v2073
      %v2075 = vrcp.pop %v2050
      %v2076 = vmul.f32 1.0, %v2075
      %v2077 = vrcp.pop %v2051
      %v2078 = vmul.f32 1.0, %v2077
      %v2079 = vrcp.pop %v2052
      %v2080 = vmul.f32 1.0, %v2079
      %v2081 = vrcp.pop %v2053
      %v2082 = vmul.f32 1.0, %v2081
      %v2083 = vrcp.pop %v2054
      %v2084 = vmul.f32 1.0, %v2083
      %v2085 = vrcp.pop %v2055
      %v2086 = vmul.f32 1.0, %v2085
      %v2087 = vrcp.pop %v2056
      %v2088 = vmul.f32 1.0, %v2087
      %v2089 = vrcp.pop %v2057
      %v2090 = vmul.f32 1.0, %v2089
      %v2091 = vrcp.pop %v2058
      %v2092 = vmul.f32 1.0, %v2091
      %v2093 = vrcp.pop %v2059
      %v2094 = vmul.f32 1.0, %v2093
      %v2095 = vrcp.pop %v2060
      %v2096 = vmul.f32 1.0, %v2095
      %v2097 = vrcp.pop %v2061
      %v2098 = vmul.f32 1.0, %v2097
      %v2099 = vrcp.pop %v2062
      %v2100 = vmul.f32 1.0, %v2099
      %v2101 = vrcp.pop %v2063
      %v2102 = vmul.f32 1.0, %v2101
      %v2103 = vrcp.pop %v2064
      %v2104 = vmul.f32 1.0, %v2103
      %v2105 = vmul.u32 %v479, 8
      %vm2106 = vcmp.ge.s32.totalorder %v326, %v2105
      %v2107 = vadd.s32 %v479, 1
      %v2108 = vmul.u32 %v2107, 8
      %vm2109 = vcmp.lt.s32.totalorder %v326, %v2108
      %vm2110 = vmand %vm2106, %vm2109
      %v2111 = vsel %vm2110, 1, 0
      %v2112 = vcvt.s32.f32 %v2111
      %v2113 = vpack.c.bf16 %v2112, %v2112
      %v2114 = vpack.c.bf16 %v2068, %v2066
      %v2115 = vpack.c.bf16 %v2072, %v2070
      %v2116 = vpack.c.bf16 %v2076, %v2074
      %v2117 = vpack.c.bf16 %v2080, %v2078
      %v2118 = vpack.c.bf16 %v2084, %v2082
      %v2119 = vpack.c.bf16 %v2088, %v2086
      %v2120 = vpack.c.bf16 %v2092, %v2090
      %v2121 = vpack.c.bf16 %v2096, %v2094
      %v2122 = vpack.c.bf16 %v2100, %v2098
      %v2123 = vpack.c.bf16 %v2104, %v2102
      %vm2124 = vcmask 31744
      %v2126 = vsel %vm2124, %v2114, 0
      %v2129 = vsel %vm2124, %v2115, 0
      %v2132 = vsel %vm2124, %v2116, 0
      %v2135 = vsel %vm2124, %v2117, 0
      %v2138 = vsel %vm2124, %v2118, 0
      %v2141 = vsel %vm2124, %v2119, 0
      %v2144 = vsel %vm2124, %v2120, 0
      %v2147 = vsel %vm2124, %v2121, 0
      %v2150 = vsel %vm2124, %v2122, 0
      %v2153 = vsel %vm2124, %v2123, 0
      %vm2155 = vcmask 1041408
      %v2157 = vsel %vm2155, %v2113, 0
      %2159 = vmatprep.subr.bf16.mxu0 0
      %2160 = vmatpush1.bf16.msra.mxu0 0
      %2161 = vmatprep.subr.bf16.mxu0 0
      %2162 = vmatpush1.bf16.msra.mxu0 0
      %2163 = vmatprep.subr.bf16.mxu0 0
      %2164 = vmatpush1.bf16.msra.mxu0 0
      %2165 = vmatprep.subr.bf16.mxu0 0
      %2166 = vmatpush1.bf16.msra.mxu0 0
      %2167 = vmatprep.subr.bf16.mxu0 0
      %2168 = vmatpush1.bf16.msra.mxu0 0
      %2169 = vmatprep.subr.bf16.mxu0 0
      %2170 = vmatpush1.bf16.msra.mxu0 0
      %2171 = vmatprep.subr.bf16.mxu0 0
      %2172 = vmatpush1.bf16.msra.mxu0 0
      %2173 = vmatprep.subr.bf16.mxu0 0
      %2174 = vmatpush1.bf16.msra.mxu0 %v2157
      %2175 = vmatprep.subr.bf16.mxu0 0
      %2176 = vmatpush2.bf16.msra.mxu0 0
      %2177 = vmatprep.subr.bf16.mxu0 0
      %2178 = vmatpush2.bf16.msra.mxu0 0
      %2179 = vmatprep.subr.bf16.mxu0 0
      %2180 = vmatpush2.bf16.msra.mxu0 0
      %2181 = vmatprep.subr.bf16.mxu0 0
      %2182 = vmatpush2.bf16.msra.mxu0 0
      %2183 = vmatprep.subr.bf16.mxu0 0
      %2184 = vmatpush2.bf16.msra.mxu0 0
      %2185 = vmatprep.subr.bf16.mxu0 0
      %2186 = vmatpush2.bf16.msra.mxu0 0
      %2187 = vmatprep.subr.bf16.mxu0 0
      %2188 = vmatpush2.bf16.msra.mxu0 0
      %2189 = vmatprep.subr.bf16.mxu0 0
      %2190 = vmatpush2.bf16.msra.mxu0 0
      %2191 = vmatprep.mubr.bf16.mxu0 0
      %2192 = vmatmul.mubr.bf16.gmra.mxu0 %v2126
      %v2193 = vpop.f32.mrf.mxu0
      %v2194 = vadd.f32 0.0, %v2193
      %v2195 = vpop.f32.mrf.mxu0
      %v2196 = vpop.f32.mrf.mxu0
      %v2197 = vadd.f32 0.0, %v2196
      %v2198 = vpop.f32.mrf.mxu0
      %2199 = vmatprep.mubr.bf16.mxu0 0
      %2200 = vmatmul.mubr.bf16.gmra.mxu0 %v2129
      %v2201 = vpop.f32.mrf.mxu0
      %v2202 = vadd.f32 0.0, %v2201
      %v2203 = vpop.f32.mrf.mxu0
      %v2204 = vpop.f32.mrf.mxu0
      %v2205 = vadd.f32 0.0, %v2204
      %v2206 = vpop.f32.mrf.mxu0
      %2207 = vmatprep.mubr.bf16.mxu0 0
      %2208 = vmatmul.mubr.bf16.gmra.mxu0 %v2132
      %v2209 = vpop.f32.mrf.mxu0
      %v2210 = vadd.f32 0.0, %v2209
      %v2211 = vpop.f32.mrf.mxu0
      %v2212 = vpop.f32.mrf.mxu0
      %v2213 = vadd.f32 0.0, %v2212
      %v2214 = vpop.f32.mrf.mxu0
      %2215 = vmatprep.mubr.bf16.mxu0 0
      %2216 = vmatmul.mubr.bf16.gmra.mxu0 %v2135
      %v2217 = vpop.f32.mrf.mxu0
      %v2218 = vadd.f32 0.0, %v2217
      %v2219 = vpop.f32.mrf.mxu0
      %v2220 = vpop.f32.mrf.mxu0
      %v2221 = vadd.f32 0.0, %v2220
      %v2222 = vpop.f32.mrf.mxu0
      %2223 = vmatprep.mubr.bf16.mxu0 0
      %2224 = vmatmul.mubr.bf16.gmra.mxu0 %v2138
      %v2225 = vpop.f32.mrf.mxu0
      %v2226 = vadd.f32 0.0, %v2225
      %v2227 = vpop.f32.mrf.mxu0
      %v2228 = vpop.f32.mrf.mxu0
      %v2229 = vadd.f32 0.0, %v2228
      %v2230 = vpop.f32.mrf.mxu0
      %2231 = vmatprep.mubr.bf16.mxu0 0
      %2232 = vmatmul.mubr.bf16.gmra.mxu0 %v2141
      %v2233 = vpop.f32.mrf.mxu0
      %v2234 = vadd.f32 0.0, %v2233
      %v2235 = vpop.f32.mrf.mxu0
      %v2236 = vpop.f32.mrf.mxu0
      %v2237 = vadd.f32 0.0, %v2236
      %v2238 = vpop.f32.mrf.mxu0
      %2239 = vmatprep.mubr.bf16.mxu0 0
      %2240 = vmatmul.mubr.bf16.gmra.mxu0 %v2144
      %v2241 = vpop.f32.mrf.mxu0
      %v2242 = vadd.f32 0.0, %v2241
      %v2243 = vpop.f32.mrf.mxu0
      %v2244 = vpop.f32.mrf.mxu0
      %v2245 = vadd.f32 0.0, %v2244
      %v2246 = vpop.f32.mrf.mxu0
      %2247 = vmatprep.mubr.bf16.mxu0 0
      %2248 = vmatmul.mubr.bf16.gmra.mxu0 %v2147
      %v2249 = vpop.f32.mrf.mxu0
      %v2250 = vadd.f32 0.0, %v2249
      %v2251 = vpop.f32.mrf.mxu0
      %v2252 = vpop.f32.mrf.mxu0
      %v2253 = vadd.f32 0.0, %v2252
      %v2254 = vpop.f32.mrf.mxu0
      %2255 = vmatprep.mubr.bf16.mxu0 0
      %2256 = vmatmul.mubr.bf16.gmra.mxu0 %v2150
      %v2257 = vpop.f32.mrf.mxu0
      %v2258 = vadd.f32 0.0, %v2257
      %v2259 = vpop.f32.mrf.mxu0
      %v2260 = vpop.f32.mrf.mxu0
      %v2261 = vadd.f32 0.0, %v2260
      %v2262 = vpop.f32.mrf.mxu0
      %2263 = vmatprep.mubr.bf16.mxu0 0
      %2264 = vmatmul.mubr.bf16.gmra.mxu0 %v2153
      %v2265 = vpop.f32.mrf.mxu0
      %v2266 = vadd.f32 0.0, %v2265
      %v2267 = vpop.f32.mrf.mxu0
      %v2268 = vpop.f32.mrf.mxu0
      %v2269 = vadd.f32 0.0, %v2268
      %v2270 = vpop.f32.mrf.mxu0
      %2271 = vdwg.mxu0
      %v2272 = vmul.f32 %v889, %v2194
      %v2273 = vmul.f32 %v892, %v2197
      %v2274 = vmul.f32 %v897, %v2202
      %v2275 = vmul.f32 %v900, %v2205
      %v2276 = vmul.f32 %v905, %v2210
      %v2277 = vmul.f32 %v908, %v2213
      %v2278 = vmul.f32 %v913, %v2218
      %v2279 = vmul.f32 %v916, %v2221
      %v2280 = vmul.f32 %v921, %v2226
      %v2281 = vmul.f32 %v924, %v2229
      %v2282 = vmul.f32 %v929, %v2234
      %v2283 = vmul.f32 %v932, %v2237
      %v2284 = vmul.f32 %v937, %v2242
      %v2285 = vmul.f32 %v940, %v2245
      %v2286 = vmul.f32 %v945, %v2250
      %v2287 = vmul.f32 %v948, %v2253
      %v2288 = vmul.f32 %v953, %v2258
      %v2289 = vmul.f32 %v956, %v2261
      %v2290 = vmul.f32 %v961, %v2266
      %v2291 = vmul.f32 %v964, %v2269
      %s2292 = scalar_lea.vmem %s296, 2
      %v2293 = vld [vmem:[%s2292] ss:$8 sm:$0x3]
      %v2294 = vadd.s32 %v479, 32
      %v2295 = vadd.s32 %v479, 40
      %v2296 = vadd.s32 %v479, 48
      %v2297 = vadd.s32 %v479, 56
      %v2298 = vadd.s32 %v479, 64
      %v2299 = vadd.s32 %v479, 72
      %v2300 = vadd.s32 %v479, 80
      %v2301 = vadd.s32 %v479, 88
      %v2302 = vlaneseq
      %v2303 = vshrl.u32 %v2302, 7
      %v2304 = vsub.s32 0, %v2303
      %v2305 = vrot.slane %v2293, %v2304
      %v2306 = vlaneseq
      %v2307 = vshrl.u32 %v2306, 7
      %v2308 = vsub.s32 1, %v2307
      %v2309 = vrot.slane %v2293, %v2308
      %vm2310 = vcmp.eq.s32.totalorder %v479, %v2305
      %vm2311 = vcmp.eq.s32.totalorder %v479, %v2309
      %vm2312 = vcmp.eq.s32.totalorder %v480, %v2305
      %vm2313 = vcmp.eq.s32.totalorder %v480, %v2309
      %vm2314 = vcmp.eq.s32.totalorder %v1765, %v2305
      %vm2315 = vcmp.eq.s32.totalorder %v1765, %v2309
      %vm2316 = vcmp.eq.s32.totalorder %v1766, %v2305
      %vm2317 = vcmp.eq.s32.totalorder %v1766, %v2309
      %vm2318 = vcmp.eq.s32.totalorder %v2294, %v2305
      %vm2319 = vcmp.eq.s32.totalorder %v2294, %v2309
      %vm2320 = vcmp.eq.s32.totalorder %v2295, %v2305
      %vm2321 = vcmp.eq.s32.totalorder %v2295, %v2309
      %vm2322 = vcmp.eq.s32.totalorder %v2296, %v2305
      %vm2323 = vcmp.eq.s32.totalorder %v2296, %v2309
      %vm2324 = vcmp.eq.s32.totalorder %v2297, %v2305
      %vm2325 = vcmp.eq.s32.totalorder %v2297, %v2309
      %vm2326 = vcmp.eq.s32.totalorder %v2298, %v2305
      %vm2327 = vcmp.eq.s32.totalorder %v2298, %v2309
      %vm2328 = vcmp.eq.s32.totalorder %v2299, %v2305
      %vm2329 = vcmp.eq.s32.totalorder %v2299, %v2309
      %vm2330 = vcmp.eq.s32.totalorder %v2300, %v2305
      %vm2331 = vcmp.eq.s32.totalorder %v2300, %v2309
      %vm2332 = vcmp.eq.s32.totalorder %v2301, %v2305
      %vm2333 = vcmp.eq.s32.totalorder %v2301, %v2309
      %v2334 = vsel %vm2310, 1, 0
      %v2335 = vsel %vm2311, 1, 0
      %v2336 = vsel %vm2312, 1, 0
      %v2337 = vsel %vm2313, 1, 0
      %v2338 = vsel %vm2314, 1, 0
      %v2339 = vsel %vm2315, 1, 0
      %v2340 = vsel %vm2316, 1, 0
      %v2341 = vsel %vm2317, 1, 0
      %v2342 = vsel %vm2318, 1, 0
      %v2343 = vsel %vm2319, 1, 0
      %v2344 = vsel %vm2320, 1, 0
      %v2345 = vsel %vm2321, 1, 0
      %v2346 = vsel %vm2322, 1, 0
      %v2347 = vsel %vm2323, 1, 0
      %v2348 = vsel %vm2324, 1, 0
      %v2349 = vsel %vm2325, 1, 0
      %v2350 = vsel %vm2326, 1, 0
      %v2351 = vsel %vm2327, 1, 0
      %v2352 = vsel %vm2328, 1, 0
      %v2353 = vsel %vm2329, 1, 0
      %v2354 = vsel %vm2330, 1, 0
      %v2355 = vsel %vm2331, 1, 0
      %v2356 = vsel %vm2332, 1, 0
      %v2357 = vsel %vm2333, 1, 0
      %v2358 = vcvt.s32.f32 %v2334
      %v2359 = vcvt.s32.f32 %v2335
      %v2360 = vcvt.s32.f32 %v2336
      %v2361 = vcvt.s32.f32 %v2337
      %v2362 = vcvt.s32.f32 %v2338
      %v2363 = vcvt.s32.f32 %v2339
      %v2364 = vcvt.s32.f32 %v2340
      %v2365 = vcvt.s32.f32 %v2341
      %v2366 = vcvt.s32.f32 %v2342
      %v2367 = vcvt.s32.f32 %v2343
      %v2368 = vcvt.s32.f32 %v2344
      %v2369 = vcvt.s32.f32 %v2345
      %v2370 = vcvt.s32.f32 %v2346
      %v2371 = vcvt.s32.f32 %v2347
      %v2372 = vcvt.s32.f32 %v2348
      %v2373 = vcvt.s32.f32 %v2349
      %v2374 = vcvt.s32.f32 %v2350
      %v2375 = vcvt.s32.f32 %v2351
      %v2376 = vcvt.s32.f32 %v2352
      %v2377 = vcvt.s32.f32 %v2353
      %v2378 = vcvt.s32.f32 %v2354
      %v2379 = vcvt.s32.f32 %v2355
      %v2380 = vcvt.s32.f32 %v2356
      %v2381 = vcvt.s32.f32 %v2357
      %v2382 = vpack.c.bf16 %v2360, %v2358
      %v2383 = vpack.c.bf16 %v2361, %v2359
      %v2384 = vpack.c.bf16 %v2364, %v2362
      %v2385 = vpack.c.bf16 %v2365, %v2363
      %v2386 = vpack.c.bf16 %v2368, %v2366
      %v2387 = vpack.c.bf16 %v2369, %v2367
      %v2388 = vpack.c.bf16 %v2372, %v2370
      %v2389 = vpack.c.bf16 %v2373, %v2371
      %v2390 = vpack.c.bf16 %v2376, %v2374
      %v2391 = vpack.c.bf16 %v2377, %v2375
      %v2392 = vpack.c.bf16 %v2380, %v2378
      %v2393 = vpack.c.bf16 %v2381, %v2379
      %v2394 = vpack.c.bf16 %v2273, %v2272
      %v2395 = vpack.c.bf16 %v2275, %v2274
      %v2396 = vpack.c.bf16 %v2277, %v2276
      %v2397 = vpack.c.bf16 %v2279, %v2278
      %v2398 = vpack.c.bf16 %v2281, %v2280
      %v2399 = vpack.c.bf16 %v2283, %v2282
      %v2400 = vpack.c.bf16 %v2285, %v2284
      %v2401 = vpack.c.bf16 %v2287, %v2286
      %v2402 = vpack.c.bf16 %v2289, %v2288
      %v2403 = vpack.c.bf16 %v2291, %v2290
      %v2405 = vsel %vm490, %v2383, 0
      %v2408 = vsel %vm490, %v2385, 0
      %v2411 = vsel %vm490, %v2387, 0
      %v2414 = vsel %vm490, %v2389, 0
      %v2417 = vsel %vm490, %v2391, 0
      %v2420 = vsel %vm490, %v2393, 0
      %2422 = vmatprep.subr.bf16.mxu0 0
      %2423 = vmatpush1.bf16.msra.mxu0 %v2401
      %2424 = vmatprep.subr.bf16.mxu0 0
      %2425 = vmatpush1.bf16.msra.mxu0 %v2400
      %2426 = vmatprep.subr.bf16.mxu0 0
      %2427 = vmatpush1.bf16.msra.mxu0 %v2399
      %2428 = vmatprep.subr.bf16.mxu0 0
      %2429 = vmatpush1.bf16.msra.mxu0 %v2398
      %2430 = vmatprep.subr.bf16.mxu0 0
      %2431 = vmatpush1.bf16.msra.mxu0 %v2397
      %2432 = vmatprep.subr.bf16.mxu0 0
      %2433 = vmatpush1.bf16.msra.mxu0 %v2396
      %2434 = vmatprep.subr.bf16.mxu0 0
      %2435 = vmatpush1.bf16.msra.mxu0 %v2395
      %2436 = vmatprep.subr.bf16.mxu0 0
      %2437 = vmatpush1.bf16.msra.mxu0 %v2394
      %2438 = vmatprep.subr.bf16.mxu0 0
      %2439 = vmatpush2.bf16.msra.mxu0 0
      %2440 = vmatprep.subr.bf16.mxu0 0
      %2441 = vmatpush2.bf16.msra.mxu0 0
      %2442 = vmatprep.subr.bf16.mxu0 0
      %2443 = vmatpush2.bf16.msra.mxu0 0
      %2444 = vmatprep.subr.bf16.mxu0 0
      %2445 = vmatpush2.bf16.msra.mxu0 0
      %2446 = vmatprep.subr.bf16.mxu0 0
      %2447 = vmatpush2.bf16.msra.mxu0 0
      %2448 = vmatprep.subr.bf16.mxu0 0
      %2449 = vmatpush2.bf16.msra.mxu0 0
      %2450 = vmatprep.subr.bf16.mxu0 0
      %2451 = vmatpush2.bf16.msra.mxu0 %v2403
      %2452 = vmatprep.subr.bf16.mxu0 0
      %2453 = vmatpush2.bf16.msra.mxu0 %v2402
      %2454 = vmatprep.mubr.bf16.mxu0 %v2405
      %2455 = vmatmul.mubr.bf16.gmra.mxu0 %v2382
      %v2456 = vpop.f32.mrf.mxu0
      %v2457 = vadd.f32 0.0, %v2456
      %v2458 = vpop.f32.mrf.mxu0
      %v2459 = vpop.f32.mrf.mxu0
      %v2460 = vadd.f32 0.0, %v2459
      %v2461 = vpop.f32.mrf.mxu0
      %2462 = vmatprep.mubr.bf16.mxu0 %v2408
      %2463 = vmatmul.mubr.bf16.gmra.mxu0 %v2384
      %v2464 = vpop.f32.mrf.mxu0
      %v2465 = vadd.f32 0.0, %v2464
      %v2466 = vpop.f32.mrf.mxu0
      %v2467 = vpop.f32.mrf.mxu0
      %v2468 = vadd.f32 0.0, %v2467
      %v2469 = vpop.f32.mrf.mxu0
      %2470 = vmatprep.mubr.bf16.mxu0 %v2411
      %2471 = vmatmul.mubr.bf16.gmra.mxu0 %v2386
      %v2472 = vpop.f32.mrf.mxu0
      %v2473 = vadd.f32 0.0, %v2472
      %v2474 = vpop.f32.mrf.mxu0
      %v2475 = vpop.f32.mrf.mxu0
      %v2476 = vadd.f32 0.0, %v2475
      %v2477 = vpop.f32.mrf.mxu0
      %2478 = vmatprep.mubr.bf16.mxu0 %v2414
      %2479 = vmatmul.mubr.bf16.gmra.mxu0 %v2388
      %v2480 = vpop.f32.mrf.mxu0
      %v2481 = vadd.f32 0.0, %v2480
      %v2482 = vpop.f32.mrf.mxu0
      %v2483 = vpop.f32.mrf.mxu0
      %v2484 = vadd.f32 0.0, %v2483
      %v2485 = vpop.f32.mrf.mxu0
      %2486 = vmatprep.mubr.bf16.mxu0 %v2417
      %2487 = vmatmul.mubr.bf16.gmra.mxu0 %v2390
      %v2488 = vpop.f32.mrf.mxu0
      %v2489 = vadd.f32 0.0, %v2488
      %v2490 = vpop.f32.mrf.mxu0
      %v2491 = vpop.f32.mrf.mxu0
      %v2492 = vadd.f32 0.0, %v2491
      %v2493 = vpop.f32.mrf.mxu0
      %2494 = vmatprep.mubr.bf16.mxu0 %v2420
      %2495 = vmatmul.mubr.bf16.gmra.mxu0 %v2392
      %v2496 = vpop.f32.mrf.mxu0
      %v2497 = vadd.f32 0.0, %v2496
      %v2498 = vpop.f32.mrf.mxu0
      %v2499 = vpop.f32.mrf.mxu0
      %v2500 = vadd.f32 0.0, %v2499
      %v2501 = vpop.f32.mrf.mxu0
      %2502 = vdwg.mxu0
      %v2503 = vld [vmem:[%s5 + $0x8] sm:$0xff]
      %v2504 = vld [vmem:[%s5 + $0x10] sm:$0xff]
      %v2505 = vld [vmem:[%s5 + $0x18] sm:$0xff]
      %v2506 = vld [vmem:[%s5 + $0x20] sm:$0xff]
      %v2507 = vpack.c.bf16 %v2460, %v2457
      %v2508 = vpack.c.bf16 %v2468, %v2465
      %v2509 = vpack.c.bf16 %v2476, %v2473
      %v2510 = vpack.c.bf16 %v2484, %v2481
      %v2511 = vpack.c.bf16 %v2492, %v2489
      %v2512 = vpack.c.bf16 %v2500, %v2497
      %v2513 = vpack.c.bf16 %v2504, %v2503
      %v2514 = vpack.c.bf16 %v2506, %v2505
      %v2515 = vld [vmem:[%s5 + $0x108] sm:$0x1]
      %v2516 = vlaneseq
      %v2517 = vshrl.u32 %v2516, 7
      %v2518 = vsub.s32 0, %v2517
      %v2519 = vrot.slane %v2515, %v2518
      %v2521 = vsel %vm490, %v2507, 0
      %v2524 = vsel %vm490, %v2508, 0
      %v2527 = vsel %vm490, %v2509, 0
      %v2530 = vsel %vm490, %v2510, 0
      %v2533 = vsel %vm490, %v2511, 0
      %v2536 = vsel %vm490, %v2512, 0
      %2538 = vmatprep.subr.bf16.mxu0 0
      %2539 = vmatpush1.bf16.msra.mxu0 0
      %2540 = vmatprep.subr.bf16.mxu0 0
      %2541 = vmatpush1.bf16.msra.mxu0 0
      %2542 = vmatprep.subr.bf16.mxu0 0
      %2543 = vmatpush1.bf16.msra.mxu0 0
      %2544 = vmatprep.subr.bf16.mxu0 0
      %2545 = vmatpush1.bf16.msra.mxu0 0
      %2546 = vmatprep.subr.bf16.mxu0 0
      %2547 = vmatpush1.bf16.msra.mxu0 0
      %2548 = vmatprep.subr.bf16.mxu0 0
      %2549 = vmatpush1.bf16.msra.mxu0 0
      %2550 = vmatprep.subr.bf16.mxu0 0
      %2551 = vmatpush1.bf16.msra.mxu0 %v2514
      %2552 = vmatprep.subr.bf16.mxu0 0
      %2553 = vmatpush1.bf16.msra.mxu0 %v2513
      %2554 = vmatprep.subr.bf16.mxu0 0
      %2555 = vmatpush2.bf16.msra.mxu0 0
      %2556 = vmatprep.subr.bf16.mxu0 0
      %2557 = vmatpush2.bf16.msra.mxu0 0
      %2558 = vmatprep.subr.bf16.mxu0 0
      %2559 = vmatpush2.bf16.msra.mxu0 0
      %2560 = vmatprep.subr.bf16.mxu0 0
      %2561 = vmatpush2.bf16.msra.mxu0 0
      %2562 = vmatprep.subr.bf16.mxu0 0
      %2563 = vmatpush2.bf16.msra.mxu0 0
      %2564 = vmatprep.subr.bf16.mxu0 0
      %2565 = vmatpush2.bf16.msra.mxu0 0
      %2566 = vmatprep.subr.bf16.mxu0 0
      %2567 = vmatpush2.bf16.msra.mxu0 0
      %2568 = vmatprep.subr.bf16.mxu0 0
      %2569 = vmatpush2.bf16.msra.mxu0 0
      %2570 = vmatprep.mubr.bf16.mxu0 0
      %2571 = vmatmul.mubr.bf16.gmra.mxu0 %v2521
      %v2572 = vpop.f32.mrf.mxu0
      %v2573 = vadd.f32 %v2519, %v2572
      %v2574 = vpop.f32.mrf.mxu0
      %v2575 = vpop.f32.mrf.mxu0
      %v2576 = vadd.f32 %v2519, %v2575
      %v2577 = vpop.f32.mrf.mxu0
      %2578 = vmatprep.mubr.bf16.mxu0 0
      %2579 = vmatmul.mubr.bf16.gmra.mxu0 %v2524
      %v2580 = vpop.f32.mrf.mxu0
      %v2581 = vadd.f32 %v2519, %v2580
      %v2582 = vpop.f32.mrf.mxu0
      %v2583 = vpop.f32.mrf.mxu0
      %v2584 = vadd.f32 %v2519, %v2583
      %v2585 = vpop.f32.mrf.mxu0
      %2586 = vmatprep.mubr.bf16.mxu0 0
      %2587 = vmatmul.mubr.bf16.gmra.mxu0 %v2527
      %v2588 = vpop.f32.mrf.mxu0
      %v2589 = vadd.f32 %v2519, %v2588
      %v2590 = vpop.f32.mrf.mxu0
      %v2591 = vpop.f32.mrf.mxu0
      %v2592 = vadd.f32 %v2519, %v2591
      %v2593 = vpop.f32.mrf.mxu0
      %2594 = vmatprep.mubr.bf16.mxu0 0
      %2595 = vmatmul.mubr.bf16.gmra.mxu0 %v2530
      %v2596 = vpop.f32.mrf.mxu0
      %v2597 = vadd.f32 %v2519, %v2596
      %v2598 = vpop.f32.mrf.mxu0
      %v2599 = vpop.f32.mrf.mxu0
      %v2600 = vadd.f32 %v2519, %v2599
      %v2601 = vpop.f32.mrf.mxu0
      %2602 = vmatprep.mubr.bf16.mxu0 0
      %2603 = vmatmul.mubr.bf16.gmra.mxu0 %v2533
      %v2604 = vpop.f32.mrf.mxu0
      %v2605 = vadd.f32 %v2519, %v2604
      %v2606 = vpop.f32.mrf.mxu0
      %v2607 = vpop.f32.mrf.mxu0
      %v2608 = vadd.f32 %v2519, %v2607
      %v2609 = vpop.f32.mrf.mxu0
      %2610 = vmatprep.mubr.bf16.mxu0 0
      %2611 = vmatmul.mubr.bf16.gmra.mxu0 %v2536
      %v2612 = vpop.f32.mrf.mxu0
      %v2613 = vadd.f32 %v2519, %v2612
      %v2614 = vpop.f32.mrf.mxu0
      %v2615 = vpop.f32.mrf.mxu0
      %v2616 = vadd.f32 %v2519, %v2615
      %v2617 = vpop.f32.mrf.mxu0
      %2618 = vdwg.mxu0
      %v2619 = vmul.f32 %v1356, %v2573
      %v2620 = vmul.f32 %v1359, %v2576
      %v2621 = vmul.f32 %v1364, %v2581
      %v2622 = vmul.f32 %v1367, %v2584
      %v2623 = vmul.f32 %v1372, %v2589
      %v2624 = vmul.f32 %v1375, %v2592
      %v2625 = vmul.f32 %v1380, %v2597
      %v2626 = vmul.f32 %v1383, %v2600
      %v2627 = vmul.f32 %v1388, %v2605
      %v2628 = vmul.f32 %v1391, %v2608
      %v2629 = vmul.f32 %v1396, %v2613
      %v2630 = vmul.f32 %v1399, %v2616
      %v2631 = vmul.f32 %v2619, %v1439
      %v2632 = vmul.f32 %v2620, %v1442
      %v2633 = vmul.f32 %v2621, %v1447
      %v2634 = vmul.f32 %v2622, %v1450
      %v2635 = vmul.f32 %v2623, %v1455
      %v2636 = vmul.f32 %v2624, %v1458
      %v2637 = vmul.f32 %v2625, %v1463
      %v2638 = vmul.f32 %v2626, %v1466
      %v2639 = vmul.f32 %v2627, %v1471
      %v2640 = vmul.f32 %v2628, %v1474
      %v2641 = vmul.f32 %v2629, %v1479
      %v2642 = vmul.f32 %v2630, %v1482
      %v2643 = vld [vmem:[%s296 + $0x1] ss:$0 sm:$0xff]
      %vm2644 = vcmp.eq.s32.totalorder %v479, %v2643
      %vm2645 = vcmp.eq.s32.totalorder %v480, %v2643
      %vm2646 = vcmp.eq.s32.totalorder %v1765, %v2643
      %vm2647 = vcmp.eq.s32.totalorder %v1766, %v2643
      %vm2648 = vcmp.eq.s32.totalorder %v2294, %v2643
      %vm2649 = vcmp.eq.s32.totalorder %v2295, %v2643
      %vm2650 = vcmp.eq.s32.totalorder %v2296, %v2643
      %vm2651 = vcmp.eq.s32.totalorder %v2297, %v2643
      %v2652 = vsel %vm2644, 1, 0
      %v2653 = vsel %vm2645, 1, 0
      %v2654 = vsel %vm2646, 1, 0
      %v2655 = vsel %vm2647, 1, 0
      %v2656 = vsel %vm2648, 1, 0
      %v2657 = vsel %vm2649, 1, 0
      %v2658 = vsel %vm2650, 1, 0
      %v2659 = vsel %vm2651, 1, 0
      %v2660 = vcvt.s32.f32 %v2652
      %v2661 = vcvt.s32.f32 %v2653
      %v2662 = vcvt.s32.f32 %v2654
      %v2663 = vcvt.s32.f32 %v2655
      %v2664 = vcvt.s32.f32 %v2656
      %v2665 = vcvt.s32.f32 %v2657
      %v2666 = vcvt.s32.f32 %v2658
      %v2667 = vcvt.s32.f32 %v2659
      %v2668 = vsel %vm1621, %v2660, 0.0
      %2669 = vadd.xlane.f32.xlu0 %v2668
      %v2670 = vpop.xlane.xlu0 %2669
      %v2671 = vsel %vm1621, %v2661, 0.0
      %2672 = vadd.xlane.f32.xlu0 %v2671
      %v2673 = vpop.xlane.xlu0 %2672
      %v2674 = vsel %vm1621, %v2662, 0.0
      %2675 = vadd.xlane.f32.xlu0 %v2674
      %v2676 = vpop.xlane.xlu0 %2675
      %v2677 = vsel %vm1621, %v2663, 0.0
      %2678 = vadd.xlane.f32.xlu0 %v2677
      %v2679 = vpop.xlane.xlu0 %2678
      %v2680 = vsel %vm1621, %v2664, 0.0
      %2681 = vadd.xlane.f32.xlu0 %v2680
      %v2682 = vpop.xlane.xlu0 %2681
      %v2683 = vsel %vm1621, %v2665, 0.0
      %2684 = vadd.xlane.f32.xlu0 %v2683
      %v2685 = vpop.xlane.xlu0 %2684
      %v2686 = vsel %vm1621, %v2666, 0.0
      %2687 = vadd.xlane.f32.xlu0 %v2686
      %v2688 = vpop.xlane.xlu0 %2687
      %v2689 = vsel %vm1621, %v2667, 0.0
      %2690 = vadd.xlane.f32.xlu0 %v2689
      %v2691 = vpop.xlane.xlu0 %2690
      %v2693 = vsel %vm1621, %v2660, 0
      %v2696 = vsel %vm1621, %v2661, 0
      %v2699 = vsel %vm1621, %v2662, 0
      %v2702 = vsel %vm1621, %v2663, 0
      %v2705 = vsel %vm1621, %v2664, 0
      %v2708 = vsel %vm1621, %v2665, 0
      %v2711 = vsel %vm1621, %v2666, 0
      %v2714 = vsel %vm1621, %v2667, 0
      %2716 = vmatprep.subr.mxu0 0.0
      %2717 = vmatpush1.msra.mxu0 0.0
      %2718 = vmatprep.subr.mxu0 0.0
      %2719 = vmatpush1.msra.mxu0 0.0
      %2720 = vmatprep.subr.mxu0 0.0
      %2721 = vmatpush1.msra.mxu0 0.0
      %2722 = vmatprep.subr.mxu0 0.0
      %2723 = vmatpush1.msra.mxu0 0.0
      %2724 = vmatprep.subr.mxu0 0.0
      %v2725 = vand.u32 %v2642, 4294901760
      %2726 = vmatpush1.msra.mxu0 %v2725
      %2727 = vmatprep.subr.mxu0 0.0
      %v2728 = vand.u32 %v2641, 4294901760
      %2729 = vmatpush1.msra.mxu0 %v2728
      %2730 = vmatprep.subr.mxu0 0.0
      %v2731 = vand.u32 %v2640, 4294901760
      %2732 = vmatpush1.msra.mxu0 %v2731
      %2733 = vmatprep.subr.mxu0 0.0
      %v2734 = vand.u32 %v2639, 4294901760
      %2735 = vmatpush1.msra.mxu0 %v2734
      %2736 = vmatprep.subr.mxu0 0.0
      %v2737 = vand.u32 %v2638, 4294901760
      %2738 = vmatpush1.msra.mxu0 %v2737
      %2739 = vmatprep.subr.mxu0 0.0
      %v2740 = vand.u32 %v2637, 4294901760
      %2741 = vmatpush1.msra.mxu0 %v2740
      %2742 = vmatprep.subr.mxu0 0.0
      %v2743 = vand.u32 %v2636, 4294901760
      %2744 = vmatpush1.msra.mxu0 %v2743
      %2745 = vmatprep.subr.mxu0 0.0
      %v2746 = vand.u32 %v2635, 4294901760
      %2747 = vmatpush1.msra.mxu0 %v2746
      %2748 = vmatprep.subr.mxu0 0.0
      %v2749 = vand.u32 %v2634, 4294901760
      %2750 = vmatpush1.msra.mxu0 %v2749
      %2751 = vmatprep.subr.mxu0 0.0
      %v2752 = vand.u32 %v2633, 4294901760
      %2753 = vmatpush1.msra.mxu0 %v2752
      %2754 = vmatprep.subr.mxu0 0.0
      %v2755 = vand.u32 %v2632, 4294901760
      %2756 = vmatpush1.msra.mxu0 %v2755
      %2757 = vmatprep.subr.mxu0 0.0
      %v2758 = vand.u32 %v2631, 4294901760
      %2759 = vmatpush1.msra.mxu0 %v2758
      %2760 = vmatprep.subr.mxu0 0.0
      %2761 = vmatpush2.msra.mxu0 0.0
      %2762 = vmatprep.subr.mxu0 0.0
      %2763 = vmatpush2.msra.mxu0 0.0
      %2764 = vmatprep.subr.mxu0 0.0
      %2765 = vmatpush2.msra.mxu0 0.0
      %2766 = vmatprep.subr.mxu0 0.0
      %2767 = vmatpush2.msra.mxu0 0.0
      %2768 = vmatprep.subr.mxu0 0.0
      %2769 = vmatpush2.msra.mxu0 0.0
      %2770 = vmatprep.subr.mxu0 0.0
      %2771 = vmatpush2.msra.mxu0 0.0
      %2772 = vmatprep.subr.mxu0 0.0
      %2773 = vmatpush2.msra.mxu0 0.0
      %2774 = vmatprep.subr.mxu0 0.0
      %2775 = vmatpush2.msra.mxu0 0.0
      %2776 = vmatprep.subr.mxu0 0.0
      %2777 = vmatpush2.msra.mxu0 0.0
      %2778 = vmatprep.subr.mxu0 0.0
      %2779 = vmatpush2.msra.mxu0 0.0
      %2780 = vmatprep.subr.mxu0 0.0
      %2781 = vmatpush2.msra.mxu0 0.0
      %2782 = vmatprep.subr.mxu0 0.0
      %2783 = vmatpush2.msra.mxu0 0.0
      %2784 = vmatprep.subr.mxu0 0.0
      %2785 = vmatpush2.msra.mxu0 0.0
      %2786 = vmatprep.subr.mxu0 0.0
      %2787 = vmatpush2.msra.mxu0 0.0
      %2788 = vmatprep.subr.mxu0 0.0
      %2789 = vmatpush2.msra.mxu0 0.0
      %2790 = vmatprep.subr.mxu0 0.0
      %2791 = vmatpush2.msra.mxu0 0.0
      %2792 = vmatprep.mubr.f32.mxu0 0.0
      %v2793 = vand.u32 %v2693, 4294901760
      %v2794 = vsub.f32 %v2693, %v2793
      %v2795 = vand.u32 %v2794, 4294901760
      %v2796 = vsub.f32 %v2794, %v2795
      %v2797 = vand.u32 %v2796, 4294901760
      %2798 = vmatmul.mubr.f32.gmra.mxu0 %v2797
      %v2799 = vpop.f32.mrf.mxu0
      %v2800 = vadd.f32 0.0, %v2799
      %v2801 = vpop.f32.mrf.mxu0
      %2802 = vmatprep.mubr.f32.mxu0 0.0
      %v2803 = vand.u32 %v2696, 4294901760
      %v2804 = vsub.f32 %v2696, %v2803
      %v2805 = vand.u32 %v2804, 4294901760
      %v2806 = vsub.f32 %v2804, %v2805
      %v2807 = vand.u32 %v2806, 4294901760
      %2808 = vmatmul.mubr.f32.gmra.mxu0 %v2807
      %v2809 = vpop.f32.mrf.mxu0
      %v2810 = vadd.f32 0.0, %v2809
      %v2811 = vpop.f32.mrf.mxu0
      %2812 = vmatprep.mubr.f32.mxu0 0.0
      %v2813 = vand.u32 %v2699, 4294901760
      %v2814 = vsub.f32 %v2699, %v2813
      %v2815 = vand.u32 %v2814, 4294901760
      %v2816 = vsub.f32 %v2814, %v2815
      %v2817 = vand.u32 %v2816, 4294901760
      %2818 = vmatmul.mubr.f32.gmra.mxu0 %v2817
      %v2819 = vpop.f32.mrf.mxu0
      %v2820 = vadd.f32 0.0, %v2819
      %v2821 = vpop.f32.mrf.mxu0
      %2822 = vmatprep.mubr.f32.mxu0 0.0
      %v2823 = vand.u32 %v2702, 4294901760
      %v2824 = vsub.f32 %v2702, %v2823
      %v2825 = vand.u32 %v2824, 4294901760
      %v2826 = vsub.f32 %v2824, %v2825
      %v2827 = vand.u32 %v2826, 4294901760
      %2828 = vmatmul.mubr.f32.gmra.mxu0 %v2827
      %v2829 = vpop.f32.mrf.mxu0
      %v2830 = vadd.f32 0.0, %v2829
      %v2831 = vpop.f32.mrf.mxu0
      %2832 = vmatprep.mubr.f32.mxu0 0.0
      %v2833 = vand.u32 %v2705, 4294901760
      %v2834 = vsub.f32 %v2705, %v2833
      %v2835 = vand.u32 %v2834, 4294901760
      %v2836 = vsub.f32 %v2834, %v2835
      %v2837 = vand.u32 %v2836, 4294901760
      %2838 = vmatmul.mubr.f32.gmra.mxu0 %v2837
      %v2839 = vpop.f32.mrf.mxu0
      %v2840 = vadd.f32 0.0, %v2839
      %v2841 = vpop.f32.mrf.mxu0
      %2842 = vmatprep.mubr.f32.mxu0 0.0
      %v2843 = vand.u32 %v2708, 4294901760
      %v2844 = vsub.f32 %v2708, %v2843
      %v2845 = vand.u32 %v2844, 4294901760
      %v2846 = vsub.f32 %v2844, %v2845
      %v2847 = vand.u32 %v2846, 4294901760
      %2848 = vmatmul.mubr.f32.gmra.mxu0 %v2847
      %v2849 = vpop.f32.mrf.mxu0
      %v2850 = vadd.f32 0.0, %v2849
      %v2851 = vpop.f32.mrf.mxu0
      %2852 = vmatprep.mubr.f32.mxu0 0.0
      %v2853 = vand.u32 %v2711, 4294901760
      %v2854 = vsub.f32 %v2711, %v2853
      %v2855 = vand.u32 %v2854, 4294901760
      %v2856 = vsub.f32 %v2854, %v2855
      %v2857 = vand.u32 %v2856, 4294901760
      %2858 = vmatmul.mubr.f32.gmra.mxu0 %v2857
      %v2859 = vpop.f32.mrf.mxu0
      %v2860 = vadd.f32 0.0, %v2859
      %v2861 = vpop.f32.mrf.mxu0
      %2862 = vmatprep.mubr.f32.mxu0 0.0
      %v2863 = vand.u32 %v2714, 4294901760
      %v2864 = vsub.f32 %v2714, %v2863
      %v2865 = vand.u32 %v2864, 4294901760
      %v2866 = vsub.f32 %v2864, %v2865
      %v2867 = vand.u32 %v2866, 4294901760
      %2868 = vmatmul.mubr.f32.gmra.mxu0 %v2867
      %v2869 = vpop.f32.mrf.mxu0
      %v2870 = vadd.f32 0.0, %v2869
      %v2871 = vpop.f32.mrf.mxu0
      %2872 = vdwg.mxu0
      %2873 = vmatprep.subr.mxu0 0.0
      %2874 = vmatpush1.msra.mxu0 0.0
      %2875 = vmatprep.subr.mxu0 0.0
      %2876 = vmatpush1.msra.mxu0 0.0
      %2877 = vmatprep.subr.mxu0 0.0
      %2878 = vmatpush1.msra.mxu0 0.0
      %2879 = vmatprep.subr.mxu0 0.0
      %2880 = vmatpush1.msra.mxu0 0.0
      %2881 = vmatprep.subr.mxu0 0.0
      %v2882 = vand.u32 %v2642, 4294901760
      %v2883 = vsub.f32 %v2642, %v2882
      %v2884 = vand.u32 %v2883, 4294901760
      %v2885 = vsub.f32 %v2883, %v2884
      %v2886 = vand.u32 %v2885, 4294901760
      %2887 = vmatpush1.msra.mxu0 %v2886
      %2888 = vmatprep.subr.mxu0 0.0
      %v2889 = vand.u32 %v2641, 4294901760
      %v2890 = vsub.f32 %v2641, %v2889
      %v2891 = vand.u32 %v2890, 4294901760
      %v2892 = vsub.f32 %v2890, %v2891
      %v2893 = vand.u32 %v2892, 4294901760
      %2894 = vmatpush1.msra.mxu0 %v2893
      %2895 = vmatprep.subr.mxu0 0.0
      %v2896 = vand.u32 %v2640, 4294901760
      %v2897 = vsub.f32 %v2640, %v2896
      %v2898 = vand.u32 %v2897, 4294901760
      %v2899 = vsub.f32 %v2897, %v2898
      %v2900 = vand.u32 %v2899, 4294901760
      %2901 = vmatpush1.msra.mxu0 %v2900
      %2902 = vmatprep.subr.mxu0 0.0
      %v2903 = vand.u32 %v2639, 4294901760
      %v2904 = vsub.f32 %v2639, %v2903
      %v2905 = vand.u32 %v2904, 4294901760
      %v2906 = vsub.f32 %v2904, %v2905
      %v2907 = vand.u32 %v2906, 4294901760
      %2908 = vmatpush1.msra.mxu0 %v2907
      %2909 = vmatprep.subr.mxu0 0.0
      %v2910 = vand.u32 %v2638, 4294901760
      %v2911 = vsub.f32 %v2638, %v2910
      %v2912 = vand.u32 %v2911, 4294901760
      %v2913 = vsub.f32 %v2911, %v2912
      %v2914 = vand.u32 %v2913, 4294901760
      %2915 = vmatpush1.msra.mxu0 %v2914
      %2916 = vmatprep.subr.mxu0 0.0
      %v2917 = vand.u32 %v2637, 4294901760
      %v2918 = vsub.f32 %v2637, %v2917
      %v2919 = vand.u32 %v2918, 4294901760
      %v2920 = vsub.f32 %v2918, %v2919
      %v2921 = vand.u32 %v2920, 4294901760
      %2922 = vmatpush1.msra.mxu0 %v2921
      %2923 = vmatprep.subr.mxu0 0.0
      %v2924 = vand.u32 %v2636, 4294901760
      %v2925 = vsub.f32 %v2636, %v2924
      %v2926 = vand.u32 %v2925, 4294901760
      %v2927 = vsub.f32 %v2925, %v2926
      %v2928 = vand.u32 %v2927, 4294901760
      %2929 = vmatpush1.msra.mxu0 %v2928
      %2930 = vmatprep.subr.mxu0 0.0
      %v2931 = vand.u32 %v2635, 4294901760
      %v2932 = vsub.f32 %v2635, %v2931
      %v2933 = vand.u32 %v2932, 4294901760
      %v2934 = vsub.f32 %v2932, %v2933
      %v2935 = vand.u32 %v2934, 4294901760
      %2936 = vmatpush1.msra.mxu0 %v2935
      %2937 = vmatprep.subr.mxu0 0.0
      %v2938 = vand.u32 %v2634, 4294901760
      %v2939 = vsub.f32 %v2634, %v2938
      %v2940 = vand.u32 %v2939, 4294901760
      %v2941 = vsub.f32 %v2939, %v2940
      %v2942 = vand.u32 %v2941, 4294901760
      %2943 = vmatpush1.msra.mxu0 %v2942
      %2944 = vmatprep.subr.mxu0 0.0
      %v2945 = vand.u32 %v2633, 4294901760
      %v2946 = vsub.f32 %v2633, %v2945
      %v2947 = vand.u32 %v2946, 4294901760
      %v2948 = vsub.f32 %v2946, %v2947
      %v2949 = vand.u32 %v2948, 4294901760
      %2950 = vmatpush1.msra.mxu0 %v2949
      %2951 = vmatprep.subr.mxu0 0.0
      %v2952 = vand.u32 %v2632, 4294901760
      %v2953 = vsub.f32 %v2632, %v2952
      %v2954 = vand.u32 %v2953, 4294901760
      %v2955 = vsub.f32 %v2953, %v2954
      %v2956 = vand.u32 %v2955, 4294901760
      %2957 = vmatpush1.msra.mxu0 %v2956
      %2958 = vmatprep.subr.mxu0 0.0
      %v2959 = vand.u32 %v2631, 4294901760
      %v2960 = vsub.f32 %v2631, %v2959
      %v2961 = vand.u32 %v2960, 4294901760
      %v2962 = vsub.f32 %v2960, %v2961
      %v2963 = vand.u32 %v2962, 4294901760
      %2964 = vmatpush1.msra.mxu0 %v2963
      %2965 = vmatprep.subr.mxu0 0.0
      %2966 = vmatpush2.msra.mxu0 0.0
      %2967 = vmatprep.subr.mxu0 0.0
      %2968 = vmatpush2.msra.mxu0 0.0
      %2969 = vmatprep.subr.mxu0 0.0
      %2970 = vmatpush2.msra.mxu0 0.0
      %2971 = vmatprep.subr.mxu0 0.0
      %2972 = vmatpush2.msra.mxu0 0.0
      %2973 = vmatprep.subr.mxu0 0.0
      %2974 = vmatpush2.msra.mxu0 0.0
      %2975 = vmatprep.subr.mxu0 0.0
      %2976 = vmatpush2.msra.mxu0 0.0
      %2977 = vmatprep.subr.mxu0 0.0
      %2978 = vmatpush2.msra.mxu0 0.0
      %2979 = vmatprep.subr.mxu0 0.0
      %2980 = vmatpush2.msra.mxu0 0.0
      %2981 = vmatprep.subr.mxu0 0.0
      %2982 = vmatpush2.msra.mxu0 0.0
      %2983 = vmatprep.subr.mxu0 0.0
      %2984 = vmatpush2.msra.mxu0 0.0
      %2985 = vmatprep.subr.mxu0 0.0
      %2986 = vmatpush2.msra.mxu0 0.0
      %2987 = vmatprep.subr.mxu0 0.0
      %2988 = vmatpush2.msra.mxu0 0.0
      %2989 = vmatprep.subr.mxu0 0.0
      %2990 = vmatpush2.msra.mxu0 0.0
      %2991 = vmatprep.subr.mxu0 0.0
      %2992 = vmatpush2.msra.mxu0 0.0
      %2993 = vmatprep.subr.mxu0 0.0
      %2994 = vmatpush2.msra.mxu0 0.0
      %2995 = vmatprep.subr.mxu0 0.0
      %2996 = vmatpush2.msra.mxu0 0.0
      %2997 = vmatprep.mubr.f32.mxu0 0.0
      %v2998 = vand.u32 %v2693, 4294901760
      %2999 = vmatmul.mubr.f32.gmra.mxu0 %v2998
      %v3000 = vpop.f32.mrf.mxu0
      %v3001 = vadd.f32 %v2800, %v3000
      %v3002 = vpop.f32.mrf.mxu0
      %3003 = vmatprep.mubr.f32.mxu0 0.0
      %v3004 = vand.u32 %v2696, 4294901760
      %3005 = vmatmul.mubr.f32.gmra.mxu0 %v3004
      %v3006 = vpop.f32.mrf.mxu0
      %v3007 = vadd.f32 %v2810, %v3006
      %v3008 = vpop.f32.mrf.mxu0
      %3009 = vmatprep.mubr.f32.mxu0 0.0
      %v3010 = vand.u32 %v2699, 4294901760
      %3011 = vmatmul.mubr.f32.gmra.mxu0 %v3010
      %v3012 = vpop.f32.mrf.mxu0
      %v3013 = vadd.f32 %v2820, %v3012
      %v3014 = vpop.f32.mrf.mxu0
      %3015 = vmatprep.mubr.f32.mxu0 0.0
      %v3016 = vand.u32 %v2702, 4294901760
      %3017 = vmatmul.mubr.f32.gmra.mxu0 %v3016
      %v3018 = vpop.f32.mrf.mxu0
      %v3019 = vadd.f32 %v2830, %v3018
      %v3020 = vpop.f32.mrf.mxu0
      %3021 = vmatprep.mubr.f32.mxu0 0.0
      %v3022 = vand.u32 %v2705, 4294901760
      %3023 = vmatmul.mubr.f32.gmra.mxu0 %v3022
      %v3024 = vpop.f32.mrf.mxu0
      %v3025 = vadd.f32 %v2840, %v3024
      %v3026 = vpop.f32.mrf.mxu0
      %3027 = vmatprep.mubr.f32.mxu0 0.0
      %v3028 = vand.u32 %v2708, 4294901760
      %3029 = vmatmul.mubr.f32.gmra.mxu0 %v3028
      %v3030 = vpop.f32.mrf.mxu0
      %v3031 = vadd.f32 %v2850, %v3030
      %v3032 = vpop.f32.mrf.mxu0
      %3033 = vmatprep.mubr.f32.mxu0 0.0
      %v3034 = vand.u32 %v2711, 4294901760
      %3035 = vmatmul.mubr.f32.gmra.mxu0 %v3034
      %v3036 = vpop.f32.mrf.mxu0
      %v3037 = vadd.f32 %v2860, %v3036
      %v3038 = vpop.f32.mrf.mxu0
      %3039 = vmatprep.mubr.f32.mxu0 0.0
      %v3040 = vand.u32 %v2714, 4294901760
      %3041 = vmatmul.mubr.f32.gmra.mxu0 %v3040
      %v3042 = vpop.f32.mrf.mxu0
      %v3043 = vadd.f32 %v2870, %v3042
      %v3044 = vpop.f32.mrf.mxu0
      %3045 = vdwg.mxu0
      %3046 = vmatprep.subr.mxu0 0.0
      %3047 = vmatpush1.msra.mxu0 0.0
      %3048 = vmatprep.subr.mxu0 0.0
      %3049 = vmatpush1.msra.mxu0 0.0
      %3050 = vmatprep.subr.mxu0 0.0
      %3051 = vmatpush1.msra.mxu0 0.0
      %3052 = vmatprep.subr.mxu0 0.0
      %3053 = vmatpush1.msra.mxu0 0.0
      %3054 = vmatprep.subr.mxu0 0.0
      %v3055 = vand.u32 %v2642, 4294901760
      %v3056 = vsub.f32 %v2642, %v3055
      %3057 = vmatpush1.msra.mxu0 %v3056
      %3058 = vmatprep.subr.mxu0 0.0
      %v3059 = vand.u32 %v2641, 4294901760
      %v3060 = vsub.f32 %v2641, %v3059
      %3061 = vmatpush1.msra.mxu0 %v3060
      %3062 = vmatprep.subr.mxu0 0.0
      %v3063 = vand.u32 %v2640, 4294901760
      %v3064 = vsub.f32 %v2640, %v3063
      %3065 = vmatpush1.msra.mxu0 %v3064
      %3066 = vmatprep.subr.mxu0 0.0
      %v3067 = vand.u32 %v2639, 4294901760
      %v3068 = vsub.f32 %v2639, %v3067
      %3069 = vmatpush1.msra.mxu0 %v3068
      %3070 = vmatprep.subr.mxu0 0.0
      %v3071 = vand.u32 %v2638, 4294901760
      %v3072 = vsub.f32 %v2638, %v3071
      %3073 = vmatpush1.msra.mxu0 %v3072
      %3074 = vmatprep.subr.mxu0 0.0
      %v3075 = vand.u32 %v2637, 4294901760
      %v3076 = vsub.f32 %v2637, %v3075
      %3077 = vmatpush1.msra.mxu0 %v3076
      %3078 = vmatprep.subr.mxu0 0.0
      %v3079 = vand.u32 %v2636, 4294901760
      %v3080 = vsub.f32 %v2636, %v3079
      %3081 = vmatpush1.msra.mxu0 %v3080
      %3082 = vmatprep.subr.mxu0 0.0
      %v3083 = vand.u32 %v2635, 4294901760
      %v3084 = vsub.f32 %v2635, %v3083
      %3085 = vmatpush1.msra.mxu0 %v3084
      %3086 = vmatprep.subr.mxu0 0.0
      %v3087 = vand.u32 %v2634, 4294901760
      %v3088 = vsub.f32 %v2634, %v3087
      %3089 = vmatpush1.msra.mxu0 %v3088
      %3090 = vmatprep.subr.mxu0 0.0
      %v3091 = vand.u32 %v2633, 4294901760
      %v3092 = vsub.f32 %v2633, %v3091
      %3093 = vmatpush1.msra.mxu0 %v3092
      %3094 = vmatprep.subr.mxu0 0.0
      %v3095 = vand.u32 %v2632, 4294901760
      %v3096 = vsub.f32 %v2632, %v3095
      %3097 = vmatpush1.msra.mxu0 %v3096
      %3098 = vmatprep.subr.mxu0 0.0
      %v3099 = vand.u32 %v2631, 4294901760
      %v3100 = vsub.f32 %v2631, %v3099
      %3101 = vmatpush1.msra.mxu0 %v3100
      %3102 = vmatprep.subr.mxu0 0.0
      %3103 = vmatpush2.msra.mxu0 0.0
      %3104 = vmatprep.subr.mxu0 0.0
      %3105 = vmatpush2.msra.mxu0 0.0
      %3106 = vmatprep.subr.mxu0 0.0
      %3107 = vmatpush2.msra.mxu0 0.0
      %3108 = vmatprep.subr.mxu0 0.0
      %3109 = vmatpush2.msra.mxu0 0.0
      %3110 = vmatprep.subr.mxu0 0.0
      %3111 = vmatpush2.msra.mxu0 0.0
      %3112 = vmatprep.subr.mxu0 0.0
      %3113 = vmatpush2.msra.mxu0 0.0
      %3114 = vmatprep.subr.mxu0 0.0
      %3115 = vmatpush2.msra.mxu0 0.0
      %3116 = vmatprep.subr.mxu0 0.0
      %3117 = vmatpush2.msra.mxu0 0.0
      %3118 = vmatprep.subr.mxu0 0.0
      %3119 = vmatpush2.msra.mxu0 0.0
      %3120 = vmatprep.subr.mxu0 0.0
      %3121 = vmatpush2.msra.mxu0 0.0
      %3122 = vmatprep.subr.mxu0 0.0
      %3123 = vmatpush2.msra.mxu0 0.0
      %3124 = vmatprep.subr.mxu0 0.0
      %3125 = vmatpush2.msra.mxu0 0.0
      %3126 = vmatprep.subr.mxu0 0.0
      %3127 = vmatpush2.msra.mxu0 0.0
      %3128 = vmatprep.subr.mxu0 0.0
      %3129 = vmatpush2.msra.mxu0 0.0
      %3130 = vmatprep.subr.mxu0 0.0
      %3131 = vmatpush2.msra.mxu0 0.0
      %3132 = vmatprep.subr.mxu0 0.0
      %3133 = vmatpush2.msra.mxu0 0.0
      %3134 = vmatprep.mubr.f32.mxu0 0.0
      %v3135 = vand.u32 %v2693, 4294901760
      %v3136 = vsub.f32 %v2693, %v3135
      %3137 = vmatmul.mubr.f32.gmra.mxu0 %v3136
      %v3138 = vpop.f32.mrf.mxu0
      %v3139 = vadd.f32 %v3001, %v3138
      %v3140 = vpop.f32.mrf.mxu0
      %3141 = vmatprep.mubr.f32.mxu0 0.0
      %v3142 = vand.u32 %v2696, 4294901760
      %v3143 = vsub.f32 %v2696, %v3142
      %3144 = vmatmul.mubr.f32.gmra.mxu0 %v3143
      %v3145 = vpop.f32.mrf.mxu0
      %v3146 = vadd.f32 %v3007, %v3145
      %v3147 = vpop.f32.mrf.mxu0
      %3148 = vmatprep.mubr.f32.mxu0 0.0
      %v3149 = vand.u32 %v2699, 4294901760
      %v3150 = vsub.f32 %v2699, %v3149
      %3151 = vmatmul.mubr.f32.gmra.mxu0 %v3150
      %v3152 = vpop.f32.mrf.mxu0
      %v3153 = vadd.f32 %v3013, %v3152
      %v3154 = vpop.f32.mrf.mxu0
      %3155 = vmatprep.mubr.f32.mxu0 0.0
      %v3156 = vand.u32 %v2702, 4294901760
      %v3157 = vsub.f32 %v2702, %v3156
      %3158 = vmatmul.mubr.f32.gmra.mxu0 %v3157
      %v3159 = vpop.f32.mrf.mxu0
      %v3160 = vadd.f32 %v3019, %v3159
      %v3161 = vpop.f32.mrf.mxu0
      %3162 = vmatprep.mubr.f32.mxu0 0.0
      %v3163 = vand.u32 %v2705, 4294901760
      %v3164 = vsub.f32 %v2705, %v3163
      %3165 = vmatmul.mubr.f32.gmra.mxu0 %v3164
      %v3166 = vpop.f32.mrf.mxu0
      %v3167 = vadd.f32 %v3025, %v3166
      %v3168 = vpop.f32.mrf.mxu0
      %3169 = vmatprep.mubr.f32.mxu0 0.0
      %v3170 = vand.u32 %v2708, 4294901760
      %v3171 = vsub.f32 %v2708, %v3170
      %3172 = vmatmul.mubr.f32.gmra.mxu0 %v3171
      %v3173 = vpop.f32.mrf.mxu0
      %v3174 = vadd.f32 %v3031, %v3173
      %v3175 = vpop.f32.mrf.mxu0
      %3176 = vmatprep.mubr.f32.mxu0 0.0
      %v3177 = vand.u32 %v2711, 4294901760
      %v3178 = vsub.f32 %v2711, %v3177
      %3179 = vmatmul.mubr.f32.gmra.mxu0 %v3178
      %v3180 = vpop.f32.mrf.mxu0
      %v3181 = vadd.f32 %v3037, %v3180
      %v3182 = vpop.f32.mrf.mxu0
      %3183 = vmatprep.mubr.f32.mxu0 0.0
      %v3184 = vand.u32 %v2714, 4294901760
      %v3185 = vsub.f32 %v2714, %v3184
      %3186 = vmatmul.mubr.f32.gmra.mxu0 %v3185
      %v3187 = vpop.f32.mrf.mxu0
      %v3188 = vadd.f32 %v3043, %v3187
      %v3189 = vpop.f32.mrf.mxu0
      %3190 = vdwg.mxu0
      %3191 = vmatprep.subr.mxu0 0.0
      %3192 = vmatpush1.msra.mxu0 0.0
      %3193 = vmatprep.subr.mxu0 0.0
      %3194 = vmatpush1.msra.mxu0 0.0
      %3195 = vmatprep.subr.mxu0 0.0
      %3196 = vmatpush1.msra.mxu0 0.0
      %3197 = vmatprep.subr.mxu0 0.0
      %3198 = vmatpush1.msra.mxu0 0.0
      %3199 = vmatprep.subr.mxu0 0.0
      %v3200 = vand.u32 %v2642, 4294901760
      %3201 = vmatpush1.msra.mxu0 %v3200
      %3202 = vmatprep.subr.mxu0 0.0
      %v3203 = vand.u32 %v2641, 4294901760
      %3204 = vmatpush1.msra.mxu0 %v3203
      %3205 = vmatprep.subr.mxu0 0.0
      %v3206 = vand.u32 %v2640, 4294901760
      %3207 = vmatpush1.msra.mxu0 %v3206
      %3208 = vmatprep.subr.mxu0 0.0
      %v3209 = vand.u32 %v2639, 4294901760
      %3210 = vmatpush1.msra.mxu0 %v3209
      %3211 = vmatprep.subr.mxu0 0.0
      %v3212 = vand.u32 %v2638, 4294901760
      %3213 = vmatpush1.msra.mxu0 %v3212
      %3214 = vmatprep.subr.mxu0 0.0
      %v3215 = vand.u32 %v2637, 4294901760
      %3216 = vmatpush1.msra.mxu0 %v3215
      %3217 = vmatprep.subr.mxu0 0.0
      %v3218 = vand.u32 %v2636, 4294901760
      %3219 = vmatpush1.msra.mxu0 %v3218
      %3220 = vmatprep.subr.mxu0 0.0
      %v3221 = vand.u32 %v2635, 4294901760
      %3222 = vmatpush1.msra.mxu0 %v3221
      %3223 = vmatprep.subr.mxu0 0.0
      %v3224 = vand.u32 %v2634, 4294901760
      %3225 = vmatpush1.msra.mxu0 %v3224
      %3226 = vmatprep.subr.mxu0 0.0
      %v3227 = vand.u32 %v2633, 4294901760
      %3228 = vmatpush1.msra.mxu0 %v3227
      %3229 = vmatprep.subr.mxu0 0.0
      %v3230 = vand.u32 %v2632, 4294901760
      %3231 = vmatpush1.msra.mxu0 %v3230
      %3232 = vmatprep.subr.mxu0 0.0
      %v3233 = vand.u32 %v2631, 4294901760
      %3234 = vmatpush1.msra.mxu0 %v3233
      %3235 = vmatprep.subr.mxu0 0.0
      %3236 = vmatpush2.msra.mxu0 0.0
      %3237 = vmatprep.subr.mxu0 0.0
      %3238 = vmatpush2.msra.mxu0 0.0
      %3239 = vmatprep.subr.mxu0 0.0
      %3240 = vmatpush2.msra.mxu0 0.0
      %3241 = vmatprep.subr.mxu0 0.0
      %3242 = vmatpush2.msra.mxu0 0.0
      %3243 = vmatprep.subr.mxu0 0.0
      %3244 = vmatpush2.msra.mxu0 0.0
      %3245 = vmatprep.subr.mxu0 0.0
      %3246 = vmatpush2.msra.mxu0 0.0
      %3247 = vmatprep.subr.mxu0 0.0
      %3248 = vmatpush2.msra.mxu0 0.0
      %3249 = vmatprep.subr.mxu0 0.0
      %3250 = vmatpush2.msra.mxu0 0.0
      %3251 = vmatprep.subr.mxu0 0.0
      %3252 = vmatpush2.msra.mxu0 0.0
      %3253 = vmatprep.subr.mxu0 0.0
      %3254 = vmatpush2.msra.mxu0 0.0
      %3255 = vmatprep.subr.mxu0 0.0
      %3256 = vmatpush2.msra.mxu0 0.0
      %3257 = vmatprep.subr.mxu0 0.0
      %3258 = vmatpush2.msra.mxu0 0.0
      %3259 = vmatprep.subr.mxu0 0.0
      %3260 = vmatpush2.msra.mxu0 0.0
      %3261 = vmatprep.subr.mxu0 0.0
      %3262 = vmatpush2.msra.mxu0 0.0
      %3263 = vmatprep.subr.mxu0 0.0
      %3264 = vmatpush2.msra.mxu0 0.0
      %3265 = vmatprep.subr.mxu0 0.0
      %3266 = vmatpush2.msra.mxu0 0.0
      %3267 = vmatprep.mubr.f32.mxu0 0.0
      %v3268 = vand.u32 %v2693, 4294901760
      %v3269 = vsub.f32 %v2693, %v3268
      %v3270 = vand.u32 %v3269, 4294901760
      %3271 = vmatmul.mubr.f32.gmra.mxu0 %v3270
      %v3272 = vpop.f32.mrf.mxu0
      %v3273 = vadd.f32 %v3139, %v3272
      %v3274 = vpop.f32.mrf.mxu0
      %3275 = vmatprep.mubr.f32.mxu0 0.0
      %v3276 = vand.u32 %v2696, 4294901760
      %v3277 = vsub.f32 %v2696, %v3276
      %v3278 = vand.u32 %v3277, 4294901760
      %3279 = vmatmul.mubr.f32.gmra.mxu0 %v3278
      %v3280 = vpop.f32.mrf.mxu0
      %v3281 = vadd.f32 %v3146, %v3280
      %v3282 = vpop.f32.mrf.mxu0
      %3283 = vmatprep.mubr.f32.mxu0 0.0
      %v3284 = vand.u32 %v2699, 4294901760
      %v3285 = vsub.f32 %v2699, %v3284
      %v3286 = vand.u32 %v3285, 4294901760
      %3287 = vmatmul.mubr.f32.gmra.mxu0 %v3286
      %v3288 = vpop.f32.mrf.mxu0
      %v3289 = vadd.f32 %v3153, %v3288
      %v3290 = vpop.f32.mrf.mxu0
      %3291 = vmatprep.mubr.f32.mxu0 0.0
      %v3292 = vand.u32 %v2702, 4294901760
      %v3293 = vsub.f32 %v2702, %v3292
      %v3294 = vand.u32 %v3293, 4294901760
      %3295 = vmatmul.mubr.f32.gmra.mxu0 %v3294
      %v3296 = vpop.f32.mrf.mxu0
      %v3297 = vadd.f32 %v3160, %v3296
      %v3298 = vpop.f32.mrf.mxu0
      %3299 = vmatprep.mubr.f32.mxu0 0.0
      %v3300 = vand.u32 %v2705, 4294901760
      %v3301 = vsub.f32 %v2705, %v3300
      %v3302 = vand.u32 %v3301, 4294901760
      %3303 = vmatmul.mubr.f32.gmra.mxu0 %v3302
      %v3304 = vpop.f32.mrf.mxu0
      %v3305 = vadd.f32 %v3167, %v3304
      %v3306 = vpop.f32.mrf.mxu0
      %3307 = vmatprep.mubr.f32.mxu0 0.0
      %v3308 = vand.u32 %v2708, 4294901760
      %v3309 = vsub.f32 %v2708, %v3308
      %v3310 = vand.u32 %v3309, 4294901760
      %3311 = vmatmul.mubr.f32.gmra.mxu0 %v3310
      %v3312 = vpop.f32.mrf.mxu0
      %v3313 = vadd.f32 %v3174, %v3312
      %v3314 = vpop.f32.mrf.mxu0
      %3315 = vmatprep.mubr.f32.mxu0 0.0
      %v3316 = vand.u32 %v2711, 4294901760
      %v3317 = vsub.f32 %v2711, %v3316
      %v3318 = vand.u32 %v3317, 4294901760
      %3319 = vmatmul.mubr.f32.gmra.mxu0 %v3318
      %v3320 = vpop.f32.mrf.mxu0
      %v3321 = vadd.f32 %v3181, %v3320
      %v3322 = vpop.f32.mrf.mxu0
      %3323 = vmatprep.mubr.f32.mxu0 0.0
      %v3324 = vand.u32 %v2714, 4294901760
      %v3325 = vsub.f32 %v2714, %v3324
      %v3326 = vand.u32 %v3325, 4294901760
      %3327 = vmatmul.mubr.f32.gmra.mxu0 %v3326
      %v3328 = vpop.f32.mrf.mxu0
      %v3329 = vadd.f32 %v3188, %v3328
      %v3330 = vpop.f32.mrf.mxu0
      %3331 = vdwg.mxu0
      %3332 = vmatprep.subr.mxu0 0.0
      %3333 = vmatpush1.msra.mxu0 0.0
      %3334 = vmatprep.subr.mxu0 0.0
      %3335 = vmatpush1.msra.mxu0 0.0
      %3336 = vmatprep.subr.mxu0 0.0
      %3337 = vmatpush1.msra.mxu0 0.0
      %3338 = vmatprep.subr.mxu0 0.0
      %3339 = vmatpush1.msra.mxu0 0.0
      %3340 = vmatprep.subr.mxu0 0.0
      %v3341 = vand.u32 %v2642, 4294901760
      %v3342 = vsub.f32 %v2642, %v3341
      %v3343 = vand.u32 %v3342, 4294901760
      %3344 = vmatpush1.msra.mxu0 %v3343
      %3345 = vmatprep.subr.mxu0 0.0
      %v3346 = vand.u32 %v2641, 4294901760
      %v3347 = vsub.f32 %v2641, %v3346
      %v3348 = vand.u32 %v3347, 4294901760
      %3349 = vmatpush1.msra.mxu0 %v3348
      %3350 = vmatprep.subr.mxu0 0.0
      %v3351 = vand.u32 %v2640, 4294901760
      %v3352 = vsub.f32 %v2640, %v3351
      %v3353 = vand.u32 %v3352, 4294901760
      %3354 = vmatpush1.msra.mxu0 %v3353
      %3355 = vmatprep.subr.mxu0 0.0
      %v3356 = vand.u32 %v2639, 4294901760
      %v3357 = vsub.f32 %v2639, %v3356
      %v3358 = vand.u32 %v3357, 4294901760
      %3359 = vmatpush1.msra.mxu0 %v3358
      %3360 = vmatprep.subr.mxu0 0.0
      %v3361 = vand.u32 %v2638, 4294901760
      %v3362 = vsub.f32 %v2638, %v3361
      %v3363 = vand.u32 %v3362, 4294901760
      %3364 = vmatpush1.msra.mxu0 %v3363
      %3365 = vmatprep.subr.mxu0 0.0
      %v3366 = vand.u32 %v2637, 4294901760
      %v3367 = vsub.f32 %v2637, %v3366
      %v3368 = vand.u32 %v3367, 4294901760
      %3369 = vmatpush1.msra.mxu0 %v3368
      %3370 = vmatprep.subr.mxu0 0.0
      %v3371 = vand.u32 %v2636, 4294901760
      %v3372 = vsub.f32 %v2636, %v3371
      %v3373 = vand.u32 %v3372, 4294901760
      %3374 = vmatpush1.msra.mxu0 %v3373
      %3375 = vmatprep.subr.mxu0 0.0
      %v3376 = vand.u32 %v2635, 4294901760
      %v3377 = vsub.f32 %v2635, %v3376
      %v3378 = vand.u32 %v3377, 4294901760
      %3379 = vmatpush1.msra.mxu0 %v3378
      %3380 = vmatprep.subr.mxu0 0.0
      %v3381 = vand.u32 %v2634, 4294901760
      %v3382 = vsub.f32 %v2634, %v3381
      %v3383 = vand.u32 %v3382, 4294901760
      %3384 = vmatpush1.msra.mxu0 %v3383
      %3385 = vmatprep.subr.mxu0 0.0
      %v3386 = vand.u32 %v2633, 4294901760
      %v3387 = vsub.f32 %v2633, %v3386
      %v3388 = vand.u32 %v3387, 4294901760
      %3389 = vmatpush1.msra.mxu0 %v3388
      %3390 = vmatprep.subr.mxu0 0.0
      %v3391 = vand.u32 %v2632, 4294901760
      %v3392 = vsub.f32 %v2632, %v3391
      %v3393 = vand.u32 %v3392, 4294901760
      %3394 = vmatpush1.msra.mxu0 %v3393
      %3395 = vmatprep.subr.mxu0 0.0
      %v3396 = vand.u32 %v2631, 4294901760
      %v3397 = vsub.f32 %v2631, %v3396
      %v3398 = vand.u32 %v3397, 4294901760
      %3399 = vmatpush1.msra.mxu0 %v3398
      %3400 = vmatprep.subr.mxu0 0.0
      %3401 = vmatpush2.msra.mxu0 0.0
      %3402 = vmatprep.subr.mxu0 0.0
      %3403 = vmatpush2.msra.mxu0 0.0
      %3404 = vmatprep.subr.mxu0 0.0
      %3405 = vmatpush2.msra.mxu0 0.0
      %3406 = vmatprep.subr.mxu0 0.0
      %3407 = vmatpush2.msra.mxu0 0.0
      %3408 = vmatprep.subr.mxu0 0.0
      %3409 = vmatpush2.msra.mxu0 0.0
      %3410 = vmatprep.subr.mxu0 0.0
      %3411 = vmatpush2.msra.mxu0 0.0
      %3412 = vmatprep.subr.mxu0 0.0
      %3413 = vmatpush2.msra.mxu0 0.0
      %3414 = vmatprep.subr.mxu0 0.0
      %3415 = vmatpush2.msra.mxu0 0.0
      %3416 = vmatprep.subr.mxu0 0.0
      %3417 = vmatpush2.msra.mxu0 0.0
      %3418 = vmatprep.subr.mxu0 0.0
      %3419 = vmatpush2.msra.mxu0 0.0
      %3420 = vmatprep.subr.mxu0 0.0
      %3421 = vmatpush2.msra.mxu0 0.0
      %3422 = vmatprep.subr.mxu0 0.0
      %3423 = vmatpush2.msra.mxu0 0.0
      %3424 = vmatprep.subr.mxu0 0.0
      %3425 = vmatpush2.msra.mxu0 0.0
      %3426 = vmatprep.subr.mxu0 0.0
      %3427 = vmatpush2.msra.mxu0 0.0
      %3428 = vmatprep.subr.mxu0 0.0
      %3429 = vmatpush2.msra.mxu0 0.0
      %3430 = vmatprep.subr.mxu0 0.0
      %3431 = vmatpush2.msra.mxu0 0.0
      %3432 = vmatprep.mubr.f32.mxu0 0.0
      %v3433 = vand.u32 %v2693, 4294901760
      %3434 = vmatmul.mubr.f32.gmra.mxu0 %v3433
      %v3435 = vpop.f32.mrf.mxu0
      %v3436 = vadd.f32 %v3273, %v3435
      %v3437 = vpop.f32.mrf.mxu0
      %3438 = vmatprep.mubr.f32.mxu0 0.0
      %v3439 = vand.u32 %v2696, 4294901760
      %3440 = vmatmul.mubr.f32.gmra.mxu0 %v3439
      %v3441 = vpop.f32.mrf.mxu0
      %v3442 = vadd.f32 %v3281, %v3441
      %v3443 = vpop.f32.mrf.mxu0
      %3444 = vmatprep.mubr.f32.mxu0 0.0
      %v3445 = vand.u32 %v2699, 4294901760
      %3446 = vmatmul.mubr.f32.gmra.mxu0 %v3445
      %v3447 = vpop.f32.mrf.mxu0
      %v3448 = vadd.f32 %v3289, %v3447
      %v3449 = vpop.f32.mrf.mxu0
      %3450 = vmatprep.mubr.f32.mxu0 0.0
      %v3451 = vand.u32 %v2702, 4294901760
      %3452 = vmatmul.mubr.f32.gmra.mxu0 %v3451
      %v3453 = vpop.f32.mrf.mxu0
      %v3454 = vadd.f32 %v3297, %v3453
      %v3455 = vpop.f32.mrf.mxu0
      %3456 = vmatprep.mubr.f32.mxu0 0.0
      %v3457 = vand.u32 %v2705, 4294901760
      %3458 = vmatmul.mubr.f32.gmra.mxu0 %v3457
      %v3459 = vpop.f32.mrf.mxu0
      %v3460 = vadd.f32 %v3305, %v3459
      %v3461 = vpop.f32.mrf.mxu0
      %3462 = vmatprep.mubr.f32.mxu0 0.0
      %v3463 = vand.u32 %v2708, 4294901760
      %3464 = vmatmul.mubr.f32.gmra.mxu0 %v3463
      %v3465 = vpop.f32.mrf.mxu0
      %v3466 = vadd.f32 %v3313, %v3465
      %v3467 = vpop.f32.mrf.mxu0
      %3468 = vmatprep.mubr.f32.mxu0 0.0
      %v3469 = vand.u32 %v2711, 4294901760
      %3470 = vmatmul.mubr.f32.gmra.mxu0 %v3469
      %v3471 = vpop.f32.mrf.mxu0
      %v3472 = vadd.f32 %v3321, %v3471
      %v3473 = vpop.f32.mrf.mxu0
      %3474 = vmatprep.mubr.f32.mxu0 0.0
      %v3475 = vand.u32 %v2714, 4294901760
      %3476 = vmatmul.mubr.f32.gmra.mxu0 %v3475
      %v3477 = vpop.f32.mrf.mxu0
      %v3478 = vadd.f32 %v3329, %v3477
      %v3479 = vpop.f32.mrf.mxu0
      %3480 = vdwg.mxu0
      %3481 = vmatprep.subr.mxu0 0.0
      %3482 = vmatpush1.msra.mxu0 0.0
      %3483 = vmatprep.subr.mxu0 0.0
      %3484 = vmatpush1.msra.mxu0 0.0
      %3485 = vmatprep.subr.mxu0 0.0
      %3486 = vmatpush1.msra.mxu0 0.0
      %3487 = vmatprep.subr.mxu0 0.0
      %3488 = vmatpush1.msra.mxu0 0.0
      %3489 = vmatprep.subr.mxu0 0.0
      %v3490 = vand.u32 %v2642, 4294901760
      %3491 = vmatpush1.msra.mxu0 %v3490
      %3492 = vmatprep.subr.mxu0 0.0
      %v3493 = vand.u32 %v2641, 4294901760
      %3494 = vmatpush1.msra.mxu0 %v3493
      %3495 = vmatprep.subr.mxu0 0.0
      %v3496 = vand.u32 %v2640, 4294901760
      %3497 = vmatpush1.msra.mxu0 %v3496
      %3498 = vmatprep.subr.mxu0 0.0
      %v3499 = vand.u32 %v2639, 4294901760
      %3500 = vmatpush1.msra.mxu0 %v3499
      %3501 = vmatprep.subr.mxu0 0.0
      %v3502 = vand.u32 %v2638, 4294901760
      %3503 = vmatpush1.msra.mxu0 %v3502
      %3504 = vmatprep.subr.mxu0 0.0
      %v3505 = vand.u32 %v2637, 4294901760
      %3506 = vmatpush1.msra.mxu0 %v3505
      %3507 = vmatprep.subr.mxu0 0.0
      %v3508 = vand.u32 %v2636, 4294901760
      %3509 = vmatpush1.msra.mxu0 %v3508
      %3510 = vmatprep.subr.mxu0 0.0
      %v3511 = vand.u32 %v2635, 4294901760
      %3512 = vmatpush1.msra.mxu0 %v3511
      %3513 = vmatprep.subr.mxu0 0.0
      %v3514 = vand.u32 %v2634, 4294901760
      %3515 = vmatpush1.msra.mxu0 %v3514
      %3516 = vmatprep.subr.mxu0 0.0
      %v3517 = vand.u32 %v2633, 4294901760
      %3518 = vmatpush1.msra.mxu0 %v3517
      %3519 = vmatprep.subr.mxu0 0.0
      %v3520 = vand.u32 %v2632, 4294901760
      %3521 = vmatpush1.msra.mxu0 %v3520
      %3522 = vmatprep.subr.mxu0 0.0
      %v3523 = vand.u32 %v2631, 4294901760
      %3524 = vmatpush1.msra.mxu0 %v3523
      %3525 = vmatprep.subr.mxu0 0.0
      %3526 = vmatpush2.msra.mxu0 0.0
      %3527 = vmatprep.subr.mxu0 0.0
      %3528 = vmatpush2.msra.mxu0 0.0
      %3529 = vmatprep.subr.mxu0 0.0
      %3530 = vmatpush2.msra.mxu0 0.0
      %3531 = vmatprep.subr.mxu0 0.0
      %3532 = vmatpush2.msra.mxu0 0.0
      %3533 = vmatprep.subr.mxu0 0.0
      %3534 = vmatpush2.msra.mxu0 0.0
      %3535 = vmatprep.subr.mxu0 0.0
      %3536 = vmatpush2.msra.mxu0 0.0
      %3537 = vmatprep.subr.mxu0 0.0
      %3538 = vmatpush2.msra.mxu0 0.0
      %3539 = vmatprep.subr.mxu0 0.0
      %3540 = vmatpush2.msra.mxu0 0.0
      %3541 = vmatprep.subr.mxu0 0.0
      %3542 = vmatpush2.msra.mxu0 0.0
      %3543 = vmatprep.subr.mxu0 0.0
      %3544 = vmatpush2.msra.mxu0 0.0
      %3545 = vmatprep.subr.mxu0 0.0
      %3546 = vmatpush2.msra.mxu0 0.0
      %3547 = vmatprep.subr.mxu0 0.0
      %3548 = vmatpush2.msra.mxu0 0.0
      %3549 = vmatprep.subr.mxu0 0.0
      %3550 = vmatpush2.msra.mxu0 0.0
      %3551 = vmatprep.subr.mxu0 0.0
      %3552 = vmatpush2.msra.mxu0 0.0
      %3553 = vmatprep.subr.mxu0 0.0
      %3554 = vmatpush2.msra.mxu0 0.0
      %3555 = vmatprep.subr.mxu0 0.0
      %3556 = vmatpush2.msra.mxu0 0.0
      %3557 = vmatprep.mubr.f32.mxu0 0.0
      %v3558 = vand.u32 %v2693, 4294901760
      %3559 = vmatmul.mubr.f32.gmra.mxu0 %v3558
      %v3560 = vpop.f32.mrf.mxu0
      %v3561 = vadd.f32 %v3436, %v3560
      %v3562 = vpop.f32.mrf.mxu0
      %3563 = vmatprep.mubr.f32.mxu0 0.0
      %v3564 = vand.u32 %v2696, 4294901760
      %3565 = vmatmul.mubr.f32.gmra.mxu0 %v3564
      %v3566 = vpop.f32.mrf.mxu0
      %v3567 = vadd.f32 %v3442, %v3566
      %v3568 = vpop.f32.mrf.mxu0
      %3569 = vmatprep.mubr.f32.mxu0 0.0
      %v3570 = vand.u32 %v2699, 4294901760
      %3571 = vmatmul.mubr.f32.gmra.mxu0 %v3570
      %v3572 = vpop.f32.mrf.mxu0
      %v3573 = vadd.f32 %v3448, %v3572
      %v3574 = vpop.f32.mrf.mxu0
      %3575 = vmatprep.mubr.f32.mxu0 0.0
      %v3576 = vand.u32 %v2702, 4294901760
      %3577 = vmatmul.mubr.f32.gmra.mxu0 %v3576
      %v3578 = vpop.f32.mrf.mxu0
      %v3579 = vadd.f32 %v3454, %v3578
      %v3580 = vpop.f32.mrf.mxu0
      %3581 = vmatprep.mubr.f32.mxu0 0.0
      %v3582 = vand.u32 %v2705, 4294901760
      %3583 = vmatmul.mubr.f32.gmra.mxu0 %v3582
      %v3584 = vpop.f32.mrf.mxu0
      %v3585 = vadd.f32 %v3460, %v3584
      %v3586 = vpop.f32.mrf.mxu0
      %3587 = vmatprep.mubr.f32.mxu0 0.0
      %v3588 = vand.u32 %v2708, 4294901760
      %3589 = vmatmul.mubr.f32.gmra.mxu0 %v3588
      %v3590 = vpop.f32.mrf.mxu0
      %v3591 = vadd.f32 %v3466, %v3590
      %v3592 = vpop.f32.mrf.mxu0
      %3593 = vmatprep.mubr.f32.mxu0 0.0
      %v3594 = vand.u32 %v2711, 4294901760
      %3595 = vmatmul.mubr.f32.gmra.mxu0 %v3594
      %v3596 = vpop.f32.mrf.mxu0
      %v3597 = vadd.f32 %v3472, %v3596
      %v3598 = vpop.f32.mrf.mxu0
      %3599 = vmatprep.mubr.f32.mxu0 0.0
      %v3600 = vand.u32 %v2714, 4294901760
      %3601 = vmatmul.mubr.f32.gmra.mxu0 %v3600
      %v3602 = vpop.f32.mrf.mxu0
      %v3603 = vadd.f32 %v3478, %v3602
      %v3604 = vpop.f32.mrf.mxu0
      %3605 = vdwg.mxu0
      %v3606 = vmul.f32 %v2631, %v2631
      %v3607 = vmul.f32 %v2632, %v2632
      %v3608 = vmul.f32 %v2633, %v2633
      %v3609 = vmul.f32 %v2634, %v2634
      %v3610 = vmul.f32 %v2635, %v2635
      %v3611 = vmul.f32 %v2636, %v2636
      %v3612 = vmul.f32 %v2637, %v2637
      %v3613 = vmul.f32 %v2638, %v2638
      %v3614 = vmul.f32 %v2639, %v2639
      %v3615 = vmul.f32 %v2640, %v2640
      %v3616 = vmul.f32 %v2641, %v2641
      %v3617 = vmul.f32 %v2642, %v2642
      %3618 = vmatprep.subr.mxu0 0.0
      %3619 = vmatpush1.msra.mxu0 0.0
      %3620 = vmatprep.subr.mxu0 0.0
      %3621 = vmatpush1.msra.mxu0 0.0
      %3622 = vmatprep.subr.mxu0 0.0
      %3623 = vmatpush1.msra.mxu0 0.0
      %3624 = vmatprep.subr.mxu0 0.0
      %3625 = vmatpush1.msra.mxu0 0.0
      %3626 = vmatprep.subr.mxu0 0.0
      %v3627 = vand.u32 %v3617, 4294901760
      %3628 = vmatpush1.msra.mxu0 %v3627
      %3629 = vmatprep.subr.mxu0 0.0
      %v3630 = vand.u32 %v3616, 4294901760
      %3631 = vmatpush1.msra.mxu0 %v3630
      %3632 = vmatprep.subr.mxu0 0.0
      %v3633 = vand.u32 %v3615, 4294901760
      %3634 = vmatpush1.msra.mxu0 %v3633
      %3635 = vmatprep.subr.mxu0 0.0
      %v3636 = vand.u32 %v3614, 4294901760
      %3637 = vmatpush1.msra.mxu0 %v3636
      %3638 = vmatprep.subr.mxu0 0.0
      %v3639 = vand.u32 %v3613, 4294901760
      %3640 = vmatpush1.msra.mxu0 %v3639
      %3641 = vmatprep.subr.mxu0 0.0
      %v3642 = vand.u32 %v3612, 4294901760
      %3643 = vmatpush1.msra.mxu0 %v3642
      %3644 = vmatprep.subr.mxu0 0.0
      %v3645 = vand.u32 %v3611, 4294901760
      %3646 = vmatpush1.msra.mxu0 %v3645
      %3647 = vmatprep.subr.mxu0 0.0
      %v3648 = vand.u32 %v3610, 4294901760
      %3649 = vmatpush1.msra.mxu0 %v3648
      %3650 = vmatprep.subr.mxu0 0.0
      %v3651 = vand.u32 %v3609, 4294901760
      %3652 = vmatpush1.msra.mxu0 %v3651
      %3653 = vmatprep.subr.mxu0 0.0
      %v3654 = vand.u32 %v3608, 4294901760
      %3655 = vmatpush1.msra.mxu0 %v3654
      %3656 = vmatprep.subr.mxu0 0.0
      %v3657 = vand.u32 %v3607, 4294901760
      %3658 = vmatpush1.msra.mxu0 %v3657
      %3659 = vmatprep.subr.mxu0 0.0
      %v3660 = vand.u32 %v3606, 4294901760
      %3661 = vmatpush1.msra.mxu0 %v3660
      %3662 = vmatprep.subr.mxu0 0.0
      %3663 = vmatpush2.msra.mxu0 0.0
      %3664 = vmatprep.subr.mxu0 0.0
      %3665 = vmatpush2.msra.mxu0 0.0
      %3666 = vmatprep.subr.mxu0 0.0
      %3667 = vmatpush2.msra.mxu0 0.0
      %3668 = vmatprep.subr.mxu0 0.0
      %3669 = vmatpush2.msra.mxu0 0.0
      %3670 = vmatprep.subr.mxu0 0.0
      %3671 = vmatpush2.msra.mxu0 0.0
      %3672 = vmatprep.subr.mxu0 0.0
      %3673 = vmatpush2.msra.mxu0 0.0
      %3674 = vmatprep.subr.mxu0 0.0
      %3675 = vmatpush2.msra.mxu0 0.0
      %3676 = vmatprep.subr.mxu0 0.0
      %3677 = vmatpush2.msra.mxu0 0.0
      %3678 = vmatprep.subr.mxu0 0.0
      %3679 = vmatpush2.msra.mxu0 0.0
      %3680 = vmatprep.subr.mxu0 0.0
      %3681 = vmatpush2.msra.mxu0 0.0
      %3682 = vmatprep.subr.mxu0 0.0
      %3683 = vmatpush2.msra.mxu0 0.0
      %3684 = vmatprep.subr.mxu0 0.0
      %3685 = vmatpush2.msra.mxu0 0.0
      %3686 = vmatprep.subr.mxu0 0.0
      %3687 = vmatpush2.msra.mxu0 0.0
      %3688 = vmatprep.subr.mxu0 0.0
      %3689 = vmatpush2.msra.mxu0 0.0
      %3690 = vmatprep.subr.mxu0 0.0
      %3691 = vmatpush2.msra.mxu0 0.0
      %3692 = vmatprep.subr.mxu0 0.0
      %3693 = vmatpush2.msra.mxu0 0.0
      %3694 = vmatprep.mubr.f32.mxu0 0.0
      %v3695 = vand.u32 %v2693, 4294901760
      %v3696 = vsub.f32 %v2693, %v3695
      %v3697 = vand.u32 %v3696, 4294901760
      %v3698 = vsub.f32 %v3696, %v3697
      %v3699 = vand.u32 %v3698, 4294901760
      %3700 = vmatmul.mubr.f32.gmra.mxu0 %v3699
      %v3701 = vpop.f32.mrf.mxu0
      %v3702 = vadd.f32 0.0, %v3701
      %v3703 = vpop.f32.mrf.mxu0
      %3704 = vmatprep.mubr.f32.mxu0 0.0
      %v3705 = vand.u32 %v2696, 4294901760
      %v3706 = vsub.f32 %v2696, %v3705
      %v3707 = vand.u32 %v3706, 4294901760
      %v3708 = vsub.f32 %v3706, %v3707
      %v3709 = vand.u32 %v3708, 4294901760
      %3710 = vmatmul.mubr.f32.gmra.mxu0 %v3709
      %v3711 = vpop.f32.mrf.mxu0
      %v3712 = vadd.f32 0.0, %v3711
      %v3713 = vpop.f32.mrf.mxu0
      %3714 = vmatprep.mubr.f32.mxu0 0.0
      %v3715 = vand.u32 %v2699, 4294901760
      %v3716 = vsub.f32 %v2699, %v3715
      %v3717 = vand.u32 %v3716, 4294901760
      %v3718 = vsub.f32 %v3716, %v3717
      %v3719 = vand.u32 %v3718, 4294901760
      %3720 = vmatmul.mubr.f32.gmra.mxu0 %v3719
      %v3721 = vpop.f32.mrf.mxu0
      %v3722 = vadd.f32 0.0, %v3721
      %v3723 = vpop.f32.mrf.mxu0
      %3724 = vmatprep.mubr.f32.mxu0 0.0
      %v3725 = vand.u32 %v2702, 4294901760
      %v3726 = vsub.f32 %v2702, %v3725
      %v3727 = vand.u32 %v3726, 4294901760
      %v3728 = vsub.f32 %v3726, %v3727
      %v3729 = vand.u32 %v3728, 4294901760
      %3730 = vmatmul.mubr.f32.gmra.mxu0 %v3729
      %v3731 = vpop.f32.mrf.mxu0
      %v3732 = vadd.f32 0.0, %v3731
      %v3733 = vpop.f32.mrf.mxu0
      %3734 = vmatprep.mubr.f32.mxu0 0.0
      %v3735 = vand.u32 %v2705, 4294901760
      %v3736 = vsub.f32 %v2705, %v3735
      %v3737 = vand.u32 %v3736, 4294901760
      %v3738 = vsub.f32 %v3736, %v3737
      %v3739 = vand.u32 %v3738, 4294901760
      %3740 = vmatmul.mubr.f32.gmra.mxu0 %v3739
      %v3741 = vpop.f32.mrf.mxu0
      %v3742 = vadd.f32 0.0, %v3741
      %v3743 = vpop.f32.mrf.mxu0
      %3744 = vmatprep.mubr.f32.mxu0 0.0
      %v3745 = vand.u32 %v2708, 4294901760
      %v3746 = vsub.f32 %v2708, %v3745
      %v3747 = vand.u32 %v3746, 4294901760
      %v3748 = vsub.f32 %v3746, %v3747
      %v3749 = vand.u32 %v3748, 4294901760
      %3750 = vmatmul.mubr.f32.gmra.mxu0 %v3749
      %v3751 = vpop.f32.mrf.mxu0
      %v3752 = vadd.f32 0.0, %v3751
      %v3753 = vpop.f32.mrf.mxu0
      %3754 = vmatprep.mubr.f32.mxu0 0.0
      %v3755 = vand.u32 %v2711, 4294901760
      %v3756 = vsub.f32 %v2711, %v3755
      %v3757 = vand.u32 %v3756, 4294901760
      %v3758 = vsub.f32 %v3756, %v3757
      %v3759 = vand.u32 %v3758, 4294901760
      %3760 = vmatmul.mubr.f32.gmra.mxu0 %v3759
      %v3761 = vpop.f32.mrf.mxu0
      %v3762 = vadd.f32 0.0, %v3761
      %v3763 = vpop.f32.mrf.mxu0
      %3764 = vmatprep.mubr.f32.mxu0 0.0
      %v3765 = vand.u32 %v2714, 4294901760
      %v3766 = vsub.f32 %v2714, %v3765
      %v3767 = vand.u32 %v3766, 4294901760
      %v3768 = vsub.f32 %v3766, %v3767
      %v3769 = vand.u32 %v3768, 4294901760
      %3770 = vmatmul.mubr.f32.gmra.mxu0 %v3769
      %v3771 = vpop.f32.mrf.mxu0
      %v3772 = vadd.f32 0.0, %v3771
      %v3773 = vpop.f32.mrf.mxu0
      %3774 = vdwg.mxu0
      %3775 = vmatprep.subr.mxu0 0.0
      %3776 = vmatpush1.msra.mxu0 0.0
      %3777 = vmatprep.subr.mxu0 0.0
      %3778 = vmatpush1.msra.mxu0 0.0
      %3779 = vmatprep.subr.mxu0 0.0
      %3780 = vmatpush1.msra.mxu0 0.0
      %3781 = vmatprep.subr.mxu0 0.0
      %3782 = vmatpush1.msra.mxu0 0.0
      %3783 = vmatprep.subr.mxu0 0.0
      %v3784 = vand.u32 %v3617, 4294901760
      %v3785 = vsub.f32 %v3617, %v3784
      %v3786 = vand.u32 %v3785, 4294901760
      %v3787 = vsub.f32 %v3785, %v3786
      %v3788 = vand.u32 %v3787, 4294901760
      %3789 = vmatpush1.msra.mxu0 %v3788
      %3790 = vmatprep.subr.mxu0 0.0
      %v3791 = vand.u32 %v3616, 4294901760
      %v3792 = vsub.f32 %v3616, %v3791
      %v3793 = vand.u32 %v3792, 4294901760
      %v3794 = vsub.f32 %v3792, %v3793
      %v3795 = vand.u32 %v3794, 4294901760
      %3796 = vmatpush1.msra.mxu0 %v3795
      %3797 = vmatprep.subr.mxu0 0.0
      %v3798 = vand.u32 %v3615, 4294901760
      %v3799 = vsub.f32 %v3615, %v3798
      %v3800 = vand.u32 %v3799, 4294901760
      %v3801 = vsub.f32 %v3799, %v3800
      %v3802 = vand.u32 %v3801, 4294901760
      %3803 = vmatpush1.msra.mxu0 %v3802
      %3804 = vmatprep.subr.mxu0 0.0
      %v3805 = vand.u32 %v3614, 4294901760
      %v3806 = vsub.f32 %v3614, %v3805
      %v3807 = vand.u32 %v3806, 4294901760
      %v3808 = vsub.f32 %v3806, %v3807
      %v3809 = vand.u32 %v3808, 4294901760
      %3810 = vmatpush1.msra.mxu0 %v3809
      %3811 = vmatprep.subr.mxu0 0.0
      %v3812 = vand.u32 %v3613, 4294901760
      %v3813 = vsub.f32 %v3613, %v3812
      %v3814 = vand.u32 %v3813, 4294901760
      %v3815 = vsub.f32 %v3813, %v3814
      %v3816 = vand.u32 %v3815, 4294901760
      %3817 = vmatpush1.msra.mxu0 %v3816
      %3818 = vmatprep.subr.mxu0 0.0
      %v3819 = vand.u32 %v3612, 4294901760
      %v3820 = vsub.f32 %v3612, %v3819
      %v3821 = vand.u32 %v3820, 4294901760
      %v3822 = vsub.f32 %v3820, %v3821
      %v3823 = vand.u32 %v3822, 4294901760
      %3824 = vmatpush1.msra.mxu0 %v3823
      %3825 = vmatprep.subr.mxu0 0.0
      %v3826 = vand.u32 %v3611, 4294901760
      %v3827 = vsub.f32 %v3611, %v3826
      %v3828 = vand.u32 %v3827, 4294901760
      %v3829 = vsub.f32 %v3827, %v3828
      %v3830 = vand.u32 %v3829, 4294901760
      %3831 = vmatpush1.msra.mxu0 %v3830
      %3832 = vmatprep.subr.mxu0 0.0
      %v3833 = vand.u32 %v3610, 4294901760
      %v3834 = vsub.f32 %v3610, %v3833
      %v3835 = vand.u32 %v3834, 4294901760
      %v3836 = vsub.f32 %v3834, %v3835
      %v3837 = vand.u32 %v3836, 4294901760
      %3838 = vmatpush1.msra.mxu0 %v3837
      %3839 = vmatprep.subr.mxu0 0.0
      %v3840 = vand.u32 %v3609, 4294901760
      %v3841 = vsub.f32 %v3609, %v3840
      %v3842 = vand.u32 %v3841, 4294901760
      %v3843 = vsub.f32 %v3841, %v3842
      %v3844 = vand.u32 %v3843, 4294901760
      %3845 = vmatpush1.msra.mxu0 %v3844
      %3846 = vmatprep.subr.mxu0 0.0
      %v3847 = vand.u32 %v3608, 4294901760
      %v3848 = vsub.f32 %v3608, %v3847
      %v3849 = vand.u32 %v3848, 4294901760
      %v3850 = vsub.f32 %v3848, %v3849
      %v3851 = vand.u32 %v3850, 4294901760
      %3852 = vmatpush1.msra.mxu0 %v3851
      %3853 = vmatprep.subr.mxu0 0.0
      %v3854 = vand.u32 %v3607, 4294901760
      %v3855 = vsub.f32 %v3607, %v3854
      %v3856 = vand.u32 %v3855, 4294901760
      %v3857 = vsub.f32 %v3855, %v3856
      %v3858 = vand.u32 %v3857, 4294901760
      %3859 = vmatpush1.msra.mxu0 %v3858
      %3860 = vmatprep.subr.mxu0 0.0
      %v3861 = vand.u32 %v3606, 4294901760
      %v3862 = vsub.f32 %v3606, %v3861
      %v3863 = vand.u32 %v3862, 4294901760
      %v3864 = vsub.f32 %v3862, %v3863
      %v3865 = vand.u32 %v3864, 4294901760
      %3866 = vmatpush1.msra.mxu0 %v3865
      %3867 = vmatprep.subr.mxu0 0.0
      %3868 = vmatpush2.msra.mxu0 0.0
      %3869 = vmatprep.subr.mxu0 0.0
      %3870 = vmatpush2.msra.mxu0 0.0
      %3871 = vmatprep.subr.mxu0 0.0
      %3872 = vmatpush2.msra.mxu0 0.0
      %3873 = vmatprep.subr.mxu0 0.0
      %3874 = vmatpush2.msra.mxu0 0.0
      %3875 = vmatprep.subr.mxu0 0.0
      %3876 = vmatpush2.msra.mxu0 0.0
      %3877 = vmatprep.subr.mxu0 0.0
      %3878 = vmatpush2.msra.mxu0 0.0
      %3879 = vmatprep.subr.mxu0 0.0
      %3880 = vmatpush2.msra.mxu0 0.0
      %3881 = vmatprep.subr.mxu0 0.0
      %3882 = vmatpush2.msra.mxu0 0.0
      %3883 = vmatprep.subr.mxu0 0.0
      %3884 = vmatpush2.msra.mxu0 0.0
      %3885 = vmatprep.subr.mxu0 0.0
      %3886 = vmatpush2.msra.mxu0 0.0
      %3887 = vmatprep.subr.mxu0 0.0
      %3888 = vmatpush2.msra.mxu0 0.0
      %3889 = vmatprep.subr.mxu0 0.0
      %3890 = vmatpush2.msra.mxu0 0.0
      %3891 = vmatprep.subr.mxu0 0.0
      %3892 = vmatpush2.msra.mxu0 0.0
      %3893 = vmatprep.subr.mxu0 0.0
      %3894 = vmatpush2.msra.mxu0 0.0
      %3895 = vmatprep.subr.mxu0 0.0
      %3896 = vmatpush2.msra.mxu0 0.0
      %3897 = vmatprep.subr.mxu0 0.0
      %3898 = vmatpush2.msra.mxu0 0.0
      %3899 = vmatprep.mubr.f32.mxu0 0.0
      %v3900 = vand.u32 %v2693, 4294901760
      %3901 = vmatmul.mubr.f32.gmra.mxu0 %v3900
      %v3902 = vpop.f32.mrf.mxu0
      %v3903 = vadd.f32 %v3702, %v3902
      %v3904 = vpop.f32.mrf.mxu0
      %3905 = vmatprep.mubr.f32.mxu0 0.0
      %v3906 = vand.u32 %v2696, 4294901760
      %3907 = vmatmul.mubr.f32.gmra.mxu0 %v3906
      %v3908 = vpop.f32.mrf.mxu0
      %v3909 = vadd.f32 %v3712, %v3908
      %v3910 = vpop.f32.mrf.mxu0
      %3911 = vmatprep.mubr.f32.mxu0 0.0
      %v3912 = vand.u32 %v2699, 4294901760
      %3913 = vmatmul.mubr.f32.gmra.mxu0 %v3912
      %v3914 = vpop.f32.mrf.mxu0
      %v3915 = vadd.f32 %v3722, %v3914
      %v3916 = vpop.f32.mrf.mxu0
      %3917 = vmatprep.mubr.f32.mxu0 0.0
      %v3918 = vand.u32 %v2702, 4294901760
      %3919 = vmatmul.mubr.f32.gmra.mxu0 %v3918
      %v3920 = vpop.f32.mrf.mxu0
      %v3921 = vadd.f32 %v3732, %v3920
      %v3922 = vpop.f32.mrf.mxu0
      %3923 = vmatprep.mubr.f32.mxu0 0.0
      %v3924 = vand.u32 %v2705, 4294901760
      %3925 = vmatmul.mubr.f32.gmra.mxu0 %v3924
      %v3926 = vpop.f32.mrf.mxu0
      %v3927 = vadd.f32 %v3742, %v3926
      %v3928 = vpop.f32.mrf.mxu0
      %3929 = vmatprep.mubr.f32.mxu0 0.0
      %v3930 = vand.u32 %v2708, 4294901760
      %3931 = vmatmul.mubr.f32.gmra.mxu0 %v3930
      %v3932 = vpop.f32.mrf.mxu0
      %v3933 = vadd.f32 %v3752, %v3932
      %v3934 = vpop.f32.mrf.mxu0
      %3935 = vmatprep.mubr.f32.mxu0 0.0
      %v3936 = vand.u32 %v2711, 4294901760
      %3937 = vmatmul.mubr.f32.gmra.mxu0 %v3936
      %v3938 = vpop.f32.mrf.mxu0
      %v3939 = vadd.f32 %v3762, %v3938
      %v3940 = vpop.f32.mrf.mxu0
      %3941 = vmatprep.mubr.f32.mxu0 0.0
      %v3942 = vand.u32 %v2714, 4294901760
      %3943 = vmatmul.mubr.f32.gmra.mxu0 %v3942
      %v3944 = vpop.f32.mrf.mxu0
      %v3945 = vadd.f32 %v3772, %v3944
      %v3946 = vpop.f32.mrf.mxu0
      %3947 = vdwg.mxu0
      %3948 = vmatprep.subr.mxu0 0.0
      %3949 = vmatpush1.msra.mxu0 0.0
      %3950 = vmatprep.subr.mxu0 0.0
      %3951 = vmatpush1.msra.mxu0 0.0
      %3952 = vmatprep.subr.mxu0 0.0
      %3953 = vmatpush1.msra.mxu0 0.0
      %3954 = vmatprep.subr.mxu0 0.0
      %3955 = vmatpush1.msra.mxu0 0.0
      %3956 = vmatprep.subr.mxu0 0.0
      %v3957 = vand.u32 %v3617, 4294901760
      %v3958 = vsub.f32 %v3617, %v3957
      %3959 = vmatpush1.msra.mxu0 %v3958
      %3960 = vmatprep.subr.mxu0 0.0
      %v3961 = vand.u32 %v3616, 4294901760
      %v3962 = vsub.f32 %v3616, %v3961
      %3963 = vmatpush1.msra.mxu0 %v3962
      %3964 = vmatprep.subr.mxu0 0.0
      %v3965 = vand.u32 %v3615, 4294901760
      %v3966 = vsub.f32 %v3615, %v3965
      %3967 = vmatpush1.msra.mxu0 %v3966
      %3968 = vmatprep.subr.mxu0 0.0
      %v3969 = vand.u32 %v3614, 4294901760
      %v3970 = vsub.f32 %v3614, %v3969
      %3971 = vmatpush1.msra.mxu0 %v3970
      %3972 = vmatprep.subr.mxu0 0.0
      %v3973 = vand.u32 %v3613, 4294901760
      %v3974 = vsub.f32 %v3613, %v3973
      %3975 = vmatpush1.msra.mxu0 %v3974
      %3976 = vmatprep.subr.mxu0 0.0
      %v3977 = vand.u32 %v3612, 4294901760
      %v3978 = vsub.f32 %v3612, %v3977
      %3979 = vmatpush1.msra.mxu0 %v3978
      %3980 = vmatprep.subr.mxu0 0.0
      %v3981 = vand.u32 %v3611, 4294901760
      %v3982 = vsub.f32 %v3611, %v3981
      %3983 = vmatpush1.msra.mxu0 %v3982
      %3984 = vmatprep.subr.mxu0 0.0
      %v3985 = vand.u32 %v3610, 4294901760
      %v3986 = vsub.f32 %v3610, %v3985
      %3987 = vmatpush1.msra.mxu0 %v3986
      %3988 = vmatprep.subr.mxu0 0.0
      %v3989 = vand.u32 %v3609, 4294901760
      %v3990 = vsub.f32 %v3609, %v3989
      %3991 = vmatpush1.msra.mxu0 %v3990
      %3992 = vmatprep.subr.mxu0 0.0
      %v3993 = vand.u32 %v3608, 4294901760
      %v3994 = vsub.f32 %v3608, %v3993
      %3995 = vmatpush1.msra.mxu0 %v3994
      %3996 = vmatprep.subr.mxu0 0.0
      %v3997 = vand.u32 %v3607, 4294901760
      %v3998 = vsub.f32 %v3607, %v3997
      %3999 = vmatpush1.msra.mxu0 %v3998
      %4000 = vmatprep.subr.mxu0 0.0
      %v4001 = vand.u32 %v3606, 4294901760
      %v4002 = vsub.f32 %v3606, %v4001
      %4003 = vmatpush1.msra.mxu0 %v4002
      %4004 = vmatprep.subr.mxu0 0.0
      %4005 = vmatpush2.msra.mxu0 0.0
      %4006 = vmatprep.subr.mxu0 0.0
      %4007 = vmatpush2.msra.mxu0 0.0
      %4008 = vmatprep.subr.mxu0 0.0
      %4009 = vmatpush2.msra.mxu0 0.0
      %4010 = vmatprep.subr.mxu0 0.0
      %4011 = vmatpush2.msra.mxu0 0.0
      %4012 = vmatprep.subr.mxu0 0.0
      %4013 = vmatpush2.msra.mxu0 0.0
      %4014 = vmatprep.subr.mxu0 0.0
      %4015 = vmatpush2.msra.mxu0 0.0
      %4016 = vmatprep.subr.mxu0 0.0
      %4017 = vmatpush2.msra.mxu0 0.0
      %4018 = vmatprep.subr.mxu0 0.0
      %4019 = vmatpush2.msra.mxu0 0.0
      %4020 = vmatprep.subr.mxu0 0.0
      %4021 = vmatpush2.msra.mxu0 0.0
      %4022 = vmatprep.subr.mxu0 0.0
      %4023 = vmatpush2.msra.mxu0 0.0
      %4024 = vmatprep.subr.mxu0 0.0
      %4025 = vmatpush2.msra.mxu0 0.0
      %4026 = vmatprep.subr.mxu0 0.0
      %4027 = vmatpush2.msra.mxu0 0.0
      %4028 = vmatprep.subr.mxu0 0.0
      %4029 = vmatpush2.msra.mxu0 0.0
      %4030 = vmatprep.subr.mxu0 0.0
      %4031 = vmatpush2.msra.mxu0 0.0
      %4032 = vmatprep.subr.mxu0 0.0
      %4033 = vmatpush2.msra.mxu0 0.0
      %4034 = vmatprep.subr.mxu0 0.0
      %4035 = vmatpush2.msra.mxu0 0.0
      %4036 = vmatprep.mubr.f32.mxu0 0.0
      %v4037 = vand.u32 %v2693, 4294901760
      %v4038 = vsub.f32 %v2693, %v4037
      %4039 = vmatmul.mubr.f32.gmra.mxu0 %v4038
      %v4040 = vpop.f32.mrf.mxu0
      %v4041 = vadd.f32 %v3903, %v4040
      %v4042 = vpop.f32.mrf.mxu0
      %4043 = vmatprep.mubr.f32.mxu0 0.0
      %v4044 = vand.u32 %v2696, 4294901760
      %v4045 = vsub.f32 %v2696, %v4044
      %4046 = vmatmul.mubr.f32.gmra.mxu0 %v4045
      %v4047 = vpop.f32.mrf.mxu0
      %v4048 = vadd.f32 %v3909, %v4047
      %v4049 = vpop.f32.mrf.mxu0
      %4050 = vmatprep.mubr.f32.mxu0 0.0
      %v4051 = vand.u32 %v2699, 4294901760
      %v4052 = vsub.f32 %v2699, %v4051
      %4053 = vmatmul.mubr.f32.gmra.mxu0 %v4052
      %v4054 = vpop.f32.mrf.mxu0
      %v4055 = vadd.f32 %v3915, %v4054
      %v4056 = vpop.f32.mrf.mxu0
      %4057 = vmatprep.mubr.f32.mxu0 0.0
      %v4058 = vand.u32 %v2702, 4294901760
      %v4059 = vsub.f32 %v2702, %v4058
      %4060 = vmatmul.mubr.f32.gmra.mxu0 %v4059
      %v4061 = vpop.f32.mrf.mxu0
      %v4062 = vadd.f32 %v3921, %v4061
      %v4063 = vpop.f32.mrf.mxu0
      %4064 = vmatprep.mubr.f32.mxu0 0.0
      %v4065 = vand.u32 %v2705, 4294901760
      %v4066 = vsub.f32 %v2705, %v4065
      %4067 = vmatmul.mubr.f32.gmra.mxu0 %v4066
      %v4068 = vpop.f32.mrf.mxu0
      %v4069 = vadd.f32 %v3927, %v4068
      %v4070 = vpop.f32.mrf.mxu0
      %4071 = vmatprep.mubr.f32.mxu0 0.0
      %v4072 = vand.u32 %v2708, 4294901760
      %v4073 = vsub.f32 %v2708, %v4072
      %4074 = vmatmul.mubr.f32.gmra.mxu0 %v4073
      %v4075 = vpop.f32.mrf.mxu0
      %v4076 = vadd.f32 %v3933, %v4075
      %v4077 = vpop.f32.mrf.mxu0
      %4078 = vmatprep.mubr.f32.mxu0 0.0
      %v4079 = vand.u32 %v2711, 4294901760
      %v4080 = vsub.f32 %v2711, %v4079
      %4081 = vmatmul.mubr.f32.gmra.mxu0 %v4080
      %v4082 = vpop.f32.mrf.mxu0
      %v4083 = vadd.f32 %v3939, %v4082
      %v4084 = vpop.f32.mrf.mxu0
      %4085 = vmatprep.mubr.f32.mxu0 0.0
      %v4086 = vand.u32 %v2714, 4294901760
      %v4087 = vsub.f32 %v2714, %v4086
      %4088 = vmatmul.mubr.f32.gmra.mxu0 %v4087
      %v4089 = vpop.f32.mrf.mxu0
      %v4090 = vadd.f32 %v3945, %v4089
      %v4091 = vpop.f32.mrf.mxu0
      %4092 = vdwg.mxu0
      %4093 = vmatprep.subr.mxu0 0.0
      %4094 = vmatpush1.msra.mxu0 0.0
      %4095 = vmatprep.subr.mxu0 0.0
      %4096 = vmatpush1.msra.mxu0 0.0
      %4097 = vmatprep.subr.mxu0 0.0
      %4098 = vmatpush1.msra.mxu0 0.0
      %4099 = vmatprep.subr.mxu0 0.0
      %4100 = vmatpush1.msra.mxu0 0.0
      %4101 = vmatprep.subr.mxu0 0.0
      %v4102 = vand.u32 %v3617, 4294901760
      %4103 = vmatpush1.msra.mxu0 %v4102
      %4104 = vmatprep.subr.mxu0 0.0
      %v4105 = vand.u32 %v3616, 4294901760
      %4106 = vmatpush1.msra.mxu0 %v4105
      %4107 = vmatprep.subr.mxu0 0.0
      %v4108 = vand.u32 %v3615, 4294901760
      %4109 = vmatpush1.msra.mxu0 %v4108
      %4110 = vmatprep.subr.mxu0 0.0
      %v4111 = vand.u32 %v3614, 4294901760
      %4112 = vmatpush1.msra.mxu0 %v4111
      %4113 = vmatprep.subr.mxu0 0.0
      %v4114 = vand.u32 %v3613, 4294901760
      %4115 = vmatpush1.msra.mxu0 %v4114
      %4116 = vmatprep.subr.mxu0 0.0
      %v4117 = vand.u32 %v3612, 4294901760
      %4118 = vmatpush1.msra.mxu0 %v4117
      %4119 = vmatprep.subr.mxu0 0.0
      %v4120 = vand.u32 %v3611, 4294901760
      %4121 = vmatpush1.msra.mxu0 %v4120
      %4122 = vmatprep.subr.mxu0 0.0
      %v4123 = vand.u32 %v3610, 4294901760
      %4124 = vmatpush1.msra.mxu0 %v4123
      %4125 = vmatprep.subr.mxu0 0.0
      %v4126 = vand.u32 %v3609, 4294901760
      %4127 = vmatpush1.msra.mxu0 %v4126
      %4128 = vmatprep.subr.mxu0 0.0
      %v4129 = vand.u32 %v3608, 4294901760
      %4130 = vmatpush1.msra.mxu0 %v4129
      %4131 = vmatprep.subr.mxu0 0.0
      %v4132 = vand.u32 %v3607, 4294901760
      %4133 = vmatpush1.msra.mxu0 %v4132
      %4134 = vmatprep.subr.mxu0 0.0
      %v4135 = vand.u32 %v3606, 4294901760
      %4136 = vmatpush1.msra.mxu0 %v4135
      %4137 = vmatprep.subr.mxu0 0.0
      %4138 = vmatpush2.msra.mxu0 0.0
      %4139 = vmatprep.subr.mxu0 0.0
      %4140 = vmatpush2.msra.mxu0 0.0
      %4141 = vmatprep.subr.mxu0 0.0
      %4142 = vmatpush2.msra.mxu0 0.0
      %4143 = vmatprep.subr.mxu0 0.0
      %4144 = vmatpush2.msra.mxu0 0.0
      %4145 = vmatprep.subr.mxu0 0.0
      %4146 = vmatpush2.msra.mxu0 0.0
      %4147 = vmatprep.subr.mxu0 0.0
      %4148 = vmatpush2.msra.mxu0 0.0
      %4149 = vmatprep.subr.mxu0 0.0
      %4150 = vmatpush2.msra.mxu0 0.0
      %4151 = vmatprep.subr.mxu0 0.0
      %4152 = vmatpush2.msra.mxu0 0.0
      %4153 = vmatprep.subr.mxu0 0.0
      %4154 = vmatpush2.msra.mxu0 0.0
      %4155 = vmatprep.subr.mxu0 0.0
      %4156 = vmatpush2.msra.mxu0 0.0
      %4157 = vmatprep.subr.mxu0 0.0
      %4158 = vmatpush2.msra.mxu0 0.0
      %4159 = vmatprep.subr.mxu0 0.0
      %4160 = vmatpush2.msra.mxu0 0.0
      %4161 = vmatprep.subr.mxu0 0.0
      %4162 = vmatpush2.msra.mxu0 0.0
      %4163 = vmatprep.subr.mxu0 0.0
      %4164 = vmatpush2.msra.mxu0 0.0
      %4165 = vmatprep.subr.mxu0 0.0
      %4166 = vmatpush2.msra.mxu0 0.0
      %4167 = vmatprep.subr.mxu0 0.0
      %4168 = vmatpush2.msra.mxu0 0.0
      %4169 = vmatprep.mubr.f32.mxu0 0.0
      %v4170 = vand.u32 %v2693, 4294901760
      %v4171 = vsub.f32 %v2693, %v4170
      %v4172 = vand.u32 %v4171, 4294901760
      %4173 = vmatmul.mubr.f32.gmra.mxu0 %v4172
      %v4174 = vpop.f32.mrf.mxu0
      %v4175 = vadd.f32 %v4041, %v4174
      %v4176 = vpop.f32.mrf.mxu0
      %4177 = vmatprep.mubr.f32.mxu0 0.0
      %v4178 = vand.u32 %v2696, 4294901760
      %v4179 = vsub.f32 %v2696, %v4178
      %v4180 = vand.u32 %v4179, 4294901760
      %4181 = vmatmul.mubr.f32.gmra.mxu0 %v4180
      %v4182 = vpop.f32.mrf.mxu0
      %v4183 = vadd.f32 %v4048, %v4182
      %v4184 = vpop.f32.mrf.mxu0
      %4185 = vmatprep.mubr.f32.mxu0 0.0
      %v4186 = vand.u32 %v2699, 4294901760
      %v4187 = vsub.f32 %v2699, %v4186
      %v4188 = vand.u32 %v4187, 4294901760
      %4189 = vmatmul.mubr.f32.gmra.mxu0 %v4188
      %v4190 = vpop.f32.mrf.mxu0
      %v4191 = vadd.f32 %v4055, %v4190
      %v4192 = vpop.f32.mrf.mxu0
      %4193 = vmatprep.mubr.f32.mxu0 0.0
      %v4194 = vand.u32 %v2702, 4294901760
      %v4195 = vsub.f32 %v2702, %v4194
      %v4196 = vand.u32 %v4195, 4294901760
      %4197 = vmatmul.mubr.f32.gmra.mxu0 %v4196
      %v4198 = vpop.f32.mrf.mxu0
      %v4199 = vadd.f32 %v4062, %v4198
      %v4200 = vpop.f32.mrf.mxu0
      %4201 = vmatprep.mubr.f32.mxu0 0.0
      %v4202 = vand.u32 %v2705, 4294901760
      %v4203 = vsub.f32 %v2705, %v4202
      %v4204 = vand.u32 %v4203, 4294901760
      %4205 = vmatmul.mubr.f32.gmra.mxu0 %v4204
      %v4206 = vpop.f32.mrf.mxu0
      %v4207 = vadd.f32 %v4069, %v4206
      %v4208 = vpop.f32.mrf.mxu0
      %4209 = vmatprep.mubr.f32.mxu0 0.0
      %v4210 = vand.u32 %v2708, 4294901760
      %v4211 = vsub.f32 %v2708, %v4210
      %v4212 = vand.u32 %v4211, 4294901760
      %4213 = vmatmul.mubr.f32.gmra.mxu0 %v4212
      %v4214 = vpop.f32.mrf.mxu0
      %v4215 = vadd.f32 %v4076, %v4214
      %v4216 = vpop.f32.mrf.mxu0
      %4217 = vmatprep.mubr.f32.mxu0 0.0
      %v4218 = vand.u32 %v2711, 4294901760
      %v4219 = vsub.f32 %v2711, %v4218
      %v4220 = vand.u32 %v4219, 4294901760
      %4221 = vmatmul.mubr.f32.gmra.mxu0 %v4220
      %v4222 = vpop.f32.mrf.mxu0
      %v4223 = vadd.f32 %v4083, %v4222
      %v4224 = vpop.f32.mrf.mxu0
      %4225 = vmatprep.mubr.f32.mxu0 0.0
      %v4226 = vand.u32 %v2714, 4294901760
      %v4227 = vsub.f32 %v2714, %v4226
      %v4228 = vand.u32 %v4227, 4294901760
      %4229 = vmatmul.mubr.f32.gmra.mxu0 %v4228
      %v4230 = vpop.f32.mrf.mxu0
      %v4231 = vadd.f32 %v4090, %v4230
      %v4232 = vpop.f32.mrf.mxu0
      %4233 = vdwg.mxu0
      %4234 = vmatprep.subr.mxu0 0.0
      %4235 = vmatpush1.msra.mxu0 0.0
      %4236 = vmatprep.subr.mxu0 0.0
      %4237 = vmatpush1.msra.mxu0 0.0
      %4238 = vmatprep.subr.mxu0 0.0
      %4239 = vmatpush1.msra.mxu0 0.0
      %4240 = vmatprep.subr.mxu0 0.0
      %4241 = vmatpush1.msra.mxu0 0.0
      %4242 = vmatprep.subr.mxu0 0.0
      %v4243 = vand.u32 %v3617, 4294901760
      %v4244 = vsub.f32 %v3617, %v4243
      %v4245 = vand.u32 %v4244, 4294901760
      %4246 = vmatpush1.msra.mxu0 %v4245
      %4247 = vmatprep.subr.mxu0 0.0
      %v4248 = vand.u32 %v3616, 4294901760
      %v4249 = vsub.f32 %v3616, %v4248
      %v4250 = vand.u32 %v4249, 4294901760
      %4251 = vmatpush1.msra.mxu0 %v4250
      %4252 = vmatprep.subr.mxu0 0.0
      %v4253 = vand.u32 %v3615, 4294901760
      %v4254 = vsub.f32 %v3615, %v4253
      %v4255 = vand.u32 %v4254, 4294901760
      %4256 = vmatpush1.msra.mxu0 %v4255
      %4257 = vmatprep.subr.mxu0 0.0
      %v4258 = vand.u32 %v3614, 4294901760
      %v4259 = vsub.f32 %v3614, %v4258
      %v4260 = vand.u32 %v4259, 4294901760
      %4261 = vmatpush1.msra.mxu0 %v4260
      %4262 = vmatprep.subr.mxu0 0.0
      %v4263 = vand.u32 %v3613, 4294901760
      %v4264 = vsub.f32 %v3613, %v4263
      %v4265 = vand.u32 %v4264, 4294901760
      %4266 = vmatpush1.msra.mxu0 %v4265
      %4267 = vmatprep.subr.mxu0 0.0
      %v4268 = vand.u32 %v3612, 4294901760
      %v4269 = vsub.f32 %v3612, %v4268
      %v4270 = vand.u32 %v4269, 4294901760
      %4271 = vmatpush1.msra.mxu0 %v4270
      %4272 = vmatprep.subr.mxu0 0.0
      %v4273 = vand.u32 %v3611, 4294901760
      %v4274 = vsub.f32 %v3611, %v4273
      %v4275 = vand.u32 %v4274, 4294901760
      %4276 = vmatpush1.msra.mxu0 %v4275
      %4277 = vmatprep.subr.mxu0 0.0
      %v4278 = vand.u32 %v3610, 4294901760
      %v4279 = vsub.f32 %v3610, %v4278
      %v4280 = vand.u32 %v4279, 4294901760
      %4281 = vmatpush1.msra.mxu0 %v4280
      %4282 = vmatprep.subr.mxu0 0.0
      %v4283 = vand.u32 %v3609, 4294901760
      %v4284 = vsub.f32 %v3609, %v4283
      %v4285 = vand.u32 %v4284, 4294901760
      %4286 = vmatpush1.msra.mxu0 %v4285
      %4287 = vmatprep.subr.mxu0 0.0
      %v4288 = vand.u32 %v3608, 4294901760
      %v4289 = vsub.f32 %v3608, %v4288
      %v4290 = vand.u32 %v4289, 4294901760
      %4291 = vmatpush1.msra.mxu0 %v4290
      %4292 = vmatprep.subr.mxu0 0.0
      %v4293 = vand.u32 %v3607, 4294901760
      %v4294 = vsub.f32 %v3607, %v4293
      %v4295 = vand.u32 %v4294, 4294901760
      %4296 = vmatpush1.msra.mxu0 %v4295
      %4297 = vmatprep.subr.mxu0 0.0
      %v4298 = vand.u32 %v3606, 4294901760
      %v4299 = vsub.f32 %v3606, %v4298
      %v4300 = vand.u32 %v4299, 4294901760
      %4301 = vmatpush1.msra.mxu0 %v4300
      %4302 = vmatprep.subr.mxu0 0.0
      %4303 = vmatpush2.msra.mxu0 0.0
      %4304 = vmatprep.subr.mxu0 0.0
      %4305 = vmatpush2.msra.mxu0 0.0
      %4306 = vmatprep.subr.mxu0 0.0
      %4307 = vmatpush2.msra.mxu0 0.0
      %4308 = vmatprep.subr.mxu0 0.0
      %4309 = vmatpush2.msra.mxu0 0.0
      %4310 = vmatprep.subr.mxu0 0.0
      %4311 = vmatpush2.msra.mxu0 0.0
      %4312 = vmatprep.subr.mxu0 0.0
      %4313 = vmatpush2.msra.mxu0 0.0
      %4314 = vmatprep.subr.mxu0 0.0
      %4315 = vmatpush2.msra.mxu0 0.0
      %4316 = vmatprep.subr.mxu0 0.0
      %4317 = vmatpush2.msra.mxu0 0.0
      %4318 = vmatprep.subr.mxu0 0.0
      %4319 = vmatpush2.msra.mxu0 0.0
      %4320 = vmatprep.subr.mxu0 0.0
      %4321 = vmatpush2.msra.mxu0 0.0
      %4322 = vmatprep.subr.mxu0 0.0
      %4323 = vmatpush2.msra.mxu0 0.0
      %4324 = vmatprep.subr.mxu0 0.0
      %4325 = vmatpush2.msra.mxu0 0.0
      %4326 = vmatprep.subr.mxu0 0.0
      %4327 = vmatpush2.msra.mxu0 0.0
      %4328 = vmatprep.subr.mxu0 0.0
      %4329 = vmatpush2.msra.mxu0 0.0
      %4330 = vmatprep.subr.mxu0 0.0
      %4331 = vmatpush2.msra.mxu0 0.0
      %4332 = vmatprep.subr.mxu0 0.0
      %4333 = vmatpush2.msra.mxu0 0.0
      %4334 = vmatprep.mubr.f32.mxu0 0.0
      %v4335 = vand.u32 %v2693, 4294901760
      %4336 = vmatmul.mubr.f32.gmra.mxu0 %v4335
      %v4337 = vpop.f32.mrf.mxu0
      %v4338 = vadd.f32 %v4175, %v4337
      %v4339 = vpop.f32.mrf.mxu0
      %4340 = vmatprep.mubr.f32.mxu0 0.0
      %v4341 = vand.u32 %v2696, 4294901760
      %4342 = vmatmul.mubr.f32.gmra.mxu0 %v4341
      %v4343 = vpop.f32.mrf.mxu0
      %v4344 = vadd.f32 %v4183, %v4343
      %v4345 = vpop.f32.mrf.mxu0
      %4346 = vmatprep.mubr.f32.mxu0 0.0
      %v4347 = vand.u32 %v2699, 4294901760
      %4348 = vmatmul.mubr.f32.gmra.mxu0 %v4347
      %v4349 = vpop.f32.mrf.mxu0
      %v4350 = vadd.f32 %v4191, %v4349
      %v4351 = vpop.f32.mrf.mxu0
      %4352 = vmatprep.mubr.f32.mxu0 0.0
      %v4353 = vand.u32 %v2702, 4294901760
      %4354 = vmatmul.mubr.f32.gmra.mxu0 %v4353
      %v4355 = vpop.f32.mrf.mxu0
      %v4356 = vadd.f32 %v4199, %v4355
      %v4357 = vpop.f32.mrf.mxu0
      %4358 = vmatprep.mubr.f32.mxu0 0.0
      %v4359 = vand.u32 %v2705, 4294901760
      %4360 = vmatmul.mubr.f32.gmra.mxu0 %v4359
      %v4361 = vpop.f32.mrf.mxu0
      %v4362 = vadd.f32 %v4207, %v4361
      %v4363 = vpop.f32.mrf.mxu0
      %4364 = vmatprep.mubr.f32.mxu0 0.0
      %v4365 = vand.u32 %v2708, 4294901760
      %4366 = vmatmul.mubr.f32.gmra.mxu0 %v4365
      %v4367 = vpop.f32.mrf.mxu0
      %v4368 = vadd.f32 %v4215, %v4367
      %v4369 = vpop.f32.mrf.mxu0
      %4370 = vmatprep.mubr.f32.mxu0 0.0
      %v4371 = vand.u32 %v2711, 4294901760
      %4372 = vmatmul.mubr.f32.gmra.mxu0 %v4371
      %v4373 = vpop.f32.mrf.mxu0
      %v4374 = vadd.f32 %v4223, %v4373
      %v4375 = vpop.f32.mrf.mxu0
      %4376 = vmatprep.mubr.f32.mxu0 0.0
      %v4377 = vand.u32 %v2714, 4294901760
      %4378 = vmatmul.mubr.f32.gmra.mxu0 %v4377
      %v4379 = vpop.f32.mrf.mxu0
      %v4380 = vadd.f32 %v4231, %v4379
      %v4381 = vpop.f32.mrf.mxu0
      %4382 = vdwg.mxu0
      %4383 = vmatprep.subr.mxu0 0.0
      %4384 = vmatpush1.msra.mxu0 0.0
      %4385 = vmatprep.subr.mxu0 0.0
      %4386 = vmatpush1.msra.mxu0 0.0
      %4387 = vmatprep.subr.mxu0 0.0
      %4388 = vmatpush1.msra.mxu0 0.0
      %4389 = vmatprep.subr.mxu0 0.0
      %4390 = vmatpush1.msra.mxu0 0.0
      %4391 = vmatprep.subr.mxu0 0.0
      %v4392 = vand.u32 %v3617, 4294901760
      %4393 = vmatpush1.msra.mxu0 %v4392
      %4394 = vmatprep.subr.mxu0 0.0
      %v4395 = vand.u32 %v3616, 4294901760
      %4396 = vmatpush1.msra.mxu0 %v4395
      %4397 = vmatprep.subr.mxu0 0.0
      %v4398 = vand.u32 %v3615, 4294901760
      %4399 = vmatpush1.msra.mxu0 %v4398
      %4400 = vmatprep.subr.mxu0 0.0
      %v4401 = vand.u32 %v3614, 4294901760
      %4402 = vmatpush1.msra.mxu0 %v4401
      %4403 = vmatprep.subr.mxu0 0.0
      %v4404 = vand.u32 %v3613, 4294901760
      %4405 = vmatpush1.msra.mxu0 %v4404
      %4406 = vmatprep.subr.mxu0 0.0
      %v4407 = vand.u32 %v3612, 4294901760
      %4408 = vmatpush1.msra.mxu0 %v4407
      %4409 = vmatprep.subr.mxu0 0.0
      %v4410 = vand.u32 %v3611, 4294901760
      %4411 = vmatpush1.msra.mxu0 %v4410
      %4412 = vmatprep.subr.mxu0 0.0
      %v4413 = vand.u32 %v3610, 4294901760
      %4414 = vmatpush1.msra.mxu0 %v4413
      %4415 = vmatprep.subr.mxu0 0.0
      %v4416 = vand.u32 %v3609, 4294901760
      %4417 = vmatpush1.msra.mxu0 %v4416
      %4418 = vmatprep.subr.mxu0 0.0
      %v4419 = vand.u32 %v3608, 4294901760
      %4420 = vmatpush1.msra.mxu0 %v4419
      %4421 = vmatprep.subr.mxu0 0.0
      %v4422 = vand.u32 %v3607, 4294901760
      %4423 = vmatpush1.msra.mxu0 %v4422
      %4424 = vmatprep.subr.mxu0 0.0
      %v4425 = vand.u32 %v3606, 4294901760
      %4426 = vmatpush1.msra.mxu0 %v4425
      %4427 = vmatprep.subr.mxu0 0.0
      %4428 = vmatpush2.msra.mxu0 0.0
      %4429 = vmatprep.subr.mxu0 0.0
      %4430 = vmatpush2.msra.mxu0 0.0
      %4431 = vmatprep.subr.mxu0 0.0
      %4432 = vmatpush2.msra.mxu0 0.0
      %4433 = vmatprep.subr.mxu0 0.0
      %4434 = vmatpush2.msra.mxu0 0.0
      %4435 = vmatprep.subr.mxu0 0.0
      %4436 = vmatpush2.msra.mxu0 0.0
      %4437 = vmatprep.subr.mxu0 0.0
      %4438 = vmatpush2.msra.mxu0 0.0
      %4439 = vmatprep.subr.mxu0 0.0
      %4440 = vmatpush2.msra.mxu0 0.0
      %4441 = vmatprep.subr.mxu0 0.0
      %4442 = vmatpush2.msra.mxu0 0.0
      %4443 = vmatprep.subr.mxu0 0.0
      %4444 = vmatpush2.msra.mxu0 0.0
      %4445 = vmatprep.subr.mxu0 0.0
      %4446 = vmatpush2.msra.mxu0 0.0
      %4447 = vmatprep.subr.mxu0 0.0
      %4448 = vmatpush2.msra.mxu0 0.0
      %4449 = vmatprep.subr.mxu0 0.0
      %4450 = vmatpush2.msra.mxu0 0.0
      %4451 = vmatprep.subr.mxu0 0.0
      %4452 = vmatpush2.msra.mxu0 0.0
      %4453 = vmatprep.subr.mxu0 0.0
      %4454 = vmatpush2.msra.mxu0 0.0
      %4455 = vmatprep.subr.mxu0 0.0
      %4456 = vmatpush2.msra.mxu0 0.0
      %4457 = vmatprep.subr.mxu0 0.0
      %4458 = vmatpush2.msra.mxu0 0.0
      %4459 = vmatprep.mubr.f32.mxu0 0.0
      %v4460 = vand.u32 %v2693, 4294901760
      %4461 = vmatmul.mubr.f32.gmra.mxu0 %v4460
      %v4462 = vpop.f32.mrf.mxu0
      %v4463 = vadd.f32 %v4338, %v4462
      %v4464 = vpop.f32.mrf.mxu0
      %4465 = vmatprep.mubr.f32.mxu0 0.0
      %v4466 = vand.u32 %v2696, 4294901760
      %4467 = vmatmul.mubr.f32.gmra.mxu0 %v4466
      %v4468 = vpop.f32.mrf.mxu0
      %v4469 = vadd.f32 %v4344, %v4468
      %v4470 = vpop.f32.mrf.mxu0
      %4471 = vmatprep.mubr.f32.mxu0 0.0
      %v4472 = vand.u32 %v2699, 4294901760
      %4473 = vmatmul.mubr.f32.gmra.mxu0 %v4472
      %v4474 = vpop.f32.mrf.mxu0
      %v4475 = vadd.f32 %v4350, %v4474
      %v4476 = vpop.f32.mrf.mxu0
      %4477 = vmatprep.mubr.f32.mxu0 0.0
      %v4478 = vand.u32 %v2702, 4294901760
      %4479 = vmatmul.mubr.f32.gmra.mxu0 %v4478
      %v4480 = vpop.f32.mrf.mxu0
      %v4481 = vadd.f32 %v4356, %v4480
      %v4482 = vpop.f32.mrf.mxu0
      %4483 = vmatprep.mubr.f32.mxu0 0.0
      %v4484 = vand.u32 %v2705, 4294901760
      %4485 = vmatmul.mubr.f32.gmra.mxu0 %v4484
      %v4486 = vpop.f32.mrf.mxu0
      %v4487 = vadd.f32 %v4362, %v4486
      %v4488 = vpop.f32.mrf.mxu0
      %4489 = vmatprep.mubr.f32.mxu0 0.0
      %v4490 = vand.u32 %v2708, 4294901760
      %4491 = vmatmul.mubr.f32.gmra.mxu0 %v4490
      %v4492 = vpop.f32.mrf.mxu0
      %v4493 = vadd.f32 %v4368, %v4492
      %v4494 = vpop.f32.mrf.mxu0
      %4495 = vmatprep.mubr.f32.mxu0 0.0
      %v4496 = vand.u32 %v2711, 4294901760
      %4497 = vmatmul.mubr.f32.gmra.mxu0 %v4496
      %v4498 = vpop.f32.mrf.mxu0
      %v4499 = vadd.f32 %v4374, %v4498
      %v4500 = vpop.f32.mrf.mxu0
      %4501 = vmatprep.mubr.f32.mxu0 0.0
      %v4502 = vand.u32 %v2714, 4294901760
      %4503 = vmatmul.mubr.f32.gmra.mxu0 %v4502
      %v4504 = vpop.f32.mrf.mxu0
      %v4505 = vadd.f32 %v4380, %v4504
      %v4506 = vpop.f32.mrf.mxu0
      %4507 = vdwg.mxu0
      %v4508 = vmax.f32 %v2670, 1.0
      %v4509 = vmax.f32 %v2673, 1.0
      %v4510 = vmax.f32 %v2676, 1.0
      %v4511 = vmax.f32 %v2679, 1.0
      %v4512 = vmax.f32 %v2682, 1.0
      %v4513 = vmax.f32 %v2685, 1.0
      %v4514 = vmax.f32 %v2688, 1.0
      %v4515 = vmax.f32 %v2691, 1.0
      %v4516 = vrcp.pop %v4508
      %v4517 = vmul.f32 %v3561, %v4516
      %v4518 = vrcp.pop %v4509
      %v4519 = vmul.f32 %v3567, %v4518
      %v4520 = vrcp.pop %v4510
      %v4521 = vmul.f32 %v3573, %v4520
      %v4522 = vrcp.pop %v4511
      %v4523 = vmul.f32 %v3579, %v4522
      %v4524 = vrcp.pop %v4512
      %v4525 = vmul.f32 %v3585, %v4524
      %v4526 = vrcp.pop %v4513
      %v4527 = vmul.f32 %v3591, %v4526
      %v4528 = vrcp.pop %v4514
      %v4529 = vmul.f32 %v3597, %v4528
      %v4530 = vrcp.pop %v4515
      %v4531 = vmul.f32 %v3603, %v4530
      %v4532 = vmul.f32 %v3561, %v3561
      %v4533 = vmul.f32 %v3567, %v3567
      %v4534 = vmul.f32 %v3573, %v3573
      %v4535 = vmul.f32 %v3579, %v3579
      %v4536 = vmul.f32 %v3585, %v3585
      %v4537 = vmul.f32 %v3591, %v3591
      %v4538 = vmul.f32 %v3597, %v3597
      %v4539 = vmul.f32 %v3603, %v3603
      %v4540 = vsub.f32 %v4463, %v4532
      %v4541 = vsub.f32 %v4469, %v4533
      %v4542 = vsub.f32 %v4475, %v4534
      %v4543 = vsub.f32 %v4481, %v4535
      %v4544 = vsub.f32 %v4487, %v4536
      %v4545 = vsub.f32 %v4493, %v4537
      %v4546 = vsub.f32 %v4499, %v4538
      %v4547 = vsub.f32 %v4505, %v4539
      %v4548 = vmax.f32 %v4540, 1e-08
      %v4549 = vmax.f32 %v4541, 1e-08
      %v4550 = vmax.f32 %v4542, 1e-08
      %v4551 = vmax.f32 %v4543, 1e-08
      %v4552 = vmax.f32 %v4544, 1e-08
      %v4553 = vmax.f32 %v4545, 1e-08
      %v4554 = vmax.f32 %v4546, 1e-08
      %v4555 = vmax.f32 %v4547, 1e-08
      %v4556 = vrsqrt.pop %v4548
      %v4557 = vmul.f32 %v4548, %v4556
      %vm4558 = vcmp.eq.f32.partialorder %v4548, inf
      %v4559 = vsel %vm4558, %v4548, %v4557
      %vm4560 = vcmp.eq.f32.partialorder %v4548, 0.0
      %v4561 = vand.u32 %v4548, 2147483648
      %v4562 = vsel %vm4560, %v4561, %v4559
      %v4563 = vrsqrt.pop %v4549
      %v4564 = vmul.f32 %v4549, %v4563
      %vm4565 = vcmp.eq.f32.partialorder %v4549, inf
      %v4566 = vsel %vm4565, %v4549, %v4564
      %vm4567 = vcmp.eq.f32.partialorder %v4549, 0.0
      %v4568 = vand.u32 %v4549, 2147483648
      %v4569 = vsel %vm4567, %v4568, %v4566
      %v4570 = vrsqrt.pop %v4550
      %v4571 = vmul.f32 %v4550, %v4570
      %vm4572 = vcmp.eq.f32.partialorder %v4550, inf
      %v4573 = vsel %vm4572, %v4550, %v4571
      %vm4574 = vcmp.eq.f32.partialorder %v4550, 0.0
      %v4575 = vand.u32 %v4550, 2147483648
      %v4576 = vsel %vm4574, %v4575, %v4573
      %v4577 = vrsqrt.pop %v4551
      %v4578 = vmul.f32 %v4551, %v4577
      %vm4579 = vcmp.eq.f32.partialorder %v4551, inf
      %v4580 = vsel %vm4579, %v4551, %v4578
      %vm4581 = vcmp.eq.f32.partialorder %v4551, 0.0
      %v4582 = vand.u32 %v4551, 2147483648
      %v4583 = vsel %vm4581, %v4582, %v4580
      %v4584 = vrsqrt.pop %v4552
      %v4585 = vmul.f32 %v4552, %v4584
      %vm4586 = vcmp.eq.f32.partialorder %v4552, inf
      %v4587 = vsel %vm4586, %v4552, %v4585
      %vm4588 = vcmp.eq.f32.partialorder %v4552, 0.0
      %v4589 = vand.u32 %v4552, 2147483648
      %v4590 = vsel %vm4588, %v4589, %v4587
      %v4591 = vrsqrt.pop %v4553
      %v4592 = vmul.f32 %v4553, %v4591
      %vm4593 = vcmp.eq.f32.partialorder %v4553, inf
      %v4594 = vsel %vm4593, %v4553, %v4592
      %vm4595 = vcmp.eq.f32.partialorder %v4553, 0.0
      %v4596 = vand.u32 %v4553, 2147483648
      %v4597 = vsel %vm4595, %v4596, %v4594
      %v4598 = vrsqrt.pop %v4554
      %v4599 = vmul.f32 %v4554, %v4598
      %vm4600 = vcmp.eq.f32.partialorder %v4554, inf
      %v4601 = vsel %vm4600, %v4554, %v4599
      %vm4602 = vcmp.eq.f32.partialorder %v4554, 0.0
      %v4603 = vand.u32 %v4554, 2147483648
      %v4604 = vsel %vm4602, %v4603, %v4601
      %v4605 = vrsqrt.pop %v4555
      %v4606 = vmul.f32 %v4555, %v4605
      %vm4607 = vcmp.eq.f32.partialorder %v4555, inf
      %v4608 = vsel %vm4607, %v4555, %v4606
      %vm4609 = vcmp.eq.f32.partialorder %v4555, 0.0
      %v4610 = vand.u32 %v4555, 2147483648
      %v4611 = vsel %vm4609, %v4610, %v4608
      %4615 = vrot.lane.b32.xlu0 %v2634, 32
      %v4616 = vpop.permute.xlu0 %4615
      %4617 = vrot.lane.b32.xlu0 %v2635, 32
      %v4618 = vpop.permute.xlu0 %4617
      %4619 = vrot.lane.b32.xlu0 %v2636, 32
      %v4620 = vpop.permute.xlu0 %4619
      %4627 = vrot.lane.b32.xlu0 %v2637, 64
      %v4628 = vpop.permute.xlu0 %4627
      %4629 = vrot.lane.b32.xlu0 %v2638, 64
      %v4630 = vpop.permute.xlu0 %4629
      %4631 = vrot.lane.b32.xlu0 %v2639, 64
      %v4632 = vpop.permute.xlu0 %4631
      %4639 = vrot.lane.b32.xlu0 %v2640, 96
      %v4640 = vpop.permute.xlu0 %4639
      %4641 = vrot.lane.b32.xlu0 %v2641, 96
      %v4642 = vpop.permute.xlu0 %4641
      %4643 = vrot.lane.b32.xlu0 %v2642, 96
      %v4644 = vpop.permute.xlu0 %4643
      %v4648 = vsel %vm490, %v2631, %v4616
      %v4649 = vsel %vm490, %v2632, %v4618
      %v4650 = vsel %vm490, %v2633, %v4620
      %vm4651 = vcmask 523264
      %v4652 = vsel %vm4651, %v4648, %v4628
      %v4653 = vsel %vm4651, %v4649, %v4630
      %v4654 = vsel %vm4651, %v4650, %v4632
      %v4655 = vsel %vm1621, %v4652, %v4640
      %v4656 = vsel %vm1621, %v4653, %v4642
      %v4657 = vsel %vm1621, %v4654, %v4644
      %v4658 = vld [vmem:[%s301] sm:$0xff]
      %v4659 = vld [vmem:[%s301 + $0x8] sm:$0xff]
      %v4660 = vld [vmem:[%s301 + $0x10] sm:$0xff]
      %vm4661 = vcmp.eq.s32.totalorder %v4658, 0
      %vm4662 = vcmp.eq.s32.totalorder %v4659, 0
      %vm4663 = vcmp.eq.s32.totalorder %v4660, 0
      %v4664 = vsel %vm4661, %v4655, -3e+38
      %v4665 = vsel %vm4662, %v4656, -3e+38
      %v4666 = vsel %vm4663, %v4657, -3e+38
      %v4667 = vmax.f32 %v4664, %v4665
      %v4668 = vmax.f32 %v4667, %v4666
      %v4669 = vrot.slane %v4668, 4
      %v4670 = vmax.f32 %v4668, %v4669
      %v4671 = vrot.slane %v4670, 2
      %v4672 = vmax.f32 %v4670, %v4671
      %v4673 = vrot.slane %v4672, 1
      %v4674 = vmax.f32 %v4672, %v4673
      %v4675 = vsel %vm4661, %v4655, 3e+38
      %v4676 = vsel %vm4662, %v4656, 3e+38
      %v4677 = vsel %vm4663, %v4657, 3e+38
      %v4678 = vmin.f32 %v4675, %v4676
      %v4679 = vmin.f32 %v4678, %v4677
      %v4680 = vrot.slane %v4679, 4
      %v4681 = vmin.f32 %v4679, %v4680
      %v4682 = vrot.slane %v4681, 2
      %v4683 = vmin.f32 %v4681, %v4682
      %v4684 = vrot.slane %v4683, 1
      %v4685 = vmin.f32 %v4683, %v4684
      %vm4686 = vcmp.eq.s32.totalorder %v4658, 1
      %vm4687 = vcmp.eq.s32.totalorder %v4659, 1
      %vm4688 = vcmp.eq.s32.totalorder %v4660, 1
      %v4689 = vsel %vm4686, %v4655, -3e+38
      %v4690 = vsel %vm4687, %v4656, -3e+38
      %v4691 = vsel %vm4688, %v4657, -3e+38
      %v4692 = vmax.f32 %v4689, %v4690
      %v4693 = vmax.f32 %v4692, %v4691
      %v4694 = vrot.slane %v4693, 4
      %v4695 = vmax.f32 %v4693, %v4694
      %v4696 = vrot.slane %v4695, 2
      %v4697 = vmax.f32 %v4695, %v4696
      %v4698 = vrot.slane %v4697, 1
      %v4699 = vmax.f32 %v4697, %v4698
      %v4700 = vsel %vm4686, %v4655, 3e+38
      %v4701 = vsel %vm4687, %v4656, 3e+38
      %v4702 = vsel %vm4688, %v4657, 3e+38
      %v4703 = vmin.f32 %v4700, %v4701
      %v4704 = vmin.f32 %v4703, %v4702
      %v4705 = vrot.slane %v4704, 4
      %v4706 = vmin.f32 %v4704, %v4705
      %v4707 = vrot.slane %v4706, 2
      %v4708 = vmin.f32 %v4706, %v4707
      %v4709 = vrot.slane %v4708, 1
      %v4710 = vmin.f32 %v4708, %v4709
      %vm4711 = vcmp.eq.s32.totalorder %v4658, 2
      %vm4712 = vcmp.eq.s32.totalorder %v4659, 2
      %vm4713 = vcmp.eq.s32.totalorder %v4660, 2
      %v4714 = vsel %vm4711, %v4655, -3e+38
      %v4715 = vsel %vm4712, %v4656, -3e+38
      %v4716 = vsel %vm4713, %v4657, -3e+38
      %v4717 = vmax.f32 %v4714, %v4715
      %v4718 = vmax.f32 %v4717, %v4716
      %v4719 = vrot.slane %v4718, 4
      %v4720 = vmax.f32 %v4718, %v4719
      %v4721 = vrot.slane %v4720, 2
      %v4722 = vmax.f32 %v4720, %v4721
      %v4723 = vrot.slane %v4722, 1
      %v4724 = vmax.f32 %v4722, %v4723
      %v4725 = vsel %vm4711, %v4655, 3e+38
      %v4726 = vsel %vm4712, %v4656, 3e+38
      %v4727 = vsel %vm4713, %v4657, 3e+38
      %v4728 = vmin.f32 %v4725, %v4726
      %v4729 = vmin.f32 %v4728, %v4727
      %v4730 = vrot.slane %v4729, 4
      %v4731 = vmin.f32 %v4729, %v4730
      %v4732 = vrot.slane %v4731, 2
      %v4733 = vmin.f32 %v4731, %v4732
      %v4734 = vrot.slane %v4733, 1
      %v4735 = vmin.f32 %v4733, %v4734
      %vm4736 = vcmp.eq.s32.totalorder %v4658, 3
      %vm4737 = vcmp.eq.s32.totalorder %v4659, 3
      %vm4738 = vcmp.eq.s32.totalorder %v4660, 3
      %v4739 = vsel %vm4736, %v4655, -3e+38
      %v4740 = vsel %vm4737, %v4656, -3e+38
      %v4741 = vsel %vm4738, %v4657, -3e+38
      %v4742 = vmax.f32 %v4739, %v4740
      %v4743 = vmax.f32 %v4742, %v4741
      %v4744 = vrot.slane %v4743, 4
      %v4745 = vmax.f32 %v4743, %v4744
      %v4746 = vrot.slane %v4745, 2
      %v4747 = vmax.f32 %v4745, %v4746
      %v4748 = vrot.slane %v4747, 1
      %v4749 = vmax.f32 %v4747, %v4748
      %v4750 = vsel %vm4736, %v4655, 3e+38
      %v4751 = vsel %vm4737, %v4656, 3e+38
      %v4752 = vsel %vm4738, %v4657, 3e+38
      %v4753 = vmin.f32 %v4750, %v4751
      %v4754 = vmin.f32 %v4753, %v4752
      %v4755 = vrot.slane %v4754, 4
      %v4756 = vmin.f32 %v4754, %v4755
      %v4757 = vrot.slane %v4756, 2
      %v4758 = vmin.f32 %v4756, %v4757
      %v4759 = vrot.slane %v4758, 1
      %v4760 = vmin.f32 %v4758, %v4759
      %vm4761 = vcmp.eq.s32.totalorder %v4658, 4
      %vm4762 = vcmp.eq.s32.totalorder %v4659, 4
      %vm4763 = vcmp.eq.s32.totalorder %v4660, 4
      %v4764 = vsel %vm4761, %v4655, -3e+38
      %v4765 = vsel %vm4762, %v4656, -3e+38
      %v4766 = vsel %vm4763, %v4657, -3e+38
      %v4767 = vmax.f32 %v4764, %v4765
      %v4768 = vmax.f32 %v4767, %v4766
      %v4769 = vrot.slane %v4768, 4
      %v4770 = vmax.f32 %v4768, %v4769
      %v4771 = vrot.slane %v4770, 2
      %v4772 = vmax.f32 %v4770, %v4771
      %v4773 = vrot.slane %v4772, 1
      %v4774 = vmax.f32 %v4772, %v4773
      %v4775 = vsel %vm4761, %v4655, 3e+38
      %v4776 = vsel %vm4762, %v4656, 3e+38
      %v4777 = vsel %vm4763, %v4657, 3e+38
      %v4778 = vmin.f32 %v4775, %v4776
      %v4779 = vmin.f32 %v4778, %v4777
      %v4780 = vrot.slane %v4779, 4
      %v4781 = vmin.f32 %v4779, %v4780
      %v4782 = vrot.slane %v4781, 2
      %v4783 = vmin.f32 %v4781, %v4782
      %v4784 = vrot.slane %v4783, 1
      %v4785 = vmin.f32 %v4783, %v4784
      %vm4786 = vcmp.eq.s32.totalorder %v4658, 5
      %vm4787 = vcmp.eq.s32.totalorder %v4659, 5
      %vm4788 = vcmp.eq.s32.totalorder %v4660, 5
      %v4789 = vsel %vm4786, %v4655, -3e+38
      %v4790 = vsel %vm4787, %v4656, -3e+38
      %v4791 = vsel %vm4788, %v4657, -3e+38
      %v4792 = vmax.f32 %v4789, %v4790
      %v4793 = vmax.f32 %v4792, %v4791
      %v4794 = vrot.slane %v4793, 4
      %v4795 = vmax.f32 %v4793, %v4794
      %v4796 = vrot.slane %v4795, 2
      %v4797 = vmax.f32 %v4795, %v4796
      %v4798 = vrot.slane %v4797, 1
      %v4799 = vmax.f32 %v4797, %v4798
      %v4800 = vsel %vm4786, %v4655, 3e+38
      %v4801 = vsel %vm4787, %v4656, 3e+38
      %v4802 = vsel %vm4788, %v4657, 3e+38
      %v4803 = vmin.f32 %v4800, %v4801
      %v4804 = vmin.f32 %v4803, %v4802
      %v4805 = vrot.slane %v4804, 4
      %v4806 = vmin.f32 %v4804, %v4805
      %v4807 = vrot.slane %v4806, 2
      %v4808 = vmin.f32 %v4806, %v4807
      %v4809 = vrot.slane %v4808, 1
      %v4810 = vmin.f32 %v4808, %v4809
      %vm4811 = vcmp.eq.s32.totalorder %v4658, 6
      %vm4812 = vcmp.eq.s32.totalorder %v4659, 6
      %vm4813 = vcmp.eq.s32.totalorder %v4660, 6
      %v4814 = vsel %vm4811, %v4655, -3e+38
      %v4815 = vsel %vm4812, %v4656, -3e+38
      %v4816 = vsel %vm4813, %v4657, -3e+38
      %v4817 = vmax.f32 %v4814, %v4815
      %v4818 = vmax.f32 %v4817, %v4816
      %v4819 = vrot.slane %v4818, 4
      %v4820 = vmax.f32 %v4818, %v4819
      %v4821 = vrot.slane %v4820, 2
      %v4822 = vmax.f32 %v4820, %v4821
      %v4823 = vrot.slane %v4822, 1
      %v4824 = vmax.f32 %v4822, %v4823
      %v4825 = vsel %vm4811, %v4655, 3e+38
      %v4826 = vsel %vm4812, %v4656, 3e+38
      %v4827 = vsel %vm4813, %v4657, 3e+38
      %v4828 = vmin.f32 %v4825, %v4826
      %v4829 = vmin.f32 %v4828, %v4827
      %v4830 = vrot.slane %v4829, 4
      %v4831 = vmin.f32 %v4829, %v4830
      %v4832 = vrot.slane %v4831, 2
      %v4833 = vmin.f32 %v4831, %v4832
      %v4834 = vrot.slane %v4833, 1
      %v4835 = vmin.f32 %v4833, %v4834
      %vm4836 = vcmp.eq.s32.totalorder %v4658, 7
      %vm4837 = vcmp.eq.s32.totalorder %v4659, 7
      %vm4838 = vcmp.eq.s32.totalorder %v4660, 7
      %v4839 = vsel %vm4836, %v4655, -3e+38
      %v4840 = vsel %vm4837, %v4656, -3e+38
      %v4841 = vsel %vm4838, %v4657, -3e+38
      %v4842 = vmax.f32 %v4839, %v4840
      %v4843 = vmax.f32 %v4842, %v4841
      %v4844 = vrot.slane %v4843, 4
      %v4845 = vmax.f32 %v4843, %v4844
      %v4846 = vrot.slane %v4845, 2
      %v4847 = vmax.f32 %v4845, %v4846
      %v4848 = vrot.slane %v4847, 1
      %v4849 = vmax.f32 %v4847, %v4848
      %v4850 = vsel %vm4836, %v4655, 3e+38
      %v4851 = vsel %vm4837, %v4656, 3e+38
      %v4852 = vsel %vm4838, %v4657, 3e+38
      %v4853 = vmin.f32 %v4850, %v4851
      %v4854 = vmin.f32 %v4853, %v4852
      %v4855 = vrot.slane %v4854, 4
      %v4856 = vmin.f32 %v4854, %v4855
      %v4857 = vrot.slane %v4856, 2
      %v4858 = vmin.f32 %v4856, %v4857
      %v4859 = vrot.slane %v4858, 1
      %v4860 = vmin.f32 %v4858, %v4859
      %vm4861 = vcmp.eq.s32.totalorder %v4658, 8
      %vm4862 = vcmp.eq.s32.totalorder %v4659, 8
      %vm4863 = vcmp.eq.s32.totalorder %v4660, 8
      %v4864 = vsel %vm4861, %v4655, -3e+38
      %v4865 = vsel %vm4862, %v4656, -3e+38
      %v4866 = vsel %vm4863, %v4657, -3e+38
      %v4867 = vmax.f32 %v4864, %v4865
      %v4868 = vmax.f32 %v4867, %v4866
      %v4869 = vrot.slane %v4868, 4
      %v4870 = vmax.f32 %v4868, %v4869
      %v4871 = vrot.slane %v4870, 2
      %v4872 = vmax.f32 %v4870, %v4871
      %v4873 = vrot.slane %v4872, 1
      %v4874 = vmax.f32 %v4872, %v4873
      %v4875 = vsel %vm4861, %v4655, 3e+38
      %v4876 = vsel %vm4862, %v4656, 3e+38
      %v4877 = vsel %vm4863, %v4657, 3e+38
      %v4878 = vmin.f32 %v4875, %v4876
      %v4879 = vmin.f32 %v4878, %v4877
      %v4880 = vrot.slane %v4879, 4
      %v4881 = vmin.f32 %v4879, %v4880
      %v4882 = vrot.slane %v4881, 2
      %v4883 = vmin.f32 %v4881, %v4882
      %v4884 = vrot.slane %v4883, 1
      %v4885 = vmin.f32 %v4883, %v4884
      %vm4886 = vcmp.eq.s32.totalorder %v4658, 9
      %vm4887 = vcmp.eq.s32.totalorder %v4659, 9
      %vm4888 = vcmp.eq.s32.totalorder %v4660, 9
      %v4889 = vsel %vm4886, %v4655, -3e+38
      %v4890 = vsel %vm4887, %v4656, -3e+38
      %v4891 = vsel %vm4888, %v4657, -3e+38
      %v4892 = vmax.f32 %v4889, %v4890
      %v4893 = vmax.f32 %v4892, %v4891
      %v4894 = vrot.slane %v4893, 4
      %v4895 = vmax.f32 %v4893, %v4894
      %v4896 = vrot.slane %v4895, 2
      %v4897 = vmax.f32 %v4895, %v4896
      %v4898 = vrot.slane %v4897, 1
      %v4899 = vmax.f32 %v4897, %v4898
      %v4900 = vsel %vm4886, %v4655, 3e+38
      %v4901 = vsel %vm4887, %v4656, 3e+38
      %v4902 = vsel %vm4888, %v4657, 3e+38
      %v4903 = vmin.f32 %v4900, %v4901
      %v4904 = vmin.f32 %v4903, %v4902
      %v4905 = vrot.slane %v4904, 4
      %v4906 = vmin.f32 %v4904, %v4905
      %v4907 = vrot.slane %v4906, 2
      %v4908 = vmin.f32 %v4906, %v4907
      %v4909 = vrot.slane %v4908, 1
      %v4910 = vmin.f32 %v4908, %v4909
      %vm4911 = vcmp.eq.s32.totalorder %v4658, 10
      %vm4912 = vcmp.eq.s32.totalorder %v4659, 10
      %vm4913 = vcmp.eq.s32.totalorder %v4660, 10
      %v4914 = vsel %vm4911, %v4655, -3e+38
      %v4915 = vsel %vm4912, %v4656, -3e+38
      %v4916 = vsel %vm4913, %v4657, -3e+38
      %v4917 = vmax.f32 %v4914, %v4915
      %v4918 = vmax.f32 %v4917, %v4916
      %v4919 = vrot.slane %v4918, 4
      %v4920 = vmax.f32 %v4918, %v4919
      %v4921 = vrot.slane %v4920, 2
      %v4922 = vmax.f32 %v4920, %v4921
      %v4923 = vrot.slane %v4922, 1
      %v4924 = vmax.f32 %v4922, %v4923
      %v4925 = vsel %vm4911, %v4655, 3e+38
      %v4926 = vsel %vm4912, %v4656, 3e+38
      %v4927 = vsel %vm4913, %v4657, 3e+38
      %v4928 = vmin.f32 %v4925, %v4926
      %v4929 = vmin.f32 %v4928, %v4927
      %v4930 = vrot.slane %v4929, 4
      %v4931 = vmin.f32 %v4929, %v4930
      %v4932 = vrot.slane %v4931, 2
      %v4933 = vmin.f32 %v4931, %v4932
      %v4934 = vrot.slane %v4933, 1
      %v4935 = vmin.f32 %v4933, %v4934
      %vm4936 = vcmp.eq.s32.totalorder %v4658, 11
      %vm4937 = vcmp.eq.s32.totalorder %v4659, 11
      %vm4938 = vcmp.eq.s32.totalorder %v4660, 11
      %v4939 = vsel %vm4936, %v4655, -3e+38
      %v4940 = vsel %vm4937, %v4656, -3e+38
      %v4941 = vsel %vm4938, %v4657, -3e+38
      %v4942 = vmax.f32 %v4939, %v4940
      %v4943 = vmax.f32 %v4942, %v4941
      %v4944 = vrot.slane %v4943, 4
      %v4945 = vmax.f32 %v4943, %v4944
      %v4946 = vrot.slane %v4945, 2
      %v4947 = vmax.f32 %v4945, %v4946
      %v4948 = vrot.slane %v4947, 1
      %v4949 = vmax.f32 %v4947, %v4948
      %v4950 = vsel %vm4936, %v4655, 3e+38
      %v4951 = vsel %vm4937, %v4656, 3e+38
      %v4952 = vsel %vm4938, %v4657, 3e+38
      %v4953 = vmin.f32 %v4950, %v4951
      %v4954 = vmin.f32 %v4953, %v4952
      %v4955 = vrot.slane %v4954, 4
      %v4956 = vmin.f32 %v4954, %v4955
      %v4957 = vrot.slane %v4956, 2
      %v4958 = vmin.f32 %v4956, %v4957
      %v4959 = vrot.slane %v4958, 1
      %v4960 = vmin.f32 %v4958, %v4959
      %vm4961 = vcmp.eq.s32.totalorder %v4658, 12
      %vm4962 = vcmp.eq.s32.totalorder %v4659, 12
      %vm4963 = vcmp.eq.s32.totalorder %v4660, 12
      %v4964 = vsel %vm4961, %v4655, -3e+38
      %v4965 = vsel %vm4962, %v4656, -3e+38
      %v4966 = vsel %vm4963, %v4657, -3e+38
      %v4967 = vmax.f32 %v4964, %v4965
      %v4968 = vmax.f32 %v4967, %v4966
      %v4969 = vrot.slane %v4968, 4
      %v4970 = vmax.f32 %v4968, %v4969
      %v4971 = vrot.slane %v4970, 2
      %v4972 = vmax.f32 %v4970, %v4971
      %v4973 = vrot.slane %v4972, 1
      %v4974 = vmax.f32 %v4972, %v4973
      %v4975 = vsel %vm4961, %v4655, 3e+38
      %v4976 = vsel %vm4962, %v4656, 3e+38
      %v4977 = vsel %vm4963, %v4657, 3e+38
      %v4978 = vmin.f32 %v4975, %v4976
      %v4979 = vmin.f32 %v4978, %v4977
      %v4980 = vrot.slane %v4979, 4
      %v4981 = vmin.f32 %v4979, %v4980
      %v4982 = vrot.slane %v4981, 2
      %v4983 = vmin.f32 %v4981, %v4982
      %v4984 = vrot.slane %v4983, 1
      %v4985 = vmin.f32 %v4983, %v4984
      %vm4986 = vcmp.eq.s32.totalorder %v4658, 13
      %vm4987 = vcmp.eq.s32.totalorder %v4659, 13
      %vm4988 = vcmp.eq.s32.totalorder %v4660, 13
      %v4989 = vsel %vm4986, %v4655, -3e+38
      %v4990 = vsel %vm4987, %v4656, -3e+38
      %v4991 = vsel %vm4988, %v4657, -3e+38
      %v4992 = vmax.f32 %v4989, %v4990
      %v4993 = vmax.f32 %v4992, %v4991
      %v4994 = vrot.slane %v4993, 4
      %v4995 = vmax.f32 %v4993, %v4994
      %v4996 = vrot.slane %v4995, 2
      %v4997 = vmax.f32 %v4995, %v4996
      %v4998 = vrot.slane %v4997, 1
      %v4999 = vmax.f32 %v4997, %v4998
      %v5000 = vsel %vm4986, %v4655, 3e+38
      %v5001 = vsel %vm4987, %v4656, 3e+38
      %v5002 = vsel %vm4988, %v4657, 3e+38
      %v5003 = vmin.f32 %v5000, %v5001
      %v5004 = vmin.f32 %v5003, %v5002
      %v5005 = vrot.slane %v5004, 4
      %v5006 = vmin.f32 %v5004, %v5005
      %v5007 = vrot.slane %v5006, 2
      %v5008 = vmin.f32 %v5006, %v5007
      %v5009 = vrot.slane %v5008, 1
      %v5010 = vmin.f32 %v5008, %v5009
      %vm5011 = vcmp.eq.s32.totalorder %v4658, 14
      %vm5012 = vcmp.eq.s32.totalorder %v4659, 14
      %vm5013 = vcmp.eq.s32.totalorder %v4660, 14
      %v5014 = vsel %vm5011, %v4655, -3e+38
      %v5015 = vsel %vm5012, %v4656, -3e+38
      %v5016 = vsel %vm5013, %v4657, -3e+38
      %v5017 = vmax.f32 %v5014, %v5015
      %v5018 = vmax.f32 %v5017, %v5016
      %v5019 = vrot.slane %v5018, 4
      %v5020 = vmax.f32 %v5018, %v5019
      %v5021 = vrot.slane %v5020, 2
      %v5022 = vmax.f32 %v5020, %v5021
      %v5023 = vrot.slane %v5022, 1
      %v5024 = vmax.f32 %v5022, %v5023
      %v5025 = vsel %vm5011, %v4655, 3e+38
      %v5026 = vsel %vm5012, %v4656, 3e+38
      %v5027 = vsel %vm5013, %v4657, 3e+38
      %v5028 = vmin.f32 %v5025, %v5026
      %v5029 = vmin.f32 %v5028, %v5027
      %v5030 = vrot.slane %v5029, 4
      %v5031 = vmin.f32 %v5029, %v5030
      %v5032 = vrot.slane %v5031, 2
      %v5033 = vmin.f32 %v5031, %v5032
      %v5034 = vrot.slane %v5033, 1
      %v5035 = vmin.f32 %v5033, %v5034
      %vm5036 = vcmp.eq.s32.totalorder %v4658, 15
      %vm5037 = vcmp.eq.s32.totalorder %v4659, 15
      %vm5038 = vcmp.eq.s32.totalorder %v4660, 15
      %v5039 = vsel %vm5036, %v4655, -3e+38
      %v5040 = vsel %vm5037, %v4656, -3e+38
      %v5041 = vsel %vm5038, %v4657, -3e+38
      %v5042 = vmax.f32 %v5039, %v5040
      %v5043 = vmax.f32 %v5042, %v5041
      %v5044 = vrot.slane %v5043, 4
      %v5045 = vmax.f32 %v5043, %v5044
      %v5046 = vrot.slane %v5045, 2
      %v5047 = vmax.f32 %v5045, %v5046
      %v5048 = vrot.slane %v5047, 1
      %v5049 = vmax.f32 %v5047, %v5048
      %v5050 = vsel %vm5036, %v4655, 3e+38
      %v5051 = vsel %vm5037, %v4656, 3e+38
      %v5052 = vsel %vm5038, %v4657, 3e+38
      %v5053 = vmin.f32 %v5050, %v5051
      %v5054 = vmin.f32 %v5053, %v5052
      %v5055 = vrot.slane %v5054, 4
      %v5056 = vmin.f32 %v5054, %v5055
      %v5057 = vrot.slane %v5056, 2
      %v5058 = vmin.f32 %v5056, %v5057
      %v5059 = vrot.slane %v5058, 1
      %v5060 = vmin.f32 %v5058, %v5059
      %vm5061 = vcmask 1040384
      %v5062 = vsel %vm5061, %v4674, %v4699
      %v5063 = vsel %vm2155, %v5062, %v4724
      %vm5064 = vcmask 1042432
      %v5065 = vsel %vm5064, %v5063, %v4749
      %v5066 = vsel %vm345, %v5065, %v4774
      %vm5067 = vcmask 1044480
      %v5068 = vsel %vm5067, %v5066, %v4799
      %vm5069 = vcmask 1045504
      %v5070 = vsel %vm5069, %v5068, %v4824
      %vm5071 = vcmask 1046528
      %v5072 = vsel %vm5071, %v5070, %v4849
      %v5073 = vsel %vm5061, %v4874, %v4899
      %v5074 = vsel %vm2155, %v5073, %v4924
      %v5075 = vsel %vm5064, %v5074, %v4949
      %v5076 = vsel %vm345, %v5075, %v4974
      %v5077 = vsel %vm5067, %v5076, %v4999
      %v5078 = vsel %vm5069, %v5077, %v5024
      %v5079 = vsel %vm5071, %v5078, %v5049
      %v5080 = vsel %vm5061, %v4685, %v4710
      %v5081 = vsel %vm2155, %v5080, %v4735
      %v5082 = vsel %vm5064, %v5081, %v4760
      %v5083 = vsel %vm345, %v5082, %v4785
      %v5084 = vsel %vm5067, %v5083, %v4810
      %v5085 = vsel %vm5069, %v5084, %v4835
      %v5086 = vsel %vm5071, %v5085, %v4860
      %v5087 = vsel %vm5061, %v4885, %v4910
      %v5088 = vsel %vm2155, %v5087, %v4935
      %v5089 = vsel %vm5064, %v5088, %v4960
      %v5090 = vsel %vm345, %v5089, %v4985
      %v5091 = vsel %vm5067, %v5090, %v5010
      %v5092 = vsel %vm5069, %v5091, %v5035
      %v5093 = vsel %vm5071, %v5092, %v5060
      %5096 = vrot.lane.b32.xlu0 %v5072, 96
      %v5097 = vpop.permute.xlu0 %5096
      %5098 = vrot.lane.b32.xlu0 %v5079, 96
      %v5099 = vpop.permute.xlu0 %5098
      %5102 = vrot.lane.b32.xlu0 %v5072, 64
      %v5103 = vpop.permute.xlu0 %5102
      %5104 = vrot.lane.b32.xlu0 %v5079, 64
      %v5105 = vpop.permute.xlu0 %5104
      %5108 = vrot.lane.b32.xlu0 %v5072, 32
      %v5109 = vpop.permute.xlu0 %5108
      %5110 = vrot.lane.b32.xlu0 %v5079, 32
      %v5111 = vpop.permute.xlu0 %5110
      %5116 = vrot.lane.b32.xlu0 %v5086, 96
      %v5117 = vpop.permute.xlu0 %5116
      %5118 = vrot.lane.b32.xlu0 %v5093, 96
      %v5119 = vpop.permute.xlu0 %5118
      %5122 = vrot.lane.b32.xlu0 %v5086, 64
      %v5123 = vpop.permute.xlu0 %5122
      %5124 = vrot.lane.b32.xlu0 %v5093, 64
      %v5125 = vpop.permute.xlu0 %5124
      %5128 = vrot.lane.b32.xlu0 %v5086, 32
      %v5129 = vpop.permute.xlu0 %5128
      %5130 = vrot.lane.b32.xlu0 %v5093, 32
      %v5131 = vpop.permute.xlu0 %5130
      %vm5134 = vcmp.gt.f32.partialorder %v2670, 0.0
      %vm5135 = vcmp.gt.f32.partialorder %v2673, 0.0
      %vm5136 = vcmp.gt.f32.partialorder %v2676, 0.0
      %vm5137 = vcmp.gt.f32.partialorder %v2679, 0.0
      %vm5138 = vcmp.gt.f32.partialorder %v2682, 0.0
      %vm5139 = vcmp.gt.f32.partialorder %v2685, 0.0
      %vm5140 = vcmp.gt.f32.partialorder %v2688, 0.0
      %vm5141 = vcmp.gt.f32.partialorder %v2691, 0.0
      %v5142 = vsel %vm5134, 1, 0
      %v5143 = vsel %vm5135, 1, 0
      %v5144 = vsel %vm5136, 1, 0
      %v5145 = vsel %vm5137, 1, 0
      %v5146 = vsel %vm5138, 1, 0
      %v5147 = vsel %vm5139, 1, 0
      %v5148 = vsel %vm5140, 1, 0
      %v5149 = vsel %vm5141, 1, 0
      %vm5150 = vcmp.eq.s32.totalorder %v5142, 1
      %vm5151 = vcmp.eq.s32.totalorder %v5143, 1
      %vm5152 = vcmp.eq.s32.totalorder %v5144, 1
      %vm5153 = vcmp.eq.s32.totalorder %v5145, 1
      %vm5154 = vcmp.eq.s32.totalorder %v5146, 1
      %vm5155 = vcmp.eq.s32.totalorder %v5147, 1
      %vm5156 = vcmp.eq.s32.totalorder %v5148, 1
      %vm5157 = vcmp.eq.s32.totalorder %v5149, 1
      %v5158 = vsel %vm5150, %v5072, 0.0
      %v5159 = vsel %vm5151, %v5079, 0.0
      %v5160 = vsel %vm5152, %v5097, 0.0
      %v5161 = vsel %vm5153, %v5099, 0.0
      %v5162 = vsel %vm5154, %v5103, 0.0
      %v5163 = vsel %vm5155, %v5105, 0.0
      %v5164 = vsel %vm5156, %v5109, 0.0
      %v5165 = vsel %vm5157, %v5111, 0.0
      %v5166 = vsel %vm5150, %v5086, 0.0
      %v5167 = vsel %vm5151, %v5093, 0.0
      %v5168 = vsel %vm5152, %v5117, 0.0
      %v5169 = vsel %vm5153, %v5119, 0.0
      %v5170 = vsel %vm5154, %v5123, 0.0
      %v5171 = vsel %vm5155, %v5125, 0.0
      %v5172 = vsel %vm5156, %v5129, 0.0
      %v5173 = vsel %vm5157, %v5131, 0.0
      %v5174 = vld [vmem:[%s5 + $0x28] sm:$0xff]
      %v5175 = vld [vmem:[%s5 + $0x30] sm:$0xff]
      %v5176 = vld [vmem:[%s5 + $0x38] sm:$0xff]
      %v5177 = vld [vmem:[%s5 + $0x40] sm:$0xff]
      %v5178 = vpack.c.bf16 %v4519, %v4517
      %v5179 = vpack.c.bf16 %v4523, %v4521
      %v5180 = vpack.c.bf16 %v4527, %v4525
      %v5181 = vpack.c.bf16 %v4531, %v4529
      %v5182 = vpack.c.bf16 %v5175, %v5174
      %v5183 = vpack.c.bf16 %v5177, %v5176
      %v5184 = vld [vmem:[%s5 + $0x48] sm:$0xff]
      %v5185 = vld [vmem:[%s5 + $0x50] sm:$0xff]
      %v5186 = vld [vmem:[%s5 + $0x58] sm:$0xff]
      %v5187 = vld [vmem:[%s5 + $0x60] sm:$0xff]
      %v5188 = vpack.c.bf16 %v5159, %v5158
      %v5189 = vpack.c.bf16 %v5161, %v5160
      %v5190 = vpack.c.bf16 %v5163, %v5162
      %v5191 = vpack.c.bf16 %v5165, %v5164
      %v5192 = vpack.c.bf16 %v5185, %v5184
      %v5193 = vpack.c.bf16 %v5187, %v5186
      %v5195 = vsel %vm490, %v5188, 0
      %v5198 = vsel %vm490, %v5189, 0
      %v5201 = vsel %vm490, %v5190, 0
      %v5204 = vsel %vm490, %v5191, 0
      %5206 = vmatprep.subr.bf16.mxu0 0
      %5207 = vmatpush1.bf16.msra.mxu0 0
      %5208 = vmatprep.subr.bf16.mxu0 0
      %5209 = vmatpush1.bf16.msra.mxu0 0
      %5210 = vmatprep.subr.bf16.mxu0 0
      %5211 = vmatpush1.bf16.msra.mxu0 0
      %5212 = vmatprep.subr.bf16.mxu0 0
      %5213 = vmatpush1.bf16.msra.mxu0 0
      %5214 = vmatprep.subr.bf16.mxu0 0
      %5215 = vmatpush1.bf16.msra.mxu0 0
      %5216 = vmatprep.subr.bf16.mxu0 0
      %5217 = vmatpush1.bf16.msra.mxu0 0
      %5218 = vmatprep.subr.bf16.mxu0 0
      %5219 = vmatpush1.bf16.msra.mxu0 %v5193
      %5220 = vmatprep.subr.bf16.mxu0 0
      %5221 = vmatpush1.bf16.msra.mxu0 %v5192
      %5222 = vmatprep.subr.bf16.mxu0 0
      %5223 = vmatpush2.bf16.msra.mxu0 0
      %5224 = vmatprep.subr.bf16.mxu0 0
      %5225 = vmatpush2.bf16.msra.mxu0 0
      %5226 = vmatprep.subr.bf16.mxu0 0
      %5227 = vmatpush2.bf16.msra.mxu0 0
      %5228 = vmatprep.subr.bf16.mxu0 0
      %5229 = vmatpush2.bf16.msra.mxu0 0
      %5230 = vmatprep.subr.bf16.mxu0 0
      %5231 = vmatpush2.bf16.msra.mxu0 0
      %5232 = vmatprep.subr.bf16.mxu0 0
      %5233 = vmatpush2.bf16.msra.mxu0 0
      %5234 = vmatprep.subr.bf16.mxu0 0
      %5235 = vmatpush2.bf16.msra.mxu0 0
      %5236 = vmatprep.subr.bf16.mxu0 0
      %5237 = vmatpush2.bf16.msra.mxu0 0
      %5238 = vmatprep.mubr.bf16.mxu0 0
      %5239 = vmatmul.mubr.bf16.gmra.mxu0 %v5195
      %v5240 = vpop.f32.mrf.mxu0
      %v5241 = vadd.f32 0.0, %v5240
      %v5242 = vpop.f32.mrf.mxu0
      %v5243 = vpop.f32.mrf.mxu0
      %v5244 = vadd.f32 0.0, %v5243
      %v5245 = vpop.f32.mrf.mxu0
      %5246 = vmatprep.mubr.bf16.mxu0 0
      %5247 = vmatmul.mubr.bf16.gmra.mxu0 %v5198
      %v5248 = vpop.f32.mrf.mxu0
      %v5249 = vadd.f32 0.0, %v5248
      %v5250 = vpop.f32.mrf.mxu0
      %v5251 = vpop.f32.mrf.mxu0
      %v5252 = vadd.f32 0.0, %v5251
      %v5253 = vpop.f32.mrf.mxu0
      %5254 = vmatprep.mubr.bf16.mxu0 0
      %5255 = vmatmul.mubr.bf16.gmra.mxu0 %v5201
      %v5256 = vpop.f32.mrf.mxu0
      %v5257 = vadd.f32 0.0, %v5256
      %v5258 = vpop.f32.mrf.mxu0
      %v5259 = vpop.f32.mrf.mxu0
      %v5260 = vadd.f32 0.0, %v5259
      %v5261 = vpop.f32.mrf.mxu0
      %5262 = vmatprep.mubr.bf16.mxu0 0
      %5263 = vmatmul.mubr.bf16.gmra.mxu0 %v5204
      %v5264 = vpop.f32.mrf.mxu0
      %v5265 = vadd.f32 0.0, %v5264
      %v5266 = vpop.f32.mrf.mxu0
      %v5267 = vpop.f32.mrf.mxu0
      %v5268 = vadd.f32 0.0, %v5267
      %v5269 = vpop.f32.mrf.mxu0
      %5270 = vdwg.mxu0
      %v5272 = vsel %vm490, %v5178, 0
      %v5275 = vsel %vm490, %v5179, 0
      %v5278 = vsel %vm490, %v5180, 0
      %v5281 = vsel %vm490, %v5181, 0
      %5283 = vmatprep.subr.bf16.mxu0 0
      %5284 = vmatpush1.bf16.msra.mxu0 0
      %5285 = vmatprep.subr.bf16.mxu0 0
      %5286 = vmatpush1.bf16.msra.mxu0 0
      %5287 = vmatprep.subr.bf16.mxu0 0
      %5288 = vmatpush1.bf16.msra.mxu0 0
      %5289 = vmatprep.subr.bf16.mxu0 0
      %5290 = vmatpush1.bf16.msra.mxu0 0
      %5291 = vmatprep.subr.bf16.mxu0 0
      %5292 = vmatpush1.bf16.msra.mxu0 0
      %5293 = vmatprep.subr.bf16.mxu0 0
      %5294 = vmatpush1.bf16.msra.mxu0 0
      %5295 = vmatprep.subr.bf16.mxu0 0
      %5296 = vmatpush1.bf16.msra.mxu0 %v5183
      %5297 = vmatprep.subr.bf16.mxu0 0
      %5298 = vmatpush1.bf16.msra.mxu0 %v5182
      %5299 = vmatprep.subr.bf16.mxu0 0
      %5300 = vmatpush2.bf16.msra.mxu0 0
      %5301 = vmatprep.subr.bf16.mxu0 0
      %5302 = vmatpush2.bf16.msra.mxu0 0
      %5303 = vmatprep.subr.bf16.mxu0 0
      %5304 = vmatpush2.bf16.msra.mxu0 0
      %5305 = vmatprep.subr.bf16.mxu0 0
      %5306 = vmatpush2.bf16.msra.mxu0 0
      %5307 = vmatprep.subr.bf16.mxu0 0
      %5308 = vmatpush2.bf16.msra.mxu0 0
      %5309 = vmatprep.subr.bf16.mxu0 0
      %5310 = vmatpush2.bf16.msra.mxu0 0
      %5311 = vmatprep.subr.bf16.mxu0 0
      %5312 = vmatpush2.bf16.msra.mxu0 0
      %5313 = vmatprep.subr.bf16.mxu0 0
      %5314 = vmatpush2.bf16.msra.mxu0 0
      %5315 = vmatprep.mubr.bf16.mxu0 0
      %5316 = vmatmul.mubr.bf16.gmra.mxu0 %v5272
      %v5317 = vpop.f32.mrf.mxu0
      %v5318 = vadd.f32 %v5241, %v5317
      %v5319 = vpop.f32.mrf.mxu0
      %v5320 = vpop.f32.mrf.mxu0
      %v5321 = vadd.f32 %v5244, %v5320
      %v5322 = vpop.f32.mrf.mxu0
      %5323 = vmatprep.mubr.bf16.mxu0 0
      %5324 = vmatmul.mubr.bf16.gmra.mxu0 %v5275
      %v5325 = vpop.f32.mrf.mxu0
      %v5326 = vadd.f32 %v5249, %v5325
      %v5327 = vpop.f32.mrf.mxu0
      %v5328 = vpop.f32.mrf.mxu0
      %v5329 = vadd.f32 %v5252, %v5328
      %v5330 = vpop.f32.mrf.mxu0
      %5331 = vmatprep.mubr.bf16.mxu0 0
      %5332 = vmatmul.mubr.bf16.gmra.mxu0 %v5278
      %v5333 = vpop.f32.mrf.mxu0
      %v5334 = vadd.f32 %v5257, %v5333
      %v5335 = vpop.f32.mrf.mxu0
      %v5336 = vpop.f32.mrf.mxu0
      %v5337 = vadd.f32 %v5260, %v5336
      %v5338 = vpop.f32.mrf.mxu0
      %5339 = vmatprep.mubr.bf16.mxu0 0
      %5340 = vmatmul.mubr.bf16.gmra.mxu0 %v5281
      %v5341 = vpop.f32.mrf.mxu0
      %v5342 = vadd.f32 %v5265, %v5341
      %v5343 = vpop.f32.mrf.mxu0
      %v5344 = vpop.f32.mrf.mxu0
      %v5345 = vadd.f32 %v5268, %v5344
      %v5346 = vpop.f32.mrf.mxu0
      %5347 = vdwg.mxu0
      %v5348 = vld [vmem:[%s5 + $0x68] sm:$0xff]
      %v5349 = vld [vmem:[%s5 + $0x70] sm:$0xff]
      %v5350 = vld [vmem:[%s5 + $0x78] sm:$0xff]
      %v5351 = vld [vmem:[%s5 + $0x80] sm:$0xff]
      %v5352 = vpack.c.bf16 %v5167, %v5166
      %v5353 = vpack.c.bf16 %v5169, %v5168
      %v5354 = vpack.c.bf16 %v5171, %v5170
      %v5355 = vpack.c.bf16 %v5173, %v5172
      %v5356 = vpack.c.bf16 %v5349, %v5348
      %v5357 = vpack.c.bf16 %v5351, %v5350
      %v5359 = vsel %vm490, %v5352, 0
      %v5362 = vsel %vm490, %v5353, 0
      %v5365 = vsel %vm490, %v5354, 0
      %v5368 = vsel %vm490, %v5355, 0
      %5370 = vmatprep.subr.bf16.mxu0 0
      %5371 = vmatpush1.bf16.msra.mxu0 0
      %5372 = vmatprep.subr.bf16.mxu0 0
      %5373 = vmatpush1.bf16.msra.mxu0 0
      %5374 = vmatprep.subr.bf16.mxu0 0
      %5375 = vmatpush1.bf16.msra.mxu0 0
      %5376 = vmatprep.subr.bf16.mxu0 0
      %5377 = vmatpush1.bf16.msra.mxu0 0
      %5378 = vmatprep.subr.bf16.mxu0 0
      %5379 = vmatpush1.bf16.msra.mxu0 0
      %5380 = vmatprep.subr.bf16.mxu0 0
      %5381 = vmatpush1.bf16.msra.mxu0 0
      %5382 = vmatprep.subr.bf16.mxu0 0
      %5383 = vmatpush1.bf16.msra.mxu0 %v5357
      %5384 = vmatprep.subr.bf16.mxu0 0
      %5385 = vmatpush1.bf16.msra.mxu0 %v5356
      %5386 = vmatprep.subr.bf16.mxu0 0
      %5387 = vmatpush2.bf16.msra.mxu0 0
      %5388 = vmatprep.subr.bf16.mxu0 0
      %5389 = vmatpush2.bf16.msra.mxu0 0
      %5390 = vmatprep.subr.bf16.mxu0 0
      %5391 = vmatpush2.bf16.msra.mxu0 0
      %5392 = vmatprep.subr.bf16.mxu0 0
      %5393 = vmatpush2.bf16.msra.mxu0 0
      %5394 = vmatprep.subr.bf16.mxu0 0
      %5395 = vmatpush2.bf16.msra.mxu0 0
      %5396 = vmatprep.subr.bf16.mxu0 0
      %5397 = vmatpush2.bf16.msra.mxu0 0
      %5398 = vmatprep.subr.bf16.mxu0 0
      %5399 = vmatpush2.bf16.msra.mxu0 0
      %5400 = vmatprep.subr.bf16.mxu0 0
      %5401 = vmatpush2.bf16.msra.mxu0 0
      %5402 = vmatprep.mubr.bf16.mxu0 0
      %5403 = vmatmul.mubr.bf16.gmra.mxu0 %v5359
      %v5404 = vpop.f32.mrf.mxu0
      %v5405 = vadd.f32 0.0, %v5404
      %v5406 = vpop.f32.mrf.mxu0
      %v5407 = vpop.f32.mrf.mxu0
      %v5408 = vadd.f32 0.0, %v5407
      %v5409 = vpop.f32.mrf.mxu0
      %5410 = vmatprep.mubr.bf16.mxu0 0
      %5411 = vmatmul.mubr.bf16.gmra.mxu0 %v5362
      %v5412 = vpop.f32.mrf.mxu0
      %v5413 = vadd.f32 0.0, %v5412
      %v5414 = vpop.f32.mrf.mxu0
      %v5415 = vpop.f32.mrf.mxu0
      %v5416 = vadd.f32 0.0, %v5415
      %v5417 = vpop.f32.mrf.mxu0
      %5418 = vmatprep.mubr.bf16.mxu0 0
      %5419 = vmatmul.mubr.bf16.gmra.mxu0 %v5365
      %v5420 = vpop.f32.mrf.mxu0
      %v5421 = vadd.f32 0.0, %v5420
      %v5422 = vpop.f32.mrf.mxu0
      %v5423 = vpop.f32.mrf.mxu0
      %v5424 = vadd.f32 0.0, %v5423
      %v5425 = vpop.f32.mrf.mxu0
      %5426 = vmatprep.mubr.bf16.mxu0 0
      %5427 = vmatmul.mubr.bf16.gmra.mxu0 %v5368
      %v5428 = vpop.f32.mrf.mxu0
      %v5429 = vadd.f32 0.0, %v5428
      %v5430 = vpop.f32.mrf.mxu0
      %v5431 = vpop.f32.mrf.mxu0
      %v5432 = vadd.f32 0.0, %v5431
      %v5433 = vpop.f32.mrf.mxu0
      %5434 = vdwg.mxu0
      %v5435 = vadd.f32 %v5318, %v5405
      %v5436 = vadd.f32 %v5321, %v5408
      %v5437 = vadd.f32 %v5326, %v5413
      %v5438 = vadd.f32 %v5329, %v5416
      %v5439 = vadd.f32 %v5334, %v5421
      %v5440 = vadd.f32 %v5337, %v5424
      %v5441 = vadd.f32 %v5342, %v5429
      %v5442 = vadd.f32 %v5345, %v5432
      %v5443 = vld [vmem:[%s5 + $0x88] sm:$0xff]
      %v5444 = vld [vmem:[%s5 + $0x90] sm:$0xff]
      %v5445 = vld [vmem:[%s5 + $0x98] sm:$0xff]
      %v5446 = vld [vmem:[%s5 + $0xa0] sm:$0xff]
      %v5447 = vpack.c.bf16 %v4569, %v4562
      %v5448 = vpack.c.bf16 %v4583, %v4576
      %v5449 = vpack.c.bf16 %v4597, %v4590
      %v5450 = vpack.c.bf16 %v4611, %v4604
      %v5451 = vpack.c.bf16 %v5444, %v5443
      %v5452 = vpack.c.bf16 %v5446, %v5445
      %v5454 = vsel %vm490, %v5447, 0
      %v5457 = vsel %vm490, %v5448, 0
      %v5460 = vsel %vm490, %v5449, 0
      %v5463 = vsel %vm490, %v5450, 0
      %5465 = vmatprep.subr.bf16.mxu0 0
      %5466 = vmatpush1.bf16.msra.mxu0 0
      %5467 = vmatprep.subr.bf16.mxu0 0
      %5468 = vmatpush1.bf16.msra.mxu0 0
      %5469 = vmatprep.subr.bf16.mxu0 0
      %5470 = vmatpush1.bf16.msra.mxu0 0
      %5471 = vmatprep.subr.bf16.mxu0 0
      %5472 = vmatpush1.bf16.msra.mxu0 0
      %5473 = vmatprep.subr.bf16.mxu0 0
      %5474 = vmatpush1.bf16.msra.mxu0 0
      %5475 = vmatprep.subr.bf16.mxu0 0
      %5476 = vmatpush1.bf16.msra.mxu0 0
      %5477 = vmatprep.subr.bf16.mxu0 0
      %5478 = vmatpush1.bf16.msra.mxu0 %v5452
      %5479 = vmatprep.subr.bf16.mxu0 0
      %5480 = vmatpush1.bf16.msra.mxu0 %v5451
      %5481 = vmatprep.subr.bf16.mxu0 0
      %5482 = vmatpush2.bf16.msra.mxu0 0
      %5483 = vmatprep.subr.bf16.mxu0 0
      %5484 = vmatpush2.bf16.msra.mxu0 0
      %5485 = vmatprep.subr.bf16.mxu0 0
      %5486 = vmatpush2.bf16.msra.mxu0 0
      %5487 = vmatprep.subr.bf16.mxu0 0
      %5488 = vmatpush2.bf16.msra.mxu0 0
      %5489 = vmatprep.subr.bf16.mxu0 0
      %5490 = vmatpush2.bf16.msra.mxu0 0
      %5491 = vmatprep.subr.bf16.mxu0 0
      %5492 = vmatpush2.bf16.msra.mxu0 0
      %5493 = vmatprep.subr.bf16.mxu0 0
      %5494 = vmatpush2.bf16.msra.mxu0 0
      %5495 = vmatprep.subr.bf16.mxu0 0
      %5496 = vmatpush2.bf16.msra.mxu0 0
      %5497 = vmatprep.mubr.bf16.mxu0 0
      %5498 = vmatmul.mubr.bf16.gmra.mxu0 %v5454
      %v5499 = vpop.f32.mrf.mxu0
      %v5500 = vadd.f32 0.0, %v5499
      %v5501 = vpop.f32.mrf.mxu0
      %v5502 = vpop.f32.mrf.mxu0
      %v5503 = vadd.f32 0.0, %v5502
      %v5504 = vpop.f32.mrf.mxu0
      %5505 = vmatprep.mubr.bf16.mxu0 0
      %5506 = vmatmul.mubr.bf16.gmra.mxu0 %v5457
      %v5507 = vpop.f32.mrf.mxu0
      %v5508 = vadd.f32 0.0, %v5507
      %v5509 = vpop.f32.mrf.mxu0
      %v5510 = vpop.f32.mrf.mxu0
      %v5511 = vadd.f32 0.0, %v5510
      %v5512 = vpop.f32.mrf.mxu0
      %5513 = vmatprep.mubr.bf16.mxu0 0
      %5514 = vmatmul.mubr.bf16.gmra.mxu0 %v5460
      %v5515 = vpop.f32.mrf.mxu0
      %v5516 = vadd.f32 0.0, %v5515
      %v5517 = vpop.f32.mrf.mxu0
      %v5518 = vpop.f32.mrf.mxu0
      %v5519 = vadd.f32 0.0, %v5518
      %v5520 = vpop.f32.mrf.mxu0
      %5521 = vmatprep.mubr.bf16.mxu0 0
      %5522 = vmatmul.mubr.bf16.gmra.mxu0 %v5463
      %v5523 = vpop.f32.mrf.mxu0
      %v5524 = vadd.f32 0.0, %v5523
      %v5525 = vpop.f32.mrf.mxu0
      %v5526 = vpop.f32.mrf.mxu0
      %v5527 = vadd.f32 0.0, %v5526
      %v5528 = vpop.f32.mrf.mxu0
      %5529 = vdwg.mxu0
      %v5530 = vadd.f32 %v5435, %v5500
      %v5531 = vadd.f32 %v5436, %v5503
      %v5532 = vadd.f32 %v5437, %v5508
      %v5533 = vadd.f32 %v5438, %v5511
      %v5534 = vadd.f32 %v5439, %v5516
      %v5535 = vadd.f32 %v5440, %v5519
      %v5536 = vadd.f32 %v5441, %v5524
      %v5537 = vadd.f32 %v5442, %v5527
      %v5538 = vld [vmem:[%s5 + $0x109] sm:$0x1]
      %v5539 = vlaneseq
      %v5540 = vshrl.u32 %v5539, 7
      %v5541 = vsub.s32 0, %v5540
      %v5542 = vrot.slane %v5538, %v5541
      %v5543 = vadd.f32 %v5530, %v5542
      %v5544 = vadd.f32 %v5531, %v5542
      %v5545 = vadd.f32 %v5532, %v5542
      %v5546 = vadd.f32 %v5533, %v5542
      %v5547 = vadd.f32 %v5534, %v5542
      %v5548 = vadd.f32 %v5535, %v5542
      %v5549 = vadd.f32 %v5536, %v5542
      %v5550 = vadd.f32 %v5537, %v5542
      %v5551 = vld [vmem:[%s5 + $0xa8] sm:$0xff]
      %v5552 = vld [vmem:[%s5 + $0xb0] sm:$0xff]
      %v5553 = vld [vmem:[%s5 + $0xb8] sm:$0xff]
      %v5554 = vld [vmem:[%s5 + $0xc0] sm:$0xff]
      %v5555 = vpack.c.bf16 %v5545, %v5543
      %v5556 = vpack.c.bf16 %v5549, %v5547
      %v5557 = vpack.c.bf16 %v5552, %v5551
      %v5558 = vpack.c.bf16 %v5554, %v5553
      %v5559 = vld [vmem:[%s5 + $0xc8] sm:$0xff]
      %v5560 = vld [vmem:[%s5 + $0xd0] sm:$0xff]
      %v5561 = vld [vmem:[%s5 + $0xd8] sm:$0xff]
      %v5562 = vld [vmem:[%s5 + $0xe0] sm:$0xff]
      %v5563 = vpack.c.bf16 %v5560, %v5559
      %v5564 = vpack.c.bf16 %v5562, %v5561
      %v5566 = vsel %vm490, %v1319, 0
      %v5569 = vsel %vm490, %v1320, 0
      %5571 = vmatprep.subr.bf16.mxu0 0
      %5572 = vmatpush1.bf16.msra.mxu0 0
      %5573 = vmatprep.subr.bf16.mxu0 0
      %5574 = vmatpush1.bf16.msra.mxu0 0
      %5575 = vmatprep.subr.bf16.mxu0 0
      %5576 = vmatpush1.bf16.msra.mxu0 0
      %5577 = vmatprep.subr.bf16.mxu0 0
      %5578 = vmatpush1.bf16.msra.mxu0 0
      %5579 = vmatprep.subr.bf16.mxu0 0
      %5580 = vmatpush1.bf16.msra.mxu0 0
      %5581 = vmatprep.subr.bf16.mxu0 0
      %5582 = vmatpush1.bf16.msra.mxu0 0
      %5583 = vmatprep.subr.bf16.mxu0 0
      %5584 = vmatpush1.bf16.msra.mxu0 %v5564
      %5585 = vmatprep.subr.bf16.mxu0 0
      %5586 = vmatpush1.bf16.msra.mxu0 %v5563
      %5587 = vmatprep.subr.bf16.mxu0 0
      %5588 = vmatpush2.bf16.msra.mxu0 0
      %5589 = vmatprep.subr.bf16.mxu0 0
      %5590 = vmatpush2.bf16.msra.mxu0 0
      %5591 = vmatprep.subr.bf16.mxu0 0
      %5592 = vmatpush2.bf16.msra.mxu0 0
      %5593 = vmatprep.subr.bf16.mxu0 0
      %5594 = vmatpush2.bf16.msra.mxu0 0
      %5595 = vmatprep.subr.bf16.mxu0 0
      %5596 = vmatpush2.bf16.msra.mxu0 0
      %5597 = vmatprep.subr.bf16.mxu0 0
      %5598 = vmatpush2.bf16.msra.mxu0 0
      %5599 = vmatprep.subr.bf16.mxu0 0
      %5600 = vmatpush2.bf16.msra.mxu0 0
      %5601 = vmatprep.subr.bf16.mxu0 0
      %5602 = vmatpush2.bf16.msra.mxu0 0
      %5603 = vmatprep.mubr.bf16.mxu0 0
      %5604 = vmatmul.mubr.bf16.gmra.mxu0 %v5566
      %v5605 = vpop.f32.mrf.mxu0
      %v5606 = vadd.f32 0.0, %v5605
      %v5607 = vpop.f32.mrf.mxu0
      %v5608 = vpop.f32.mrf.mxu0
      %v5609 = vadd.f32 0.0, %v5608
      %v5610 = vpop.f32.mrf.mxu0
      %5611 = vmatprep.mubr.bf16.mxu0 0
      %5612 = vmatmul.mubr.bf16.gmra.mxu0 %v5569
      %v5613 = vpop.f32.mrf.mxu0
      %v5614 = vadd.f32 0.0, %v5613
      %v5615 = vpop.f32.mrf.mxu0
      %v5616 = vpop.f32.mrf.mxu0
      %v5617 = vadd.f32 0.0, %v5616
      %v5618 = vpop.f32.mrf.mxu0
      %5619 = vdwg.mxu0
      %v5621 = vsel %vm490, %v5555, 0
      %v5624 = vsel %vm490, %v5556, 0
      %5626 = vmatprep.subr.bf16.mxu0 0
      %5627 = vmatpush1.bf16.msra.mxu0 0
      %5628 = vmatprep.subr.bf16.mxu0 0
      %5629 = vmatpush1.bf16.msra.mxu0 0
      %5630 = vmatprep.subr.bf16.mxu0 0
      %5631 = vmatpush1.bf16.msra.mxu0 0
      %5632 = vmatprep.subr.bf16.mxu0 0
      %5633 = vmatpush1.bf16.msra.mxu0 0
      %5634 = vmatprep.subr.bf16.mxu0 0
      %5635 = vmatpush1.bf16.msra.mxu0 0
      %5636 = vmatprep.subr.bf16.mxu0 0
      %5637 = vmatpush1.bf16.msra.mxu0 0
      %5638 = vmatprep.subr.bf16.mxu0 0
      %5639 = vmatpush1.bf16.msra.mxu0 %v5558
      %5640 = vmatprep.subr.bf16.mxu0 0
      %5641 = vmatpush1.bf16.msra.mxu0 %v5557
      %5642 = vmatprep.subr.bf16.mxu0 0
      %5643 = vmatpush2.bf16.msra.mxu0 0
      %5644 = vmatprep.subr.bf16.mxu0 0
      %5645 = vmatpush2.bf16.msra.mxu0 0
      %5646 = vmatprep.subr.bf16.mxu0 0
      %5647 = vmatpush2.bf16.msra.mxu0 0
      %5648 = vmatprep.subr.bf16.mxu0 0
      %5649 = vmatpush2.bf16.msra.mxu0 0
      %5650 = vmatprep.subr.bf16.mxu0 0
      %5651 = vmatpush2.bf16.msra.mxu0 0
      %5652 = vmatprep.subr.bf16.mxu0 0
      %5653 = vmatpush2.bf16.msra.mxu0 0
      %5654 = vmatprep.subr.bf16.mxu0 0
      %5655 = vmatpush2.bf16.msra.mxu0 0
      %5656 = vmatprep.subr.bf16.mxu0 0
      %5657 = vmatpush2.bf16.msra.mxu0 0
      %5658 = vmatprep.mubr.bf16.mxu0 0
      %5659 = vmatmul.mubr.bf16.gmra.mxu0 %v5621
      %v5660 = vpop.f32.mrf.mxu0
      %v5661 = vadd.f32 %v5606, %v5660
      %v5662 = vpop.f32.mrf.mxu0
      %v5663 = vpop.f32.mrf.mxu0
      %v5664 = vadd.f32 %v5609, %v5663
      %v5665 = vpop.f32.mrf.mxu0
      %5666 = vmatprep.mubr.bf16.mxu0 0
      %5667 = vmatmul.mubr.bf16.gmra.mxu0 %v5624
      %v5668 = vpop.f32.mrf.mxu0
      %v5669 = vadd.f32 %v5614, %v5668
      %v5670 = vpop.f32.mrf.mxu0
      %v5671 = vpop.f32.mrf.mxu0
      %v5672 = vadd.f32 %v5617, %v5671
      %v5673 = vpop.f32.mrf.mxu0
      %5674 = vdwg.mxu0
      %v5675 = vld [vmem:[%s5 + $0xe8] sm:$0xff]
      %v5676 = vld [vmem:[%s5 + $0xf0] sm:$0xff]
      %v5677 = vld [vmem:[%s5 + $0xf8] sm:$0xff]
      %v5678 = vld [vmem:[%s5 + $0x100] sm:$0xff]
      %v5679 = vpack.c.bf16 %v466, %v463
      %v5680 = vpack.c.bf16 %v474, %v471
      %v5681 = vpack.c.bf16 %v5676, %v5675
      %v5682 = vpack.c.bf16 %v5678, %v5677
      %v5684 = vsel %vm490, %v5679, 0
      %v5687 = vsel %vm490, %v5680, 0
      %5689 = vmatprep.subr.bf16.mxu0 0
      %5690 = vmatpush1.bf16.msra.mxu0 0
      %5691 = vmatprep.subr.bf16.mxu0 0
      %5692 = vmatpush1.bf16.msra.mxu0 0
      %5693 = vmatprep.subr.bf16.mxu0 0
      %5694 = vmatpush1.bf16.msra.mxu0 0
      %5695 = vmatprep.subr.bf16.mxu0 0
      %5696 = vmatpush1.bf16.msra.mxu0 0
      %5697 = vmatprep.subr.bf16.mxu0 0
      %5698 = vmatpush1.bf16.msra.mxu0 0
      %5699 = vmatprep.subr.bf16.mxu0 0
      %5700 = vmatpush1.bf16.msra.mxu0 0
      %5701 = vmatprep.subr.bf16.mxu0 0
      %5702 = vmatpush1.bf16.msra.mxu0 %v5682
      %5703 = vmatprep.subr.bf16.mxu0 0
      %5704 = vmatpush1.bf16.msra.mxu0 %v5681
      %5705 = vmatprep.subr.bf16.mxu0 0
      %5706 = vmatpush2.bf16.msra.mxu0 0
      %5707 = vmatprep.subr.bf16.mxu0 0
      %5708 = vmatpush2.bf16.msra.mxu0 0
      %5709 = vmatprep.subr.bf16.mxu0 0
      %5710 = vmatpush2.bf16.msra.mxu0 0
      %5711 = vmatprep.subr.bf16.mxu0 0
      %5712 = vmatpush2.bf16.msra.mxu0 0
      %5713 = vmatprep.subr.bf16.mxu0 0
      %5714 = vmatpush2.bf16.msra.mxu0 0
      %5715 = vmatprep.subr.bf16.mxu0 0
      %5716 = vmatpush2.bf16.msra.mxu0 0
      %5717 = vmatprep.subr.bf16.mxu0 0
      %5718 = vmatpush2.bf16.msra.mxu0 0
      %5719 = vmatprep.subr.bf16.mxu0 0
      %5720 = vmatpush2.bf16.msra.mxu0 0
      %5721 = vmatprep.mubr.bf16.mxu0 0
      %5722 = vmatmul.mubr.bf16.gmra.mxu0 %v5684
      %v5723 = vpop.f32.mrf.mxu0
      %v5724 = vadd.f32 0.0, %v5723
      %v5725 = vpop.f32.mrf.mxu0
      %v5726 = vpop.f32.mrf.mxu0
      %v5727 = vadd.f32 0.0, %v5726
      %v5728 = vpop.f32.mrf.mxu0
      %5729 = vmatprep.mubr.bf16.mxu0 0
      %5730 = vmatmul.mubr.bf16.gmra.mxu0 %v5687
      %v5731 = vpop.f32.mrf.mxu0
      %v5732 = vadd.f32 0.0, %v5731
      %v5733 = vpop.f32.mrf.mxu0
      %v5734 = vpop.f32.mrf.mxu0
      %v5735 = vadd.f32 0.0, %v5734
      %v5736 = vpop.f32.mrf.mxu0
      %5737 = vdwg.mxu0
      %v5738 = vadd.f32 %v5661, %v5724
      %v5739 = vadd.f32 %v5664, %v5727
      %v5740 = vadd.f32 %v5669, %v5732
      %v5741 = vadd.f32 %v5672, %v5735
      %v5742 = vxor.u32 %v5738, 2147483648
      %v5743 = vxor.u32 %v5739, 2147483648
      %v5744 = vxor.u32 %v5740, 2147483648
      %v5745 = vxor.u32 %v5741, 2147483648
      %v5746 = vmul.f32 %v5742, 1.442695
      %v5747 = vpow.pop %v5746
      %v5748 = vmul.f32 %v5743, 1.442695
      %v5749 = vpow.pop %v5748
      %v5750 = vmul.f32 %v5744, 1.442695
      %v5751 = vpow.pop %v5750
      %v5752 = vmul.f32 %v5745, 1.442695
      %v5753 = vpow.pop %v5752
      %v5754 = vadd.f32 %v5747, 1.0
      %v5755 = vadd.f32 %v5749, 1.0
      %v5756 = vadd.f32 %v5751, 1.0
      %v5757 = vadd.f32 %v5753, 1.0
      %v5758 = vrcp.pop %v5754
      %v5759 = vmul.f32 1.0, %v5758
      %v5760 = vrcp.pop %v5755
      %v5761 = vmul.f32 1.0, %v5760
      %v5762 = vrcp.pop %v5756
      %v5763 = vmul.f32 1.0, %v5762
      %v5764 = vrcp.pop %v5757
      %v5765 = vmul.f32 1.0, %v5764
      %v5766 = vmul.f32 %v5543, %v5759
      %v5767 = vmul.f32 %v5545, %v5761
      %v5768 = vmul.f32 %v5547, %v5763
      %v5769 = vmul.f32 %v5549, %v5765
      %v5770 = vadd.f32 %v5766, %v314
      %v5771 = vadd.f32 %v5767, %v315
      %v5772 = vadd.f32 %v5768, %v316
      %v5773 = vadd.f32 %v5769, %v317
      %v5774 = vsel %vm490, %v5770, 0.0
      %5775 = vadd.xlane.f32.xlu0 %v5774
      %v5776 = vpop.xlane.xlu0 %5775
      %v5777 = vsel %vm490, %v5544, 0.0
      %5778 = vadd.xlane.f32.xlu0 %v5777
      %v5779 = vpop.xlane.xlu0 %5778
      %v5780 = vsel %vm490, %v5771, 0.0
      %5781 = vadd.xlane.f32.xlu0 %v5780
      %v5782 = vpop.xlane.xlu0 %5781
      %v5783 = vsel %vm490, %v5546, 0.0
      %5784 = vadd.xlane.f32.xlu0 %v5783
      %v5785 = vpop.xlane.xlu0 %5784
      %v5786 = vsel %vm490, %v5772, 0.0
      %5787 = vadd.xlane.f32.xlu0 %v5786
      %v5788 = vpop.xlane.xlu0 %5787
      %v5789 = vsel %vm490, %v5548, 0.0
      %5790 = vadd.xlane.f32.xlu0 %v5789
      %v5791 = vpop.xlane.xlu0 %5790
      %v5792 = vsel %vm490, %v5773, 0.0
      %5793 = vadd.xlane.f32.xlu0 %v5792
      %v5794 = vpop.xlane.xlu0 %5793
      %v5795 = vsel %vm490, %v5550, 0.0
      %5796 = vadd.xlane.f32.xlu0 %v5795
      %v5797 = vpop.xlane.xlu0 %5796
      %v5798 = vrcp.pop 32.0
      %v5799 = vmul.f32 %v5776, %v5798
      %v5800 = vmul.f32 %v5779, %v5798
      %v5801 = vmul.f32 %v5782, %v5798
      %v5802 = vmul.f32 %v5785, %v5798
      %v5803 = vmul.f32 %v5788, %v5798
      %v5804 = vmul.f32 %v5791, %v5798
      %v5805 = vmul.f32 %v5794, %v5798
      %v5806 = vmul.f32 %v5797, %v5798
      %v5807 = vsub.f32 %v5770, %v5799
      %v5808 = vsub.f32 %v5544, %v5800
      %v5809 = vsub.f32 %v5771, %v5801
      %v5810 = vsub.f32 %v5546, %v5802
      %v5811 = vsub.f32 %v5772, %v5803
      %v5812 = vsub.f32 %v5548, %v5804
      %v5813 = vsub.f32 %v5773, %v5805
      %v5814 = vsub.f32 %v5550, %v5806
      %v5815 = vmul.f32 %v5807, %v5807
      %v5816 = vmul.f32 %v5808, %v5808
      %v5817 = vmul.f32 %v5809, %v5809
      %v5818 = vmul.f32 %v5810, %v5810
      %v5819 = vmul.f32 %v5811, %v5811
      %v5820 = vmul.f32 %v5812, %v5812
      %v5821 = vmul.f32 %v5813, %v5813
      %v5822 = vmul.f32 %v5814, %v5814
      %v5823 = vsel %vm490, %v5815, 0.0
      %5824 = vadd.xlane.f32.xlu0 %v5823
      %v5825 = vpop.xlane.xlu0 %5824
      %v5826 = vsel %vm490, %v5816, 0.0
      %5827 = vadd.xlane.f32.xlu0 %v5826
      %v5828 = vpop.xlane.xlu0 %5827
      %v5829 = vsel %vm490, %v5817, 0.0
      %5830 = vadd.xlane.f32.xlu0 %v5829
      %v5831 = vpop.xlane.xlu0 %5830
      %v5832 = vsel %vm490, %v5818, 0.0
      %5833 = vadd.xlane.f32.xlu0 %v5832
      %v5834 = vpop.xlane.xlu0 %5833
      %v5835 = vsel %vm490, %v5819, 0.0
      %5836 = vadd.xlane.f32.xlu0 %v5835
      %v5837 = vpop.xlane.xlu0 %5836
      %v5838 = vsel %vm490, %v5820, 0.0
      %5839 = vadd.xlane.f32.xlu0 %v5838
      %v5840 = vpop.xlane.xlu0 %5839
      %v5841 = vsel %vm490, %v5821, 0.0
      %5842 = vadd.xlane.f32.xlu0 %v5841
      %v5843 = vpop.xlane.xlu0 %5842
      %v5844 = vsel %vm490, %v5822, 0.0
      %5845 = vadd.xlane.f32.xlu0 %v5844
      %v5846 = vpop.xlane.xlu0 %5845
      %v5847 = vmul.f32 %v5825, %v5798
      %v5848 = vmul.f32 %v5828, %v5798
      %v5849 = vmul.f32 %v5831, %v5798
      %v5850 = vmul.f32 %v5834, %v5798
      %v5851 = vmul.f32 %v5837, %v5798
      %v5852 = vmul.f32 %v5840, %v5798
      %v5853 = vmul.f32 %v5843, %v5798
      %v5854 = vmul.f32 %v5846, %v5798
      %v5855 = vadd.f32 %v5847, 1e-05
      %v5856 = vadd.f32 %v5848, 1e-05
      %v5857 = vadd.f32 %v5849, 1e-05
      %v5858 = vadd.f32 %v5850, 1e-05
      %v5859 = vadd.f32 %v5851, 1e-05
      %v5860 = vadd.f32 %v5852, 1e-05
      %v5861 = vadd.f32 %v5853, 1e-05
      %v5862 = vadd.f32 %v5854, 1e-05
      %v5863 = vrsqrt.pop %v5855
      %v5864 = vrsqrt.pop %v5856
      %v5865 = vrsqrt.pop %v5857
      %v5866 = vrsqrt.pop %v5858
      %v5867 = vrsqrt.pop %v5859
      %v5868 = vrsqrt.pop %v5860
      %v5869 = vrsqrt.pop %v5861
      %v5870 = vrsqrt.pop %v5862
      %v5871 = vmul.f32 %v5807, %v5863
      %v5872 = vmul.f32 %v5808, %v5864
      %v5873 = vmul.f32 %v5809, %v5865
      %v5874 = vmul.f32 %v5810, %v5866
      %v5875 = vmul.f32 %v5811, %v5867
      %v5876 = vmul.f32 %v5812, %v5868
      %v5877 = vmul.f32 %v5813, %v5869
      %v5878 = vmul.f32 %v5814, %v5870
      %v5879 = vld [vmem:[%s5 + $0x10a] sm:$0x1]
      %v5880 = vlaneseq
      %v5881 = vshrl.u32 %v5880, 7
      %v5882 = vsub.s32 0, %v5881
      %v5883 = vrot.slane %v5879, %v5882
      %v5884 = vmul.f32 %v5871, %v5883
      %v5885 = vmul.f32 %v5872, %v5883
      %v5886 = vmul.f32 %v5873, %v5883
      %v5887 = vmul.f32 %v5874, %v5883
      %v5888 = vmul.f32 %v5875, %v5883
      %v5889 = vmul.f32 %v5876, %v5883
      %v5890 = vmul.f32 %v5877, %v5883
      %v5891 = vmul.f32 %v5878, %v5883
      %v5892 = vld [vmem:[%s5 + $0x10b] sm:$0x1]
      %v5893 = vlaneseq
      %v5894 = vshrl.u32 %v5893, 7
      %v5895 = vsub.s32 0, %v5894
      %v5896 = vrot.slane %v5892, %v5895
      %v5897 = vadd.f32 %v5884, %v5896
      %v5898 = vadd.f32 %v5885, %v5896
      %v5899 = vadd.f32 %v5886, %v5896
      %v5900 = vadd.f32 %v5887, %v5896
      %v5901 = vadd.f32 %v5888, %v5896
      %v5902 = vadd.f32 %v5889, %v5896
      %v5903 = vadd.f32 %v5890, %v5896
      %v5904 = vadd.f32 %v5891, %v5896
      %5905 = vst.msk [vmem:[%s311] sm:$0xff] %vm490, %v5897
      %5906 = vst.msk [vmem:[%s311 + $0x8] sm:$0xff] %vm490, %v5898
      %5907 = vst.msk [vmem:[%s311 + $0x10] sm:$0xff] %vm490, %v5899
      %5908 = vst.msk [vmem:[%s311 + $0x18] sm:$0xff] %vm490, %v5900
      %5909 = vst.msk [vmem:[%s311 + $0x20] sm:$0xff] %vm490, %v5901
      %5910 = vst.msk [vmem:[%s311 + $0x28] sm:$0xff] %vm490, %v5902
      %5911 = vst.msk [vmem:[%s311 + $0x30] sm:$0xff] %vm490, %v5903
      %5912 = vst.msk [vmem:[%s311 + $0x38] sm:$0xff] %vm490, %v5904
      %s5913 = smul.u32 8, %s17
      %p5914 = scmp.lt.s32.totalorder %s5913, 15
      %s5915 = scalar_select %p5914, %s5913, 15
      %s5916 = smul.addr %s5915, 8
      %s5917 = scalar_lea.vmem %s6, %s5916
      // Predicated region
      $region45: #{tpu_custom_call.1} parent=43 // pred_check
        %p5918 = pneg %p181
      $region46: #{tpu_custom_call.1} parent=43 // pred_check_branch
        %5920 = sbr.rel (%p5918) target = $region48
      $region47: #{tpu_custom_call.1} parent=43 // pred_region
        %s5921 = smul.u32 8, %s17
      $region48: #{tpu_custom_call.1} parent=43 // pred_fallthru
        _
    $region44: #{tpu_custom_call.1} parent=5 // pred_fallthru
      _
    %p5922 = scmp.le.s32.totalorder 2, %s12
    // Predicated region
    $region49: #{tpu_custom_call.1} parent=5 // pred_check
      %p5923 = pneg %p5922
    $region50: #{tpu_custom_call.1} parent=5 // pred_check_branch
      %5925 = sbr.rel (%p5923) target = $region52
    $region51: #{tpu_custom_call.1} parent=5 // pred_region
      %s5926 = ssub.s32 %s12, 2
      // Predicated region
      $region53: #{tpu_custom_call.1} parent=51 // pred_check
        %p5927 = pneg %p187
      $region54: #{tpu_custom_call.1} parent=51 // pred_check_branch
        %5929 = sbr.rel (%p5927) target = $region56
      $region55: #{tpu_custom_call.1} parent=51 // pred_region
        %s5930 = smul.u32 8, %s18
        %p5931 = scmp.lt.s32.totalorder %s5930, 15
        %s5932 = scalar_select %p5931, %s5930, 15
        %s5933 = smul.addr %s5932, 8
        %s5934 = scalar_lea.vmem %s6, %s5933
      $region56: #{tpu_custom_call.1} parent=51 // pred_fallthru
        _
    $region52: #{tpu_custom_call.1} parent=5 // pred_fallthru
      _
  $region6: #{tpu_custom_call.1} parent=0 // loop_footer
    %s16 = sadd.s32 1, %s12
  $region7: #{tpu_custom_call.1} parent=0 // loop_footer_branch
    %11 = sbr.rel target = $region3
  $region8: #{tpu_custom_call.1} parent=0 // loop_exit
    _

</llo_original>
